<compile_context>
chip_gen: v5e
topology: v5e:2x2
jax: 0.10.0
libtpu: 0.0.40
codegen_flags: <defaults>
</compile_context>

<pallas_src>
import functools

import jax
import jax.numpy as jnp
from jax.experimental import pallas as pl
from jax.experimental.pallas import tpu as pltpu


_VMEM_LIMIT = 32 * 1024 * 1024  # blocks are tiny; fits v7x's 64 MiB VMEM


# ---------------------------------------------------------------------------
# Kernel 1a: 3x3 conv (stride 1, pad 1) + folded BN affine (+ReLU), no im2col
# ---------------------------------------------------------------------------
def _conv3x3_s1_kernel(x_ref, w_ref, scale_ref, bias_ref, o_ref, *,
                       th, Wo, relu):
    # x_ref:      (1, H+2, W+2, Cin) f32  padded image (resident across rows)
    # w_ref:      (9, Cin, Cout)     bf16 per-tap weights
    # scale/bias: (1, Cout)          f32  folded BatchNorm affine
    # o_ref:      (1, th, Wo, Cout)  f32  one block of output rows
    cin = x_ref.shape[-1]
    cout = w_ref.shape[-1]
    row0 = pl.program_id(1) * th
    acc = jnp.zeros((th * Wo, cout), jnp.float32)
    for kh in range(3):
        for kw in range(3):
            patch = x_ref[0, pl.ds(row0 + kh, th), pl.ds(kw, Wo), :]
            patch = patch.reshape(th * Wo, cin).astype(jnp.bfloat16)
            acc = acc + jnp.dot(patch, w_ref[3 * kh + kw],
                                preferred_element_type=jnp.float32)
    y = acc * scale_ref[...] + bias_ref[...]          # epilogue stays f32
    if relu:
        y = jnp.maximum(y, 0.0)
    o_ref[...] = y.reshape(1, th, Wo, cout)


def conv3x3_bn_s1(x_nhwc, w9, scale, bias, relu=False):
    B, H, W, Cin = x_nhwc.shape
    Cout = w9.shape[-1]
    Ho, Wo = H, W
    th = 8 if Ho % 8 == 0 else Ho
    xp = jnp.pad(x_nhwc, ((0, 0), (1, 1), (1, 1), (0, 0)))
    return pl.pallas_call(
        functools.partial(_conv3x3_s1_kernel, th=th, Wo=Wo, relu=relu),
        out_shape=jax.ShapeDtypeStruct((B, Ho, Wo, Cout), jnp.float32),
        grid=(B, Ho // th),
        in_specs=[
            pl.BlockSpec((1, H + 2, W + 2, Cin), lambda b, r: (b, 0, 0, 0)),
            pl.BlockSpec((9, Cin, Cout), lambda b, r: (0, 0, 0)),
            pl.BlockSpec((1, Cout), lambda b, r: (0, 0)),
            pl.BlockSpec((1, Cout), lambda b, r: (0, 0)),
        ],
        out_specs=pl.BlockSpec((1, th, Wo, Cout), lambda b, r: (b, r, 0, 0)),
        compiler_params=pltpu.CompilerParams(
            dimension_semantics=("parallel", "parallel"),
            vmem_limit_bytes=_VMEM_LIMIT),
    )(xp, w9, scale, bias)


# ---------------------------------------------------------------------------
# Kernel 1b: 3x3 conv (stride 2, pad 1) + folded BN affine (+ReLU), no im2col
# ---------------------------------------------------------------------------
def _conv3x3_s2_kernel(x_ref, w_ref, scale_ref, bias_ref, o_ref, *,
                       th, Wo, relu):
    # x_ref: (1, 4, Ho+1, Wo+1, Cin) f32 polyphase split of the padded input,
    #        phase p = 2*row_parity + col_parity (resident across row blocks)
    # w_ref: (9, Cin, Cout) bf16 ; scale/bias: (1, Cout) f32
    # o_ref: (1, th, Wo, Cout) f32
    cin = x_ref.shape[-1]
    cout = w_ref.shape[-1]
    row0 = pl.program_id(1) * th
    acc = jnp.zeros((th * Wo, cout), jnp.float32)
    for kh in range(3):
        for kw in range(3):
            p = 2 * (kh % 2) + (kw % 2)
            patch = x_ref[0, p, pl.ds(row0 + kh // 2, th),
                          pl.ds(kw // 2, Wo), :]
            patch = patch.reshape(th * Wo, cin).astype(jnp.bfloat16)
            acc = acc + jnp.dot(patch, w_ref[3 * kh + kw],
                                preferred_element_type=jnp.float32)
    y = acc * scale_ref[...] + bias_ref[...]
    if relu:
        y = jnp.maximum(y, 0.0)
    o_ref[...] = y.reshape(1, th, Wo, cout)


def conv3x3_bn_s2(x_nhwc, w9, scale, bias, relu=True):
    B, H, W, Cin = x_nhwc.shape
    Cout = w9.shape[-1]
    Ho, Wo = H // 2, W // 2
    th = 8 if Ho % 8 == 0 else Ho
    xp = jnp.pad(x_nhwc, ((0, 0), (1, 1), (1, 1), (0, 0)))
    # polyphase split: a stride-2 tap becomes a contiguous static slice of one
    # phase, so no strided loads inside the kernel and no 9x im2col expansion.
    phases = jnp.stack([xp[:, rp::2, cp::2, :]
                        for rp in (0, 1) for cp in (0, 1)], axis=1)
    Hh, Wh = Ho + 1, Wo + 1
    return pl.pallas_call(
        functools.partial(_conv3x3_s2_kernel, th=th, Wo=Wo, relu=relu),
        out_shape=jax.ShapeDtypeStruct((B, Ho, Wo, Cout), jnp.float32),
        grid=(B, Ho // th),
        in_specs=[
            pl.BlockSpec((1, 4, Hh, Wh, Cin), lambda b, r: (b, 0, 0, 0, 0)),
            pl.BlockSpec((9, Cin, Cout), lambda b, r: (0, 0, 0)),
            pl.BlockSpec((1, Cout), lambda b, r: (0, 0)),
            pl.BlockSpec((1, Cout), lambda b, r: (0, 0)),
        ],
        out_specs=pl.BlockSpec((1, th, Wo, Cout), lambda b, r: (b, r, 0, 0)),
        compiler_params=pltpu.CompilerParams(
            dimension_semantics=("parallel", "parallel"),
            vmem_limit_bytes=_VMEM_LIMIT),
    )(phases, w9, scale, bias)


# ---------------------------------------------------------------------------
# Kernel 2: fused SearchBigDAG (node mixing + beta-weighted concat)
# ---------------------------------------------------------------------------
def _dag_kernel(wdag_ref, wcat_ref, s_ref, o_ref, *, n_big_nodes, window):
    # wdag_ref: (n_big_nodes, window) f32 SMEM ; wcat_ref: (2,) f32 SMEM
    # s_ref: (tm, C) f32 ; o_ref: (tm, 2C) f32
    s = s_ref[...]
    states = [s, s]             # SearchStage.forward always feeds s0 == s1
    for i in range(n_big_nodes):
        n_edges = min(len(states), window)
        acc = None
        for e in range(n_edges):
            w = wdag_ref[i, e]                       # scalar, read once
            term = w * states[len(states) - n_edges + e]
            acc = term if acc is None else acc + term
        states.append(acc)
    out = jnp.concatenate(
        [wcat_ref[0] * states[-2], wcat_ref[1] * states[-1]], axis=-1)
    o_ref[...] = out            # single dense store (no half-slice stores)


def _choose_m_tile(M, target=256):
    if M <= target:
        return M
    t = target
    while M % t:
        t -= 8
    return t


def search_big_dag(s_nhwc, w_dag, w_concat, n_big_nodes, window):
    # TODO(synk): genotype-defined GetCell ops per edge are not available in
    # the reference source; edges are identity ops, only the continuous
    # relaxation weights (weights_DAG) and the node concat are applied.
    B, H, W, C = s_nhwc.shape
    M = B * H * W
    tm = _choose_m_tile(M)
    s2 = s_nhwc.reshape(M, C)
    out = pl.pallas_call(
        functools.partial(_dag_kernel, n_big_nodes=n_big_nodes, window=window),
        out_shape=jax.ShapeDtypeStruct((M, 2 * C), jnp.float32),
        grid=(M // tm,),
        in_specs=[
            pl.BlockSpec((n_big_nodes, window), lambda m: (0, 0),
                         memory_space=pltpu.MemorySpace.SMEM),
            pl.BlockSpec((2,), lambda m: (0,),
                         memory_space=pltpu.MemorySpace.SMEM),
            pl.BlockSpec((tm, C), lambda m: (m, 0)),
        ],
        out_specs=pl.BlockSpec((tm, 2 * C), lambda m: (m, 0)),
        compiler_params=pltpu.CompilerParams(
            dimension_semantics=("parallel",),
            vmem_limit_bytes=_VMEM_LIMIT),
    )(w_dag, w_concat, s2)
    return out.reshape(B, H, W, 2 * C)


# ---------------------------------------------------------------------------
# Kernel 3: fused AdaptiveAvgPool2d(1) + Linear head
# ---------------------------------------------------------------------------
def _gap_linear_kernel(x_ref, w_ref, b_ref, o_ref, acc_ref, *, inv_s):
    @pl.when(pl.program_id(0) == 0)
    def _():
        acc_ref[...] = jnp.zeros_like(acc_ref)
    summed = jnp.sum(x_ref[...], axis=1)                  # (B, Cf) f32
    acc_ref[...] += jnp.dot(summed.astype(jnp.bfloat16), w_ref[...],
                            preferred_element_type=jnp.float32)
    @pl.when(pl.program_id(0) == pl.num_programs(0) - 1)
    def _():
        o_ref[...] = acc_ref[...] * inv_s + b_ref[...]    # mean folded in


def gap_linear(x_bsc, w_pad_bf16, b_pad_f32, n_classes):
    B, S, Cf = x_bsc.shape
    Np = w_pad_bf16.shape[-1]
    ts = 8 if S % 8 == 0 else S
    out = pl.pallas_call(
        functools.partial(_gap_linear_kernel, inv_s=1.0 / S),
        out_shape=jax.ShapeDtypeStruct((B, Np), jnp.float32),
        grid=(S // ts,),
        in_specs=[
            pl.BlockSpec((B, ts, Cf), lambda s: (0, s, 0)),
            pl.BlockSpec((Cf, Np), lambda s: (0, 0)),
            pl.BlockSpec((1, Np), lambda s: (0, 0)),
        ],
        out_specs=pl.BlockSpec((B, Np), lambda s: (0, 0)),
        scratch_shapes=[pltpu.VMEM((B, Np), jnp.float32)],
        compiler_params=pltpu.CompilerParams(
            dimension_semantics=("arbitrary",),
            vmem_limit_bytes=_VMEM_LIMIT),
    )(x_bsc, w_pad_bf16, b_pad_f32)
    return out[:, :n_classes]


# ---------------------------------------------------------------------------
# Deterministic parameter construction (synthetic, no checkpoint)
# ---------------------------------------------------------------------------
def make_bn(key, cout):
    k1, k2, k3, k4 = jax.random.split(key, 4)
    gamma = 1.0 + 0.1 * jax.random.normal(k1, (1, cout), jnp.float32)
    beta = 0.1 * jax.random.normal(k2, (1, cout), jnp.float32)
    mean = 0.1 * jax.random.normal(k3, (1, cout), jnp.float32)
    var = 1.0 + 0.1 * jax.random.uniform(k4, (1, cout), jnp.float32)
    scale = gamma / jnp.sqrt(var + 1e-5)
    bias = beta - mean * scale
    return scale, bias


def init_params(key, C_in, C, n_classes, stem_mult=4, cell_mult=4):
    ks = jax.random.split(key, 8)
    c_stem = stem_mult * C            # 4C
    c_red1 = 2 * cell_mult * C        # 8C   (DAG1 concat out / red-cell io)
    c_red2 = 4 * cell_mult * C        # 16C  (DAG2 concat out / red-cell io)
    c_head = 8 * cell_mult * C        # 32C  (DAG3 concat out)
    n_pad = max(128, ((n_classes + 127) // 128) * 128)
    p = {}
    # conv weights stored per-tap (9, Cin, Cout) and pre-cast to bf16 (MXU
    # native on v6e/v7x); BN affines / biases stay f32 (VPU math stays f32).
    p["stem_w"] = (0.1 * jax.random.normal(
        ks[0], (9, C_in, c_stem), jnp.float32)).astype(jnp.bfloat16)
    p["stem_scale"], p["stem_bias"] = make_bn(ks[1], c_stem)
    p["red1_w"] = (0.05 * jax.random.normal(
        ks[2], (9, c_red1, c_red1), jnp.float32)).astype(jnp.bfloat16)
    p["red1_scale"], p["red1_bias"] = make_bn(ks[3], c_red1)
    p["red2_w"] = (0.05 * jax.random.normal(
        ks[4], (9, c_red2, c_red2), jnp.float32)).astype(jnp.bfloat16)
    p["red2_scale"], p["red2_bias"] = make_bn(ks[5], c_red2)
    lw = 0.05 * jax.random.normal(ks[6], (c_head, n_classes), jnp.float32)
    lb = 0.1 * jax.random.normal(ks[7], (1, n_classes), jnp.float32)
    # pad the class dim to 128 lanes once so the head's output store is dense
    p["linear_w"] = jnp.zeros((c_head, n_pad), jnp.float32
                              ).at[:, :n_classes].set(lw).astype(jnp.bfloat16)
    p["linear_b"] = jnp.zeros((1, n_pad), jnp.float32
                              ).at[:, :n_classes].set(lb)
    return p


# ---------------------------------------------------------------------------
# Forward pass
# ---------------------------------------------------------------------------
def search_stage_forward(params, x_nchw, weights_DAG, weight_concat, *,
                         n_big_nodes=2, window=3, n_classes=10):
    x = jnp.transpose(x_nchw, (0, 2, 3, 1)).astype(jnp.float32)   # NCHW->NHWC
    # stem: Conv3x3(s=1,p=1) + BN
    s = conv3x3_bn_s1(x, params["stem_w"], params["stem_scale"],
                      params["stem_bias"], relu=False)
    # bigDAG1 -> reduction cell -> bigDAG2 -> reduction cell -> bigDAG3
    d1 = search_big_dag(s, weights_DAG[0 * n_big_nodes:1 * n_big_nodes],
                        weight_concat[0], n_big_nodes, window)
    r1 = conv3x3_bn_s2(d1, params["red1_w"], params["red1_scale"],
                       params["red1_bias"], relu=True)
    d2 = search_big_dag(r1, weights_DAG[1 * n_big_nodes:2 * n_big_nodes],
                        weight_concat[1], n_big_nodes, window)
    r2 = conv3x3_bn_s2(d2, params["red2_w"], params["red2_scale"],
                       params["red2_bias"], relu=True)
    d3 = search_big_dag(r2, weights_DAG[2 * n_big_nodes:3 * n_big_nodes],
                        weight_concat[2], n_big_nodes, window)
    # GAP + Linear(32*C, n_classes), fused
    B, H, W, Cf = d3.shape
    return gap_linear(d3.reshape(B, H * W, Cf),
                      params["linear_w"], params["linear_b"], n_classes)


if __name__ == "__main__":
    key = jax.random.PRNGKey(0)
    kx, kp, ka, kb = jax.random.split(key, 4)

    # Small CIFAR-like configuration consistent with the module's channel
    # arithmetic (linear head sees 32*C channels).
    B, C_in, HW = 2, 3, 32
    C, n_classes = 8, 10
    n_big_nodes, window = 2, 3

    x = jax.random.normal(kx, (B, C_in, HW, HW), jnp.float32)     # NCHW input
    params = init_params(kp, C_in, C, n_classes)

    # architecture weights: 3 DAGs * n_big_nodes edge rows (softmax-relaxed)
    # and per-DAG concat betas (softmax-relaxed).
    alphas = jax.random.normal(ka, (3 * n_big_nodes, window), jnp.float32)
    weights_DAG = jax.nn.softmax(alphas, axis=-1)
    betas = jax.random.normal(kb, (3, 2), jnp.float32)
    weight_concat = jax.nn.softmax(betas, axis=-1)

    fwd = jax.jit(functools.partial(search_stage_forward,
                                    n_big_nodes=n_big_nodes, window=window,
                                    n_classes=n_classes))
    logits = fwd(params, x, weights_DAG, weight_concat)
    jax.block_until_ready(logits)
    assert logits.shape == (B, n_classes)
    print("KERNEL_OK")
</pallas_src>

<mosaic_0001>
module attributes {stable_mosaic.version = 11 : i64} {
  func.func @_conv3x3_s1_kernel(%arg0: i32, %arg1: i32, %arg2: memref<1x34x34x3xf32, #tpu.memory_space<vmem>>, %arg3: memref<9x3x32xbf16, #tpu.memory_space<vmem>>, %arg4: memref<1x32xf32, #tpu.memory_space<vmem>>, %arg5: memref<1x32xf32, #tpu.memory_space<vmem>>, %arg6: memref<1x8x32x32xf32, #tpu.memory_space<vmem>>) attributes {dimension_semantics = [#tpu.dimension_semantics<parallel>, #tpu.dimension_semantics<parallel>], iteration_bounds = array<i64: 2, 4>, scalar_prefetch = 0 : i64, scratch_operands = 0 : i64, tpu.core_type = #tpu.core_type<tc>, window_params = [{transform_indices = @transform_0, window_bounds = array<i64: 1, 34, 34, 3>}, {pipeline_mode = #tpu.pipeline_mode<synchronous>, transform_indices = @transform_1, window_bounds = array<i64: 9, 3, 32>}, {pipeline_mode = #tpu.pipeline_mode<synchronous>, transform_indices = @transform_2, window_bounds = array<i64: 1, 32>}, {pipeline_mode = #tpu.pipeline_mode<synchronous>, transform_indices = @transform_3, window_bounds = array<i64: 1, 32>}, {transform_indices = @transform_4, window_bounds = array<i64: 1, 8, 32, 32>}]} {
    %c8_i32 = arith.constant 8 : i32
    %0 = arith.muli %arg1, %c8_i32 : i32
    %cst = arith.constant 0.000000e+00 : f32
    %1 = vector.broadcast %cst : f32 to vector<256x32xf32>
    %c0_i32 = arith.constant 0 : i32
    %2 = arith.addi %0, %c0_i32 : i32
    %c0 = arith.constant 0 : index
    %3 = arith.index_cast %2 : i32 to index
    %c0_0 = arith.constant 0 : index
    %c0_1 = arith.constant 0 : index
    %4 = vector.load %arg2[%c0, %3, %c0_0, %c0_1] : memref<1x34x34x3xf32, #tpu.memory_space<vmem>>, vector<1x8x32x3xf32>
    %5 = vector.shape_cast %4 : vector<1x8x32x3xf32> to vector<8x32x3xf32>
    %6 = vector.shape_cast %5 : vector<8x32x3xf32> to vector<256x3xf32>
    %7 = arith.truncf %6 : vector<256x3xf32> to vector<256x3xbf16>
    %c0_2 = arith.constant 0 : index
    %c0_3 = arith.constant 0 : index
    %c0_4 = arith.constant 0 : index
    %8 = vector.load %arg3[%c0_2, %c0_3, %c0_4] : memref<9x3x32xbf16, #tpu.memory_space<vmem>>, vector<1x3x32xbf16>
    %9 = vector.shape_cast %8 : vector<1x3x32xbf16> to vector<3x32xbf16>
    %cst_5 = arith.constant dense<0.000000e+00> : vector<256x32xf32>
    %10 = tpu.matmul %7, %9, %cst_5 {dimension_numbers = #tpu.dot_dimension_numbers<[1], [0], [0], [1], [0, 0, 1, 1], [], []>} : vector<256x3xbf16>, vector<3x32xbf16>, vector<256x32xf32> -> vector<256x32xf32>
    %11 = arith.addf %1, %10 : vector<256x32xf32>
    %c0_i32_6 = arith.constant 0 : i32
    %12 = arith.addi %0, %c0_i32_6 : i32
    %c0_7 = arith.constant 0 : index
    %13 = arith.index_cast %12 : i32 to index
    %c1 = arith.constant 1 : index
    %c0_8 = arith.constant 0 : index
    %14 = vector.load %arg2[%c0_7, %13, %c1, %c0_8] : memref<1x34x34x3xf32, #tpu.memory_space<vmem>>, vector<1x8x32x3xf32>
    %15 = vector.shape_cast %14 : vector<1x8x32x3xf32> to vector<8x32x3xf32>
    %16 = vector.shape_cast %15 : vector<8x32x3xf32> to vector<256x3xf32>
    %17 = arith.truncf %16 : vector<256x3xf32> to vector<256x3xbf16>
    %c1_9 = arith.constant 1 : index
    %c0_10 = arith.constant 0 : index
    %c0_11 = arith.constant 0 : index
    %18 = vector.load %arg3[%c1_9, %c0_10, %c0_11] : memref<9x3x32xbf16, #tpu.memory_space<vmem>>, vector<1x3x32xbf16>
    %19 = vector.shape_cast %18 : vector<1x3x32xbf16> to vector<3x32xbf16>
    %cst_12 = arith.constant dense<0.000000e+00> : vector<256x32xf32>
    %20 = tpu.matmul %17, %19, %cst_12 {dimension_numbers = #tpu.dot_dimension_numbers<[1], [0], [0], [1], [0, 0, 1, 1], [], []>} : vector<256x3xbf16>, vector<3x32xbf16>, vector<256x32xf32> -> vector<256x32xf32>
    %21 = arith.addf %11, %20 : vector<256x32xf32>
    %c0_i32_13 = arith.constant 0 : i32
    %22 = arith.addi %0, %c0_i32_13 : i32
    %c0_14 = arith.constant 0 : index
    %23 = arith.index_cast %22 : i32 to index
    %c2 = arith.constant 2 : index
    %c0_15 = arith.constant 0 : index
    %24 = vector.load %arg2[%c0_14, %23, %c2, %c0_15] : memref<1x34x34x3xf32, #tpu.memory_space<vmem>>, vector<1x8x32x3xf32>
    %25 = vector.shape_cast %24 : vector<1x8x32x3xf32> to vector<8x32x3xf32>
    %26 = vector.shape_cast %25 : vector<8x32x3xf32> to vector<256x3xf32>
    %27 = arith.truncf %26 : vector<256x3xf32> to vector<256x3xbf16>
    %c2_16 = arith.constant 2 : index
    %c0_17 = arith.constant 0 : index
    %c0_18 = arith.constant 0 : index
    %28 = vector.load %arg3[%c2_16, %c0_17, %c0_18] : memref<9x3x32xbf16, #tpu.memory_space<vmem>>, vector<1x3x32xbf16>
    %29 = vector.shape_cast %28 : vector<1x3x32xbf16> to vector<3x32xbf16>
    %cst_19 = arith.constant dense<0.000000e+00> : vector<256x32xf32>
    %30 = tpu.matmul %27, %29, %cst_19 {dimension_numbers = #tpu.dot_dimension_numbers<[1], [0], [0], [1], [0, 0, 1, 1], [], []>} : vector<256x3xbf16>, vector<3x32xbf16>, vector<256x32xf32> -> vector<256x32xf32>
    %31 = arith.addf %21, %30 : vector<256x32xf32>
    %c1_i32 = arith.constant 1 : i32
    %32 = arith.addi %0, %c1_i32 : i32
    %c0_20 = arith.constant 0 : index
    %33 = arith.index_cast %32 : i32 to index
    %c0_21 = arith.constant 0 : index
    %c0_22 = arith.constant 0 : index
    %34 = vector.load %arg2[%c0_20, %33, %c0_21, %c0_22] : memref<1x34x34x3xf32, #tpu.memory_space<vmem>>, vector<1x8x32x3xf32>
    %35 = vector.shape_cast %34 : vector<1x8x32x3xf32> to vector<8x32x3xf32>
    %36 = vector.shape_cast %35 : vector<8x32x3xf32> to vector<256x3xf32>
    %37 = arith.truncf %36 : vector<256x3xf32> to vector<256x3xbf16>
    %c3 = arith.constant 3 : index
    %c0_23 = arith.constant 0 : index
    %c0_24 = arith.constant 0 : index
    %38 = vector.load %arg3[%c3, %c0_23, %c0_24] : memref<9x3x32xbf16, #tpu.memory_space<vmem>>, vector<1x3x32xbf16>
    %39 = vector.shape_cast %38 : vector<1x3x32xbf16> to vector<3x32xbf16>
    %cst_25 = arith.constant dense<0.000000e+00> : vector<256x32xf32>
    %40 = tpu.matmul %37, %39, %cst_25 {dimension_numbers = #tpu.dot_dimension_numbers<[1], [0], [0], [1], [0, 0, 1, 1], [], []>} : vector<256x3xbf16>, vector<3x32xbf16>, vector<256x32xf32> -> vector<256x32xf32>
    %41 = arith.addf %31, %40 : vector<256x32xf32>
    %c1_i32_26 = arith.constant 1 : i32
    %42 = arith.addi %0, %c1_i32_26 : i32
    %c0_27 = arith.constant 0 : index
    %43 = arith.index_cast %42 : i32 to index
    %c1_28 = arith.constant 1 : index
    %c0_29 = arith.constant 0 : index
    %44 = vector.load %arg2[%c0_27, %43, %c1_28, %c0_29] : memref<1x34x34x3xf32, #tpu.memory_space<vmem>>, vector<1x8x32x3xf32>
    %45 = vector.shape_cast %44 : vector<1x8x32x3xf32> to vector<8x32x3xf32>
    %46 = vector.shape_cast %45 : vector<8x32x3xf32> to vector<256x3xf32>
    %47 = arith.truncf %46 : vector<256x3xf32> to vector<256x3xbf16>
    %c4 = arith.constant 4 : index
    %c0_30 = arith.constant 0 : index
    %c0_31 = arith.constant 0 : index
    %48 = vector.load %arg3[%c4, %c0_30, %c0_31] : memref<9x3x32xbf16, #tpu.memory_space<vmem>>, vector<1x3x32xbf16>
    %49 = vector.shape_cast %48 : vector<1x3x32xbf16> to vector<3x32xbf16>
    %cst_32 = arith.constant dense<0.000000e+00> : vector<256x32xf32>
    %50 = tpu.matmul %47, %49, %cst_32 {dimension_numbers = #tpu.dot_dimension_numbers<[1], [0], [0], [1], [0, 0, 1, 1], [], []>} : vector<256x3xbf16>, vector<3x32xbf16>, vector<256x32xf32> -> vector<256x32xf32>
    %51 = arith.addf %41, %50 : vector<256x32xf32>
    %c1_i32_33 = arith.constant 1 : i32
    %52 = arith.addi %0, %c1_i32_33 : i32
    %c0_34 = arith.constant 0 : index
    %53 = arith.index_cast %52 : i32 to index
    %c2_35 = arith.constant 2 : index
    %c0_36 = arith.constant 0 : index
    %54 = vector.load %arg2[%c0_34, %53, %c2_35, %c0_36] : memref<1x34x34x3xf32, #tpu.memory_space<vmem>>, vector<1x8x32x3xf32>
    %55 = vector.shape_cast %54 : vector<1x8x32x3xf32> to vector<8x32x3xf32>
    %56 = vector.shape_cast %55 : vector<8x32x3xf32> to vector<256x3xf32>
    %57 = arith.truncf %56 : vector<256x3xf32> to vector<256x3xbf16>
    %c5 = arith.constant 5 : index
    %c0_37 = arith.constant 0 : index
    %c0_38 = arith.constant 0 : index
    %58 = vector.load %arg3[%c5, %c0_37, %c0_38] : memref<9x3x32xbf16, #tpu.memory_space<vmem>>, vector<1x3x32xbf16>
    %59 = vector.shape_cast %58 : vector<1x3x32xbf16> to vector<3x32xbf16>
    %cst_39 = arith.constant dense<0.000000e+00> : vector<256x32xf32>
    %60 = tpu.matmul %57, %59, %cst_39 {dimension_numbers = #tpu.dot_dimension_numbers<[1], [0], [0], [1], [0, 0, 1, 1], [], []>} : vector<256x3xbf16>, vector<3x32xbf16>, vector<256x32xf32> -> vector<256x32xf32>
    %61 = arith.addf %51, %60 : vector<256x32xf32>
    %c2_i32 = arith.constant 2 : i32
    %62 = arith.addi %0, %c2_i32 : i32
    %c0_40 = arith.constant 0 : index
    %63 = arith.index_cast %62 : i32 to index
    %c0_41 = arith.constant 0 : index
    %c0_42 = arith.constant 0 : index
    %64 = vector.load %arg2[%c0_40, %63, %c0_41, %c0_42] : memref<1x34x34x3xf32, #tpu.memory_space<vmem>>, vector<1x8x32x3xf32>
    %65 = vector.shape_cast %64 : vector<1x8x32x3xf32> to vector<8x32x3xf32>
    %66 = vector.shape_cast %65 : vector<8x32x3xf32> to vector<256x3xf32>
    %67 = arith.truncf %66 : vector<256x3xf32> to vector<256x3xbf16>
    %c6 = arith.constant 6 : index
    %c0_43 = arith.constant 0 : index
    %c0_44 = arith.constant 0 : index
    %68 = vector.load %arg3[%c6, %c0_43, %c0_44] : memref<9x3x32xbf16, #tpu.memory_space<vmem>>, vector<1x3x32xbf16>
    %69 = vector.shape_cast %68 : vector<1x3x32xbf16> to vector<3x32xbf16>
    %cst_45 = arith.constant dense<0.000000e+00> : vector<256x32xf32>
    %70 = tpu.matmul %67, %69, %cst_45 {dimension_numbers = #tpu.dot_dimension_numbers<[1], [0], [0], [1], [0, 0, 1, 1], [], []>} : vector<256x3xbf16>, vector<3x32xbf16>, vector<256x32xf32> -> vector<256x32xf32>
    %71 = arith.addf %61, %70 : vector<256x32xf32>
    %c2_i32_46 = arith.constant 2 : i32
    %72 = arith.addi %0, %c2_i32_46 : i32
    %c0_47 = arith.constant 0 : index
    %73 = arith.index_cast %72 : i32 to index
    %c1_48 = arith.constant 1 : index
    %c0_49 = arith.constant 0 : index
    %74 = vector.load %arg2[%c0_47, %73, %c1_48, %c0_49] : memref<1x34x34x3xf32, #tpu.memory_space<vmem>>, vector<1x8x32x3xf32>
    %75 = vector.shape_cast %74 : vector<1x8x32x3xf32> to vector<8x32x3xf32>
    %76 = vector.shape_cast %75 : vector<8x32x3xf32> to vector<256x3xf32>
    %77 = arith.truncf %76 : vector<256x3xf32> to vector<256x3xbf16>
    %c7 = arith.constant 7 : index
    %c0_50 = arith.constant 0 : index
    %c0_51 = arith.constant 0 : index
    %78 = vector.load %arg3[%c7, %c0_50, %c0_51] : memref<9x3x32xbf16, #tpu.memory_space<vmem>>, vector<1x3x32xbf16>
    %79 = vector.shape_cast %78 : vector<1x3x32xbf16> to vector<3x32xbf16>
    %cst_52 = arith.constant dense<0.000000e+00> : vector<256x32xf32>
    %80 = tpu.matmul %77, %79, %cst_52 {dimension_numbers = #tpu.dot_dimension_numbers<[1], [0], [0], [1], [0, 0, 1, 1], [], []>} : vector<256x3xbf16>, vector<3x32xbf16>, vector<256x32xf32> -> vector<256x32xf32>
    %81 = arith.addf %71, %80 : vector<256x32xf32>
    %c2_i32_53 = arith.constant 2 : i32
    %82 = arith.addi %0, %c2_i32_53 : i32
    %c0_54 = arith.constant 0 : index
    %83 = arith.index_cast %82 : i32 to index
    %c2_55 = arith.constant 2 : index
    %c0_56 = arith.constant 0 : index
    %84 = vector.load %arg2[%c0_54, %83, %c2_55, %c0_56] : memref<1x34x34x3xf32, #tpu.memory_space<vmem>>, vector<1x8x32x3xf32>
    %85 = vector.shape_cast %84 : vector<1x8x32x3xf32> to vector<8x32x3xf32>
    %86 = vector.shape_cast %85 : vector<8x32x3xf32> to vector<256x3xf32>
    %87 = arith.truncf %86 : vector<256x3xf32> to vector<256x3xbf16>
    %c8 = arith.constant 8 : index
    %c0_57 = arith.constant 0 : index
    %c0_58 = arith.constant 0 : index
    %88 = vector.load %arg3[%c8, %c0_57, %c0_58] : memref<9x3x32xbf16, #tpu.memory_space<vmem>>, vector<1x3x32xbf16>
    %89 = vector.shape_cast %88 : vector<1x3x32xbf16> to vector<3x32xbf16>
    %cst_59 = arith.constant dense<0.000000e+00> : vector<256x32xf32>
    %90 = tpu.matmul %87, %89, %cst_59 {dimension_numbers = #tpu.dot_dimension_numbers<[1], [0], [0], [1], [0, 0, 1, 1], [], []>} : vector<256x3xbf16>, vector<3x32xbf16>, vector<256x32xf32> -> vector<256x32xf32>
    %91 = arith.addf %81, %90 : vector<256x32xf32>
    %c0_60 = arith.constant 0 : index
    %c0_61 = arith.constant 0 : index
    %92 = vector.load %arg4[%c0_60, %c0_61] : memref<1x32xf32, #tpu.memory_space<vmem>>, vector<1x32xf32>
    %93 = vector.broadcast %92 : vector<1x32xf32> to vector<256x32xf32>
    %94 = arith.mulf %91, %93 : vector<256x32xf32>
    %c0_62 = arith.constant 0 : index
    %c0_63 = arith.constant 0 : index
    %95 = vector.load %arg5[%c0_62, %c0_63] : memref<1x32xf32, #tpu.memory_space<vmem>>, vector<1x32xf32>
    %96 = vector.broadcast %95 : vector<1x32xf32> to vector<256x32xf32>
    %97 = arith.addf %94, %96 : vector<256x32xf32>
    %98 = vector.shape_cast %97 : vector<256x32xf32> to vector<1x8x32x32xf32>
    %c0_64 = arith.constant 0 : index
    %c0_65 = arith.constant 0 : index
    %c0_66 = arith.constant 0 : index
    %c0_67 = arith.constant 0 : index
    %99 = vector.load %arg6[%c0_64, %c0_65, %c0_66, %c0_67] : memref<1x8x32x32xf32, #tpu.memory_space<vmem>>, vector<1x8x32x32xf32>
    tpu.vector_store %arg6[%c0_64, %c0_65, %c0_66, %c0_67], %98 {strides = array<i32>} : memref<1x8x32x32xf32, #tpu.memory_space<vmem>>, vector<1x8x32x32xf32>,
    return
  }
  func.func @transform_0(%arg0: i32, %arg1: i32) -> (i32, i32, i32, i32) {
    %c0_i32 = arith.constant 0 : i32
    %c0_i32_0 = arith.constant 0 : i32
    %c0_i32_1 = arith.constant 0 : i32
    %c0_i32_2 = arith.constant 0 : i32
    return %arg0, %c0_i32, %c0_i32_0, %c0_i32_1 : i32, i32, i32, i32
  }
  func.func @transform_1(%arg0: i32, %arg1: i32) -> (i32, i32, i32) {
    %c0_i32 = arith.constant 0 : i32
    %c0_i32_0 = arith.constant 0 : i32
    %c0_i32_1 = arith.constant 0 : i32
    %c0_i32_2 = arith.constant 0 : i32
    return %c0_i32, %c0_i32_0, %c0_i32_1 : i32, i32, i32
  }
  func.func @transform_2(%arg0: i32, %arg1: i32) -> (i32, i32) {
    %c0_i32 = arith.constant 0 : i32
    %c0_i32_0 = arith.constant 0 : i32
    %c0_i32_1 = arith.constant 0 : i32
    return %c0_i32, %c0_i32_0 : i32, i32
  }
  func.func @transform_3(%arg0: i32, %arg1: i32) -> (i32, i32) {
    %c0_i32 = arith.constant 0 : i32
    %c0_i32_0 = arith.constant 0 : i32
    %c0_i32_1 = arith.constant 0 : i32
    return %c0_i32, %c0_i32_0 : i32, i32
  }
  func.func @transform_4(%arg0: i32, %arg1: i32) -> (i32, i32, i32, i32) {
    %c0_i32 = arith.constant 0 : i32
    %c0_i32_0 = arith.constant 0 : i32
    %c0_i32_1 = arith.constant 0 : i32
    return %arg0, %arg1, %c0_i32, %c0_i32_0 : i32, i32, i32, i32
  }
}

module attributes {stable_mosaic.version = 11 : i64} {
  func.func @_dag_kernel(%arg0: i32, %arg1: memref<2x3xf32, #tpu.memory_space<smem>>, %arg2: memref<2xf32, #tpu.memory_space<smem>>, %arg3: memref<256x32xf32, #tpu.memory_space<vmem>>, %arg4: memref<256x64xf32, #tpu.memory_space<vmem>>) attributes {dimension_semantics = [#tpu.dimension_semantics<parallel>], iteration_bounds = array<i64: 8>, scalar_prefetch = 0 : i64, scratch_operands = 0 : i64, tpu.core_type = #tpu.core_type<tc>, window_params = [{transform_indices = @transform_0, window_bounds = array<i64: 2, 3>}, {transform_indices = @transform_1, window_bounds = array<i64: 2>}, {transform_indices = @transform_2, window_bounds = array<i64: 256, 32>}, {transform_indices = @transform_3, window_bounds = array<i64: 256, 64>}]} {
    %c0 = arith.constant 0 : index
    %c0_0 = arith.constant 0 : index
    %0 = vector.load %arg3[%c0, %c0_0] : memref<256x32xf32, #tpu.memory_space<vmem>>, vector<256x32xf32>
    %c0_1 = arith.constant 0 : index
    %c0_2 = arith.constant 0 : index
    %1 = memref.load %arg1[%c0_1, %c0_2] : memref<2x3xf32, #tpu.memory_space<smem>>
    %2 = vector.broadcast %1 : f32 to vector<256x32xf32>
    %3 = arith.mulf %2, %0 : vector<256x32xf32>
    %c0_3 = arith.constant 0 : index
    %c1 = arith.constant 1 : index
    %4 = memref.load %arg1[%c0_3, %c1] : memref<2x3xf32, #tpu.memory_space<smem>>
    %5 = vector.broadcast %4 : f32 to vector<256x32xf32>
    %6 = arith.mulf %5, %0 : vector<256x32xf32>
    %7 = arith.addf %3, %6 : vector<256x32xf32>
    %c1_4 = arith.constant 1 : index
    %c0_5 = arith.constant 0 : index
    %8 = memref.load %arg1[%c1_4, %c0_5] : memref<2x3xf32, #tpu.memory_space<smem>>
    %9 = vector.broadcast %8 : f32 to vector<256x32xf32>
    %10 = arith.mulf %9, %0 : vector<256x32xf32>
    %c1_6 = arith.constant 1 : index
    %c1_7 = arith.constant 1 : index
    %11 = memref.load %arg1[%c1_6, %c1_7] : memref<2x3xf32, #tpu.memory_space<smem>>
    %12 = vector.broadcast %11 : f32 to vector<256x32xf32>
    %13 = arith.mulf %12, %0 : vector<256x32xf32>
    %14 = arith.addf %10, %13 : vector<256x32xf32>
    %c1_8 = arith.constant 1 : index
    %c2 = arith.constant 2 : index
    %15 = memref.load %arg1[%c1_8, %c2] : memref<2x3xf32, #tpu.memory_space<smem>>
    %16 = vector.broadcast %15 : f32 to vector<256x32xf32>
    %17 = arith.mulf %16, %7 : vector<256x32xf32>
    %18 = arith.addf %14, %17 : vector<256x32xf32>
    %c0_9 = arith.constant 0 : index
    %19 = memref.load %arg2[%c0_9] : memref<2xf32, #tpu.memory_space<smem>>
    %20 = vector.broadcast %19 : f32 to vector<256x32xf32>
    %21 = arith.mulf %20, %7 : vector<256x32xf32>
    %c1_10 = arith.constant 1 : index
    %22 = memref.load %arg2[%c1_10] : memref<2xf32, #tpu.memory_space<smem>>
    %23 = vector.broadcast %22 : f32 to vector<256x32xf32>
    %24 = arith.mulf %23, %18 : vector<256x32xf32>
    %25 = tpu.concatenate %21, %24 in 1 : vector<256x32xf32>, vector<256x32xf32> -> vector<256x64xf32>
    %c0_11 = arith.constant 0 : index
    %c0_12 = arith.constant 0 : index
    %26 = vector.load %arg4[%c0_11, %c0_12] : memref<256x64xf32, #tpu.memory_space<vmem>>, vector<256x64xf32>
    tpu.vector_store %arg4[%c0_11, %c0_12], %25 {strides = array<i32>} : memref<256x64xf32, #tpu.memory_space<vmem>>, vector<256x64xf32>,
    return
  }
  func.func @transform_0(%arg0: i32) -> (i32, i32) {
    %c0_i32 = arith.constant 0 : i32
    %c0_i32_0 = arith.constant 0 : i32
    %c0_i32_1 = arith.constant 0 : i32
    return %c0_i32, %c0_i32_0 : i32, i32
  }
  func.func @transform_1(%arg0: i32) -> i32 {
    %c0_i32 = arith.constant 0 : i32
    %c0_i32_0 = arith.constant 0 : i32
    return %c0_i32 : i32
  }
  func.func @transform_2(%arg0: i32) -> (i32, i32) {
    %c0_i32 = arith.constant 0 : i32
    %c0_i32_0 = arith.constant 0 : i32
    return %arg0, %c0_i32 : i32, i32
  }
  func.func @transform_3(%arg0: i32) -> (i32, i32) {
    %c0_i32 = arith.constant 0 : i32
    %c0_i32_0 = arith.constant 0 : i32
    return %arg0, %c0_i32 : i32, i32
  }
}

module attributes {stable_mosaic.version = 11 : i64} {
  func.func @_conv3x3_s2_kernel(%arg0: i32, %arg1: i32, %arg2: memref<1x4x17x17x64xf32, #tpu.memory_space<vmem>>, %arg3: memref<9x64x64xbf16, #tpu.memory_space<vmem>>, %arg4: memref<1x64xf32, #tpu.memory_space<vmem>>, %arg5: memref<1x64xf32, #tpu.memory_space<vmem>>, %arg6: memref<1x8x16x64xf32, #tpu.memory_space<vmem>>) attributes {dimension_semantics = [#tpu.dimension_semantics<parallel>, #tpu.dimension_semantics<parallel>], iteration_bounds = array<i64: 2, 2>, scalar_prefetch = 0 : i64, scratch_operands = 0 : i64, tpu.core_type = #tpu.core_type<tc>, window_params = [{transform_indices = @transform_0, window_bounds = array<i64: 1, 4, 17, 17, 64>}, {pipeline_mode = #tpu.pipeline_mode<synchronous>, transform_indices = @transform_1, window_bounds = array<i64: 9, 64, 64>}, {pipeline_mode = #tpu.pipeline_mode<synchronous>, transform_indices = @transform_2, window_bounds = array<i64: 1, 64>}, {pipeline_mode = #tpu.pipeline_mode<synchronous>, transform_indices = @transform_3, window_bounds = array<i64: 1, 64>}, {transform_indices = @transform_4, window_bounds = array<i64: 1, 8, 16, 64>}]} {
    %c8_i32 = arith.constant 8 : i32
    %0 = arith.muli %arg1, %c8_i32 : i32
    %cst = arith.constant 0.000000e+00 : f32
    %1 = vector.broadcast %cst : f32 to vector<128x64xf32>
    %c0_i32 = arith.constant 0 : i32
    %2 = arith.addi %0, %c0_i32 : i32
    %c0 = arith.constant 0 : index
    %c0_0 = arith.constant 0 : index
    %3 = arith.index_cast %2 : i32 to index
    %c0_1 = arith.constant 0 : index
    %c0_2 = arith.constant 0 : index
    %4 = vector.load %arg2[%c0, %c0_0, %3, %c0_1, %c0_2] : memref<1x4x17x17x64xf32, #tpu.memory_space<vmem>>, vector<1x1x8x16x64xf32>
    %5 = vector.shape_cast %4 : vector<1x1x8x16x64xf32> to vector<8x16x64xf32>
    %6 = vector.shape_cast %5 : vector<8x16x64xf32> to vector<128x64xf32>
    %7 = arith.truncf %6 : vector<128x64xf32> to vector<128x64xbf16>
    %c0_3 = arith.constant 0 : index
    %c0_4 = arith.constant 0 : index
    %c0_5 = arith.constant 0 : index
    %8 = vector.load %arg3[%c0_3, %c0_4, %c0_5] : memref<9x64x64xbf16, #tpu.memory_space<vmem>>, vector<1x64x64xbf16>
    %9 = vector.shape_cast %8 : vector<1x64x64xbf16> to vector<64x64xbf16>
    %cst_6 = arith.constant dense<0.000000e+00> : vector<128x64xf32>
    %10 = tpu.matmul %7, %9, %cst_6 {dimension_numbers = #tpu.dot_dimension_numbers<[1], [0], [0], [1], [0, 0, 1, 1], [], []>} : vector<128x64xbf16>, vector<64x64xbf16>, vector<128x64xf32> -> vector<128x64xf32>
    %11 = arith.addf %1, %10 : vector<128x64xf32>
    %c0_i32_7 = arith.constant 0 : i32
    %12 = arith.addi %0, %c0_i32_7 : i32
    %c0_8 = arith.constant 0 : index
    %c1 = arith.constant 1 : index
    %13 = arith.index_cast %12 : i32 to index
    %c0_9 = arith.constant 0 : index
    %c0_10 = arith.constant 0 : index
    %14 = vector.load %arg2[%c0_8, %c1, %13, %c0_9, %c0_10] : memref<1x4x17x17x64xf32, #tpu.memory_space<vmem>>, vector<1x1x8x16x64xf32>
    %15 = vector.shape_cast %14 : vector<1x1x8x16x64xf32> to vector<8x16x64xf32>
    %16 = vector.shape_cast %15 : vector<8x16x64xf32> to vector<128x64xf32>
    %17 = arith.truncf %16 : vector<128x64xf32> to vector<128x64xbf16>
    %c1_11 = arith.constant 1 : index
    %c0_12 = arith.constant 0 : index
    %c0_13 = arith.constant 0 : index
    %18 = vector.load %arg3[%c1_11, %c0_12, %c0_13] : memref<9x64x64xbf16, #tpu.memory_space<vmem>>, vector<1x64x64xbf16>
    %19 = vector.shape_cast %18 : vector<1x64x64xbf16> to vector<64x64xbf16>
    %cst_14 = arith.constant dense<0.000000e+00> : vector<128x64xf32>
    %20 = tpu.matmul %17, %19, %cst_14 {dimension_numbers = #tpu.dot_dimension_numbers<[1], [0], [0], [1], [0, 0, 1, 1], [], []>} : vector<128x64xbf16>, vector<64x64xbf16>, vector<128x64xf32> -> vector<128x64xf32>
    %21 = arith.addf %11, %20 : vector<128x64xf32>
    %c0_i32_15 = arith.constant 0 : i32
    %22 = arith.addi %0, %c0_i32_15 : i32
    %c0_16 = arith.constant 0 : index
    %c0_17 = arith.constant 0 : index
    %23 = arith.index_cast %22 : i32 to index
    %c1_18 = arith.constant 1 : index
    %c0_19 = arith.constant 0 : index
    %24 = vector.load %arg2[%c0_16, %c0_17, %23, %c1_18, %c0_19] : memref<1x4x17x17x64xf32, #tpu.memory_space<vmem>>, vector<1x1x8x16x64xf32>
    %25 = vector.shape_cast %24 : vector<1x1x8x16x64xf32> to vector<8x16x64xf32>
    %26 = vector.shape_cast %25 : vector<8x16x64xf32> to vector<128x64xf32>
    %27 = arith.truncf %26 : vector<128x64xf32> to vector<128x64xbf16>
    %c2 = arith.constant 2 : index
    %c0_20 = arith.constant 0 : index
    %c0_21 = arith.constant 0 : index
    %28 = vector.load %arg3[%c2, %c0_20, %c0_21] : memref<9x64x64xbf16, #tpu.memory_space<vmem>>, vector<1x64x64xbf16>
    %29 = vector.shape_cast %28 : vector<1x64x64xbf16> to vector<64x64xbf16>
    %cst_22 = arith.constant dense<0.000000e+00> : vector<128x64xf32>
    %30 = tpu.matmul %27, %29, %cst_22 {dimension_numbers = #tpu.dot_dimension_numbers<[1], [0], [0], [1], [0, 0, 1, 1], [], []>} : vector<128x64xbf16>, vector<64x64xbf16>, vector<128x64xf32> -> vector<128x64xf32>
    %31 = arith.addf %21, %30 : vector<128x64xf32>
    %c0_i32_23 = arith.constant 0 : i32
    %32 = arith.addi %0, %c0_i32_23 : i32
    %c0_24 = arith.constant 0 : index
    %c2_25 = arith.constant 2 : index
    %33 = arith.index_cast %32 : i32 to index
    %c0_26 = arith.constant 0 : index
    %c0_27 = arith.constant 0 : index
    %34 = vector.load %arg2[%c0_24, %c2_25, %33, %c0_26, %c0_27] : memref<1x4x17x17x64xf32, #tpu.memory_space<vmem>>, vector<1x1x8x16x64xf32>
    %35 = vector.shape_cast %34 : vector<1x1x8x16x64xf32> to vector<8x16x64xf32>
    %36 = vector.shape_cast %35 : vector<8x16x64xf32> to vector<128x64xf32>
    %37 = arith.truncf %36 : vector<128x64xf32> to vector<128x64xbf16>
    %c3 = arith.constant 3 : index
    %c0_28 = arith.constant 0 : index
    %c0_29 = arith.constant 0 : index
    %38 = vector.load %arg3[%c3, %c0_28, %c0_29] : memref<9x64x64xbf16, #tpu.memory_space<vmem>>, vector<1x64x64xbf16>
    %39 = vector.shape_cast %38 : vector<1x64x64xbf16> to vector<64x64xbf16>
    %cst_30 = arith.constant dense<0.000000e+00> : vector<128x64xf32>
    %40 = tpu.matmul %37, %39, %cst_30 {dimension_numbers = #tpu.dot_dimension_numbers<[1], [0], [0], [1], [0, 0, 1, 1], [], []>} : vector<128x64xbf16>, vector<64x64xbf16>, vector<128x64xf32> -> vector<128x64xf32>
    %41 = arith.addf %31, %40 : vector<128x64xf32>
    %c0_i32_31 = arith.constant 0 : i32
    %42 = arith.addi %0, %c0_i32_31 : i32
    %c0_32 = arith.constant 0 : index
    %c3_33 = arith.constant 3 : index
    %43 = arith.index_cast %42 : i32 to index
    %c0_34 = arith.constant 0 : index
    %c0_35 = arith.constant 0 : index
    %44 = vector.load %arg2[%c0_32, %c3_33, %43, %c0_34, %c0_35] : memref<1x4x17x17x64xf32, #tpu.memory_space<vmem>>, vector<1x1x8x16x64xf32>
    %45 = vector.shape_cast %44 : vector<1x1x8x16x64xf32> to vector<8x16x64xf32>
    %46 = vector.shape_cast %45 : vector<8x16x64xf32> to vector<128x64xf32>
    %47 = arith.truncf %46 : vector<128x64xf32> to vector<128x64xbf16>
    %c4 = arith.constant 4 : index
    %c0_36 = arith.constant 0 : index
    %c0_37 = arith.constant 0 : index
    %48 = vector.load %arg3[%c4, %c0_36, %c0_37] : memref<9x64x64xbf16, #tpu.memory_space<vmem>>, vector<1x64x64xbf16>
    %49 = vector.shape_cast %48 : vector<1x64x64xbf16> to vector<64x64xbf16>
    %cst_38 = arith.constant dense<0.000000e+00> : vector<128x64xf32>
    %50 = tpu.matmul %47, %49, %cst_38 {dimension_numbers = #tpu.dot_dimension_numbers<[1], [0], [0], [1], [0, 0, 1, 1], [], []>} : vector<128x64xbf16>, vector<64x64xbf16>, vector<128x64xf32> -> vector<128x64xf32>
    %51 = arith.addf %41, %50 : vector<128x64xf32>
    %c0_i32_39 = arith.constant 0 : i32
    %52 = arith.addi %0, %c0_i32_39 : i32
    %c0_40 = arith.constant 0 : index
    %c2_41 = arith.constant 2 : index
    %53 = arith.index_cast %52 : i32 to index
    %c1_42 = arith.constant 1 : index
    %c0_43 = arith.constant 0 : index
    %54 = vector.load %arg2[%c0_40, %c2_41, %53, %c1_42, %c0_43] : memref<1x4x17x17x64xf32, #tpu.memory_space<vmem>>, vector<1x1x8x16x64xf32>
    %55 = vector.shape_cast %54 : vector<1x1x8x16x64xf32> to vector<8x16x64xf32>
    %56 = vector.shape_cast %55 : vector<8x16x64xf32> to vector<128x64xf32>
    %57 = arith.truncf %56 : vector<128x64xf32> to vector<128x64xbf16>
    %c5 = arith.constant 5 : index
    %c0_44 = arith.constant 0 : index
    %c0_45 = arith.constant 0 : index
    %58 = vector.load %arg3[%c5, %c0_44, %c0_45] : memref<9x64x64xbf16, #tpu.memory_space<vmem>>, vector<1x64x64xbf16>
    %59 = vector.shape_cast %58 : vector<1x64x64xbf16> to vector<64x64xbf16>
    %cst_46 = arith.constant dense<0.000000e+00> : vector<128x64xf32>
    %60 = tpu.matmul %57, %59, %cst_46 {dimension_numbers = #tpu.dot_dimension_numbers<[1], [0], [0], [1], [0, 0, 1, 1], [], []>} : vector<128x64xbf16>, vector<64x64xbf16>, vector<128x64xf32> -> vector<128x64xf32>
    %61 = arith.addf %51, %60 : vector<128x64xf32>
    %c1_i32 = arith.constant 1 : i32
    %62 = arith.addi %0, %c1_i32 : i32
    %c0_47 = arith.constant 0 : index
    %c0_48 = arith.constant 0 : index
    %63 = arith.index_cast %62 : i32 to index
    %c0_49 = arith.constant 0 : index
    %c0_50 = arith.constant 0 : index
    %64 = vector.load %arg2[%c0_47, %c0_48, %63, %c0_49, %c0_50] : memref<1x4x17x17x64xf32, #tpu.memory_space<vmem>>, vector<1x1x8x16x64xf32>
    %65 = vector.shape_cast %64 : vector<1x1x8x16x64xf32> to vector<8x16x64xf32>
    %66 = vector.shape_cast %65 : vector<8x16x64xf32> to vector<128x64xf32>
    %67 = arith.truncf %66 : vector<128x64xf32> to vector<128x64xbf16>
    %c6 = arith.constant 6 : index
    %c0_51 = arith.constant 0 : index
    %c0_52 = arith.constant 0 : index
    %68 = vector.load %arg3[%c6, %c0_51, %c0_52] : memref<9x64x64xbf16, #tpu.memory_space<vmem>>, vector<1x64x64xbf16>
    %69 = vector.shape_cast %68 : vector<1x64x64xbf16> to vector<64x64xbf16>
    %cst_53 = arith.constant dense<0.000000e+00> : vector<128x64xf32>
    %70 = tpu.matmul %67, %69, %cst_53 {dimension_numbers = #tpu.dot_dimension_numbers<[1], [0], [0], [1], [0, 0, 1, 1], [], []>} : vector<128x64xbf16>, vector<64x64xbf16>, vector<128x64xf32> -> vector<128x64xf32>
    %71 = arith.addf %61, %70 : vector<128x64xf32>
    %c1_i32_54 = arith.constant 1 : i32
    %72 = arith.addi %0, %c1_i32_54 : i32
    %c0_55 = arith.constant 0 : index
    %c1_56 = arith.constant 1 : index
    %73 = arith.index_cast %72 : i32 to index
    %c0_57 = arith.constant 0 : index
    %c0_58 = arith.constant 0 : index
    %74 = vector.load %arg2[%c0_55, %c1_56, %73, %c0_57, %c0_58] : memref<1x4x17x17x64xf32, #tpu.memory_space<vmem>>, vector<1x1x8x16x64xf32>
    %75 = vector.shape_cast %74 : vector<1x1x8x16x64xf32> to vector<8x16x64xf32>
    %76 = vector.shape_cast %75 : vector<8x16x64xf32> to vector<128x64xf32>
    %77 = arith.truncf %76 : vector<128x64xf32> to vector<128x64xbf16>
    %c7 = arith.constant 7 : index
    %c0_59 = arith.constant 0 : index
    %c0_60 = arith.constant 0 : index
    %78 = vector.load %arg3[%c7, %c0_59, %c0_60] : memref<9x64x64xbf16, #tpu.memory_space<vmem>>, vector<1x64x64xbf16>
    %79 = vector.shape_cast %78 : vector<1x64x64xbf16> to vector<64x64xbf16>
    %cst_61 = arith.constant dense<0.000000e+00> : vector<128x64xf32>
    %80 = tpu.matmul %77, %79, %cst_61 {dimension_numbers = #tpu.dot_dimension_numbers<[1], [0], [0], [1], [0, 0, 1, 1], [], []>} : vector<128x64xbf16>, vector<64x64xbf16>, vector<128x64xf32> -> vector<128x64xf32>
    %81 = arith.addf %71, %80 : vector<128x64xf32>
    %c1_i32_62 = arith.constant 1 : i32
    %82 = arith.addi %0, %c1_i32_62 : i32
    %c0_63 = arith.constant 0 : index
    %c0_64 = arith.constant 0 : index
    %83 = arith.index_cast %82 : i32 to index
    %c1_65 = arith.constant 1 : index
    %c0_66 = arith.constant 0 : index
    %84 = vector.load %arg2[%c0_63, %c0_64, %83, %c1_65, %c0_66] : memref<1x4x17x17x64xf32, #tpu.memory_space<vmem>>, vector<1x1x8x16x64xf32>
    %85 = vector.shape_cast %84 : vector<1x1x8x16x64xf32> to vector<8x16x64xf32>
    %86 = vector.shape_cast %85 : vector<8x16x64xf32> to vector<128x64xf32>
    %87 = arith.truncf %86 : vector<128x64xf32> to vector<128x64xbf16>
    %c8 = arith.constant 8 : index
    %c0_67 = arith.constant 0 : index
    %c0_68 = arith.constant 0 : index
    %88 = vector.load %arg3[%c8, %c0_67, %c0_68] : memref<9x64x64xbf16, #tpu.memory_space<vmem>>, vector<1x64x64xbf16>
    %89 = vector.shape_cast %88 : vector<1x64x64xbf16> to vector<64x64xbf16>
    %cst_69 = arith.constant dense<0.000000e+00> : vector<128x64xf32>
    %90 = tpu.matmul %87, %89, %cst_69 {dimension_numbers = #tpu.dot_dimension_numbers<[1], [0], [0], [1], [0, 0, 1, 1], [], []>} : vector<128x64xbf16>, vector<64x64xbf16>, vector<128x64xf32> -> vector<128x64xf32>
    %91 = arith.addf %81, %90 : vector<128x64xf32>
    %c0_70 = arith.constant 0 : index
    %c0_71 = arith.constant 0 : index
    %92 = vector.load %arg4[%c0_70, %c0_71] : memref<1x64xf32, #tpu.memory_space<vmem>>, vector<1x64xf32>
    %93 = vector.broadcast %92 : vector<1x64xf32> to vector<128x64xf32>
    %94 = arith.mulf %91, %93 : vector<128x64xf32>
    %c0_72 = arith.constant 0 : index
    %c0_73 = arith.constant 0 : index
    %95 = vector.load %arg5[%c0_72, %c0_73] : memref<1x64xf32, #tpu.memory_space<vmem>>, vector<1x64xf32>
    %96 = vector.broadcast %95 : vector<1x64xf32> to vector<128x64xf32>
    %97 = arith.addf %94, %96 : vector<128x64xf32>
    %cst_74 = arith.constant 0.000000e+00 : f32
    %98 = vector.broadcast %cst_74 : f32 to vector<128x64xf32>
    %99 = arith.maximumf %97, %98 : vector<128x64xf32>
    %100 = vector.shape_cast %99 : vector<128x64xf32> to vector<1x8x16x64xf32>
    %c0_75 = arith.constant 0 : index
    %c0_76 = arith.constant 0 : index
    %c0_77 = arith.constant 0 : index
    %c0_78 = arith.constant 0 : index
    %101 = vector.load %arg6[%c0_75, %c0_76, %c0_77, %c0_78] : memref<1x8x16x64xf32, #tpu.memory_space<vmem>>, vector<1x8x16x64xf32>
    tpu.vector_store %arg6[%c0_75, %c0_76, %c0_77, %c0_78], %100 {strides = array<i32>} : memref<1x8x16x64xf32, #tpu.memory_space<vmem>>, vector<1x8x16x64xf32>,
    return
  }
  func.func @transform_0(%arg0: i32, %arg1: i32) -> (i32, i32, i32, i32, i32) {
    %c0_i32 = arith.constant 0 : i32
    %c0_i32_0 = arith.constant 0 : i32
    %c0_i32_1 = arith.constant 0 : i32
    %c0_i32_2 = arith.constant 0 : i32
    %c0_i32_3 = arith.constant 0 : i32
    return %arg0, %c0_i32, %c0_i32_0, %c0_i32_1, %c0_i32_2 : i32, i32, i32, i32, i32
  }
  func.func @transform_1(%arg0: i32, %arg1: i32) -> (i32, i32, i32) {
    %c0_i32 = arith.constant 0 : i32
    %c0_i32_0 = arith.constant 0 : i32
    %c0_i32_1 = arith.constant 0 : i32
    %c0_i32_2 = arith.constant 0 : i32
    return %c0_i32, %c0_i32_0, %c0_i32_1 : i32, i32, i32
  }
  func.func @transform_2(%arg0: i32, %arg1: i32) -> (i32, i32) {
    %c0_i32 = arith.constant 0 : i32
    %c0_i32_0 = arith.constant 0 : i32
    %c0_i32_1 = arith.constant 0 : i32
    return %c0_i32, %c0_i32_0 : i32, i32
  }
  func.func @transform_3(%arg0: i32, %arg1: i32) -> (i32, i32) {
    %c0_i32 = arith.constant 0 : i32
    %c0_i32_0 = arith.constant 0 : i32
    %c0_i32_1 = arith.constant 0 : i32
    return %c0_i32, %c0_i32_0 : i32, i32
  }
  func.func @transform_4(%arg0: i32, %arg1: i32) -> (i32, i32, i32, i32) {
    %c0_i32 = arith.constant 0 : i32
    %c0_i32_0 = arith.constant 0 : i32
    %c0_i32_1 = arith.constant 0 : i32
    return %arg0, %arg1, %c0_i32, %c0_i32_0 : i32, i32, i32, i32
  }
}

module attributes {stable_mosaic.version = 11 : i64} {
  func.func @_dag_kernel(%arg0: i32, %arg1: memref<2x3xf32, #tpu.memory_space<smem>>, %arg2: memref<2xf32, #tpu.memory_space<smem>>, %arg3: memref<256x64xf32, #tpu.memory_space<vmem>>, %arg4: memref<256x128xf32, #tpu.memory_space<vmem>>) attributes {dimension_semantics = [#tpu.dimension_semantics<parallel>], iteration_bounds = array<i64: 2>, scalar_prefetch = 0 : i64, scratch_operands = 0 : i64, tpu.core_type = #tpu.core_type<tc>, window_params = [{transform_indices = @transform_0, window_bounds = array<i64: 2, 3>}, {transform_indices = @transform_1, window_bounds = array<i64: 2>}, {transform_indices = @transform_2, window_bounds = array<i64: 256, 64>}, {transform_indices = @transform_3, window_bounds = array<i64: 256, 128>}]} {
    %c0 = arith.constant 0 : index
    %c0_0 = arith.constant 0 : index
    %0 = vector.load %arg3[%c0, %c0_0] : memref<256x64xf32, #tpu.memory_space<vmem>>, vector<256x64xf32>
    %c0_1 = arith.constant 0 : index
    %c0_2 = arith.constant 0 : index
    %1 = memref.load %arg1[%c0_1, %c0_2] : memref<2x3xf32, #tpu.memory_space<smem>>
    %2 = vector.broadcast %1 : f32 to vector<256x64xf32>
    %3 = arith.mulf %2, %0 : vector<256x64xf32>
    %c0_3 = arith.constant 0 : index
    %c1 = arith.constant 1 : index
    %4 = memref.load %arg1[%c0_3, %c1] : memref<2x3xf32, #tpu.memory_space<smem>>
    %5 = vector.broadcast %4 : f32 to vector<256x64xf32>
    %6 = arith.mulf %5, %0 : vector<256x64xf32>
    %7 = arith.addf %3, %6 : vector<256x64xf32>
    %c1_4 = arith.constant 1 : index
    %c0_5 = arith.constant 0 : index
    %8 = memref.load %arg1[%c1_4, %c0_5] : memref<2x3xf32, #tpu.memory_space<smem>>
    %9 = vector.broadcast %8 : f32 to vector<256x64xf32>
    %10 = arith.mulf %9, %0 : vector<256x64xf32>
    %c1_6 = arith.constant 1 : index
    %c1_7 = arith.constant 1 : index
    %11 = memref.load %arg1[%c1_6, %c1_7] : memref<2x3xf32, #tpu.memory_space<smem>>
    %12 = vector.broadcast %11 : f32 to vector<256x64xf32>
    %13 = arith.mulf %12, %0 : vector<256x64xf32>
    %14 = arith.addf %10, %13 : vector<256x64xf32>
    %c1_8 = arith.constant 1 : index
    %c2 = arith.constant 2 : index
    %15 = memref.load %arg1[%c1_8, %c2] : memref<2x3xf32, #tpu.memory_space<smem>>
    %16 = vector.broadcast %15 : f32 to vector<256x64xf32>
    %17 = arith.mulf %16, %7 : vector<256x64xf32>
    %18 = arith.addf %14, %17 : vector<256x64xf32>
    %c0_9 = arith.constant 0 : index
    %19 = memref.load %arg2[%c0_9] : memref<2xf32, #tpu.memory_space<smem>>
    %20 = vector.broadcast %19 : f32 to vector<256x64xf32>
    %21 = arith.mulf %20, %7 : vector<256x64xf32>
    %c1_10 = arith.constant 1 : index
    %22 = memref.load %arg2[%c1_10] : memref<2xf32, #tpu.memory_space<smem>>
    %23 = vector.broadcast %22 : f32 to vector<256x64xf32>
    %24 = arith.mulf %23, %18 : vector<256x64xf32>
    %25 = tpu.concatenate %21, %24 in 1 : vector<256x64xf32>, vector<256x64xf32> -> vector<256x128xf32>
    %c0_11 = arith.constant 0 : index
    %c0_12 = arith.constant 0 : index
    %26 = vector.load %arg4[%c0_11, %c0_12] : memref<256x128xf32, #tpu.memory_space<vmem>>, vector<256x128xf32>
    tpu.vector_store %arg4[%c0_11, %c0_12], %25 {strides = array<i32>} : memref<256x128xf32, #tpu.memory_space<vmem>>, vector<256x128xf32>,
    return
  }
  func.func @transform_0(%arg0: i32) -> (i32, i32) {
    %c0_i32 = arith.constant 0 : i32
    %c0_i32_0 = arith.constant 0 : i32
    %c0_i32_1 = arith.constant 0 : i32
    return %c0_i32, %c0_i32_0 : i32, i32
  }
  func.func @transform_1(%arg0: i32) -> i32 {
    %c0_i32 = arith.constant 0 : i32
    %c0_i32_0 = arith.constant 0 : i32
    return %c0_i32 : i32
  }
  func.func @transform_2(%arg0: i32) -> (i32, i32) {
    %c0_i32 = arith.constant 0 : i32
    %c0_i32_0 = arith.constant 0 : i32
    return %arg0, %c0_i32 : i32, i32
  }
  func.func @transform_3(%arg0: i32) -> (i32, i32) {
    %c0_i32 = arith.constant 0 : i32
    %c0_i32_0 = arith.constant 0 : i32
    return %arg0, %c0_i32 : i32, i32
  }
}

module attributes {stable_mosaic.version = 11 : i64} {
  func.func @_conv3x3_s2_kernel(%arg0: i32, %arg1: i32, %arg2: memref<1x4x9x9x128xf32, #tpu.memory_space<vmem>>, %arg3: memref<9x128x128xbf16, #tpu.memory_space<vmem>>, %arg4: memref<1x128xf32, #tpu.memory_space<vmem>>, %arg5: memref<1x128xf32, #tpu.memory_space<vmem>>, %arg6: memref<1x8x8x128xf32, #tpu.memory_space<vmem>>) attributes {dimension_semantics = [#tpu.dimension_semantics<parallel>, #tpu.dimension_semantics<parallel>], iteration_bounds = array<i64: 2, 1>, scalar_prefetch = 0 : i64, scratch_operands = 0 : i64, tpu.core_type = #tpu.core_type<tc>, window_params = [{transform_indices = @transform_0, window_bounds = array<i64: 1, 4, 9, 9, 128>}, {pipeline_mode = #tpu.pipeline_mode<synchronous>, transform_indices = @transform_1, window_bounds = array<i64: 9, 128, 128>}, {pipeline_mode = #tpu.pipeline_mode<synchronous>, transform_indices = @transform_2, window_bounds = array<i64: 1, 128>}, {pipeline_mode = #tpu.pipeline_mode<synchronous>, transform_indices = @transform_3, window_bounds = array<i64: 1, 128>}, {transform_indices = @transform_4, window_bounds = array<i64: 1, 8, 8, 128>}]} {
    %c8_i32 = arith.constant 8 : i32
    %0 = arith.muli %arg1, %c8_i32 : i32
    %cst = arith.constant 0.000000e+00 : f32
    %1 = vector.broadcast %cst : f32 to vector<64x128xf32>
    %c0_i32 = arith.constant 0 : i32
    %2 = arith.addi %0, %c0_i32 : i32
    %c0 = arith.constant 0 : index
    %c0_0 = arith.constant 0 : index
    %3 = arith.index_cast %2 : i32 to index
    %c0_1 = arith.constant 0 : index
    %c0_2 = arith.constant 0 : index
    %4 = vector.load %arg2[%c0, %c0_0, %3, %c0_1, %c0_2] : memref<1x4x9x9x128xf32, #tpu.memory_space<vmem>>, vector<1x1x8x8x128xf32>
    %5 = vector.shape_cast %4 : vector<1x1x8x8x128xf32> to vector<8x8x128xf32>
    %6 = vector.shape_cast %5 : vector<8x8x128xf32> to vector<64x128xf32>
    %7 = arith.truncf %6 : vector<64x128xf32> to vector<64x128xbf16>
    %c0_3 = arith.constant 0 : index
    %c0_4 = arith.constant 0 : index
    %c0_5 = arith.constant 0 : index
    %8 = vector.load %arg3[%c0_3, %c0_4, %c0_5] : memref<9x128x128xbf16, #tpu.memory_space<vmem>>, vector<1x128x128xbf16>
    %9 = vector.shape_cast %8 : vector<1x128x128xbf16> to vector<128x128xbf16>
    %cst_6 = arith.constant dense<0.000000e+00> : vector<64x128xf32>
    %10 = tpu.matmul %7, %9, %cst_6 {dimension_numbers = #tpu.dot_dimension_numbers<[1], [0], [0], [1], [0, 0, 1, 1], [], []>} : vector<64x128xbf16>, vector<128x128xbf16>, vector<64x128xf32> -> vector<64x128xf32>
    %11 = arith.addf %1, %10 : vector<64x128xf32>
    %c0_i32_7 = arith.constant 0 : i32
    %12 = arith.addi %0, %c0_i32_7 : i32
    %c0_8 = arith.constant 0 : index
    %c1 = arith.constant 1 : index
    %13 = arith.index_cast %12 : i32 to index
    %c0_9 = arith.constant 0 : index
    %c0_10 = arith.constant 0 : index
    %14 = vector.load %arg2[%c0_8, %c1, %13, %c0_9, %c0_10] : memref<1x4x9x9x128xf32, #tpu.memory_space<vmem>>, vector<1x1x8x8x128xf32>
    %15 = vector.shape_cast %14 : vector<1x1x8x8x128xf32> to vector<8x8x128xf32>
    %16 = vector.shape_cast %15 : vector<8x8x128xf32> to vector<64x128xf32>
    %17 = arith.truncf %16 : vector<64x128xf32> to vector<64x128xbf16>
    %c1_11 = arith.constant 1 : index
    %c0_12 = arith.constant 0 : index
    %c0_13 = arith.constant 0 : index
    %18 = vector.load %arg3[%c1_11, %c0_12, %c0_13] : memref<9x128x128xbf16, #tpu.memory_space<vmem>>, vector<1x128x128xbf16>
    %19 = vector.shape_cast %18 : vector<1x128x128xbf16> to vector<128x128xbf16>
    %cst_14 = arith.constant dense<0.000000e+00> : vector<64x128xf32>
    %20 = tpu.matmul %17, %19, %cst_14 {dimension_numbers = #tpu.dot_dimension_numbers<[1], [0], [0], [1], [0, 0, 1, 1], [], []>} : vector<64x128xbf16>, vector<128x128xbf16>, vector<64x128xf32> -> vector<64x128xf32>
    %21 = arith.addf %11, %20 : vector<64x128xf32>
    %c0_i32_15 = arith.constant 0 : i32
    %22 = arith.addi %0, %c0_i32_15 : i32
    %c0_16 = arith.constant 0 : index
    %c0_17 = arith.constant 0 : index
    %23 = arith.index_cast %22 : i32 to index
    %c1_18 = arith.constant 1 : index
    %c0_19 = arith.constant 0 : index
    %24 = vector.load %arg2[%c0_16, %c0_17, %23, %c1_18, %c0_19] : memref<1x4x9x9x128xf32, #tpu.memory_space<vmem>>, vector<1x1x8x8x128xf32>
    %25 = vector.shape_cast %24 : vector<1x1x8x8x128xf32> to vector<8x8x128xf32>
    %26 = vector.shape_cast %25 : vector<8x8x128xf32> to vector<64x128xf32>
    %27 = arith.truncf %26 : vector<64x128xf32> to vector<64x128xbf16>
    %c2 = arith.constant 2 : index
    %c0_20 = arith.constant 0 : index
    %c0_21 = arith.constant 0 : index
    %28 = vector.load %arg3[%c2, %c0_20, %c0_21] : memref<9x128x128xbf16, #tpu.memory_space<vmem>>, vector<1x128x128xbf16>
    %29 = vector.shape_cast %28 : vector<1x128x128xbf16> to vector<128x128xbf16>
    %cst_22 = arith.constant dense<0.000000e+00> : vector<64x128xf32>
    %30 = tpu.matmul %27, %29, %cst_22 {dimension_numbers = #tpu.dot_dimension_numbers<[1], [0], [0], [1], [0, 0, 1, 1], [], []>} : vector<64x128xbf16>, vector<128x128xbf16>, vector<64x128xf32> -> vector<64x128xf32>
    %31 = arith.addf %21, %30 : vector<64x128xf32>
    %c0_i32_23 = arith.constant 0 : i32
    %32 = arith.addi %0, %c0_i32_23 : i32
    %c0_24 = arith.constant 0 : index
    %c2_25 = arith.constant 2 : index
    %33 = arith.index_cast %32 : i32 to index
    %c0_26 = arith.constant 0 : index
    %c0_27 = arith.constant 0 : index
    %34 = vector.load %arg2[%c0_24, %c2_25, %33, %c0_26, %c0_27] : memref<1x4x9x9x128xf32, #tpu.memory_space<vmem>>, vector<1x1x8x8x128xf32>
    %35 = vector.shape_cast %34 : vector<1x1x8x8x128xf32> to vector<8x8x128xf32>
    %36 = vector.shape_cast %35 : vector<8x8x128xf32> to vector<64x128xf32>
    %37 = arith.truncf %36 : vector<64x128xf32> to vector<64x128xbf16>
    %c3 = arith.constant 3 : index
    %c0_28 = arith.constant 0 : index
    %c0_29 = arith.constant 0 : index
    %38 = vector.load %arg3[%c3, %c0_28, %c0_29] : memref<9x128x128xbf16, #tpu.memory_space<vmem>>, vector<1x128x128xbf16>
    %39 = vector.shape_cast %38 : vector<1x128x128xbf16> to vector<128x128xbf16>
    %cst_30 = arith.constant dense<0.000000e+00> : vector<64x128xf32>
    %40 = tpu.matmul %37, %39, %cst_30 {dimension_numbers = #tpu.dot_dimension_numbers<[1], [0], [0], [1], [0, 0, 1, 1], [], []>} : vector<64x128xbf16>, vector<128x128xbf16>, vector<64x128xf32> -> vector<64x128xf32>
    %41 = arith.addf %31, %40 : vector<64x128xf32>
    %c0_i32_31 = arith.constant 0 : i32
    %42 = arith.addi %0, %c0_i32_31 : i32
    %c0_32 = arith.constant 0 : index
    %c3_33 = arith.constant 3 : index
    %43 = arith.index_cast %42 : i32 to index
    %c0_34 = arith.constant 0 : index
    %c0_35 = arith.constant 0 : index
    %44 = vector.load %arg2[%c0_32, %c3_33, %43, %c0_34, %c0_35] : memref<1x4x9x9x128xf32, #tpu.memory_space<vmem>>, vector<1x1x8x8x128xf32>
    %45 = vector.shape_cast %44 : vector<1x1x8x8x128xf32> to vector<8x8x128xf32>
    %46 = vector.shape_cast %45 : vector<8x8x128xf32> to vector<64x128xf32>
    %47 = arith.truncf %46 : vector<64x128xf32> to vector<64x128xbf16>
    %c4 = arith.constant 4 : index
    %c0_36 = arith.constant 0 : index
    %c0_37 = arith.constant 0 : index
    %48 = vector.load %arg3[%c4, %c0_36, %c0_37] : memref<9x128x128xbf16, #tpu.memory_space<vmem>>, vector<1x128x128xbf16>
    %49 = vector.shape_cast %48 : vector<1x128x128xbf16> to vector<128x128xbf16>
    %cst_38 = arith.constant dense<0.000000e+00> : vector<64x128xf32>
    %50 = tpu.matmul %47, %49, %cst_38 {dimension_numbers = #tpu.dot_dimension_numbers<[1], [0], [0], [1], [0, 0, 1, 1], [], []>} : vector<64x128xbf16>, vector<128x128xbf16>, vector<64x128xf32> -> vector<64x128xf32>
    %51 = arith.addf %41, %50 : vector<64x128xf32>
    %c0_i32_39 = arith.constant 0 : i32
    %52 = arith.addi %0, %c0_i32_39 : i32
    %c0_40 = arith.constant 0 : index
    %c2_41 = arith.constant 2 : index
    %53 = arith.index_cast %52 : i32 to index
    %c1_42 = arith.constant 1 : index
    %c0_43 = arith.constant 0 : index
    %54 = vector.load %arg2[%c0_40, %c2_41, %53, %c1_42, %c0_43] : memref<1x4x9x9x128xf32, #tpu.memory_space<vmem>>, vector<1x1x8x8x128xf32>
    %55 = vector.shape_cast %54 : vector<1x1x8x8x128xf32> to vector<8x8x128xf32>
    %56 = vector.shape_cast %55 : vector<8x8x128xf32> to vector<64x128xf32>
    %57 = arith.truncf %56 : vector<64x128xf32> to vector<64x128xbf16>
    %c5 = arith.constant 5 : index
    %c0_44 = arith.constant 0 : index
    %c0_45 = arith.constant 0 : index
    %58 = vector.load %arg3[%c5, %c0_44, %c0_45] : memref<9x128x128xbf16, #tpu.memory_space<vmem>>, vector<1x128x128xbf16>
    %59 = vector.shape_cast %58 : vector<1x128x128xbf16> to vector<128x128xbf16>
    %cst_46 = arith.constant dense<0.000000e+00> : vector<64x128xf32>
    %60 = tpu.matmul %57, %59, %cst_46 {dimension_numbers = #tpu.dot_dimension_numbers<[1], [0], [0], [1], [0, 0, 1, 1], [], []>} : vector<64x128xbf16>, vector<128x128xbf16>, vector<64x128xf32> -> vector<64x128xf32>
    %61 = arith.addf %51, %60 : vector<64x128xf32>
    %c1_i32 = arith.constant 1 : i32
    %62 = arith.addi %0, %c1_i32 : i32
    %c0_47 = arith.constant 0 : index
    %c0_48 = arith.constant 0 : index
    %63 = arith.index_cast %62 : i32 to index
    %c0_49 = arith.constant 0 : index
    %c0_50 = arith.constant 0 : index
    %64 = vector.load %arg2[%c0_47, %c0_48, %63, %c0_49, %c0_50] : memref<1x4x9x9x128xf32, #tpu.memory_space<vmem>>, vector<1x1x8x8x128xf32>
    %65 = vector.shape_cast %64 : vector<1x1x8x8x128xf32> to vector<8x8x128xf32>
    %66 = vector.shape_cast %65 : vector<8x8x128xf32> to vector<64x128xf32>
    %67 = arith.truncf %66 : vector<64x128xf32> to vector<64x128xbf16>
    %c6 = arith.constant 6 : index
    %c0_51 = arith.constant 0 : index
    %c0_52 = arith.constant 0 : index
    %68 = vector.load %arg3[%c6, %c0_51, %c0_52] : memref<9x128x128xbf16, #tpu.memory_space<vmem>>, vector<1x128x128xbf16>
    %69 = vector.shape_cast %68 : vector<1x128x128xbf16> to vector<128x128xbf16>
    %cst_53 = arith.constant dense<0.000000e+00> : vector<64x128xf32>
    %70 = tpu.matmul %67, %69, %cst_53 {dimension_numbers = #tpu.dot_dimension_numbers<[1], [0], [0], [1], [0, 0, 1, 1], [], []>} : vector<64x128xbf16>, vector<128x128xbf16>, vector<64x128xf32> -> vector<64x128xf32>
    %71 = arith.addf %61, %70 : vector<64x128xf32>
    %c1_i32_54 = arith.constant 1 : i32
    %72 = arith.addi %0, %c1_i32_54 : i32
    %c0_55 = arith.constant 0 : index
    %c1_56 = arith.constant 1 : index
    %73 = arith.index_cast %72 : i32 to index
    %c0_57 = arith.constant 0 : index
    %c0_58 = arith.constant 0 : index
    %74 = vector.load %arg2[%c0_55, %c1_56, %73, %c0_57, %c0_58] : memref<1x4x9x9x128xf32, #tpu.memory_space<vmem>>, vector<1x1x8x8x128xf32>
    %75 = vector.shape_cast %74 : vector<1x1x8x8x128xf32> to vector<8x8x128xf32>
    %76 = vector.shape_cast %75 : vector<8x8x128xf32> to vector<64x128xf32>
    %77 = arith.truncf %76 : vector<64x128xf32> to vector<64x128xbf16>
    %c7 = arith.constant 7 : index
    %c0_59 = arith.constant 0 : index
    %c0_60 = arith.constant 0 : index
    %78 = vector.load %arg3[%c7, %c0_59, %c0_60] : memref<9x128x128xbf16, #tpu.memory_space<vmem>>, vector<1x128x128xbf16>
    %79 = vector.shape_cast %78 : vector<1x128x128xbf16> to vector<128x128xbf16>
    %cst_61 = arith.constant dense<0.000000e+00> : vector<64x128xf32>
    %80 = tpu.matmul %77, %79, %cst_61 {dimension_numbers = #tpu.dot_dimension_numbers<[1], [0], [0], [1], [0, 0, 1, 1], [], []>} : vector<64x128xbf16>, vector<128x128xbf16>, vector<64x128xf32> -> vector<64x128xf32>
    %81 = arith.addf %71, %80 : vector<64x128xf32>
    %c1_i32_62 = arith.constant 1 : i32
    %82 = arith.addi %0, %c1_i32_62 : i32
    %c0_63 = arith.constant 0 : index
    %c0_64 = arith.constant 0 : index
    %83 = arith.index_cast %82 : i32 to index
    %c1_65 = arith.constant 1 : index
    %c0_66 = arith.constant 0 : index
    %84 = vector.load %arg2[%c0_63, %c0_64, %83, %c1_65, %c0_66] : memref<1x4x9x9x128xf32, #tpu.memory_space<vmem>>, vector<1x1x8x8x128xf32>
    %85 = vector.shape_cast %84 : vector<1x1x8x8x128xf32> to vector<8x8x128xf32>
    %86 = vector.shape_cast %85 : vector<8x8x128xf32> to vector<64x128xf32>
    %87 = arith.truncf %86 : vector<64x128xf32> to vector<64x128xbf16>
    %c8 = arith.constant 8 : index
    %c0_67 = arith.constant 0 : index
    %c0_68 = arith.constant 0 : index
    %88 = vector.load %arg3[%c8, %c0_67, %c0_68] : memref<9x128x128xbf16, #tpu.memory_space<vmem>>, vector<1x128x128xbf16>
    %89 = vector.shape_cast %88 : vector<1x128x128xbf16> to vector<128x128xbf16>
    %cst_69 = arith.constant dense<0.000000e+00> : vector<64x128xf32>
    %90 = tpu.matmul %87, %89, %cst_69 {dimension_numbers = #tpu.dot_dimension_numbers<[1], [0], [0], [1], [0, 0, 1, 1], [], []>} : vector<64x128xbf16>, vector<128x128xbf16>, vector<64x128xf32> -> vector<64x128xf32>
    %91 = arith.addf %81, %90 : vector<64x128xf32>
    %c0_70 = arith.constant 0 : index
    %c0_71 = arith.constant 0 : index
    %92 = vector.load %arg4[%c0_70, %c0_71] : memref<1x128xf32, #tpu.memory_space<vmem>>, vector<1x128xf32>
    %93 = vector.broadcast %92 : vector<1x128xf32> to vector<64x128xf32>
    %94 = arith.mulf %91, %93 : vector<64x128xf32>
    %c0_72 = arith.constant 0 : index
    %c0_73 = arith.constant 0 : index
    %95 = vector.load %arg5[%c0_72, %c0_73] : memref<1x128xf32, #tpu.memory_space<vmem>>, vector<1x128xf32>
    %96 = vector.broadcast %95 : vector<1x128xf32> to vector<64x128xf32>
    %97 = arith.addf %94, %96 : vector<64x128xf32>
    %cst_74 = arith.constant 0.000000e+00 : f32
    %98 = vector.broadcast %cst_74 : f32 to vector<64x128xf32>
    %99 = arith.maximumf %97, %98 : vector<64x128xf32>
    %100 = vector.shape_cast %99 : vector<64x128xf32> to vector<1x8x8x128xf32>
    %c0_75 = arith.constant 0 : index
    %c0_76 = arith.constant 0 : index
    %c0_77 = arith.constant 0 : index
    %c0_78 = arith.constant 0 : index
    %101 = vector.load %arg6[%c0_75, %c0_76, %c0_77, %c0_78] : memref<1x8x8x128xf32, #tpu.memory_space<vmem>>, vector<1x8x8x128xf32>
    tpu.vector_store %arg6[%c0_75, %c0_76, %c0_77, %c0_78], %100 {strides = array<i32>} : memref<1x8x8x128xf32, #tpu.memory_space<vmem>>, vector<1x8x8x128xf32>,
    return
  }
  func.func @transform_0(%arg0: i32, %arg1: i32) -> (i32, i32, i32, i32, i32) {
    %c0_i32 = arith.constant 0 : i32
    %c0_i32_0 = arith.constant 0 : i32
    %c0_i32_1 = arith.constant 0 : i32
    %c0_i32_2 = arith.constant 0 : i32
    %c0_i32_3 = arith.constant 0 : i32
    return %arg0, %c0_i32, %c0_i32_0, %c0_i32_1, %c0_i32_2 : i32, i32, i32, i32, i32
  }
  func.func @transform_1(%arg0: i32, %arg1: i32) -> (i32, i32, i32) {
    %c0_i32 = arith.constant 0 : i32
    %c0_i32_0 = arith.constant 0 : i32
    %c0_i32_1 = arith.constant 0 : i32
    %c0_i32_2 = arith.constant 0 : i32
    return %c0_i32, %c0_i32_0, %c0_i32_1 : i32, i32, i32
  }
  func.func @transform_2(%arg0: i32, %arg1: i32) -> (i32, i32) {
    %c0_i32 = arith.constant 0 : i32
    %c0_i32_0 = arith.constant 0 : i32
    %c0_i32_1 = arith.constant 0 : i32
    return %c0_i32, %c0_i32_0 : i32, i32
  }
  func.func @transform_3(%arg0: i32, %arg1: i32) -> (i32, i32) {
    %c0_i32 = arith.constant 0 : i32
    %c0_i32_0 = arith.constant 0 : i32
    %c0_i32_1 = arith.constant 0 : i32
    return %c0_i32, %c0_i32_0 : i32, i32
  }
  func.func @transform_4(%arg0: i32, %arg1: i32) -> (i32, i32, i32, i32) {
    %c0_i32 = arith.constant 0 : i32
    %c0_i32_0 = arith.constant 0 : i32
    %c0_i32_1 = arith.constant 0 : i32
    return %arg0, %arg1, %c0_i32, %c0_i32_0 : i32, i32, i32, i32
  }
}

module attributes {stable_mosaic.version = 11 : i64} {
  func.func @_dag_kernel(%arg0: i32, %arg1: memref<2x3xf32, #tpu.memory_space<smem>>, %arg2: memref<2xf32, #tpu.memory_space<smem>>, %arg3: memref<128x128xf32, #tpu.memory_space<vmem>>, %arg4: memref<128x256xf32, #tpu.memory_space<vmem>>) attributes {dimension_semantics = [#tpu.dimension_semantics<parallel>], iteration_bounds = array<i64: 1>, scalar_prefetch = 0 : i64, scratch_operands = 0 : i64, tpu.core_type = #tpu.core_type<tc>, window_params = [{transform_indices = @transform_0, window_bounds = array<i64: 2, 3>}, {transform_indices = @transform_1, window_bounds = array<i64: 2>}, {transform_indices = @transform_2, window_bounds = array<i64: 128, 128>}, {transform_indices = @transform_3, window_bounds = array<i64: 128, 256>}]} {
    %c0 = arith.constant 0 : index
    %c0_0 = arith.constant 0 : index
    %0 = vector.load %arg3[%c0, %c0_0] : memref<128x128xf32, #tpu.memory_space<vmem>>, vector<128x128xf32>
    %c0_1 = arith.constant 0 : index
    %c0_2 = arith.constant 0 : index
    %1 = memref.load %arg1[%c0_1, %c0_2] : memref<2x3xf32, #tpu.memory_space<smem>>
    %2 = vector.broadcast %1 : f32 to vector<128x128xf32>
    %3 = arith.mulf %2, %0 : vector<128x128xf32>
    %c0_3 = arith.constant 0 : index
    %c1 = arith.constant 1 : index
    %4 = memref.load %arg1[%c0_3, %c1] : memref<2x3xf32, #tpu.memory_space<smem>>
    %5 = vector.broadcast %4 : f32 to vector<128x128xf32>
    %6 = arith.mulf %5, %0 : vector<128x128xf32>
    %7 = arith.addf %3, %6 : vector<128x128xf32>
    %c1_4 = arith.constant 1 : index
    %c0_5 = arith.constant 0 : index
    %8 = memref.load %arg1[%c1_4, %c0_5] : memref<2x3xf32, #tpu.memory_space<smem>>
    %9 = vector.broadcast %8 : f32 to vector<128x128xf32>
    %10 = arith.mulf %9, %0 : vector<128x128xf32>
    %c1_6 = arith.constant 1 : index
    %c1_7 = arith.constant 1 : index
    %11 = memref.load %arg1[%c1_6, %c1_7] : memref<2x3xf32, #tpu.memory_space<smem>>
    %12 = vector.broadcast %11 : f32 to vector<128x128xf32>
    %13 = arith.mulf %12, %0 : vector<128x128xf32>
    %14 = arith.addf %10, %13 : vector<128x128xf32>
    %c1_8 = arith.constant 1 : index
    %c2 = arith.constant 2 : index
    %15 = memref.load %arg1[%c1_8, %c2] : memref<2x3xf32, #tpu.memory_space<smem>>
    %16 = vector.broadcast %15 : f32 to vector<128x128xf32>
    %17 = arith.mulf %16, %7 : vector<128x128xf32>
    %18 = arith.addf %14, %17 : vector<128x128xf32>
    %c0_9 = arith.constant 0 : index
    %19 = memref.load %arg2[%c0_9] : memref<2xf32, #tpu.memory_space<smem>>
    %20 = vector.broadcast %19 : f32 to vector<128x128xf32>
    %21 = arith.mulf %20, %7 : vector<128x128xf32>
    %c1_10 = arith.constant 1 : index
    %22 = memref.load %arg2[%c1_10] : memref<2xf32, #tpu.memory_space<smem>>
    %23 = vector.broadcast %22 : f32 to vector<128x128xf32>
    %24 = arith.mulf %23, %18 : vector<128x128xf32>
    %25 = tpu.concatenate %21, %24 in 1 : vector<128x128xf32>, vector<128x128xf32> -> vector<128x256xf32>
    %c0_11 = arith.constant 0 : index
    %c0_12 = arith.constant 0 : index
    %26 = vector.load %arg4[%c0_11, %c0_12] : memref<128x256xf32, #tpu.memory_space<vmem>>, vector<128x256xf32>
    tpu.vector_store %arg4[%c0_11, %c0_12], %25 {strides = array<i32>} : memref<128x256xf32, #tpu.memory_space<vmem>>, vector<128x256xf32>,
    return
  }
  func.func @transform_0(%arg0: i32) -> (i32, i32) {
    %c0_i32 = arith.constant 0 : i32
    %c0_i32_0 = arith.constant 0 : i32
    %c0_i32_1 = arith.constant 0 : i32
    return %c0_i32, %c0_i32_0 : i32, i32
  }
  func.func @transform_1(%arg0: i32) -> i32 {
    %c0_i32 = arith.constant 0 : i32
    %c0_i32_0 = arith.constant 0 : i32
    return %c0_i32 : i32
  }
  func.func @transform_2(%arg0: i32) -> (i32, i32) {
    %c0_i32 = arith.constant 0 : i32
    %c0_i32_0 = arith.constant 0 : i32
    return %arg0, %c0_i32 : i32, i32
  }
  func.func @transform_3(%arg0: i32) -> (i32, i32) {
    %c0_i32 = arith.constant 0 : i32
    %c0_i32_0 = arith.constant 0 : i32
    return %arg0, %c0_i32 : i32, i32
  }
}

module attributes {stable_mosaic.version = 11 : i64} {
  func.func @_gap_linear_kernel(%arg0: i32, %arg1: memref<2x8x256xf32, #tpu.memory_space<vmem>>, %arg2: memref<256x128xbf16, #tpu.memory_space<vmem>>, %arg3: memref<1x128xf32, #tpu.memory_space<vmem>>, %arg4: memref<2x128xf32, #tpu.memory_space<vmem>>, %arg5: memref<2x128xf32, #tpu.memory_space<vmem>>) attributes {dimension_semantics = [#tpu.dimension_semantics<arbitrary>], iteration_bounds = array<i64: 8>, scalar_prefetch = 0 : i64, scratch_operands = 1 : i64, tpu.core_type = #tpu.core_type<tc>, window_params = [{transform_indices = @transform_0, window_bounds = array<i64: 2, 8, 256>}, {pipeline_mode = #tpu.pipeline_mode<synchronous>, transform_indices = @transform_1, window_bounds = array<i64: 256, 128>}, {pipeline_mode = #tpu.pipeline_mode<synchronous>, transform_indices = @transform_2, window_bounds = array<i64: 1, 128>}, {pipeline_mode = #tpu.pipeline_mode<synchronous>, transform_indices = @transform_3, window_bounds = array<i64: 2, 128>}]} {
    %c0_i32 = arith.constant 0 : i32
    %0 = arith.cmpi eq, %arg0, %c0_i32 : i32
    %1 = arith.extui %0 : i1 to i32
    %c0_i32_0 = arith.constant 0 : i32
    %2 = arith.cmpi ne, %1, %c0_i32_0 : i32
    scf.if %2 {
      %cst_11 = arith.constant 0.000000e+00 : f32
      %14 = vector.broadcast %cst_11 : f32 to vector<2x128xf32>
      %c0_12 = arith.constant 0 : index
      %c0_13 = arith.constant 0 : index
      %15 = vector.load %arg5[%c0_12, %c0_13] : memref<2x128xf32, #tpu.memory_space<vmem>>, vector<2x128xf32>
      tpu.vector_store %arg5[%c0_12, %c0_13], %14 {strides = array<i32>} : memref<2x128xf32, #tpu.memory_space<vmem>>, vector<2x128xf32>,
    } else {
    }
    %c0 = arith.constant 0 : index
    %c0_1 = arith.constant 0 : index
    %c0_2 = arith.constant 0 : index
    %3 = vector.load %arg1[%c0, %c0_1, %c0_2] : memref<2x8x256xf32, #tpu.memory_space<vmem>>, vector<2x8x256xf32>
    %cst = arith.constant dense<0.000000e+00> : vector<2x256xf32>
    %4 = vector.multi_reduction <add>, %3, %cst [1] : vector<2x8x256xf32> to vector<2x256xf32>
    %c0_3 = arith.constant 0 : index
    %c0_4 = arith.constant 0 : index
    %5 = vector.load %arg5[%c0_3, %c0_4] : memref<2x128xf32, #tpu.memory_space<vmem>>, vector<2x128xf32>
    %6 = arith.truncf %4 : vector<2x256xf32> to vector<2x256xbf16>
    %c0_5 = arith.constant 0 : index
    %c0_6 = arith.constant 0 : index
    %7 = vector.load %arg2[%c0_5, %c0_6] : memref<256x128xbf16, #tpu.memory_space<vmem>>, vector<256x128xbf16>
    %cst_7 = arith.constant dense<0.000000e+00> : vector<2x128xf32>
    %8 = tpu.matmul %6, %7, %cst_7 {dimension_numbers = #tpu.dot_dimension_numbers<[1], [0], [0], [1], [0, 0, 1, 1], [], []>} : vector<2x256xbf16>, vector<256x128xbf16>, vector<2x128xf32> -> vector<2x128xf32>
    %9 = arith.addf %5, %8 : vector<2x128xf32>
    %c0_8 = arith.constant 0 : index
    %c0_9 = arith.constant 0 : index
    %10 = vector.load %arg5[%c0_8, %c0_9] : memref<2x128xf32, #tpu.memory_space<vmem>>, vector<2x128xf32>
    tpu.vector_store %arg5[%c0_8, %c0_9], %9 {strides = array<i32>} : memref<2x128xf32, #tpu.memory_space<vmem>>, vector<2x128xf32>,
    %c7_i32 = arith.constant 7 : i32
    %11 = arith.cmpi eq, %arg0, %c7_i32 : i32
    %12 = arith.extui %11 : i1 to i32
    %c0_i32_10 = arith.constant 0 : i32
    %13 = arith.cmpi ne, %12, %c0_i32_10 : i32
    scf.if %13 {
      %c0_11 = arith.constant 0 : index
      %c0_12 = arith.constant 0 : index
      %14 = vector.load %arg5[%c0_11, %c0_12] : memref<2x128xf32, #tpu.memory_space<vmem>>, vector<2x128xf32>
      %cst_13 = arith.constant 1.562500e-02 : f32
      %15 = vector.broadcast %cst_13 : f32 to vector<2x128xf32>
      %16 = arith.mulf %14, %15 : vector<2x128xf32>
      %c0_14 = arith.constant 0 : index
      %c0_15 = arith.constant 0 : index
      %17 = vector.load %arg3[%c0_14, %c0_15] : memref<1x128xf32, #tpu.memory_space<vmem>>, vector<1x128xf32>
      %18 = vector.broadcast %17 : vector<1x128xf32> to vector<2x128xf32>
      %19 = arith.addf %16, %18 : vector<2x128xf32>
      %c0_16 = arith.constant 0 : index
      %c0_17 = arith.constant 0 : index
      %20 = vector.load %arg4[%c0_16, %c0_17] : memref<2x128xf32, #tpu.memory_space<vmem>>, vector<2x128xf32>
      tpu.vector_store %arg4[%c0_16, %c0_17], %19 {strides = array<i32>} : memref<2x128xf32, #tpu.memory_space<vmem>>, vector<2x128xf32>,
    } else {
    }
    return
  }
  func.func @transform_0(%arg0: i32) -> (i32, i32, i32) {
    %c0_i32 = arith.constant 0 : i32
    %c0_i32_0 = arith.constant 0 : i32
    %c0_i32_1 = arith.constant 0 : i32
    return %c0_i32, %arg0, %c0_i32_0 : i32, i32, i32
  }
  func.func @transform_1(%arg0: i32) -> (i32, i32) {
    %c0_i32 = arith.constant 0 : i32
    %c0_i32_0 = arith.constant 0 : i32
    %c0_i32_1 = arith.constant 0 : i32
    return %c0_i32, %c0_i32_0 : i32, i32
  }
  func.func @transform_2(%arg0: i32) -> (i32, i32) {
    %c0_i32 = arith.constant 0 : i32
    %c0_i32_0 = arith.constant 0 : i32
    %c0_i32_1 = arith.constant 0 : i32
    return %c0_i32, %c0_i32_0 : i32, i32
  }
  func.func @transform_3(%arg0: i32) -> (i32, i32) {
    %c0_i32 = arith.constant 0 : i32
    %c0_i32_0 = arith.constant 0 : i32
    %c0_i32_1 = arith.constant 0 : i32
    return %c0_i32, %c0_i32_0 : i32, i32
  }
}

</mosaic_0001>

<llo_original>
// kernel: search_stage_forward.8
$region0: #{search_stage_forward.8}
  #allocation0 [shape = 'u32[]', space=smem, size = 0x4, offset = 0x4, fixed_abs, tag = 'smem constant byte address 0x4 - core index']
  #allocation1 [shape = 'u32[72,128]{1,0:T(1,128)}', space=vmem, size = 0x9000, scoped, tag = 'internal scratch']
  %s0 = inlined_call_operand.vmem [shape: f32[2,3], index: 0, kind: input, shape index: {}]
  %s1 = inlined_call_operand.vmem [shape: f32[2], index: 1, kind: input, shape index: {}]
  %s2 = inlined_call_operand.vmem [shape: f32[2048,32], index: 2, kind: input, shape index: {}]
  %s3 = inlined_call_operand.vmem [shape: f32[2048,64], index: 3, kind: output, shape index: {}]
  %s4 = sld [smem:[#allocation0]]
  $region53: #{search_stage_forward.8} parent=0
    _
  %s6 = ssub.s32 1, %s4
  %s7 = scalar_select 0, %s6, %s4
  $region1: #{search_stage_forward.8} parent=0
    #allocation2 [shape = 'u8[1024]{0}', space=smem, size = 0x400, scoped, tag = 'input window, operand 0, single buffered']
    #allocation3 [shape = 's32[2]{0}', space=sflag, size = 0x8, scoped, tag = 'scoped memory for search_stage_forward.8']
    #allocation4 [shape = 'u8[512]{0}', space=smem, size = 0x200, scoped, tag = 'input window, operand 1, single buffered']
    #allocation5 [shape = 's32[1]{0}', space=sflag, size = 0x4, scoped, tag = 'scoped memory for search_stage_forward.8']
    %8 = vsyncpa [#allocation3], 0
    %9 = vsyncpa [#allocation5], 0
    loop: start=0, step=1, limit=10
    $region2: #{search_stage_forward.8} parent=1 // loop_pre_header
      _
    $region3: #{search_stage_forward.8} parent=1 // loop_header
      %s11 = sphi 0, %s15
      %p12 = scmp.ge.s32.totalorder %s11, 10
      %s19 = sphi 0, %s19
      %s21 = sphi 0, %s19
      %s22 = sphi 0, %s21
      %s36 = sphi 0, %s22
      %s40 = sphi 0, %s40
      %s42 = sphi 0, %s40
      %s43 = sphi 0, %s42
      %s57 = sphi 0, %s43
      %s63 = sphi 0, %s65
      %s66 = sphi 0, %s63
      %s67 = sphi 0, %s66
      %s83 = sphi 0, %s67
      %s89 = sphi 0, %s91
      %s92 = sphi 0, %s89
      %s93 = sphi 0, %s92
      %s109 = sphi 0, %s93
    $region4: #{search_stage_forward.8} parent=1 // loop_header_branch
      %14 = sbr.rel (%p12) target = $region8
    $region5: #{search_stage_forward.8} parent=1 // loop_body
      %s16 = ssub.s32 %s11, 1
      %s17 = ssub.s32 %s11, 2
      %s18 = sadd.s32 %s11, 1
      %s20 = sadd.s32 %s19, 1
      %p23 = scmp.eq.s32.totalorder %s11, 7
      %p24 = scmp.ne.s32.totalorder %s19, %s21
      %p25 = scmp.eq.s32.totalorder %s11, 0
      %p26 = por %p24, %p25
      %p27 = scmp.ne.s32.totalorder %s19, %s21
      %p28 = scmp.eq.s32.totalorder %s16, 7
      %p29 = por %p27, %p28
      %p30 = scmp.ne.s32.totalorder %s21, %s22
      %p31 = scmp.eq.s32.totalorder %s16, 0
      %p32 = por %p30, %p31
      %p33 = scmp.ne.s32.totalorder %s21, %s22
      %p34 = scmp.eq.s32.totalorder %s17, 7
      %p35 = por %p33, %p34
      %p37 = scmp.ne.s32.totalorder %s22, %s36
      %p38 = scmp.eq.s32.totalorder %s17, 0
      %p39 = por %p37, %p38
      %s41 = sadd.s32 %s40, 1
      %p44 = scmp.eq.s32.totalorder %s11, 7
      %p45 = scmp.ne.s32.totalorder %s40, %s42
      %p46 = scmp.eq.s32.totalorder %s11, 0
      %p47 = por %p45, %p46
      %p48 = scmp.ne.s32.totalorder %s40, %s42
      %p49 = scmp.eq.s32.totalorder %s16, 7
      %p50 = por %p48, %p49
      %p51 = scmp.ne.s32.totalorder %s42, %s43
      %p52 = scmp.eq.s32.totalorder %s16, 0
      %p53 = por %p51, %p52
      %p54 = scmp.ne.s32.totalorder %s42, %s43
      %p55 = scmp.eq.s32.totalorder %s17, 7
      %p56 = por %p54, %p55
      %p58 = scmp.ne.s32.totalorder %s43, %s57
      %p59 = scmp.eq.s32.totalorder %s17, 0
      %p60 = por %p58, %p59
      %s61 = ssub.s32 %s11, %s18
      %p62 = scmp.eq.s32.totalorder %s61, 0
      %s64 = sadd.s32 %s63, 1
      %s65 = scalar_select %p62, %s63, %s64
      %p68 = pneg %p62
      %p69 = scmp.eq.s32.totalorder %s11, 7
      %p70 = por %p68, %p69
      %p71 = scmp.ne.s32.totalorder %s63, %s66
      %p72 = scmp.eq.s32.totalorder %s11, 0
      %p73 = por %p71, %p72
      %p74 = scmp.ne.s32.totalorder %s63, %s66
      %p75 = scmp.eq.s32.totalorder %s16, 7
      %p76 = por %p74, %p75
      %p77 = scmp.ne.s32.totalorder %s66, %s67
      %p78 = scmp.eq.s32.totalorder %s16, 0
      %p79 = por %p77, %p78
      %p80 = scmp.ne.s32.totalorder %s66, %s67
      %p81 = scmp.eq.s32.totalorder %s17, 7
      %p82 = por %p80, %p81
      %p84 = scmp.ne.s32.totalorder %s67, %s83
      %p85 = scmp.eq.s32.totalorder %s17, 0
      %p86 = por %p84, %p85
      %s87 = ssub.s32 %s11, %s18
      %p88 = scmp.eq.s32.totalorder %s87, 0
      %s90 = sadd.s32 %s89, 1
      %s91 = scalar_select %p88, %s89, %s90
      %p94 = pneg %p88
      %p95 = scmp.eq.s32.totalorder %s11, 7
      %p96 = por %p94, %p95
      %p97 = scmp.ne.s32.totalorder %s89, %s92
      %p98 = scmp.eq.s32.totalorder %s11, 0
      %p99 = por %p97, %p98
      %p100 = scmp.ne.s32.totalorder %s89, %s92
      %p101 = scmp.eq.s32.totalorder %s16, 7
      %p102 = por %p100, %p101
      %p103 = scmp.ne.s32.totalorder %s92, %s93
      %p104 = scmp.eq.s32.totalorder %s16, 0
      %p105 = por %p103, %p104
      %p106 = scmp.ne.s32.totalorder %s92, %s93
      %p107 = scmp.eq.s32.totalorder %s17, 7
      %p108 = por %p106, %p107
      %p110 = scmp.ne.s32.totalorder %s93, %s109
      %p111 = scmp.eq.s32.totalorder %s17, 0
      %p112 = por %p110, %p111
      %p113 = scmp.le.s32.totalorder 1, %s11
      %p114 = scmp.lt.s32.totalorder %s11, 9
      %p115 = pnand %p113, %p114
      %p116 = pneg %p115
      // Predicated region
      $region9: #{search_stage_forward.8} parent=5 // pred_check
        _
      $region10: #{search_stage_forward.8} parent=5 // pred_check_branch
        %118 = sbr.rel (%p115) target = $region12
      $region11: #{search_stage_forward.8} parent=5 // pred_region
        %s119 = ssub.s32 %s11, 1
        // Predicated region
        $region13: #{search_stage_forward.8} parent=11 // pred_check
          %p120 = pneg %p32
        $region14: #{search_stage_forward.8} parent=11 // pred_check_branch
          %122 = sbr.rel (%p120) target = $region16
        $region15: #{search_stage_forward.8} parent=11 // pred_region
          %124 = vsyncadd [#allocation3], 0
          %s126 = sshll.u32 %s0, 4
          %s127 = int_to_ptr.vmem [resolvable:$true] %s126
          %129 = dma.vmem_to_smem %s127, 32, [#allocation2], [#allocation3]
        $region16: #{search_stage_forward.8} parent=11 // pred_fallthru
          _
        // Predicated region
        $region17: #{search_stage_forward.8} parent=11 // pred_check
          %p130 = pneg %p53
        $region18: #{search_stage_forward.8} parent=11 // pred_check_branch
          %132 = sbr.rel (%p130) target = $region20
        $region19: #{search_stage_forward.8} parent=11 // pred_region
          %134 = vsyncadd [#allocation5], 0
          %s136 = sshll.u32 %s1, 4
          %s137 = int_to_ptr.vmem [resolvable:$true] %s136
          %139 = dma.vmem_to_smem %s137, 16, [#allocation4], [#allocation5]
        $region20: #{search_stage_forward.8} parent=11 // pred_fallthru
          _
      $region12: #{search_stage_forward.8} parent=5 // pred_fallthru
        _
      %p140 = scmp.lt.s32.totalorder %s11, 8
      // Predicated region
      $region21: #{search_stage_forward.8} parent=5 // pred_check
        %p141 = pneg %p140
      $region22: #{search_stage_forward.8} parent=5 // pred_check_branch
        %143 = sbr.rel (%p141) target = $region24
      $region23: #{search_stage_forward.8} parent=5 // pred_region
        // Predicated region
        $region25: #{search_stage_forward.8} parent=23 // pred_check
          %p144 = pneg %p73
        $region26: #{search_stage_forward.8} parent=23 // pred_check_branch
          %146 = sbr.rel (%p144) target = $region28
        $region27: #{search_stage_forward.8} parent=23 // pred_region
          %s147 = smul.u32 32, %s11
          %p148 = scmp.lt.s32.totalorder %s147, 255
          %s149 = scalar_select %p148, %s147, 255
          %s150 = smul.addr %s149, 8
          %s151 = scalar_lea.vmem %s2, %s150
          %s152 = smul.u32 32, %s11
        $region28: #{search_stage_forward.8} parent=23 // pred_fallthru
          _
      $region24: #{search_stage_forward.8} parent=5 // pred_fallthru
        _
      %p153 = scmp.le.s32.totalorder 1, %s11
      %p154 = scmp.lt.s32.totalorder %s11, 9
      %p155 = pnand %p153, %p154
      %p156 = pneg %p155
      // Predicated region
      $region29: #{search_stage_forward.8} parent=5 // pred_check
        _
      $region30: #{search_stage_forward.8} parent=5 // pred_check_branch
        %158 = sbr.rel (%p155) target = $region32
      $region31: #{search_stage_forward.8} parent=5 // pred_region
        %s159 = ssub.s32 %s11, 1
        // Predicated region
        $region33: #{search_stage_forward.8} parent=31 // pred_check
          %p160 = pneg %p32
        $region34: #{search_stage_forward.8} parent=31 // pred_check_branch
          %162 = sbr.rel (%p160) target = $region36
        $region35: #{search_stage_forward.8} parent=31 // pred_region
          %164 = dma.done [#allocation3], 32
        $region36: #{search_stage_forward.8} parent=31 // pred_fallthru
          _
        // Predicated region
        $region37: #{search_stage_forward.8} parent=31 // pred_check
          %p165 = pneg %p53
        $region38: #{search_stage_forward.8} parent=31 // pred_check_branch
          %167 = sbr.rel (%p165) target = $region40
        $region39: #{search_stage_forward.8} parent=31 // pred_region
          %169 = dma.done [#allocation5], 16
        $region40: #{search_stage_forward.8} parent=31 // pred_fallthru
          _
        %170 = sfence
        %p171 = pneg %p32
        %p172 = pneg %p29
        %p173 = pneg %p53
        %p174 = pneg %p50
        %s175 = smul.u32 32, %s16
        %p176 = scmp.lt.s32.totalorder %s175, 255
        %s177 = scalar_select %p176, %s175, 255
        %s178 = smul.addr %s177, 8
        %s179 = scalar_lea.vmem %s2, %s178
        %p180 = pneg %p79
        %p181 = pneg %p76
        %p182 = pneg %p105
        %p183 = pneg %p102
        %s184 = smul.u32 32, %s16
        %p185 = scmp.lt.s32.totalorder %s184, 255
        %s186 = scalar_select %p185, %s184, 255
        %s187 = smul.addr %s186, 8
        %s188 = scalar_lea.vmem %s3, %s187
        %s189 = smul.u32 32, %s16
        %p190 = scmp.lt.s32.totalorder %s189, 255
        %s191 = scalar_select %p190, %s189, 255
        %s192 = smul.addr %s191, 8
        %s193 = scalar_lea.vmem %s2, %s192
        %s194 = smul.u32 32, %s16
        %s195 = smul.u32 32, %s16
        %p196 = scmp.lt.s32.totalorder %s195, 255
        %s197 = scalar_select %p196, %s195, 255
        %s198 = smul.addr %s197, 8
        %s199 = scalar_lea.vmem %s3, %s198
        %s200 = smul.u32 32, %s16
        %v201 = vld [vmem:[%s193] sm:$0xff]
        %v202 = vld [vmem:[%s193 + $0x8] sm:$0xff]
        %v203 = vld [vmem:[%s193 + $0x10] sm:$0xff]
        %v204 = vld [vmem:[%s193 + $0x18] sm:$0xff]
        %v205 = vld [vmem:[%s193 + $0x20] sm:$0xff]
        %v206 = vld [vmem:[%s193 + $0x28] sm:$0xff]
        %v207 = vld [vmem:[%s193 + $0x30] sm:$0xff]
        %v208 = vld [vmem:[%s193 + $0x38] sm:$0xff]
        %v209 = vld [vmem:[%s193 + $0x40] sm:$0xff]
        %v210 = vld [vmem:[%s193 + $0x48] sm:$0xff]
        %v211 = vld [vmem:[%s193 + $0x50] sm:$0xff]
        %v212 = vld [vmem:[%s193 + $0x58] sm:$0xff]
        %v213 = vld [vmem:[%s193 + $0x60] sm:$0xff]
        %v214 = vld [vmem:[%s193 + $0x68] sm:$0xff]
        %v215 = vld [vmem:[%s193 + $0x70] sm:$0xff]
        %v216 = vld [vmem:[%s193 + $0x78] sm:$0xff]
        %v217 = vld [vmem:[%s193 + $0x80] sm:$0xff]
        %v218 = vld [vmem:[%s193 + $0x88] sm:$0xff]
        %v219 = vld [vmem:[%s193 + $0x90] sm:$0xff]
        %v220 = vld [vmem:[%s193 + $0x98] sm:$0xff]
        %v221 = vld [vmem:[%s193 + $0xa0] sm:$0xff]
        %v222 = vld [vmem:[%s193 + $0xa8] sm:$0xff]
        %v223 = vld [vmem:[%s193 + $0xb0] sm:$0xff]
        %v224 = vld [vmem:[%s193 + $0xb8] sm:$0xff]
        %v225 = vld [vmem:[%s193 + $0xc0] sm:$0xff]
        %v226 = vld [vmem:[%s193 + $0xc8] sm:$0xff]
        %v227 = vld [vmem:[%s193 + $0xd0] sm:$0xff]
        %v228 = vld [vmem:[%s193 + $0xd8] sm:$0xff]
        %v229 = vld [vmem:[%s193 + $0xe0] sm:$0xff]
        %v230 = vld [vmem:[%s193 + $0xe8] sm:$0xff]
        %v231 = vld [vmem:[%s193 + $0xf0] sm:$0xff]
        %v232 = vld [vmem:[%s193 + $0xf8] sm:$0xff]
        %s233 = sld [smem:[#allocation2]]
        %v234 = vstv %s233
        %v235 = vmul.f32 %v234, %v201
        %v236 = vmul.f32 %v234, %v202
        %v237 = vmul.f32 %v234, %v203
        %v238 = vmul.f32 %v234, %v204
        %v239 = vmul.f32 %v234, %v205
        %v240 = vmul.f32 %v234, %v206
        %v241 = vmul.f32 %v234, %v207
        %v242 = vmul.f32 %v234, %v208
        %v243 = vmul.f32 %v234, %v209
        %v244 = vmul.f32 %v234, %v210
        %v245 = vmul.f32 %v234, %v211
        %v246 = vmul.f32 %v234, %v212
        %v247 = vmul.f32 %v234, %v213
        %v248 = vmul.f32 %v234, %v214
        %v249 = vmul.f32 %v234, %v215
        %v250 = vmul.f32 %v234, %v216
        %v251 = vmul.f32 %v234, %v217
        %v252 = vmul.f32 %v234, %v218
        %v253 = vmul.f32 %v234, %v219
        %v254 = vmul.f32 %v234, %v220
        %v255 = vmul.f32 %v234, %v221
        %v256 = vmul.f32 %v234, %v222
        %v257 = vmul.f32 %v234, %v223
        %v258 = vmul.f32 %v234, %v224
        %v259 = vmul.f32 %v234, %v225
        %v260 = vmul.f32 %v234, %v226
        %v261 = vmul.f32 %v234, %v227
        %v262 = vmul.f32 %v234, %v228
        %v263 = vmul.f32 %v234, %v229
        %v264 = vmul.f32 %v234, %v230
        %v265 = vmul.f32 %v234, %v231
        %v266 = vmul.f32 %v234, %v232
        %s267 = sld [smem:[#allocation2 + $0x1]]
        %v268 = vstv %s267
        %v269 = vmul.f32 %v268, %v201
        %v270 = vmul.f32 %v268, %v202
        %v271 = vmul.f32 %v268, %v203
        %v272 = vmul.f32 %v268, %v204
        %v273 = vmul.f32 %v268, %v205
        %v274 = vmul.f32 %v268, %v206
        %v275 = vmul.f32 %v268, %v207
        %v276 = vmul.f32 %v268, %v208
        %v277 = vmul.f32 %v268, %v209
        %v278 = vmul.f32 %v268, %v210
        %v279 = vmul.f32 %v268, %v211
        %v280 = vmul.f32 %v268, %v212
        %v281 = vmul.f32 %v268, %v213
        %v282 = vmul.f32 %v268, %v214
        %v283 = vmul.f32 %v268, %v215
        %v284 = vmul.f32 %v268, %v216
        %v285 = vmul.f32 %v268, %v217
        %v286 = vmul.f32 %v268, %v218
        %v287 = vmul.f32 %v268, %v219
        %v288 = vmul.f32 %v268, %v220
        %v289 = vmul.f32 %v268, %v221
        %v290 = vmul.f32 %v268, %v222
        %v291 = vmul.f32 %v268, %v223
        %v292 = vmul.f32 %v268, %v224
        %v293 = vmul.f32 %v268, %v225
        %v294 = vmul.f32 %v268, %v226
        %v295 = vmul.f32 %v268, %v227
        %v296 = vmul.f32 %v268, %v228
        %v297 = vmul.f32 %v268, %v229
        %v298 = vmul.f32 %v268, %v230
        %v299 = vmul.f32 %v268, %v231
        %v300 = vmul.f32 %v268, %v232
        %v301 = vadd.f32 %v235, %v269
        %v302 = vadd.f32 %v236, %v270
        %v303 = vadd.f32 %v237, %v271
        %v304 = vadd.f32 %v238, %v272
        %v305 = vadd.f32 %v239, %v273
        %v306 = vadd.f32 %v240, %v274
        %v307 = vadd.f32 %v241, %v275
        %v308 = vadd.f32 %v242, %v276
        %v309 = vadd.f32 %v243, %v277
        %v310 = vadd.f32 %v244, %v278
        %v311 = vadd.f32 %v245, %v279
        %v312 = vadd.f32 %v246, %v280
        %v313 = vadd.f32 %v247, %v281
        %v314 = vadd.f32 %v248, %v282
        %v315 = vadd.f32 %v249, %v283
        %v316 = vadd.f32 %v250, %v284
        %v317 = vadd.f32 %v251, %v285
        %v318 = vadd.f32 %v252, %v286
        %v319 = vadd.f32 %v253, %v287
        %v320 = vadd.f32 %v254, %v288
        %v321 = vadd.f32 %v255, %v289
        %v322 = vadd.f32 %v256, %v290
        %v323 = vadd.f32 %v257, %v291
        %v324 = vadd.f32 %v258, %v292
        %v325 = vadd.f32 %v259, %v293
        %v326 = vadd.f32 %v260, %v294
        %v327 = vadd.f32 %v261, %v295
        %v328 = vadd.f32 %v262, %v296
        %v329 = vadd.f32 %v263, %v297
        %v330 = vadd.f32 %v264, %v298
        %v331 = vadd.f32 %v265, %v299
        %v332 = vadd.f32 %v266, %v300
        %s333 = sld [smem:[#allocation2 + $0x80]]
        %v334 = vstv %s333
        %v335 = vmul.f32 %v334, %v201
        %v336 = vmul.f32 %v334, %v202
        %v337 = vmul.f32 %v334, %v203
        %v338 = vmul.f32 %v334, %v204
        %v339 = vmul.f32 %v334, %v205
        %v340 = vmul.f32 %v334, %v206
        %v341 = vmul.f32 %v334, %v207
        %v342 = vmul.f32 %v334, %v208
        %v343 = vmul.f32 %v334, %v209
        %v344 = vmul.f32 %v334, %v210
        %v345 = vmul.f32 %v334, %v211
        %v346 = vmul.f32 %v334, %v212
        %v347 = vmul.f32 %v334, %v213
        %v348 = vmul.f32 %v334, %v214
        %v349 = vmul.f32 %v334, %v215
        %v350 = vmul.f32 %v334, %v216
        %v351 = vmul.f32 %v334, %v217
        %v352 = vmul.f32 %v334, %v218
        %v353 = vmul.f32 %v334, %v219
        %v354 = vmul.f32 %v334, %v220
        %v355 = vmul.f32 %v334, %v221
        %v356 = vmul.f32 %v334, %v222
        %v357 = vmul.f32 %v334, %v223
        %v358 = vmul.f32 %v334, %v224
        %v359 = vmul.f32 %v334, %v225
        %v360 = vmul.f32 %v334, %v226
        %v361 = vmul.f32 %v334, %v227
        %v362 = vmul.f32 %v334, %v228
        %v363 = vmul.f32 %v334, %v229
        %v364 = vmul.f32 %v334, %v230
        %v365 = vmul.f32 %v334, %v231
        %v366 = vmul.f32 %v334, %v232
        %s367 = sld [smem:[#allocation2 + $0x81]]
        %v368 = vstv %s367
        %v369 = vmul.f32 %v368, %v201
        %v370 = vmul.f32 %v368, %v202
        %v371 = vmul.f32 %v368, %v203
        %v372 = vmul.f32 %v368, %v204
        %v373 = vmul.f32 %v368, %v205
        %v374 = vmul.f32 %v368, %v206
        %v375 = vmul.f32 %v368, %v207
        %v376 = vmul.f32 %v368, %v208
        %v377 = vmul.f32 %v368, %v209
        %v378 = vmul.f32 %v368, %v210
        %v379 = vmul.f32 %v368, %v211
        %v380 = vmul.f32 %v368, %v212
        %v381 = vmul.f32 %v368, %v213
        %v382 = vmul.f32 %v368, %v214
        %v383 = vmul.f32 %v368, %v215
        %v384 = vmul.f32 %v368, %v216
        %v385 = vmul.f32 %v368, %v217
        %v386 = vmul.f32 %v368, %v218
        %v387 = vmul.f32 %v368, %v219
        %v388 = vmul.f32 %v368, %v220
        %v389 = vmul.f32 %v368, %v221
        %v390 = vmul.f32 %v368, %v222
        %v391 = vmul.f32 %v368, %v223
        %v392 = vmul.f32 %v368, %v224
        %v393 = vmul.f32 %v368, %v225
        %v394 = vmul.f32 %v368, %v226
        %v395 = vmul.f32 %v368, %v227
        %v396 = vmul.f32 %v368, %v228
        %v397 = vmul.f32 %v368, %v229
        %v398 = vmul.f32 %v368, %v230
        %v399 = vmul.f32 %v368, %v231
        %v400 = vmul.f32 %v368, %v232
        %v401 = vadd.f32 %v335, %v369
        %v402 = vadd.f32 %v336, %v370
        %v403 = vadd.f32 %v337, %v371
        %v404 = vadd.f32 %v338, %v372
        %v405 = vadd.f32 %v339, %v373
        %v406 = vadd.f32 %v340, %v374
        %v407 = vadd.f32 %v341, %v375
        %v408 = vadd.f32 %v342, %v376
        %v409 = vadd.f32 %v343, %v377
        %v410 = vadd.f32 %v344, %v378
        %v411 = vadd.f32 %v345, %v379
        %v412 = vadd.f32 %v346, %v380
        %v413 = vadd.f32 %v347, %v381
        %v414 = vadd.f32 %v348, %v382
        %v415 = vadd.f32 %v349, %v383
        %v416 = vadd.f32 %v350, %v384
        %v417 = vadd.f32 %v351, %v385
        %v418 = vadd.f32 %v352, %v386
        %v419 = vadd.f32 %v353, %v387
        %v420 = vadd.f32 %v354, %v388
        %v421 = vadd.f32 %v355, %v389
        %v422 = vadd.f32 %v356, %v390
        %v423 = vadd.f32 %v357, %v391
        %v424 = vadd.f32 %v358, %v392
        %v425 = vadd.f32 %v359, %v393
        %v426 = vadd.f32 %v360, %v394
        %v427 = vadd.f32 %v361, %v395
        %v428 = vadd.f32 %v362, %v396
        %v429 = vadd.f32 %v363, %v397
        %v430 = vadd.f32 %v364, %v398
        %v431 = vadd.f32 %v365, %v399
        %v432 = vadd.f32 %v366, %v400
        %s433 = sld [smem:[#allocation2 + $0x82]]
        %v434 = vstv %s433
        %v435 = vmul.f32 %v434, %v301
        %v436 = vmul.f32 %v434, %v302
        %v437 = vmul.f32 %v434, %v303
        %v438 = vmul.f32 %v434, %v304
        %v439 = vmul.f32 %v434, %v305
        %v440 = vmul.f32 %v434, %v306
        %v441 = vmul.f32 %v434, %v307
        %v442 = vmul.f32 %v434, %v308
        %v443 = vmul.f32 %v434, %v309
        %v444 = vmul.f32 %v434, %v310
        %v445 = vmul.f32 %v434, %v311
        %v446 = vmul.f32 %v434, %v312
        %v447 = vmul.f32 %v434, %v313
        %v448 = vmul.f32 %v434, %v314
        %v449 = vmul.f32 %v434, %v315
        %v450 = vmul.f32 %v434, %v316
        %v451 = vmul.f32 %v434, %v317
        %v452 = vmul.f32 %v434, %v318
        %v453 = vmul.f32 %v434, %v319
        %v454 = vmul.f32 %v434, %v320
        %v455 = vmul.f32 %v434, %v321
        %v456 = vmul.f32 %v434, %v322
        %v457 = vmul.f32 %v434, %v323
        %v458 = vmul.f32 %v434, %v324
        %v459 = vmul.f32 %v434, %v325
        %v460 = vmul.f32 %v434, %v326
        %v461 = vmul.f32 %v434, %v327
        %v462 = vmul.f32 %v434, %v328
        %v463 = vmul.f32 %v434, %v329
        %v464 = vmul.f32 %v434, %v330
        %v465 = vmul.f32 %v434, %v331
        %v466 = vmul.f32 %v434, %v332
        %v467 = vadd.f32 %v401, %v435
        %v468 = vadd.f32 %v402, %v436
        %v469 = vadd.f32 %v403, %v437
        %v470 = vadd.f32 %v404, %v438
        %v471 = vadd.f32 %v405, %v439
        %v472 = vadd.f32 %v406, %v440
        %v473 = vadd.f32 %v407, %v441
        %v474 = vadd.f32 %v408, %v442
        %v475 = vadd.f32 %v409, %v443
        %v476 = vadd.f32 %v410, %v444
        %v477 = vadd.f32 %v411, %v445
        %v478 = vadd.f32 %v412, %v446
        %v479 = vadd.f32 %v413, %v447
        %v480 = vadd.f32 %v414, %v448
        %v481 = vadd.f32 %v415, %v449
        %v482 = vadd.f32 %v416, %v450
        %v483 = vadd.f32 %v417, %v451
        %v484 = vadd.f32 %v418, %v452
        %v485 = vadd.f32 %v419, %v453
        %v486 = vadd.f32 %v420, %v454
        %v487 = vadd.f32 %v421, %v455
        %v488 = vadd.f32 %v422, %v456
        %v489 = vadd.f32 %v423, %v457
        %v490 = vadd.f32 %v424, %v458
        %v491 = vadd.f32 %v425, %v459
        %v492 = vadd.f32 %v426, %v460
        %v493 = vadd.f32 %v427, %v461
        %v494 = vadd.f32 %v428, %v462
        %v495 = vadd.f32 %v429, %v463
        %v496 = vadd.f32 %v430, %v464
        %v497 = vadd.f32 %v431, %v465
        %v498 = vadd.f32 %v432, %v466
        %s499 = sld [smem:[#allocation4]]
        %v500 = vstv %s499
        %v501 = vmul.f32 %v500, %v301
        %v502 = vmul.f32 %v500, %v302
        %v503 = vmul.f32 %v500, %v303
        %v504 = vmul.f32 %v500, %v304
        %v505 = vmul.f32 %v500, %v305
        %v506 = vmul.f32 %v500, %v306
        %v507 = vmul.f32 %v500, %v307
        %v508 = vmul.f32 %v500, %v308
        %v509 = vmul.f32 %v500, %v309
        %v510 = vmul.f32 %v500, %v310
        %v511 = vmul.f32 %v500, %v311
        %v512 = vmul.f32 %v500, %v312
        %v513 = vmul.f32 %v500, %v313
        %v514 = vmul.f32 %v500, %v314
        %v515 = vmul.f32 %v500, %v315
        %v516 = vmul.f32 %v500, %v316
        %v517 = vmul.f32 %v500, %v317
        %v518 = vmul.f32 %v500, %v318
        %v519 = vmul.f32 %v500, %v319
        %v520 = vmul.f32 %v500, %v320
        %v521 = vmul.f32 %v500, %v321
        %v522 = vmul.f32 %v500, %v322
        %v523 = vmul.f32 %v500, %v323
        %v524 = vmul.f32 %v500, %v324
        %v525 = vmul.f32 %v500, %v325
        %v526 = vmul.f32 %v500, %v326
        %v527 = vmul.f32 %v500, %v327
        %v528 = vmul.f32 %v500, %v328
        %v529 = vmul.f32 %v500, %v329
        %v530 = vmul.f32 %v500, %v330
        %v531 = vmul.f32 %v500, %v331
        %v532 = vmul.f32 %v500, %v332
        %s533 = sld [smem:[#allocation4 + $0x1]]
        %v534 = vstv %s533
        %v535 = vmul.f32 %v534, %v467
        %v536 = vmul.f32 %v534, %v468
        %v537 = vmul.f32 %v534, %v469
        %v538 = vmul.f32 %v534, %v470
        %v539 = vmul.f32 %v534, %v471
        %v540 = vmul.f32 %v534, %v472
        %v541 = vmul.f32 %v534, %v473
        %v542 = vmul.f32 %v534, %v474
        %v543 = vmul.f32 %v534, %v475
        %v544 = vmul.f32 %v534, %v476
        %v545 = vmul.f32 %v534, %v477
        %v546 = vmul.f32 %v534, %v478
        %v547 = vmul.f32 %v534, %v479
        %v548 = vmul.f32 %v534, %v480
        %v549 = vmul.f32 %v534, %v481
        %v550 = vmul.f32 %v534, %v482
        %v551 = vmul.f32 %v534, %v483
        %v552 = vmul.f32 %v534, %v484
        %v553 = vmul.f32 %v534, %v485
        %v554 = vmul.f32 %v534, %v486
        %v555 = vmul.f32 %v534, %v487
        %v556 = vmul.f32 %v534, %v488
        %v557 = vmul.f32 %v534, %v489
        %v558 = vmul.f32 %v534, %v490
        %v559 = vmul.f32 %v534, %v491
        %v560 = vmul.f32 %v534, %v492
        %v561 = vmul.f32 %v534, %v493
        %v562 = vmul.f32 %v534, %v494
        %v563 = vmul.f32 %v534, %v495
        %v564 = vmul.f32 %v534, %v496
        %v565 = vmul.f32 %v534, %v497
        %v566 = vmul.f32 %v534, %v498
        %599 = vrot.lane.b32.xlu0 %v535, 32
        %v600 = vpop.permute.xlu0 %599
        %601 = vrot.lane.b32.xlu0 %v536, 32
        %v602 = vpop.permute.xlu0 %601
        %603 = vrot.lane.b32.xlu0 %v537, 32
        %v604 = vpop.permute.xlu0 %603
        %605 = vrot.lane.b32.xlu0 %v538, 32
        %v606 = vpop.permute.xlu0 %605
        %607 = vrot.lane.b32.xlu0 %v539, 32
        %v608 = vpop.permute.xlu0 %607
        %609 = vrot.lane.b32.xlu0 %v540, 32
        %v610 = vpop.permute.xlu0 %609
        %611 = vrot.lane.b32.xlu0 %v541, 32
        %v612 = vpop.permute.xlu0 %611
        %613 = vrot.lane.b32.xlu0 %v542, 32
        %v614 = vpop.permute.xlu0 %613
        %615 = vrot.lane.b32.xlu0 %v543, 32
        %v616 = vpop.permute.xlu0 %615
        %617 = vrot.lane.b32.xlu0 %v544, 32
        %v618 = vpop.permute.xlu0 %617
        %619 = vrot.lane.b32.xlu0 %v545, 32
        %v620 = vpop.permute.xlu0 %619
        %621 = vrot.lane.b32.xlu0 %v546, 32
        %v622 = vpop.permute.xlu0 %621
        %623 = vrot.lane.b32.xlu0 %v547, 32
        %v624 = vpop.permute.xlu0 %623
        %625 = vrot.lane.b32.xlu0 %v548, 32
        %v626 = vpop.permute.xlu0 %625
        %627 = vrot.lane.b32.xlu0 %v549, 32
        %v628 = vpop.permute.xlu0 %627
        %629 = vrot.lane.b32.xlu0 %v550, 32
        %v630 = vpop.permute.xlu0 %629
        %631 = vrot.lane.b32.xlu0 %v551, 32
        %v632 = vpop.permute.xlu0 %631
        %633 = vrot.lane.b32.xlu0 %v552, 32
        %v634 = vpop.permute.xlu0 %633
        %635 = vrot.lane.b32.xlu0 %v553, 32
        %v636 = vpop.permute.xlu0 %635
        %637 = vrot.lane.b32.xlu0 %v554, 32
        %v638 = vpop.permute.xlu0 %637
        %639 = vrot.lane.b32.xlu0 %v555, 32
        %v640 = vpop.permute.xlu0 %639
        %641 = vrot.lane.b32.xlu0 %v556, 32
        %v642 = vpop.permute.xlu0 %641
        %643 = vrot.lane.b32.xlu0 %v557, 32
        %v644 = vpop.permute.xlu0 %643
        %645 = vrot.lane.b32.xlu0 %v558, 32
        %v646 = vpop.permute.xlu0 %645
        %647 = vrot.lane.b32.xlu0 %v559, 32
        %v648 = vpop.permute.xlu0 %647
        %649 = vrot.lane.b32.xlu0 %v560, 32
        %v650 = vpop.permute.xlu0 %649
        %651 = vrot.lane.b32.xlu0 %v561, 32
        %v652 = vpop.permute.xlu0 %651
        %653 = vrot.lane.b32.xlu0 %v562, 32
        %v654 = vpop.permute.xlu0 %653
        %655 = vrot.lane.b32.xlu0 %v563, 32
        %v656 = vpop.permute.xlu0 %655
        %657 = vrot.lane.b32.xlu0 %v564, 32
        %v658 = vpop.permute.xlu0 %657
        %659 = vrot.lane.b32.xlu0 %v565, 32
        %v660 = vpop.permute.xlu0 %659
        %661 = vrot.lane.b32.xlu0 %v566, 32
        %v662 = vpop.permute.xlu0 %661
        %vm695 = vcmask 261120
        %v696 = vsel %vm695, %v501, %v600
        %v697 = vsel %vm695, %v502, %v602
        %v698 = vsel %vm695, %v503, %v604
        %v699 = vsel %vm695, %v504, %v606
        %v700 = vsel %vm695, %v505, %v608
        %v701 = vsel %vm695, %v506, %v610
        %v702 = vsel %vm695, %v507, %v612
        %v703 = vsel %vm695, %v508, %v614
        %v704 = vsel %vm695, %v509, %v616
        %v705 = vsel %vm695, %v510, %v618
        %v706 = vsel %vm695, %v511, %v620
        %v707 = vsel %vm695, %v512, %v622
        %v708 = vsel %vm695, %v513, %v624
        %v709 = vsel %vm695, %v514, %v626
        %v710 = vsel %vm695, %v515, %v628
        %v711 = vsel %vm695, %v516, %v630
        %v712 = vsel %vm695, %v517, %v632
        %v713 = vsel %vm695, %v518, %v634
        %v714 = vsel %vm695, %v519, %v636
        %v715 = vsel %vm695, %v520, %v638
        %v716 = vsel %vm695, %v521, %v640
        %v717 = vsel %vm695, %v522, %v642
        %v718 = vsel %vm695, %v523, %v644
        %v719 = vsel %vm695, %v524, %v646
        %v720 = vsel %vm695, %v525, %v648
        %v721 = vsel %vm695, %v526, %v650
        %v722 = vsel %vm695, %v527, %v652
        %v723 = vsel %vm695, %v528, %v654
        %v724 = vsel %vm695, %v529, %v656
        %v725 = vsel %vm695, %v530, %v658
        %v726 = vsel %vm695, %v531, %v660
        %v727 = vsel %vm695, %v532, %v662
        %vm728 = vcmask 523264
        %729 = vst.msk [vmem:[%s199] sm:$0xff] %vm728, %v696
        %730 = vst.msk [vmem:[%s199 + $0x8] sm:$0xff] %vm728, %v697
        %731 = vst.msk [vmem:[%s199 + $0x10] sm:$0xff] %vm728, %v698
        %732 = vst.msk [vmem:[%s199 + $0x18] sm:$0xff] %vm728, %v699
        %733 = vst.msk [vmem:[%s199 + $0x20] sm:$0xff] %vm728, %v700
        %734 = vst.msk [vmem:[%s199 + $0x28] sm:$0xff] %vm728, %v701
        %735 = vst.msk [vmem:[%s199 + $0x30] sm:$0xff] %vm728, %v702
        %736 = vst.msk [vmem:[%s199 + $0x38] sm:$0xff] %vm728, %v703
        %737 = vst.msk [vmem:[%s199 + $0x40] sm:$0xff] %vm728, %v704
        %738 = vst.msk [vmem:[%s199 + $0x48] sm:$0xff] %vm728, %v705
        %739 = vst.msk [vmem:[%s199 + $0x50] sm:$0xff] %vm728, %v706
        %740 = vst.msk [vmem:[%s199 + $0x58] sm:$0xff] %vm728, %v707
        %741 = vst.msk [vmem:[%s199 + $0x60] sm:$0xff] %vm728, %v708
        %742 = vst.msk [vmem:[%s199 + $0x68] sm:$0xff] %vm728, %v709
        %743 = vst.msk [vmem:[%s199 + $0x70] sm:$0xff] %vm728, %v710
        %744 = vst.msk [vmem:[%s199 + $0x78] sm:$0xff] %vm728, %v711
        %745 = vst.msk [vmem:[%s199 + $0x80] sm:$0xff] %vm728, %v712
        %746 = vst.msk [vmem:[%s199 + $0x88] sm:$0xff] %vm728, %v713
        %747 = vst.msk [vmem:[%s199 + $0x90] sm:$0xff] %vm728, %v714
        %748 = vst.msk [vmem:[%s199 + $0x98] sm:$0xff] %vm728, %v715
        %749 = vst.msk [vmem:[%s199 + $0xa0] sm:$0xff] %vm728, %v716
        %750 = vst.msk [vmem:[%s199 + $0xa8] sm:$0xff] %vm728, %v717
        %751 = vst.msk [vmem:[%s199 + $0xb0] sm:$0xff] %vm728, %v718
        %752 = vst.msk [vmem:[%s199 + $0xb8] sm:$0xff] %vm728, %v719
        %753 = vst.msk [vmem:[%s199 + $0xc0] sm:$0xff] %vm728, %v720
        %754 = vst.msk [vmem:[%s199 + $0xc8] sm:$0xff] %vm728, %v721
        %755 = vst.msk [vmem:[%s199 + $0xd0] sm:$0xff] %vm728, %v722
        %756 = vst.msk [vmem:[%s199 + $0xd8] sm:$0xff] %vm728, %v723
        %757 = vst.msk [vmem:[%s199 + $0xe0] sm:$0xff] %vm728, %v724
        %758 = vst.msk [vmem:[%s199 + $0xe8] sm:$0xff] %vm728, %v725
        %759 = vst.msk [vmem:[%s199 + $0xf0] sm:$0xff] %vm728, %v726
        %760 = vst.msk [vmem:[%s199 + $0xf8] sm:$0xff] %vm728, %v727
        %s761 = smul.u32 32, %s16
        %p762 = scmp.lt.s32.totalorder %s761, 255
        %s763 = scalar_select %p762, %s761, 255
        %s764 = smul.addr %s763, 8
        %s765 = scalar_lea.vmem %s3, %s764
        // Predicated region
        $region41: #{search_stage_forward.8} parent=31 // pred_check
          %p766 = pneg %p102
        $region42: #{search_stage_forward.8} parent=31 // pred_check_branch
          %768 = sbr.rel (%p766) target = $region44
        $region43: #{search_stage_forward.8} parent=31 // pred_region
          %s769 = smul.u32 32, %s16
        $region44: #{search_stage_forward.8} parent=31 // pred_fallthru
          _
      $region32: #{search_stage_forward.8} parent=5 // pred_fallthru
        _
      %p770 = scmp.le.s32.totalorder 2, %s11
      // Predicated region
      $region45: #{search_stage_forward.8} parent=5 // pred_check
        %p771 = pneg %p770
      $region46: #{search_stage_forward.8} parent=5 // pred_check_branch
        %773 = sbr.rel (%p771) target = $region48
      $region47: #{search_stage_forward.8} parent=5 // pred_region
        %s774 = ssub.s32 %s11, 2
        // Predicated region
        $region49: #{search_stage_forward.8} parent=47 // pred_check
          %p775 = pneg %p108
        $region50: #{search_stage_forward.8} parent=47 // pred_check_branch
          %777 = sbr.rel (%p775) target = $region52
        $region51: #{search_stage_forward.8} parent=47 // pred_region
          %s778 = smul.u32 32, %s17
          %p779 = scmp.lt.s32.totalorder %s778, 255
          %s780 = scalar_select %p779, %s778, 255
          %s781 = smul.addr %s780, 8
          %s782 = scalar_lea.vmem %s3, %s781
        $region52: #{search_stage_forward.8} parent=47 // pred_fallthru
          _
      $region48: #{search_stage_forward.8} parent=5 // pred_fallthru
        _
    $region6: #{search_stage_forward.8} parent=1 // loop_footer
      %s15 = sadd.s32 1, %s11
    $region7: #{search_stage_forward.8} parent=1 // loop_footer_branch
      %10 = sbr.rel target = $region3
    $region8: #{search_stage_forward.8} parent=1 // loop_exit
      _
    %783 = vsyncpa [#allocation3], 1
    %s784 = scalar_lea.sflag [#allocation3], 1
    %785 = vsyncpa %s784, 1
    %786 = vsyncpa [#allocation5], 1

// kernel: search_stage_forward.7
$region0: #{search_stage_forward.7}
  #allocation0 [shape = 'u32[]', space=smem, size = 0x4, offset = 0x4, fixed_abs, tag = 'smem constant byte address 0x4 - core index']
  #allocation1 [shape = 'u32[72,128]{1,0:T(1,128)}', space=vmem, size = 0x9000, scoped, tag = 'internal scratch']
  %s0 = inlined_call_operand.vmem [shape: f32[2,34,34,3], index: 0, kind: input, shape index: {}]
  %s1 = inlined_call_operand.vmem [shape: bf16[9,3,32], index: 1, kind: input, shape index: {}]
  %s2 = inlined_call_operand.vmem [shape: f32[1,32], index: 2, kind: input, shape index: {}]
  %s3 = inlined_call_operand.vmem [shape: f32[1,32], index: 3, kind: input, shape index: {}]
  %s4 = inlined_call_operand.vmem [shape: f32[2,32,32,32], index: 4, kind: output, shape index: {}]
  %s5 = sld [smem:[#allocation0]]
  $region49: #{search_stage_forward.7} parent=0
    _
  %s7 = ssub.s32 1, %s5
  %s8 = scalar_select 0, %s7, %s5
  loop: start=0, step=1, limit=10
  $region2: #{search_stage_forward.7} parent=0 // loop_pre_header
    _
  $region3: #{search_stage_forward.7} parent=0 // loop_header
    %s10 = sphi 0, %s14
    %p11 = scmp.ge.s32.totalorder %s10, 10
    %s17 = sphi 0, %s29
    %s18 = sphi 0, %s25
    %s19 = sphi 0, %s17
    %s20 = sphi 0, %s18
    %s21 = sphi 0, %s19
    %s22 = sphi 0, %s20
    %s32 = sphi 0, %s34
    %s35 = sphi 0, %s32
    %s36 = sphi 0, %s35
    %s52 = sphi 0, %s36
    %s56 = sphi 0, %s56
    %s58 = sphi 0, %s56
    %s59 = sphi 0, %s58
    %s73 = sphi 0, %s59
    %s77 = sphi 0, %s77
    %s79 = sphi 0, %s77
    %s80 = sphi 0, %s79
    %s94 = sphi 0, %s80
    %s98 = sphi 0, %s98
    %s100 = sphi 0, %s98
    %s101 = sphi 0, %s100
    %s115 = sphi 0, %s101
    %s123 = sphi 0, %s125
    %s126 = sphi 0, %s123
    %s127 = sphi 0, %s126
    %s143 = sphi 0, %s127
  $region4: #{search_stage_forward.7} parent=0 // loop_header_branch
    %13 = sbr.rel (%p11) target = $region8
  $region5: #{search_stage_forward.7} parent=0 // loop_body
    %s15 = ssub.s32 %s10, 1
    %s16 = ssub.s32 %s10, 2
    %s23 = sadd.s32 1, %s18
    %p24 = scmp.ge.s32.totalorder %s23, 4
    %s25 = scalar_select %p24, 0, %s23
    %s26 = sadd.s32 1, %s17
    %s27 = scalar_select %p24, %s26, %s17
    %p28 = scmp.ge.s32.totalorder %s27, 2
    %s29 = scalar_select %p28, 0, %s27
    %s30 = ssub.s32 %s17, %s29
    %p31 = scmp.eq.s32.totalorder %s30, 0
    %s33 = sadd.s32 %s32, 1
    %s34 = scalar_select %p31, %s32, %s33
    %p37 = pneg %p31
    %p38 = scmp.eq.s32.totalorder %s10, 7
    %p39 = por %p37, %p38
    %p40 = scmp.ne.s32.totalorder %s32, %s35
    %p41 = scmp.eq.s32.totalorder %s10, 0
    %p42 = por %p40, %p41
    %p43 = scmp.ne.s32.totalorder %s32, %s35
    %p44 = scmp.eq.s32.totalorder %s15, 7
    %p45 = por %p43, %p44
    %p46 = scmp.ne.s32.totalorder %s35, %s36
    %p47 = scmp.eq.s32.totalorder %s15, 0
    %p48 = por %p46, %p47
    %p49 = scmp.ne.s32.totalorder %s35, %s36
    %p50 = scmp.eq.s32.totalorder %s16, 7
    %p51 = por %p49, %p50
    %p53 = scmp.ne.s32.totalorder %s36, %s52
    %p54 = scmp.eq.s32.totalorder %s16, 0
    %p55 = por %p53, %p54
    %s57 = sadd.s32 %s56, 1
    %p60 = scmp.eq.s32.totalorder %s10, 7
    %p61 = scmp.ne.s32.totalorder %s56, %s58
    %p62 = scmp.eq.s32.totalorder %s10, 0
    %p63 = por %p61, %p62
    %p64 = scmp.ne.s32.totalorder %s56, %s58
    %p65 = scmp.eq.s32.totalorder %s15, 7
    %p66 = por %p64, %p65
    %p67 = scmp.ne.s32.totalorder %s58, %s59
    %p68 = scmp.eq.s32.totalorder %s15, 0
    %p69 = por %p67, %p68
    %p70 = scmp.ne.s32.totalorder %s58, %s59
    %p71 = scmp.eq.s32.totalorder %s16, 7
    %p72 = por %p70, %p71
    %p74 = scmp.ne.s32.totalorder %s59, %s73
    %p75 = scmp.eq.s32.totalorder %s16, 0
    %p76 = por %p74, %p75
    %s78 = sadd.s32 %s77, 1
    %p81 = scmp.eq.s32.totalorder %s10, 7
    %p82 = scmp.ne.s32.totalorder %s77, %s79
    %p83 = scmp.eq.s32.totalorder %s10, 0
    %p84 = por %p82, %p83
    %p85 = scmp.ne.s32.totalorder %s77, %s79
    %p86 = scmp.eq.s32.totalorder %s15, 7
    %p87 = por %p85, %p86
    %p88 = scmp.ne.s32.totalorder %s79, %s80
    %p89 = scmp.eq.s32.totalorder %s15, 0
    %p90 = por %p88, %p89
    %p91 = scmp.ne.s32.totalorder %s79, %s80
    %p92 = scmp.eq.s32.totalorder %s16, 7
    %p93 = por %p91, %p92
    %p95 = scmp.ne.s32.totalorder %s80, %s94
    %p96 = scmp.eq.s32.totalorder %s16, 0
    %p97 = por %p95, %p96
    %s99 = sadd.s32 %s98, 1
    %p102 = scmp.eq.s32.totalorder %s10, 7
    %p103 = scmp.ne.s32.totalorder %s98, %s100
    %p104 = scmp.eq.s32.totalorder %s10, 0
    %p105 = por %p103, %p104
    %p106 = scmp.ne.s32.totalorder %s98, %s100
    %p107 = scmp.eq.s32.totalorder %s15, 7
    %p108 = por %p106, %p107
    %p109 = scmp.ne.s32.totalorder %s100, %s101
    %p110 = scmp.eq.s32.totalorder %s15, 0
    %p111 = por %p109, %p110
    %p112 = scmp.ne.s32.totalorder %s100, %s101
    %p113 = scmp.eq.s32.totalorder %s16, 7
    %p114 = por %p112, %p113
    %p116 = scmp.ne.s32.totalorder %s101, %s115
    %p117 = scmp.eq.s32.totalorder %s16, 0
    %p118 = por %p116, %p117
    %s119 = ssub.s32 %s17, %s29
    %s120 = ssub.s32 %s18, %s25
    %s121 = sor.u32 %s119, %s120
    %p122 = scmp.eq.s32.totalorder %s121, 0
    %s124 = sadd.s32 %s123, 1
    %s125 = scalar_select %p122, %s123, %s124
    %p128 = pneg %p122
    %p129 = scmp.eq.s32.totalorder %s10, 7
    %p130 = por %p128, %p129
    %p131 = scmp.ne.s32.totalorder %s123, %s126
    %p132 = scmp.eq.s32.totalorder %s10, 0
    %p133 = por %p131, %p132
    %p134 = scmp.ne.s32.totalorder %s123, %s126
    %p135 = scmp.eq.s32.totalorder %s15, 7
    %p136 = por %p134, %p135
    %p137 = scmp.ne.s32.totalorder %s126, %s127
    %p138 = scmp.eq.s32.totalorder %s15, 0
    %p139 = por %p137, %p138
    %p140 = scmp.ne.s32.totalorder %s126, %s127
    %p141 = scmp.eq.s32.totalorder %s16, 7
    %p142 = por %p140, %p141
    %p144 = scmp.ne.s32.totalorder %s127, %s143
    %p145 = scmp.eq.s32.totalorder %s16, 0
    %p146 = por %p144, %p145
    %p147 = scmp.le.s32.totalorder 1, %s10
    %p148 = scmp.lt.s32.totalorder %s10, 9
    %p149 = pnand %p147, %p148
    %p150 = pneg %p149
    // Predicated region
    $region9: #{search_stage_forward.7} parent=5 // pred_check
      _
    $region10: #{search_stage_forward.7} parent=5 // pred_check_branch
      %152 = sbr.rel (%p149) target = $region12
    $region11: #{search_stage_forward.7} parent=5 // pred_region
      %s153 = ssub.s32 %s10, 1
      // Predicated region
      $region13: #{search_stage_forward.7} parent=11 // pred_check
        %p154 = pneg %p69
      $region14: #{search_stage_forward.7} parent=11 // pred_check_branch
        %156 = sbr.rel (%p154) target = $region16
      $region15: #{search_stage_forward.7} parent=11 // pred_region
        _
      $region16: #{search_stage_forward.7} parent=11 // pred_fallthru
        _
      // Predicated region
      $region17: #{search_stage_forward.7} parent=11 // pred_check
        %p157 = pneg %p90
      $region18: #{search_stage_forward.7} parent=11 // pred_check_branch
        %159 = sbr.rel (%p157) target = $region20
      $region19: #{search_stage_forward.7} parent=11 // pred_region
        _
      $region20: #{search_stage_forward.7} parent=11 // pred_fallthru
        _
      // Predicated region
      $region21: #{search_stage_forward.7} parent=11 // pred_check
        %p160 = pneg %p111
      $region22: #{search_stage_forward.7} parent=11 // pred_check_branch
        %162 = sbr.rel (%p160) target = $region24
      $region23: #{search_stage_forward.7} parent=11 // pred_region
        _
      $region24: #{search_stage_forward.7} parent=11 // pred_fallthru
        _
    $region12: #{search_stage_forward.7} parent=5 // pred_fallthru
      _
    %p163 = scmp.lt.s32.totalorder %s10, 8
    // Predicated region
    $region25: #{search_stage_forward.7} parent=5 // pred_check
      %p164 = pneg %p163
    $region26: #{search_stage_forward.7} parent=5 // pred_check_branch
      %166 = sbr.rel (%p164) target = $region28
    $region27: #{search_stage_forward.7} parent=5 // pred_region
      // Predicated region
      $region29: #{search_stage_forward.7} parent=27 // pred_check
        %p167 = pneg %p42
      $region30: #{search_stage_forward.7} parent=27 // pred_check_branch
        %169 = sbr.rel (%p167) target = $region32
      $region31: #{search_stage_forward.7} parent=27 // pred_region
        %p170 = scmp.lt.s32.totalorder %s17, 1
        %s171 = scalar_select %p170, %s17, 1
        %s172 = smul.addr %s171, 170
        %s173 = smul.addr %s172, 8
        %s174 = scalar_lea.vmem %s0, %s173
      $region32: #{search_stage_forward.7} parent=27 // pred_fallthru
        _
    $region28: #{search_stage_forward.7} parent=5 // pred_fallthru
      _
    %p175 = scmp.le.s32.totalorder 1, %s10
    %p176 = scmp.lt.s32.totalorder %s10, 9
    %p177 = pnand %p175, %p176
    %p178 = pneg %p177
    // Predicated region
    $region33: #{search_stage_forward.7} parent=5 // pred_check
      _
    $region34: #{search_stage_forward.7} parent=5 // pred_check_branch
      %180 = sbr.rel (%p177) target = $region36
    $region35: #{search_stage_forward.7} parent=5 // pred_region
      %s181 = ssub.s32 %s10, 1
      %p182 = scmp.lt.s32.totalorder %s19, 1
      %s183 = scalar_select %p182, %s19, 1
      %s184 = smul.addr %s183, 170
      %s185 = smul.addr %s184, 8
      %s186 = scalar_lea.vmem %s0, %s185
      %p187 = pneg %p48
      %p188 = pneg %p45
      %p189 = pneg %p69
      %p190 = pneg %p66
      %p191 = pneg %p90
      %p192 = pneg %p87
      %p193 = pneg %p111
      %p194 = pneg %p108
      %p195 = pneg %p139
      %p196 = pneg %p136
      %s197 = smul.u32 8, %s20
      %p198 = scmp.lt.s32.totalorder %s19, 1
      %s199 = scalar_select %p198, %s19, 1
      %p200 = scmp.lt.s32.totalorder %s197, 31
      %s201 = scalar_select %p200, %s197, 31
      %s202 = smul.addr %s201, 4
      %s203 = smul.addr %s199, 128
      %s204 = sadd.s32 %s202, %s203
      %s205 = smul.addr %s204, 8
      %s206 = scalar_lea.vmem %s4, %s205
      %p207 = scmp.lt.s32.totalorder %s19, 1
      %s208 = scalar_select %p207, %s19, 1
      %s209 = smul.addr %s208, 170
      %s210 = smul.addr %s209, 8
      %s211 = scalar_lea.vmem %s0, %s210
      %s212 = smul.u32 8, %s20
      %p213 = scmp.lt.s32.totalorder %s19, 1
      %s214 = scalar_select %p213, %s19, 1
      %p215 = scmp.lt.s32.totalorder %s212, 31
      %s216 = scalar_select %p215, %s212, 31
      %s217 = smul.addr %s216, 4
      %s218 = smul.addr %s214, 128
      %s219 = sadd.s32 %s217, %s218
      %s220 = smul.addr %s219, 8
      %s221 = scalar_lea.vmem %s4, %s220
      %s222 = smul.u32 8, %s20
      %s224 = smul.u32 %s20, 8
      %s225 = smul.u32 %s224, 40
      %s226 = scalar_lea.vmem %s211, %s225
      %v227 = vld [vmem:[%s226] sm:$0xff]
      %v228 = vld [vmem:[%s226 + $0x8] sm:$0xff]
      %v229 = vld [vmem:[%s226 + $0x10] sm:$0xff]
      %v230 = vld [vmem:[%s226 + $0x18] sm:$0xff]
      %v231 = vld [vmem:[%s226 + $0x28] sm:$0xff]
      %v232 = vld [vmem:[%s226 + $0x30] sm:$0xff]
      %v233 = vld [vmem:[%s226 + $0x38] sm:$0xff]
      %v234 = vld [vmem:[%s226 + $0x40] sm:$0xff]
      %v235 = vld [vmem:[%s226 + $0x50] sm:$0xff]
      %v236 = vld [vmem:[%s226 + $0x58] sm:$0xff]
      %v237 = vld [vmem:[%s226 + $0x60] sm:$0xff]
      %v238 = vld [vmem:[%s226 + $0x68] sm:$0xff]
      %v239 = vld [vmem:[%s226 + $0x78] sm:$0xff]
      %v240 = vld [vmem:[%s226 + $0x80] sm:$0xff]
      %v241 = vld [vmem:[%s226 + $0x88] sm:$0xff]
      %v242 = vld [vmem:[%s226 + $0x90] sm:$0xff]
      %v243 = vld [vmem:[%s226 + $0xa0] sm:$0xff]
      %v244 = vld [vmem:[%s226 + $0xa8] sm:$0xff]
      %v245 = vld [vmem:[%s226 + $0xb0] sm:$0xff]
      %v246 = vld [vmem:[%s226 + $0xb8] sm:$0xff]
      %v247 = vld [vmem:[%s226 + $0xc8] sm:$0xff]
      %v248 = vld [vmem:[%s226 + $0xd0] sm:$0xff]
      %v249 = vld [vmem:[%s226 + $0xd8] sm:$0xff]
      %v250 = vld [vmem:[%s226 + $0xe0] sm:$0xff]
      %v251 = vld [vmem:[%s226 + $0xf0] sm:$0xff]
      %v252 = vld [vmem:[%s226 + $0xf8] sm:$0xff]
      %v253 = vld [vmem:[%s226 + $0x100] sm:$0xff]
      %v254 = vld [vmem:[%s226 + $0x108] sm:$0xff]
      %v255 = vld [vmem:[%s226 + $0x118] sm:$0xff]
      %v256 = vld [vmem:[%s226 + $0x120] sm:$0xff]
      %v257 = vld [vmem:[%s226 + $0x128] sm:$0xff]
      %v258 = vld [vmem:[%s226 + $0x130] sm:$0xff]
      %v259 = vpack.c.bf16 %v228, %v227
      %v260 = vpack.c.bf16 %v230, %v229
      %v261 = vpack.c.bf16 %v232, %v231
      %v262 = vpack.c.bf16 %v234, %v233
      %v263 = vpack.c.bf16 %v236, %v235
      %v264 = vpack.c.bf16 %v238, %v237
      %v265 = vpack.c.bf16 %v240, %v239
      %v266 = vpack.c.bf16 %v242, %v241
      %v267 = vpack.c.bf16 %v244, %v243
      %v268 = vpack.c.bf16 %v246, %v245
      %v269 = vpack.c.bf16 %v248, %v247
      %v270 = vpack.c.bf16 %v250, %v249
      %v271 = vpack.c.bf16 %v252, %v251
      %v272 = vpack.c.bf16 %v254, %v253
      %v273 = vpack.c.bf16 %v256, %v255
      %v274 = vpack.c.bf16 %v258, %v257
      %v275 = vld [vmem:[%s1] sm:$0x3]
      %v276 = vld [vmem:[%s226 + $0x1] sm:$0xff]
      %v277 = vld [vmem:[%s226 + $0x9] sm:$0xff]
      %v278 = vld [vmem:[%s226 + $0x11] sm:$0xff]
      %v279 = vld [vmem:[%s226 + $0x19] sm:$0xff]
      %v280 = vld [vmem:[%s226 + $0x29] sm:$0xff]
      %v281 = vld [vmem:[%s226 + $0x31] sm:$0xff]
      %v282 = vld [vmem:[%s226 + $0x39] sm:$0xff]
      %v283 = vld [vmem:[%s226 + $0x41] sm:$0xff]
      %v284 = vld [vmem:[%s226 + $0x51] sm:$0xff]
      %v285 = vld [vmem:[%s226 + $0x59] sm:$0xff]
      %v286 = vld [vmem:[%s226 + $0x61] sm:$0xff]
      %v287 = vld [vmem:[%s226 + $0x69] sm:$0xff]
      %v288 = vld [vmem:[%s226 + $0x79] sm:$0xff]
      %v289 = vld [vmem:[%s226 + $0x81] sm:$0xff]
      %v290 = vld [vmem:[%s226 + $0x89] sm:$0xff]
      %v291 = vld [vmem:[%s226 + $0x91] sm:$0xff]
      %v292 = vld [vmem:[%s226 + $0xa1] sm:$0xff]
      %v293 = vld [vmem:[%s226 + $0xa9] sm:$0xff]
      %v294 = vld [vmem:[%s226 + $0xb1] sm:$0xff]
      %v295 = vld [vmem:[%s226 + $0xb9] sm:$0xff]
      %v296 = vld [vmem:[%s226 + $0xc9] sm:$0xff]
      %v297 = vld [vmem:[%s226 + $0xd1] sm:$0xff]
      %v298 = vld [vmem:[%s226 + $0xd9] sm:$0xff]
      %v299 = vld [vmem:[%s226 + $0xe1] sm:$0xff]
      %v300 = vld [vmem:[%s226 + $0xf1] sm:$0xff]
      %v301 = vld [vmem:[%s226 + $0xf9] sm:$0xff]
      %v302 = vld [vmem:[%s226 + $0x101] sm:$0xff]
      %v303 = vld [vmem:[%s226 + $0x109] sm:$0xff]
      %v304 = vld [vmem:[%s226 + $0x119] sm:$0xff]
      %v305 = vld [vmem:[%s226 + $0x121] sm:$0xff]
      %v306 = vld [vmem:[%s226 + $0x129] sm:$0xff]
      %v307 = vld [vmem:[%s226 + $0x131] sm:$0xff]
      %v308 = vpack.c.bf16 %v277, %v276
      %v309 = vpack.c.bf16 %v279, %v278
      %v310 = vpack.c.bf16 %v281, %v280
      %v311 = vpack.c.bf16 %v283, %v282
      %v312 = vpack.c.bf16 %v285, %v284
      %v313 = vpack.c.bf16 %v287, %v286
      %v314 = vpack.c.bf16 %v289, %v288
      %v315 = vpack.c.bf16 %v291, %v290
      %v316 = vpack.c.bf16 %v293, %v292
      %v317 = vpack.c.bf16 %v295, %v294
      %v318 = vpack.c.bf16 %v297, %v296
      %v319 = vpack.c.bf16 %v299, %v298
      %v320 = vpack.c.bf16 %v301, %v300
      %v321 = vpack.c.bf16 %v303, %v302
      %v322 = vpack.c.bf16 %v305, %v304
      %v323 = vpack.c.bf16 %v307, %v306
      %s324 = scalar_lea.vmem %s1, 2
      %v325 = vld [vmem:[%s324] sm:$0x3]
      %vm326 = vcmask 23552
      %v328 = vsel %vm326, %v308, 0
      %v331 = vsel %vm326, %v309, 0
      %v334 = vsel %vm326, %v310, 0
      %v337 = vsel %vm326, %v311, 0
      %v340 = vsel %vm326, %v312, 0
      %v343 = vsel %vm326, %v313, 0
      %v346 = vsel %vm326, %v314, 0
      %v349 = vsel %vm326, %v315, 0
      %v352 = vsel %vm326, %v316, 0
      %v355 = vsel %vm326, %v317, 0
      %v358 = vsel %vm326, %v318, 0
      %v361 = vsel %vm326, %v319, 0
      %v364 = vsel %vm326, %v320, 0
      %v367 = vsel %vm326, %v321, 0
      %v370 = vsel %vm326, %v322, 0
      %v373 = vsel %vm326, %v323, 0
      %vm375 = vcmask 1040384
      %vm376 = vcmask 1041408
      %v377 = vsel %vm375, 4294967295, 65535
      %v378 = vsel %vm376, %v377, 0
      %v380 = vand.u32 %v325, %v378
      %382 = vmatpush.bf16.msra.mxu0 0
      %383 = vmatpush.bf16.msra.mxu0 0
      %384 = vmatpush.bf16.msra.mxu0 0
      %385 = vmatpush.bf16.msra.mxu0 0
      %386 = vmatpush.bf16.msra.mxu0 0
      %387 = vmatpush.bf16.msra.mxu0 0
      %388 = vmatpush.bf16.msra.mxu0 0
      %389 = vmatpush.bf16.msra.mxu0 %v380
      %390 = vmatmul.bf16.gmra.mxu0 %v328
      %v391 = vpop.f32.mrf.mxu0
      %v392 = vadd.f32 0.0, %v391
      %v393 = vpop.f32.mrf.mxu0
      %v394 = vadd.f32 0.0, %v393
      %395 = vmatmul.bf16.gmra.mxu0 %v331
      %v396 = vpop.f32.mrf.mxu0
      %v397 = vadd.f32 0.0, %v396
      %v398 = vpop.f32.mrf.mxu0
      %v399 = vadd.f32 0.0, %v398
      %400 = vmatmul.bf16.gmra.mxu0 %v334
      %v401 = vpop.f32.mrf.mxu0
      %v402 = vadd.f32 0.0, %v401
      %v403 = vpop.f32.mrf.mxu0
      %v404 = vadd.f32 0.0, %v403
      %405 = vmatmul.bf16.gmra.mxu0 %v337
      %v406 = vpop.f32.mrf.mxu0
      %v407 = vadd.f32 0.0, %v406
      %v408 = vpop.f32.mrf.mxu0
      %v409 = vadd.f32 0.0, %v408
      %410 = vmatmul.bf16.gmra.mxu0 %v340
      %v411 = vpop.f32.mrf.mxu0
      %v412 = vadd.f32 0.0, %v411
      %v413 = vpop.f32.mrf.mxu0
      %v414 = vadd.f32 0.0, %v413
      %415 = vmatmul.bf16.gmra.mxu0 %v343
      %v416 = vpop.f32.mrf.mxu0
      %v417 = vadd.f32 0.0, %v416
      %v418 = vpop.f32.mrf.mxu0
      %v419 = vadd.f32 0.0, %v418
      %420 = vmatmul.bf16.gmra.mxu0 %v346
      %v421 = vpop.f32.mrf.mxu0
      %v422 = vadd.f32 0.0, %v421
      %v423 = vpop.f32.mrf.mxu0
      %v424 = vadd.f32 0.0, %v423
      %425 = vmatmul.bf16.gmra.mxu0 %v349
      %v426 = vpop.f32.mrf.mxu0
      %v427 = vadd.f32 0.0, %v426
      %v428 = vpop.f32.mrf.mxu0
      %v429 = vadd.f32 0.0, %v428
      %430 = vmatmul.bf16.gmra.mxu0 %v352
      %v431 = vpop.f32.mrf.mxu0
      %v432 = vadd.f32 0.0, %v431
      %v433 = vpop.f32.mrf.mxu0
      %v434 = vadd.f32 0.0, %v433
      %435 = vmatmul.bf16.gmra.mxu0 %v355
      %v436 = vpop.f32.mrf.mxu0
      %v437 = vadd.f32 0.0, %v436
      %v438 = vpop.f32.mrf.mxu0
      %v439 = vadd.f32 0.0, %v438
      %440 = vmatmul.bf16.gmra.mxu0 %v358
      %v441 = vpop.f32.mrf.mxu0
      %v442 = vadd.f32 0.0, %v441
      %v443 = vpop.f32.mrf.mxu0
      %v444 = vadd.f32 0.0, %v443
      %445 = vmatmul.bf16.gmra.mxu0 %v361
      %v446 = vpop.f32.mrf.mxu0
      %v447 = vadd.f32 0.0, %v446
      %v448 = vpop.f32.mrf.mxu0
      %v449 = vadd.f32 0.0, %v448
      %450 = vmatmul.bf16.gmra.mxu0 %v364
      %v451 = vpop.f32.mrf.mxu0
      %v452 = vadd.f32 0.0, %v451
      %v453 = vpop.f32.mrf.mxu0
      %v454 = vadd.f32 0.0, %v453
      %455 = vmatmul.bf16.gmra.mxu0 %v367
      %v456 = vpop.f32.mrf.mxu0
      %v457 = vadd.f32 0.0, %v456
      %v458 = vpop.f32.mrf.mxu0
      %v459 = vadd.f32 0.0, %v458
      %460 = vmatmul.bf16.gmra.mxu0 %v370
      %v461 = vpop.f32.mrf.mxu0
      %v462 = vadd.f32 0.0, %v461
      %v463 = vpop.f32.mrf.mxu0
      %v464 = vadd.f32 0.0, %v463
      %465 = vmatmul.bf16.gmra.mxu0 %v373
      %v466 = vpop.f32.mrf.mxu0
      %v467 = vadd.f32 0.0, %v466
      %v468 = vpop.f32.mrf.mxu0
      %v469 = vadd.f32 0.0, %v468
      %470 = vdwg.mxu0
      %v472 = vsel %vm326, %v259, 0
      %v475 = vsel %vm326, %v260, 0
      %v478 = vsel %vm326, %v261, 0
      %v481 = vsel %vm326, %v262, 0
      %v484 = vsel %vm326, %v263, 0
      %v487 = vsel %vm326, %v264, 0
      %v490 = vsel %vm326, %v265, 0
      %v493 = vsel %vm326, %v266, 0
      %v496 = vsel %vm326, %v267, 0
      %v499 = vsel %vm326, %v268, 0
      %v502 = vsel %vm326, %v269, 0
      %v505 = vsel %vm326, %v270, 0
      %v508 = vsel %vm326, %v271, 0
      %v511 = vsel %vm326, %v272, 0
      %v514 = vsel %vm326, %v273, 0
      %v517 = vsel %vm326, %v274, 0
      %v520 = vand.u32 %v275, %v378
      %522 = vmatpush.bf16.msra.mxu0 0
      %523 = vmatpush.bf16.msra.mxu0 0
      %524 = vmatpush.bf16.msra.mxu0 0
      %525 = vmatpush.bf16.msra.mxu0 0
      %526 = vmatpush.bf16.msra.mxu0 0
      %527 = vmatpush.bf16.msra.mxu0 0
      %528 = vmatpush.bf16.msra.mxu0 0
      %529 = vmatpush.bf16.msra.mxu0 %v520
      %530 = vmatmul.bf16.gmra.mxu0 %v472
      %v531 = vpop.f32.mrf.mxu0
      %v532 = vadd.f32 %v392, %v531
      %v533 = vpop.f32.mrf.mxu0
      %v534 = vadd.f32 %v394, %v533
      %535 = vmatmul.bf16.gmra.mxu0 %v475
      %v536 = vpop.f32.mrf.mxu0
      %v537 = vadd.f32 %v397, %v536
      %v538 = vpop.f32.mrf.mxu0
      %v539 = vadd.f32 %v399, %v538
      %540 = vmatmul.bf16.gmra.mxu0 %v478
      %v541 = vpop.f32.mrf.mxu0
      %v542 = vadd.f32 %v402, %v541
      %v543 = vpop.f32.mrf.mxu0
      %v544 = vadd.f32 %v404, %v543
      %545 = vmatmul.bf16.gmra.mxu0 %v481
      %v546 = vpop.f32.mrf.mxu0
      %v547 = vadd.f32 %v407, %v546
      %v548 = vpop.f32.mrf.mxu0
      %v549 = vadd.f32 %v409, %v548
      %550 = vmatmul.bf16.gmra.mxu0 %v484
      %v551 = vpop.f32.mrf.mxu0
      %v552 = vadd.f32 %v412, %v551
      %v553 = vpop.f32.mrf.mxu0
      %v554 = vadd.f32 %v414, %v553
      %555 = vmatmul.bf16.gmra.mxu0 %v487
      %v556 = vpop.f32.mrf.mxu0
      %v557 = vadd.f32 %v417, %v556
      %v558 = vpop.f32.mrf.mxu0
      %v559 = vadd.f32 %v419, %v558
      %560 = vmatmul.bf16.gmra.mxu0 %v490
      %v561 = vpop.f32.mrf.mxu0
      %v562 = vadd.f32 %v422, %v561
      %v563 = vpop.f32.mrf.mxu0
      %v564 = vadd.f32 %v424, %v563
      %565 = vmatmul.bf16.gmra.mxu0 %v493
      %v566 = vpop.f32.mrf.mxu0
      %v567 = vadd.f32 %v427, %v566
      %v568 = vpop.f32.mrf.mxu0
      %v569 = vadd.f32 %v429, %v568
      %570 = vmatmul.bf16.gmra.mxu0 %v496
      %v571 = vpop.f32.mrf.mxu0
      %v572 = vadd.f32 %v432, %v571
      %v573 = vpop.f32.mrf.mxu0
      %v574 = vadd.f32 %v434, %v573
      %575 = vmatmul.bf16.gmra.mxu0 %v499
      %v576 = vpop.f32.mrf.mxu0
      %v577 = vadd.f32 %v437, %v576
      %v578 = vpop.f32.mrf.mxu0
      %v579 = vadd.f32 %v439, %v578
      %580 = vmatmul.bf16.gmra.mxu0 %v502
      %v581 = vpop.f32.mrf.mxu0
      %v582 = vadd.f32 %v442, %v581
      %v583 = vpop.f32.mrf.mxu0
      %v584 = vadd.f32 %v444, %v583
      %585 = vmatmul.bf16.gmra.mxu0 %v505
      %v586 = vpop.f32.mrf.mxu0
      %v587 = vadd.f32 %v447, %v586
      %v588 = vpop.f32.mrf.mxu0
      %v589 = vadd.f32 %v449, %v588
      %590 = vmatmul.bf16.gmra.mxu0 %v508
      %v591 = vpop.f32.mrf.mxu0
      %v592 = vadd.f32 %v452, %v591
      %v593 = vpop.f32.mrf.mxu0
      %v594 = vadd.f32 %v454, %v593
      %595 = vmatmul.bf16.gmra.mxu0 %v511
      %v596 = vpop.f32.mrf.mxu0
      %v597 = vadd.f32 %v457, %v596
      %v598 = vpop.f32.mrf.mxu0
      %v599 = vadd.f32 %v459, %v598
      %600 = vmatmul.bf16.gmra.mxu0 %v514
      %v601 = vpop.f32.mrf.mxu0
      %v602 = vadd.f32 %v462, %v601
      %v603 = vpop.f32.mrf.mxu0
      %v604 = vadd.f32 %v464, %v603
      %605 = vmatmul.bf16.gmra.mxu0 %v517
      %v606 = vpop.f32.mrf.mxu0
      %v607 = vadd.f32 %v467, %v606
      %v608 = vpop.f32.mrf.mxu0
      %v609 = vadd.f32 %v469, %v608
      %610 = vdwg.mxu0
      %v611 = vld [vmem:[%s226 + $0x2] sm:$0xff]
      %v612 = vld [vmem:[%s226 + $0xa] sm:$0xff]
      %v613 = vld [vmem:[%s226 + $0x12] sm:$0xff]
      %v614 = vld [vmem:[%s226 + $0x1a] sm:$0xff]
      %v615 = vld [vmem:[%s226 + $0x2a] sm:$0xff]
      %v616 = vld [vmem:[%s226 + $0x32] sm:$0xff]
      %v617 = vld [vmem:[%s226 + $0x3a] sm:$0xff]
      %v618 = vld [vmem:[%s226 + $0x42] sm:$0xff]
      %v619 = vld [vmem:[%s226 + $0x52] sm:$0xff]
      %v620 = vld [vmem:[%s226 + $0x5a] sm:$0xff]
      %v621 = vld [vmem:[%s226 + $0x62] sm:$0xff]
      %v622 = vld [vmem:[%s226 + $0x6a] sm:$0xff]
      %v623 = vld [vmem:[%s226 + $0x7a] sm:$0xff]
      %v624 = vld [vmem:[%s226 + $0x82] sm:$0xff]
      %v625 = vld [vmem:[%s226 + $0x8a] sm:$0xff]
      %v626 = vld [vmem:[%s226 + $0x92] sm:$0xff]
      %v627 = vld [vmem:[%s226 + $0xa2] sm:$0xff]
      %v628 = vld [vmem:[%s226 + $0xaa] sm:$0xff]
      %v629 = vld [vmem:[%s226 + $0xb2] sm:$0xff]
      %v630 = vld [vmem:[%s226 + $0xba] sm:$0xff]
      %v631 = vld [vmem:[%s226 + $0xca] sm:$0xff]
      %v632 = vld [vmem:[%s226 + $0xd2] sm:$0xff]
      %v633 = vld [vmem:[%s226 + $0xda] sm:$0xff]
      %v634 = vld [vmem:[%s226 + $0xe2] sm:$0xff]
      %v635 = vld [vmem:[%s226 + $0xf2] sm:$0xff]
      %v636 = vld [vmem:[%s226 + $0xfa] sm:$0xff]
      %v637 = vld [vmem:[%s226 + $0x102] sm:$0xff]
      %v638 = vld [vmem:[%s226 + $0x10a] sm:$0xff]
      %v639 = vld [vmem:[%s226 + $0x11a] sm:$0xff]
      %v640 = vld [vmem:[%s226 + $0x122] sm:$0xff]
      %v641 = vld [vmem:[%s226 + $0x12a] sm:$0xff]
      %v642 = vld [vmem:[%s226 + $0x132] sm:$0xff]
      %v643 = vpack.c.bf16 %v612, %v611
      %v644 = vpack.c.bf16 %v614, %v613
      %v645 = vpack.c.bf16 %v616, %v615
      %v646 = vpack.c.bf16 %v618, %v617
      %v647 = vpack.c.bf16 %v620, %v619
      %v648 = vpack.c.bf16 %v622, %v621
      %v649 = vpack.c.bf16 %v624, %v623
      %v650 = vpack.c.bf16 %v626, %v625
      %v651 = vpack.c.bf16 %v628, %v627
      %v652 = vpack.c.bf16 %v630, %v629
      %v653 = vpack.c.bf16 %v632, %v631
      %v654 = vpack.c.bf16 %v634, %v633
      %v655 = vpack.c.bf16 %v636, %v635
      %v656 = vpack.c.bf16 %v638, %v637
      %v657 = vpack.c.bf16 %v640, %v639
      %v658 = vpack.c.bf16 %v642, %v641
      %s659 = scalar_lea.vmem %s1, 4
      %v660 = vld [vmem:[%s659] sm:$0x3]
      %v662 = vsel %vm326, %v643, 0
      %v665 = vsel %vm326, %v644, 0
      %v668 = vsel %vm326, %v645, 0
      %v671 = vsel %vm326, %v646, 0
      %v674 = vsel %vm326, %v647, 0
      %v677 = vsel %vm326, %v648, 0
      %v680 = vsel %vm326, %v649, 0
      %v683 = vsel %vm326, %v650, 0
      %v686 = vsel %vm326, %v651, 0
      %v689 = vsel %vm326, %v652, 0
      %v692 = vsel %vm326, %v653, 0
      %v695 = vsel %vm326, %v654, 0
      %v698 = vsel %vm326, %v655, 0
      %v701 = vsel %vm326, %v656, 0
      %v704 = vsel %vm326, %v657, 0
      %v707 = vsel %vm326, %v658, 0
      %v710 = vand.u32 %v660, %v378
      %712 = vmatpush.bf16.msra.mxu0 0
      %713 = vmatpush.bf16.msra.mxu0 0
      %714 = vmatpush.bf16.msra.mxu0 0
      %715 = vmatpush.bf16.msra.mxu0 0
      %716 = vmatpush.bf16.msra.mxu0 0
      %717 = vmatpush.bf16.msra.mxu0 0
      %718 = vmatpush.bf16.msra.mxu0 0
      %719 = vmatpush.bf16.msra.mxu0 %v710
      %720 = vmatmul.bf16.gmra.mxu0 %v662
      %v721 = vpop.f32.mrf.mxu0
      %v722 = vadd.f32 0.0, %v721
      %v723 = vpop.f32.mrf.mxu0
      %v724 = vadd.f32 0.0, %v723
      %725 = vmatmul.bf16.gmra.mxu0 %v665
      %v726 = vpop.f32.mrf.mxu0
      %v727 = vadd.f32 0.0, %v726
      %v728 = vpop.f32.mrf.mxu0
      %v729 = vadd.f32 0.0, %v728
      %730 = vmatmul.bf16.gmra.mxu0 %v668
      %v731 = vpop.f32.mrf.mxu0
      %v732 = vadd.f32 0.0, %v731
      %v733 = vpop.f32.mrf.mxu0
      %v734 = vadd.f32 0.0, %v733
      %735 = vmatmul.bf16.gmra.mxu0 %v671
      %v736 = vpop.f32.mrf.mxu0
      %v737 = vadd.f32 0.0, %v736
      %v738 = vpop.f32.mrf.mxu0
      %v739 = vadd.f32 0.0, %v738
      %740 = vmatmul.bf16.gmra.mxu0 %v674
      %v741 = vpop.f32.mrf.mxu0
      %v742 = vadd.f32 0.0, %v741
      %v743 = vpop.f32.mrf.mxu0
      %v744 = vadd.f32 0.0, %v743
      %745 = vmatmul.bf16.gmra.mxu0 %v677
      %v746 = vpop.f32.mrf.mxu0
      %v747 = vadd.f32 0.0, %v746
      %v748 = vpop.f32.mrf.mxu0
      %v749 = vadd.f32 0.0, %v748
      %750 = vmatmul.bf16.gmra.mxu0 %v680
      %v751 = vpop.f32.mrf.mxu0
      %v752 = vadd.f32 0.0, %v751
      %v753 = vpop.f32.mrf.mxu0
      %v754 = vadd.f32 0.0, %v753
      %755 = vmatmul.bf16.gmra.mxu0 %v683
      %v756 = vpop.f32.mrf.mxu0
      %v757 = vadd.f32 0.0, %v756
      %v758 = vpop.f32.mrf.mxu0
      %v759 = vadd.f32 0.0, %v758
      %760 = vmatmul.bf16.gmra.mxu0 %v686
      %v761 = vpop.f32.mrf.mxu0
      %v762 = vadd.f32 0.0, %v761
      %v763 = vpop.f32.mrf.mxu0
      %v764 = vadd.f32 0.0, %v763
      %765 = vmatmul.bf16.gmra.mxu0 %v689
      %v766 = vpop.f32.mrf.mxu0
      %v767 = vadd.f32 0.0, %v766
      %v768 = vpop.f32.mrf.mxu0
      %v769 = vadd.f32 0.0, %v768
      %770 = vmatmul.bf16.gmra.mxu0 %v692
      %v771 = vpop.f32.mrf.mxu0
      %v772 = vadd.f32 0.0, %v771
      %v773 = vpop.f32.mrf.mxu0
      %v774 = vadd.f32 0.0, %v773
      %775 = vmatmul.bf16.gmra.mxu0 %v695
      %v776 = vpop.f32.mrf.mxu0
      %v777 = vadd.f32 0.0, %v776
      %v778 = vpop.f32.mrf.mxu0
      %v779 = vadd.f32 0.0, %v778
      %780 = vmatmul.bf16.gmra.mxu0 %v698
      %v781 = vpop.f32.mrf.mxu0
      %v782 = vadd.f32 0.0, %v781
      %v783 = vpop.f32.mrf.mxu0
      %v784 = vadd.f32 0.0, %v783
      %785 = vmatmul.bf16.gmra.mxu0 %v701
      %v786 = vpop.f32.mrf.mxu0
      %v787 = vadd.f32 0.0, %v786
      %v788 = vpop.f32.mrf.mxu0
      %v789 = vadd.f32 0.0, %v788
      %790 = vmatmul.bf16.gmra.mxu0 %v704
      %v791 = vpop.f32.mrf.mxu0
      %v792 = vadd.f32 0.0, %v791
      %v793 = vpop.f32.mrf.mxu0
      %v794 = vadd.f32 0.0, %v793
      %795 = vmatmul.bf16.gmra.mxu0 %v707
      %v796 = vpop.f32.mrf.mxu0
      %v797 = vadd.f32 0.0, %v796
      %v798 = vpop.f32.mrf.mxu0
      %v799 = vadd.f32 0.0, %v798
      %800 = vdwg.mxu0
      %v801 = vadd.f32 %v532, %v722
      %v802 = vadd.f32 %v534, %v724
      %v803 = vadd.f32 %v537, %v727
      %v804 = vadd.f32 %v539, %v729
      %v805 = vadd.f32 %v542, %v732
      %v806 = vadd.f32 %v544, %v734
      %v807 = vadd.f32 %v547, %v737
      %v808 = vadd.f32 %v549, %v739
      %v809 = vadd.f32 %v552, %v742
      %v810 = vadd.f32 %v554, %v744
      %v811 = vadd.f32 %v557, %v747
      %v812 = vadd.f32 %v559, %v749
      %v813 = vadd.f32 %v562, %v752
      %v814 = vadd.f32 %v564, %v754
      %v815 = vadd.f32 %v567, %v757
      %v816 = vadd.f32 %v569, %v759
      %v817 = vadd.f32 %v572, %v762
      %v818 = vadd.f32 %v574, %v764
      %v819 = vadd.f32 %v577, %v767
      %v820 = vadd.f32 %v579, %v769
      %v821 = vadd.f32 %v582, %v772
      %v822 = vadd.f32 %v584, %v774
      %v823 = vadd.f32 %v587, %v777
      %v824 = vadd.f32 %v589, %v779
      %v825 = vadd.f32 %v592, %v782
      %v826 = vadd.f32 %v594, %v784
      %v827 = vadd.f32 %v597, %v787
      %v828 = vadd.f32 %v599, %v789
      %v829 = vadd.f32 %v602, %v792
      %v830 = vadd.f32 %v604, %v794
      %v831 = vadd.f32 %v607, %v797
      %v832 = vadd.f32 %v609, %v799
      %s833 = sadd.s32 %s224, 1
      %s834 = smul.u32 %s833, 40
      %s835 = scalar_lea.vmem %s211, %s834
      %v836 = vld [vmem:[%s835] sm:$0xff]
      %v837 = vld [vmem:[%s835 + $0x8] sm:$0xff]
      %v838 = vld [vmem:[%s835 + $0x10] sm:$0xff]
      %v839 = vld [vmem:[%s835 + $0x18] sm:$0xff]
      %v840 = vld [vmem:[%s835 + $0x28] sm:$0xff]
      %v841 = vld [vmem:[%s835 + $0x30] sm:$0xff]
      %v842 = vld [vmem:[%s835 + $0x38] sm:$0xff]
      %v843 = vld [vmem:[%s835 + $0x40] sm:$0xff]
      %v844 = vld [vmem:[%s835 + $0x50] sm:$0xff]
      %v845 = vld [vmem:[%s835 + $0x58] sm:$0xff]
      %v846 = vld [vmem:[%s835 + $0x60] sm:$0xff]
      %v847 = vld [vmem:[%s835 + $0x68] sm:$0xff]
      %v848 = vld [vmem:[%s835 + $0x78] sm:$0xff]
      %v849 = vld [vmem:[%s835 + $0x80] sm:$0xff]
      %v850 = vld [vmem:[%s835 + $0x88] sm:$0xff]
      %v851 = vld [vmem:[%s835 + $0x90] sm:$0xff]
      %v852 = vld [vmem:[%s835 + $0xa0] sm:$0xff]
      %v853 = vld [vmem:[%s835 + $0xa8] sm:$0xff]
      %v854 = vld [vmem:[%s835 + $0xb0] sm:$0xff]
      %v855 = vld [vmem:[%s835 + $0xb8] sm:$0xff]
      %v856 = vld [vmem:[%s835 + $0xc8] sm:$0xff]
      %v857 = vld [vmem:[%s835 + $0xd0] sm:$0xff]
      %v858 = vld [vmem:[%s835 + $0xd8] sm:$0xff]
      %v859 = vld [vmem:[%s835 + $0xe0] sm:$0xff]
      %v860 = vld [vmem:[%s835 + $0xf0] sm:$0xff]
      %v861 = vld [vmem:[%s835 + $0xf8] sm:$0xff]
      %v862 = vld [vmem:[%s835 + $0x100] sm:$0xff]
      %v863 = vld [vmem:[%s835 + $0x108] sm:$0xff]
      %v864 = vld [vmem:[%s835 + $0x118] sm:$0xff]
      %v865 = vld [vmem:[%s835 + $0x120] sm:$0xff]
      %v866 = vld [vmem:[%s835 + $0x128] sm:$0xff]
      %v867 = vld [vmem:[%s835 + $0x130] sm:$0xff]
      %v868 = vpack.c.bf16 %v837, %v836
      %v869 = vpack.c.bf16 %v839, %v838
      %v870 = vpack.c.bf16 %v841, %v840
      %v871 = vpack.c.bf16 %v843, %v842
      %v872 = vpack.c.bf16 %v845, %v844
      %v873 = vpack.c.bf16 %v847, %v846
      %v874 = vpack.c.bf16 %v849, %v848
      %v875 = vpack.c.bf16 %v851, %v850
      %v876 = vpack.c.bf16 %v853, %v852
      %v877 = vpack.c.bf16 %v855, %v854
      %v878 = vpack.c.bf16 %v857, %v856
      %v879 = vpack.c.bf16 %v859, %v858
      %v880 = vpack.c.bf16 %v861, %v860
      %v881 = vpack.c.bf16 %v863, %v862
      %v882 = vpack.c.bf16 %v865, %v864
      %v883 = vpack.c.bf16 %v867, %v866
      %s884 = scalar_lea.vmem %s1, 6
      %v885 = vld [vmem:[%s884] sm:$0x3]
      %v887 = vsel %vm326, %v868, 0
      %v890 = vsel %vm326, %v869, 0
      %v893 = vsel %vm326, %v870, 0
      %v896 = vsel %vm326, %v871, 0
      %v899 = vsel %vm326, %v872, 0
      %v902 = vsel %vm326, %v873, 0
      %v905 = vsel %vm326, %v874, 0
      %v908 = vsel %vm326, %v875, 0
      %v911 = vsel %vm326, %v876, 0
      %v914 = vsel %vm326, %v877, 0
      %v917 = vsel %vm326, %v878, 0
      %v920 = vsel %vm326, %v879, 0
      %v923 = vsel %vm326, %v880, 0
      %v926 = vsel %vm326, %v881, 0
      %v929 = vsel %vm326, %v882, 0
      %v932 = vsel %vm326, %v883, 0
      %v935 = vand.u32 %v885, %v378
      %937 = vmatpush.bf16.msra.mxu0 0
      %938 = vmatpush.bf16.msra.mxu0 0
      %939 = vmatpush.bf16.msra.mxu0 0
      %940 = vmatpush.bf16.msra.mxu0 0
      %941 = vmatpush.bf16.msra.mxu0 0
      %942 = vmatpush.bf16.msra.mxu0 0
      %943 = vmatpush.bf16.msra.mxu0 0
      %944 = vmatpush.bf16.msra.mxu0 %v935
      %945 = vmatmul.bf16.gmra.mxu0 %v887
      %v946 = vpop.f32.mrf.mxu0
      %v947 = vadd.f32 0.0, %v946
      %v948 = vpop.f32.mrf.mxu0
      %v949 = vadd.f32 0.0, %v948
      %950 = vmatmul.bf16.gmra.mxu0 %v890
      %v951 = vpop.f32.mrf.mxu0
      %v952 = vadd.f32 0.0, %v951
      %v953 = vpop.f32.mrf.mxu0
      %v954 = vadd.f32 0.0, %v953
      %955 = vmatmul.bf16.gmra.mxu0 %v893
      %v956 = vpop.f32.mrf.mxu0
      %v957 = vadd.f32 0.0, %v956
      %v958 = vpop.f32.mrf.mxu0
      %v959 = vadd.f32 0.0, %v958
      %960 = vmatmul.bf16.gmra.mxu0 %v896
      %v961 = vpop.f32.mrf.mxu0
      %v962 = vadd.f32 0.0, %v961
      %v963 = vpop.f32.mrf.mxu0
      %v964 = vadd.f32 0.0, %v963
      %965 = vmatmul.bf16.gmra.mxu0 %v899
      %v966 = vpop.f32.mrf.mxu0
      %v967 = vadd.f32 0.0, %v966
      %v968 = vpop.f32.mrf.mxu0
      %v969 = vadd.f32 0.0, %v968
      %970 = vmatmul.bf16.gmra.mxu0 %v902
      %v971 = vpop.f32.mrf.mxu0
      %v972 = vadd.f32 0.0, %v971
      %v973 = vpop.f32.mrf.mxu0
      %v974 = vadd.f32 0.0, %v973
      %975 = vmatmul.bf16.gmra.mxu0 %v905
      %v976 = vpop.f32.mrf.mxu0
      %v977 = vadd.f32 0.0, %v976
      %v978 = vpop.f32.mrf.mxu0
      %v979 = vadd.f32 0.0, %v978
      %980 = vmatmul.bf16.gmra.mxu0 %v908
      %v981 = vpop.f32.mrf.mxu0
      %v982 = vadd.f32 0.0, %v981
      %v983 = vpop.f32.mrf.mxu0
      %v984 = vadd.f32 0.0, %v983
      %985 = vmatmul.bf16.gmra.mxu0 %v911
      %v986 = vpop.f32.mrf.mxu0
      %v987 = vadd.f32 0.0, %v986
      %v988 = vpop.f32.mrf.mxu0
      %v989 = vadd.f32 0.0, %v988
      %990 = vmatmul.bf16.gmra.mxu0 %v914
      %v991 = vpop.f32.mrf.mxu0
      %v992 = vadd.f32 0.0, %v991
      %v993 = vpop.f32.mrf.mxu0
      %v994 = vadd.f32 0.0, %v993
      %995 = vmatmul.bf16.gmra.mxu0 %v917
      %v996 = vpop.f32.mrf.mxu0
      %v997 = vadd.f32 0.0, %v996
      %v998 = vpop.f32.mrf.mxu0
      %v999 = vadd.f32 0.0, %v998
      %1000 = vmatmul.bf16.gmra.mxu0 %v920
      %v1001 = vpop.f32.mrf.mxu0
      %v1002 = vadd.f32 0.0, %v1001
      %v1003 = vpop.f32.mrf.mxu0
      %v1004 = vadd.f32 0.0, %v1003
      %1005 = vmatmul.bf16.gmra.mxu0 %v923
      %v1006 = vpop.f32.mrf.mxu0
      %v1007 = vadd.f32 0.0, %v1006
      %v1008 = vpop.f32.mrf.mxu0
      %v1009 = vadd.f32 0.0, %v1008
      %1010 = vmatmul.bf16.gmra.mxu0 %v926
      %v1011 = vpop.f32.mrf.mxu0
      %v1012 = vadd.f32 0.0, %v1011
      %v1013 = vpop.f32.mrf.mxu0
      %v1014 = vadd.f32 0.0, %v1013
      %1015 = vmatmul.bf16.gmra.mxu0 %v929
      %v1016 = vpop.f32.mrf.mxu0
      %v1017 = vadd.f32 0.0, %v1016
      %v1018 = vpop.f32.mrf.mxu0
      %v1019 = vadd.f32 0.0, %v1018
      %1020 = vmatmul.bf16.gmra.mxu0 %v932
      %v1021 = vpop.f32.mrf.mxu0
      %v1022 = vadd.f32 0.0, %v1021
      %v1023 = vpop.f32.mrf.mxu0
      %v1024 = vadd.f32 0.0, %v1023
      %1025 = vdwg.mxu0
      %v1026 = vadd.f32 %v801, %v947
      %v1027 = vadd.f32 %v802, %v949
      %v1028 = vadd.f32 %v803, %v952
      %v1029 = vadd.f32 %v804, %v954
      %v1030 = vadd.f32 %v805, %v957
      %v1031 = vadd.f32 %v806, %v959
      %v1032 = vadd.f32 %v807, %v962
      %v1033 = vadd.f32 %v808, %v964
      %v1034 = vadd.f32 %v809, %v967
      %v1035 = vadd.f32 %v810, %v969
      %v1036 = vadd.f32 %v811, %v972
      %v1037 = vadd.f32 %v812, %v974
      %v1038 = vadd.f32 %v813, %v977
      %v1039 = vadd.f32 %v814, %v979
      %v1040 = vadd.f32 %v815, %v982
      %v1041 = vadd.f32 %v816, %v984
      %v1042 = vadd.f32 %v817, %v987
      %v1043 = vadd.f32 %v818, %v989
      %v1044 = vadd.f32 %v819, %v992
      %v1045 = vadd.f32 %v820, %v994
      %v1046 = vadd.f32 %v821, %v997
      %v1047 = vadd.f32 %v822, %v999
      %v1048 = vadd.f32 %v823, %v1002
      %v1049 = vadd.f32 %v824, %v1004
      %v1050 = vadd.f32 %v825, %v1007
      %v1051 = vadd.f32 %v826, %v1009
      %v1052 = vadd.f32 %v827, %v1012
      %v1053 = vadd.f32 %v828, %v1014
      %v1054 = vadd.f32 %v829, %v1017
      %v1055 = vadd.f32 %v830, %v1019
      %v1056 = vadd.f32 %v831, %v1022
      %v1057 = vadd.f32 %v832, %v1024
      %v1058 = vld [vmem:[%s835 + $0x1] sm:$0xff]
      %v1059 = vld [vmem:[%s835 + $0x9] sm:$0xff]
      %v1060 = vld [vmem:[%s835 + $0x11] sm:$0xff]
      %v1061 = vld [vmem:[%s835 + $0x19] sm:$0xff]
      %v1062 = vld [vmem:[%s835 + $0x29] sm:$0xff]
      %v1063 = vld [vmem:[%s835 + $0x31] sm:$0xff]
      %v1064 = vld [vmem:[%s835 + $0x39] sm:$0xff]
      %v1065 = vld [vmem:[%s835 + $0x41] sm:$0xff]
      %v1066 = vld [vmem:[%s835 + $0x51] sm:$0xff]
      %v1067 = vld [vmem:[%s835 + $0x59] sm:$0xff]
      %v1068 = vld [vmem:[%s835 + $0x61] sm:$0xff]
      %v1069 = vld [vmem:[%s835 + $0x69] sm:$0xff]
      %v1070 = vld [vmem:[%s835 + $0x79] sm:$0xff]
      %v1071 = vld [vmem:[%s835 + $0x81] sm:$0xff]
      %v1072 = vld [vmem:[%s835 + $0x89] sm:$0xff]
      %v1073 = vld [vmem:[%s835 + $0x91] sm:$0xff]
      %v1074 = vld [vmem:[%s835 + $0xa1] sm:$0xff]
      %v1075 = vld [vmem:[%s835 + $0xa9] sm:$0xff]
      %v1076 = vld [vmem:[%s835 + $0xb1] sm:$0xff]
      %v1077 = vld [vmem:[%s835 + $0xb9] sm:$0xff]
      %v1078 = vld [vmem:[%s835 + $0xc9] sm:$0xff]
      %v1079 = vld [vmem:[%s835 + $0xd1] sm:$0xff]
      %v1080 = vld [vmem:[%s835 + $0xd9] sm:$0xff]
      %v1081 = vld [vmem:[%s835 + $0xe1] sm:$0xff]
      %v1082 = vld [vmem:[%s835 + $0xf1] sm:$0xff]
      %v1083 = vld [vmem:[%s835 + $0xf9] sm:$0xff]
      %v1084 = vld [vmem:[%s835 + $0x101] sm:$0xff]
      %v1085 = vld [vmem:[%s835 + $0x109] sm:$0xff]
      %v1086 = vld [vmem:[%s835 + $0x119] sm:$0xff]
      %v1087 = vld [vmem:[%s835 + $0x121] sm:$0xff]
      %v1088 = vld [vmem:[%s835 + $0x129] sm:$0xff]
      %v1089 = vld [vmem:[%s835 + $0x131] sm:$0xff]
      %v1090 = vpack.c.bf16 %v1059, %v1058
      %v1091 = vpack.c.bf16 %v1061, %v1060
      %v1092 = vpack.c.bf16 %v1063, %v1062
      %v1093 = vpack.c.bf16 %v1065, %v1064
      %v1094 = vpack.c.bf16 %v1067, %v1066
      %v1095 = vpack.c.bf16 %v1069, %v1068
      %v1096 = vpack.c.bf16 %v1071, %v1070
      %v1097 = vpack.c.bf16 %v1073, %v1072
      %v1098 = vpack.c.bf16 %v1075, %v1074
      %v1099 = vpack.c.bf16 %v1077, %v1076
      %v1100 = vpack.c.bf16 %v1079, %v1078
      %v1101 = vpack.c.bf16 %v1081, %v1080
      %v1102 = vpack.c.bf16 %v1083, %v1082
      %v1103 = vpack.c.bf16 %v1085, %v1084
      %v1104 = vpack.c.bf16 %v1087, %v1086
      %v1105 = vpack.c.bf16 %v1089, %v1088
      %s1106 = scalar_lea.vmem %s1, 8
      %v1107 = vld [vmem:[%s1106] sm:$0x3]
      %v1109 = vsel %vm326, %v1090, 0
      %v1112 = vsel %vm326, %v1091, 0
      %v1115 = vsel %vm326, %v1092, 0
      %v1118 = vsel %vm326, %v1093, 0
      %v1121 = vsel %vm326, %v1094, 0
      %v1124 = vsel %vm326, %v1095, 0
      %v1127 = vsel %vm326, %v1096, 0
      %v1130 = vsel %vm326, %v1097, 0
      %v1133 = vsel %vm326, %v1098, 0
      %v1136 = vsel %vm326, %v1099, 0
      %v1139 = vsel %vm326, %v1100, 0
      %v1142 = vsel %vm326, %v1101, 0
      %v1145 = vsel %vm326, %v1102, 0
      %v1148 = vsel %vm326, %v1103, 0
      %v1151 = vsel %vm326, %v1104, 0
      %v1154 = vsel %vm326, %v1105, 0
      %v1157 = vand.u32 %v1107, %v378
      %1159 = vmatpush.bf16.msra.mxu0 0
      %1160 = vmatpush.bf16.msra.mxu0 0
      %1161 = vmatpush.bf16.msra.mxu0 0
      %1162 = vmatpush.bf16.msra.mxu0 0
      %1163 = vmatpush.bf16.msra.mxu0 0
      %1164 = vmatpush.bf16.msra.mxu0 0
      %1165 = vmatpush.bf16.msra.mxu0 0
      %1166 = vmatpush.bf16.msra.mxu0 %v1157
      %1167 = vmatmul.bf16.gmra.mxu0 %v1109
      %v1168 = vpop.f32.mrf.mxu0
      %v1169 = vadd.f32 0.0, %v1168
      %v1170 = vpop.f32.mrf.mxu0
      %v1171 = vadd.f32 0.0, %v1170
      %1172 = vmatmul.bf16.gmra.mxu0 %v1112
      %v1173 = vpop.f32.mrf.mxu0
      %v1174 = vadd.f32 0.0, %v1173
      %v1175 = vpop.f32.mrf.mxu0
      %v1176 = vadd.f32 0.0, %v1175
      %1177 = vmatmul.bf16.gmra.mxu0 %v1115
      %v1178 = vpop.f32.mrf.mxu0
      %v1179 = vadd.f32 0.0, %v1178
      %v1180 = vpop.f32.mrf.mxu0
      %v1181 = vadd.f32 0.0, %v1180
      %1182 = vmatmul.bf16.gmra.mxu0 %v1118
      %v1183 = vpop.f32.mrf.mxu0
      %v1184 = vadd.f32 0.0, %v1183
      %v1185 = vpop.f32.mrf.mxu0
      %v1186 = vadd.f32 0.0, %v1185
      %1187 = vmatmul.bf16.gmra.mxu0 %v1121
      %v1188 = vpop.f32.mrf.mxu0
      %v1189 = vadd.f32 0.0, %v1188
      %v1190 = vpop.f32.mrf.mxu0
      %v1191 = vadd.f32 0.0, %v1190
      %1192 = vmatmul.bf16.gmra.mxu0 %v1124
      %v1193 = vpop.f32.mrf.mxu0
      %v1194 = vadd.f32 0.0, %v1193
      %v1195 = vpop.f32.mrf.mxu0
      %v1196 = vadd.f32 0.0, %v1195
      %1197 = vmatmul.bf16.gmra.mxu0 %v1127
      %v1198 = vpop.f32.mrf.mxu0
      %v1199 = vadd.f32 0.0, %v1198
      %v1200 = vpop.f32.mrf.mxu0
      %v1201 = vadd.f32 0.0, %v1200
      %1202 = vmatmul.bf16.gmra.mxu0 %v1130
      %v1203 = vpop.f32.mrf.mxu0
      %v1204 = vadd.f32 0.0, %v1203
      %v1205 = vpop.f32.mrf.mxu0
      %v1206 = vadd.f32 0.0, %v1205
      %1207 = vmatmul.bf16.gmra.mxu0 %v1133
      %v1208 = vpop.f32.mrf.mxu0
      %v1209 = vadd.f32 0.0, %v1208
      %v1210 = vpop.f32.mrf.mxu0
      %v1211 = vadd.f32 0.0, %v1210
      %1212 = vmatmul.bf16.gmra.mxu0 %v1136
      %v1213 = vpop.f32.mrf.mxu0
      %v1214 = vadd.f32 0.0, %v1213
      %v1215 = vpop.f32.mrf.mxu0
      %v1216 = vadd.f32 0.0, %v1215
      %1217 = vmatmul.bf16.gmra.mxu0 %v1139
      %v1218 = vpop.f32.mrf.mxu0
      %v1219 = vadd.f32 0.0, %v1218
      %v1220 = vpop.f32.mrf.mxu0
      %v1221 = vadd.f32 0.0, %v1220
      %1222 = vmatmul.bf16.gmra.mxu0 %v1142
      %v1223 = vpop.f32.mrf.mxu0
      %v1224 = vadd.f32 0.0, %v1223
      %v1225 = vpop.f32.mrf.mxu0
      %v1226 = vadd.f32 0.0, %v1225
      %1227 = vmatmul.bf16.gmra.mxu0 %v1145
      %v1228 = vpop.f32.mrf.mxu0
      %v1229 = vadd.f32 0.0, %v1228
      %v1230 = vpop.f32.mrf.mxu0
      %v1231 = vadd.f32 0.0, %v1230
      %1232 = vmatmul.bf16.gmra.mxu0 %v1148
      %v1233 = vpop.f32.mrf.mxu0
      %v1234 = vadd.f32 0.0, %v1233
      %v1235 = vpop.f32.mrf.mxu0
      %v1236 = vadd.f32 0.0, %v1235
      %1237 = vmatmul.bf16.gmra.mxu0 %v1151
      %v1238 = vpop.f32.mrf.mxu0
      %v1239 = vadd.f32 0.0, %v1238
      %v1240 = vpop.f32.mrf.mxu0
      %v1241 = vadd.f32 0.0, %v1240
      %1242 = vmatmul.bf16.gmra.mxu0 %v1154
      %v1243 = vpop.f32.mrf.mxu0
      %v1244 = vadd.f32 0.0, %v1243
      %v1245 = vpop.f32.mrf.mxu0
      %v1246 = vadd.f32 0.0, %v1245
      %1247 = vdwg.mxu0
      %v1248 = vadd.f32 %v1026, %v1169
      %v1249 = vadd.f32 %v1027, %v1171
      %v1250 = vadd.f32 %v1028, %v1174
      %v1251 = vadd.f32 %v1029, %v1176
      %v1252 = vadd.f32 %v1030, %v1179
      %v1253 = vadd.f32 %v1031, %v1181
      %v1254 = vadd.f32 %v1032, %v1184
      %v1255 = vadd.f32 %v1033, %v1186
      %v1256 = vadd.f32 %v1034, %v1189
      %v1257 = vadd.f32 %v1035, %v1191
      %v1258 = vadd.f32 %v1036, %v1194
      %v1259 = vadd.f32 %v1037, %v1196
      %v1260 = vadd.f32 %v1038, %v1199
      %v1261 = vadd.f32 %v1039, %v1201
      %v1262 = vadd.f32 %v1040, %v1204
      %v1263 = vadd.f32 %v1041, %v1206
      %v1264 = vadd.f32 %v1042, %v1209
      %v1265 = vadd.f32 %v1043, %v1211
      %v1266 = vadd.f32 %v1044, %v1214
      %v1267 = vadd.f32 %v1045, %v1216
      %v1268 = vadd.f32 %v1046, %v1219
      %v1269 = vadd.f32 %v1047, %v1221
      %v1270 = vadd.f32 %v1048, %v1224
      %v1271 = vadd.f32 %v1049, %v1226
      %v1272 = vadd.f32 %v1050, %v1229
      %v1273 = vadd.f32 %v1051, %v1231
      %v1274 = vadd.f32 %v1052, %v1234
      %v1275 = vadd.f32 %v1053, %v1236
      %v1276 = vadd.f32 %v1054, %v1239
      %v1277 = vadd.f32 %v1055, %v1241
      %v1278 = vadd.f32 %v1056, %v1244
      %v1279 = vadd.f32 %v1057, %v1246
      %v1280 = vld [vmem:[%s835 + $0x2] sm:$0xff]
      %v1281 = vld [vmem:[%s835 + $0xa] sm:$0xff]
      %v1282 = vld [vmem:[%s835 + $0x12] sm:$0xff]
      %v1283 = vld [vmem:[%s835 + $0x1a] sm:$0xff]
      %v1284 = vld [vmem:[%s835 + $0x2a] sm:$0xff]
      %v1285 = vld [vmem:[%s835 + $0x32] sm:$0xff]
      %v1286 = vld [vmem:[%s835 + $0x3a] sm:$0xff]
      %v1287 = vld [vmem:[%s835 + $0x42] sm:$0xff]
      %v1288 = vld [vmem:[%s835 + $0x52] sm:$0xff]
      %v1289 = vld [vmem:[%s835 + $0x5a] sm:$0xff]
      %v1290 = vld [vmem:[%s835 + $0x62] sm:$0xff]
      %v1291 = vld [vmem:[%s835 + $0x6a] sm:$0xff]
      %v1292 = vld [vmem:[%s835 + $0x7a] sm:$0xff]
      %v1293 = vld [vmem:[%s835 + $0x82] sm:$0xff]
      %v1294 = vld [vmem:[%s835 + $0x8a] sm:$0xff]
      %v1295 = vld [vmem:[%s835 + $0x92] sm:$0xff]
      %v1296 = vld [vmem:[%s835 + $0xa2] sm:$0xff]
      %v1297 = vld [vmem:[%s835 + $0xaa] sm:$0xff]
      %v1298 = vld [vmem:[%s835 + $0xb2] sm:$0xff]
      %v1299 = vld [vmem:[%s835 + $0xba] sm:$0xff]
      %v1300 = vld [vmem:[%s835 + $0xca] sm:$0xff]
      %v1301 = vld [vmem:[%s835 + $0xd2] sm:$0xff]
      %v1302 = vld [vmem:[%s835 + $0xda] sm:$0xff]
      %v1303 = vld [vmem:[%s835 + $0xe2] sm:$0xff]
      %v1304 = vld [vmem:[%s835 + $0xf2] sm:$0xff]
      %v1305 = vld [vmem:[%s835 + $0xfa] sm:$0xff]
      %v1306 = vld [vmem:[%s835 + $0x102] sm:$0xff]
      %v1307 = vld [vmem:[%s835 + $0x10a] sm:$0xff]
      %v1308 = vld [vmem:[%s835 + $0x11a] sm:$0xff]
      %v1309 = vld [vmem:[%s835 + $0x122] sm:$0xff]
      %v1310 = vld [vmem:[%s835 + $0x12a] sm:$0xff]
      %v1311 = vld [vmem:[%s835 + $0x132] sm:$0xff]
      %v1312 = vpack.c.bf16 %v1281, %v1280
      %v1313 = vpack.c.bf16 %v1283, %v1282
      %v1314 = vpack.c.bf16 %v1285, %v1284
      %v1315 = vpack.c.bf16 %v1287, %v1286
      %v1316 = vpack.c.bf16 %v1289, %v1288
      %v1317 = vpack.c.bf16 %v1291, %v1290
      %v1318 = vpack.c.bf16 %v1293, %v1292
      %v1319 = vpack.c.bf16 %v1295, %v1294
      %v1320 = vpack.c.bf16 %v1297, %v1296
      %v1321 = vpack.c.bf16 %v1299, %v1298
      %v1322 = vpack.c.bf16 %v1301, %v1300
      %v1323 = vpack.c.bf16 %v1303, %v1302
      %v1324 = vpack.c.bf16 %v1305, %v1304
      %v1325 = vpack.c.bf16 %v1307, %v1306
      %v1326 = vpack.c.bf16 %v1309, %v1308
      %v1327 = vpack.c.bf16 %v1311, %v1310
      %s1328 = scalar_lea.vmem %s1, 10
      %v1329 = vld [vmem:[%s1328] sm:$0x3]
      %v1331 = vsel %vm326, %v1312, 0
      %v1334 = vsel %vm326, %v1313, 0
      %v1337 = vsel %vm326, %v1314, 0
      %v1340 = vsel %vm326, %v1315, 0
      %v1343 = vsel %vm326, %v1316, 0
      %v1346 = vsel %vm326, %v1317, 0
      %v1349 = vsel %vm326, %v1318, 0
      %v1352 = vsel %vm326, %v1319, 0
      %v1355 = vsel %vm326, %v1320, 0
      %v1358 = vsel %vm326, %v1321, 0
      %v1361 = vsel %vm326, %v1322, 0
      %v1364 = vsel %vm326, %v1323, 0
      %v1367 = vsel %vm326, %v1324, 0
      %v1370 = vsel %vm326, %v1325, 0
      %v1373 = vsel %vm326, %v1326, 0
      %v1376 = vsel %vm326, %v1327, 0
      %v1379 = vand.u32 %v1329, %v378
      %1381 = vmatpush.bf16.msra.mxu0 0
      %1382 = vmatpush.bf16.msra.mxu0 0
      %1383 = vmatpush.bf16.msra.mxu0 0
      %1384 = vmatpush.bf16.msra.mxu0 0
      %1385 = vmatpush.bf16.msra.mxu0 0
      %1386 = vmatpush.bf16.msra.mxu0 0
      %1387 = vmatpush.bf16.msra.mxu0 0
      %1388 = vmatpush.bf16.msra.mxu0 %v1379
      %1389 = vmatmul.bf16.gmra.mxu0 %v1331
      %v1390 = vpop.f32.mrf.mxu0
      %v1391 = vadd.f32 0.0, %v1390
      %v1392 = vpop.f32.mrf.mxu0
      %v1393 = vadd.f32 0.0, %v1392
      %1394 = vmatmul.bf16.gmra.mxu0 %v1334
      %v1395 = vpop.f32.mrf.mxu0
      %v1396 = vadd.f32 0.0, %v1395
      %v1397 = vpop.f32.mrf.mxu0
      %v1398 = vadd.f32 0.0, %v1397
      %1399 = vmatmul.bf16.gmra.mxu0 %v1337
      %v1400 = vpop.f32.mrf.mxu0
      %v1401 = vadd.f32 0.0, %v1400
      %v1402 = vpop.f32.mrf.mxu0
      %v1403 = vadd.f32 0.0, %v1402
      %1404 = vmatmul.bf16.gmra.mxu0 %v1340
      %v1405 = vpop.f32.mrf.mxu0
      %v1406 = vadd.f32 0.0, %v1405
      %v1407 = vpop.f32.mrf.mxu0
      %v1408 = vadd.f32 0.0, %v1407
      %1409 = vmatmul.bf16.gmra.mxu0 %v1343
      %v1410 = vpop.f32.mrf.mxu0
      %v1411 = vadd.f32 0.0, %v1410
      %v1412 = vpop.f32.mrf.mxu0
      %v1413 = vadd.f32 0.0, %v1412
      %1414 = vmatmul.bf16.gmra.mxu0 %v1346
      %v1415 = vpop.f32.mrf.mxu0
      %v1416 = vadd.f32 0.0, %v1415
      %v1417 = vpop.f32.mrf.mxu0
      %v1418 = vadd.f32 0.0, %v1417
      %1419 = vmatmul.bf16.gmra.mxu0 %v1349
      %v1420 = vpop.f32.mrf.mxu0
      %v1421 = vadd.f32 0.0, %v1420
      %v1422 = vpop.f32.mrf.mxu0
      %v1423 = vadd.f32 0.0, %v1422
      %1424 = vmatmul.bf16.gmra.mxu0 %v1352
      %v1425 = vpop.f32.mrf.mxu0
      %v1426 = vadd.f32 0.0, %v1425
      %v1427 = vpop.f32.mrf.mxu0
      %v1428 = vadd.f32 0.0, %v1427
      %1429 = vmatmul.bf16.gmra.mxu0 %v1355
      %v1430 = vpop.f32.mrf.mxu0
      %v1431 = vadd.f32 0.0, %v1430
      %v1432 = vpop.f32.mrf.mxu0
      %v1433 = vadd.f32 0.0, %v1432
      %1434 = vmatmul.bf16.gmra.mxu0 %v1358
      %v1435 = vpop.f32.mrf.mxu0
      %v1436 = vadd.f32 0.0, %v1435
      %v1437 = vpop.f32.mrf.mxu0
      %v1438 = vadd.f32 0.0, %v1437
      %1439 = vmatmul.bf16.gmra.mxu0 %v1361
      %v1440 = vpop.f32.mrf.mxu0
      %v1441 = vadd.f32 0.0, %v1440
      %v1442 = vpop.f32.mrf.mxu0
      %v1443 = vadd.f32 0.0, %v1442
      %1444 = vmatmul.bf16.gmra.mxu0 %v1364
      %v1445 = vpop.f32.mrf.mxu0
      %v1446 = vadd.f32 0.0, %v1445
      %v1447 = vpop.f32.mrf.mxu0
      %v1448 = vadd.f32 0.0, %v1447
      %1449 = vmatmul.bf16.gmra.mxu0 %v1367
      %v1450 = vpop.f32.mrf.mxu0
      %v1451 = vadd.f32 0.0, %v1450
      %v1452 = vpop.f32.mrf.mxu0
      %v1453 = vadd.f32 0.0, %v1452
      %1454 = vmatmul.bf16.gmra.mxu0 %v1370
      %v1455 = vpop.f32.mrf.mxu0
      %v1456 = vadd.f32 0.0, %v1455
      %v1457 = vpop.f32.mrf.mxu0
      %v1458 = vadd.f32 0.0, %v1457
      %1459 = vmatmul.bf16.gmra.mxu0 %v1373
      %v1460 = vpop.f32.mrf.mxu0
      %v1461 = vadd.f32 0.0, %v1460
      %v1462 = vpop.f32.mrf.mxu0
      %v1463 = vadd.f32 0.0, %v1462
      %1464 = vmatmul.bf16.gmra.mxu0 %v1376
      %v1465 = vpop.f32.mrf.mxu0
      %v1466 = vadd.f32 0.0, %v1465
      %v1467 = vpop.f32.mrf.mxu0
      %v1468 = vadd.f32 0.0, %v1467
      %1469 = vdwg.mxu0
      %v1470 = vadd.f32 %v1248, %v1391
      %v1471 = vadd.f32 %v1249, %v1393
      %v1472 = vadd.f32 %v1250, %v1396
      %v1473 = vadd.f32 %v1251, %v1398
      %v1474 = vadd.f32 %v1252, %v1401
      %v1475 = vadd.f32 %v1253, %v1403
      %v1476 = vadd.f32 %v1254, %v1406
      %v1477 = vadd.f32 %v1255, %v1408
      %v1478 = vadd.f32 %v1256, %v1411
      %v1479 = vadd.f32 %v1257, %v1413
      %v1480 = vadd.f32 %v1258, %v1416
      %v1481 = vadd.f32 %v1259, %v1418
      %v1482 = vadd.f32 %v1260, %v1421
      %v1483 = vadd.f32 %v1261, %v1423
      %v1484 = vadd.f32 %v1262, %v1426
      %v1485 = vadd.f32 %v1263, %v1428
      %v1486 = vadd.f32 %v1264, %v1431
      %v1487 = vadd.f32 %v1265, %v1433
      %v1488 = vadd.f32 %v1266, %v1436
      %v1489 = vadd.f32 %v1267, %v1438
      %v1490 = vadd.f32 %v1268, %v1441
      %v1491 = vadd.f32 %v1269, %v1443
      %v1492 = vadd.f32 %v1270, %v1446
      %v1493 = vadd.f32 %v1271, %v1448
      %v1494 = vadd.f32 %v1272, %v1451
      %v1495 = vadd.f32 %v1273, %v1453
      %v1496 = vadd.f32 %v1274, %v1456
      %v1497 = vadd.f32 %v1275, %v1458
      %v1498 = vadd.f32 %v1276, %v1461
      %v1499 = vadd.f32 %v1277, %v1463
      %v1500 = vadd.f32 %v1278, %v1466
      %v1501 = vadd.f32 %v1279, %v1468
      %s1502 = sadd.s32 %s224, 2
      %s1503 = smul.u32 %s1502, 40
      %s1504 = scalar_lea.vmem %s211, %s1503
      %v1505 = vld [vmem:[%s1504] sm:$0xff]
      %v1506 = vld [vmem:[%s1504 + $0x8] sm:$0xff]
      %v1507 = vld [vmem:[%s1504 + $0x10] sm:$0xff]
      %v1508 = vld [vmem:[%s1504 + $0x18] sm:$0xff]
      %v1509 = vld [vmem:[%s1504 + $0x28] sm:$0xff]
      %v1510 = vld [vmem:[%s1504 + $0x30] sm:$0xff]
      %v1511 = vld [vmem:[%s1504 + $0x38] sm:$0xff]
      %v1512 = vld [vmem:[%s1504 + $0x40] sm:$0xff]
      %v1513 = vld [vmem:[%s1504 + $0x50] sm:$0xff]
      %v1514 = vld [vmem:[%s1504 + $0x58] sm:$0xff]
      %v1515 = vld [vmem:[%s1504 + $0x60] sm:$0xff]
      %v1516 = vld [vmem:[%s1504 + $0x68] sm:$0xff]
      %v1517 = vld [vmem:[%s1504 + $0x78] sm:$0xff]
      %v1518 = vld [vmem:[%s1504 + $0x80] sm:$0xff]
      %v1519 = vld [vmem:[%s1504 + $0x88] sm:$0xff]
      %v1520 = vld [vmem:[%s1504 + $0x90] sm:$0xff]
      %v1521 = vld [vmem:[%s1504 + $0xa0] sm:$0xff]
      %v1522 = vld [vmem:[%s1504 + $0xa8] sm:$0xff]
      %v1523 = vld [vmem:[%s1504 + $0xb0] sm:$0xff]
      %v1524 = vld [vmem:[%s1504 + $0xb8] sm:$0xff]
      %v1525 = vld [vmem:[%s1504 + $0xc8] sm:$0xff]
      %v1526 = vld [vmem:[%s1504 + $0xd0] sm:$0xff]
      %v1527 = vld [vmem:[%s1504 + $0xd8] sm:$0xff]
      %v1528 = vld [vmem:[%s1504 + $0xe0] sm:$0xff]
      %v1529 = vld [vmem:[%s1504 + $0xf0] sm:$0xff]
      %v1530 = vld [vmem:[%s1504 + $0xf8] sm:$0xff]
      %v1531 = vld [vmem:[%s1504 + $0x100] sm:$0xff]
      %v1532 = vld [vmem:[%s1504 + $0x108] sm:$0xff]
      %v1533 = vld [vmem:[%s1504 + $0x118] sm:$0xff]
      %v1534 = vld [vmem:[%s1504 + $0x120] sm:$0xff]
      %v1535 = vld [vmem:[%s1504 + $0x128] sm:$0xff]
      %v1536 = vld [vmem:[%s1504 + $0x130] sm:$0xff]
      %v1537 = vpack.c.bf16 %v1506, %v1505
      %v1538 = vpack.c.bf16 %v1508, %v1507
      %v1539 = vpack.c.bf16 %v1510, %v1509
      %v1540 = vpack.c.bf16 %v1512, %v1511
      %v1541 = vpack.c.bf16 %v1514, %v1513
      %v1542 = vpack.c.bf16 %v1516, %v1515
      %v1543 = vpack.c.bf16 %v1518, %v1517
      %v1544 = vpack.c.bf16 %v1520, %v1519
      %v1545 = vpack.c.bf16 %v1522, %v1521
      %v1546 = vpack.c.bf16 %v1524, %v1523
      %v1547 = vpack.c.bf16 %v1526, %v1525
      %v1548 = vpack.c.bf16 %v1528, %v1527
      %v1549 = vpack.c.bf16 %v1530, %v1529
      %v1550 = vpack.c.bf16 %v1532, %v1531
      %v1551 = vpack.c.bf16 %v1534, %v1533
      %v1552 = vpack.c.bf16 %v1536, %v1535
      %s1553 = scalar_lea.vmem %s1, 12
      %v1554 = vld [vmem:[%s1553] sm:$0x3]
      %v1556 = vsel %vm326, %v1537, 0
      %v1559 = vsel %vm326, %v1538, 0
      %v1562 = vsel %vm326, %v1539, 0
      %v1565 = vsel %vm326, %v1540, 0
      %v1568 = vsel %vm326, %v1541, 0
      %v1571 = vsel %vm326, %v1542, 0
      %v1574 = vsel %vm326, %v1543, 0
      %v1577 = vsel %vm326, %v1544, 0
      %v1580 = vsel %vm326, %v1545, 0
      %v1583 = vsel %vm326, %v1546, 0
      %v1586 = vsel %vm326, %v1547, 0
      %v1589 = vsel %vm326, %v1548, 0
      %v1592 = vsel %vm326, %v1549, 0
      %v1595 = vsel %vm326, %v1550, 0
      %v1598 = vsel %vm326, %v1551, 0
      %v1601 = vsel %vm326, %v1552, 0
      %v1604 = vand.u32 %v1554, %v378
      %1606 = vmatpush.bf16.msra.mxu0 0
      %1607 = vmatpush.bf16.msra.mxu0 0
      %1608 = vmatpush.bf16.msra.mxu0 0
      %1609 = vmatpush.bf16.msra.mxu0 0
      %1610 = vmatpush.bf16.msra.mxu0 0
      %1611 = vmatpush.bf16.msra.mxu0 0
      %1612 = vmatpush.bf16.msra.mxu0 0
      %1613 = vmatpush.bf16.msra.mxu0 %v1604
      %1614 = vmatmul.bf16.gmra.mxu0 %v1556
      %v1615 = vpop.f32.mrf.mxu0
      %v1616 = vadd.f32 0.0, %v1615
      %v1617 = vpop.f32.mrf.mxu0
      %v1618 = vadd.f32 0.0, %v1617
      %1619 = vmatmul.bf16.gmra.mxu0 %v1559
      %v1620 = vpop.f32.mrf.mxu0
      %v1621 = vadd.f32 0.0, %v1620
      %v1622 = vpop.f32.mrf.mxu0
      %v1623 = vadd.f32 0.0, %v1622
      %1624 = vmatmul.bf16.gmra.mxu0 %v1562
      %v1625 = vpop.f32.mrf.mxu0
      %v1626 = vadd.f32 0.0, %v1625
      %v1627 = vpop.f32.mrf.mxu0
      %v1628 = vadd.f32 0.0, %v1627
      %1629 = vmatmul.bf16.gmra.mxu0 %v1565
      %v1630 = vpop.f32.mrf.mxu0
      %v1631 = vadd.f32 0.0, %v1630
      %v1632 = vpop.f32.mrf.mxu0
      %v1633 = vadd.f32 0.0, %v1632
      %1634 = vmatmul.bf16.gmra.mxu0 %v1568
      %v1635 = vpop.f32.mrf.mxu0
      %v1636 = vadd.f32 0.0, %v1635
      %v1637 = vpop.f32.mrf.mxu0
      %v1638 = vadd.f32 0.0, %v1637
      %1639 = vmatmul.bf16.gmra.mxu0 %v1571
      %v1640 = vpop.f32.mrf.mxu0
      %v1641 = vadd.f32 0.0, %v1640
      %v1642 = vpop.f32.mrf.mxu0
      %v1643 = vadd.f32 0.0, %v1642
      %1644 = vmatmul.bf16.gmra.mxu0 %v1574
      %v1645 = vpop.f32.mrf.mxu0
      %v1646 = vadd.f32 0.0, %v1645
      %v1647 = vpop.f32.mrf.mxu0
      %v1648 = vadd.f32 0.0, %v1647
      %1649 = vmatmul.bf16.gmra.mxu0 %v1577
      %v1650 = vpop.f32.mrf.mxu0
      %v1651 = vadd.f32 0.0, %v1650
      %v1652 = vpop.f32.mrf.mxu0
      %v1653 = vadd.f32 0.0, %v1652
      %1654 = vmatmul.bf16.gmra.mxu0 %v1580
      %v1655 = vpop.f32.mrf.mxu0
      %v1656 = vadd.f32 0.0, %v1655
      %v1657 = vpop.f32.mrf.mxu0
      %v1658 = vadd.f32 0.0, %v1657
      %1659 = vmatmul.bf16.gmra.mxu0 %v1583
      %v1660 = vpop.f32.mrf.mxu0
      %v1661 = vadd.f32 0.0, %v1660
      %v1662 = vpop.f32.mrf.mxu0
      %v1663 = vadd.f32 0.0, %v1662
      %1664 = vmatmul.bf16.gmra.mxu0 %v1586
      %v1665 = vpop.f32.mrf.mxu0
      %v1666 = vadd.f32 0.0, %v1665
      %v1667 = vpop.f32.mrf.mxu0
      %v1668 = vadd.f32 0.0, %v1667
      %1669 = vmatmul.bf16.gmra.mxu0 %v1589
      %v1670 = vpop.f32.mrf.mxu0
      %v1671 = vadd.f32 0.0, %v1670
      %v1672 = vpop.f32.mrf.mxu0
      %v1673 = vadd.f32 0.0, %v1672
      %1674 = vmatmul.bf16.gmra.mxu0 %v1592
      %v1675 = vpop.f32.mrf.mxu0
      %v1676 = vadd.f32 0.0, %v1675
      %v1677 = vpop.f32.mrf.mxu0
      %v1678 = vadd.f32 0.0, %v1677
      %1679 = vmatmul.bf16.gmra.mxu0 %v1595
      %v1680 = vpop.f32.mrf.mxu0
      %v1681 = vadd.f32 0.0, %v1680
      %v1682 = vpop.f32.mrf.mxu0
      %v1683 = vadd.f32 0.0, %v1682
      %1684 = vmatmul.bf16.gmra.mxu0 %v1598
      %v1685 = vpop.f32.mrf.mxu0
      %v1686 = vadd.f32 0.0, %v1685
      %v1687 = vpop.f32.mrf.mxu0
      %v1688 = vadd.f32 0.0, %v1687
      %1689 = vmatmul.bf16.gmra.mxu0 %v1601
      %v1690 = vpop.f32.mrf.mxu0
      %v1691 = vadd.f32 0.0, %v1690
      %v1692 = vpop.f32.mrf.mxu0
      %v1693 = vadd.f32 0.0, %v1692
      %1694 = vdwg.mxu0
      %v1695 = vadd.f32 %v1470, %v1616
      %v1696 = vadd.f32 %v1471, %v1618
      %v1697 = vadd.f32 %v1472, %v1621
      %v1698 = vadd.f32 %v1473, %v1623
      %v1699 = vadd.f32 %v1474, %v1626
      %v1700 = vadd.f32 %v1475, %v1628
      %v1701 = vadd.f32 %v1476, %v1631
      %v1702 = vadd.f32 %v1477, %v1633
      %v1703 = vadd.f32 %v1478, %v1636
      %v1704 = vadd.f32 %v1479, %v1638
      %v1705 = vadd.f32 %v1480, %v1641
      %v1706 = vadd.f32 %v1481, %v1643
      %v1707 = vadd.f32 %v1482, %v1646
      %v1708 = vadd.f32 %v1483, %v1648
      %v1709 = vadd.f32 %v1484, %v1651
      %v1710 = vadd.f32 %v1485, %v1653
      %v1711 = vadd.f32 %v1486, %v1656
      %v1712 = vadd.f32 %v1487, %v1658
      %v1713 = vadd.f32 %v1488, %v1661
      %v1714 = vadd.f32 %v1489, %v1663
      %v1715 = vadd.f32 %v1490, %v1666
      %v1716 = vadd.f32 %v1491, %v1668
      %v1717 = vadd.f32 %v1492, %v1671
      %v1718 = vadd.f32 %v1493, %v1673
      %v1719 = vadd.f32 %v1494, %v1676
      %v1720 = vadd.f32 %v1495, %v1678
      %v1721 = vadd.f32 %v1496, %v1681
      %v1722 = vadd.f32 %v1497, %v1683
      %v1723 = vadd.f32 %v1498, %v1686
      %v1724 = vadd.f32 %v1499, %v1688
      %v1725 = vadd.f32 %v1500, %v1691
      %v1726 = vadd.f32 %v1501, %v1693
      %v1727 = vld [vmem:[%s1504 + $0x1] sm:$0xff]
      %v1728 = vld [vmem:[%s1504 + $0x9] sm:$0xff]
      %v1729 = vld [vmem:[%s1504 + $0x11] sm:$0xff]
      %v1730 = vld [vmem:[%s1504 + $0x19] sm:$0xff]
      %v1731 = vld [vmem:[%s1504 + $0x29] sm:$0xff]
      %v1732 = vld [vmem:[%s1504 + $0x31] sm:$0xff]
      %v1733 = vld [vmem:[%s1504 + $0x39] sm:$0xff]
      %v1734 = vld [vmem:[%s1504 + $0x41] sm:$0xff]
      %v1735 = vld [vmem:[%s1504 + $0x51] sm:$0xff]
      %v1736 = vld [vmem:[%s1504 + $0x59] sm:$0xff]
      %v1737 = vld [vmem:[%s1504 + $0x61] sm:$0xff]
      %v1738 = vld [vmem:[%s1504 + $0x69] sm:$0xff]
      %v1739 = vld [vmem:[%s1504 + $0x79] sm:$0xff]
      %v1740 = vld [vmem:[%s1504 + $0x81] sm:$0xff]
      %v1741 = vld [vmem:[%s1504 + $0x89] sm:$0xff]
      %v1742 = vld [vmem:[%s1504 + $0x91] sm:$0xff]
      %v1743 = vld [vmem:[%s1504 + $0xa1] sm:$0xff]
      %v1744 = vld [vmem:[%s1504 + $0xa9] sm:$0xff]
      %v1745 = vld [vmem:[%s1504 + $0xb1] sm:$0xff]
      %v1746 = vld [vmem:[%s1504 + $0xb9] sm:$0xff]
      %v1747 = vld [vmem:[%s1504 + $0xc9] sm:$0xff]
      %v1748 = vld [vmem:[%s1504 + $0xd1] sm:$0xff]
      %v1749 = vld [vmem:[%s1504 + $0xd9] sm:$0xff]
      %v1750 = vld [vmem:[%s1504 + $0xe1] sm:$0xff]
      %v1751 = vld [vmem:[%s1504 + $0xf1] sm:$0xff]
      %v1752 = vld [vmem:[%s1504 + $0xf9] sm:$0xff]
      %v1753 = vld [vmem:[%s1504 + $0x101] sm:$0xff]
      %v1754 = vld [vmem:[%s1504 + $0x109] sm:$0xff]
      %v1755 = vld [vmem:[%s1504 + $0x119] sm:$0xff]
      %v1756 = vld [vmem:[%s1504 + $0x121] sm:$0xff]
      %v1757 = vld [vmem:[%s1504 + $0x129] sm:$0xff]
      %v1758 = vld [vmem:[%s1504 + $0x131] sm:$0xff]
      %v1759 = vpack.c.bf16 %v1728, %v1727
      %v1760 = vpack.c.bf16 %v1730, %v1729
      %v1761 = vpack.c.bf16 %v1732, %v1731
      %v1762 = vpack.c.bf16 %v1734, %v1733
      %v1763 = vpack.c.bf16 %v1736, %v1735
      %v1764 = vpack.c.bf16 %v1738, %v1737
      %v1765 = vpack.c.bf16 %v1740, %v1739
      %v1766 = vpack.c.bf16 %v1742, %v1741
      %v1767 = vpack.c.bf16 %v1744, %v1743
      %v1768 = vpack.c.bf16 %v1746, %v1745
      %v1769 = vpack.c.bf16 %v1748, %v1747
      %v1770 = vpack.c.bf16 %v1750, %v1749
      %v1771 = vpack.c.bf16 %v1752, %v1751
      %v1772 = vpack.c.bf16 %v1754, %v1753
      %v1773 = vpack.c.bf16 %v1756, %v1755
      %v1774 = vpack.c.bf16 %v1758, %v1757
      %s1775 = scalar_lea.vmem %s1, 14
      %v1776 = vld [vmem:[%s1775] sm:$0x3]
      %v1778 = vsel %vm326, %v1759, 0
      %v1781 = vsel %vm326, %v1760, 0
      %v1784 = vsel %vm326, %v1761, 0
      %v1787 = vsel %vm326, %v1762, 0
      %v1790 = vsel %vm326, %v1763, 0
      %v1793 = vsel %vm326, %v1764, 0
      %v1796 = vsel %vm326, %v1765, 0
      %v1799 = vsel %vm326, %v1766, 0
      %v1802 = vsel %vm326, %v1767, 0
      %v1805 = vsel %vm326, %v1768, 0
      %v1808 = vsel %vm326, %v1769, 0
      %v1811 = vsel %vm326, %v1770, 0
      %v1814 = vsel %vm326, %v1771, 0
      %v1817 = vsel %vm326, %v1772, 0
      %v1820 = vsel %vm326, %v1773, 0
      %v1823 = vsel %vm326, %v1774, 0
      %v1826 = vand.u32 %v1776, %v378
      %1828 = vmatpush.bf16.msra.mxu0 0
      %1829 = vmatpush.bf16.msra.mxu0 0
      %1830 = vmatpush.bf16.msra.mxu0 0
      %1831 = vmatpush.bf16.msra.mxu0 0
      %1832 = vmatpush.bf16.msra.mxu0 0
      %1833 = vmatpush.bf16.msra.mxu0 0
      %1834 = vmatpush.bf16.msra.mxu0 0
      %1835 = vmatpush.bf16.msra.mxu0 %v1826
      %1836 = vmatmul.bf16.gmra.mxu0 %v1778
      %v1837 = vpop.f32.mrf.mxu0
      %v1838 = vadd.f32 0.0, %v1837
      %v1839 = vpop.f32.mrf.mxu0
      %v1840 = vadd.f32 0.0, %v1839
      %1841 = vmatmul.bf16.gmra.mxu0 %v1781
      %v1842 = vpop.f32.mrf.mxu0
      %v1843 = vadd.f32 0.0, %v1842
      %v1844 = vpop.f32.mrf.mxu0
      %v1845 = vadd.f32 0.0, %v1844
      %1846 = vmatmul.bf16.gmra.mxu0 %v1784
      %v1847 = vpop.f32.mrf.mxu0
      %v1848 = vadd.f32 0.0, %v1847
      %v1849 = vpop.f32.mrf.mxu0
      %v1850 = vadd.f32 0.0, %v1849
      %1851 = vmatmul.bf16.gmra.mxu0 %v1787
      %v1852 = vpop.f32.mrf.mxu0
      %v1853 = vadd.f32 0.0, %v1852
      %v1854 = vpop.f32.mrf.mxu0
      %v1855 = vadd.f32 0.0, %v1854
      %1856 = vmatmul.bf16.gmra.mxu0 %v1790
      %v1857 = vpop.f32.mrf.mxu0
      %v1858 = vadd.f32 0.0, %v1857
      %v1859 = vpop.f32.mrf.mxu0
      %v1860 = vadd.f32 0.0, %v1859
      %1861 = vmatmul.bf16.gmra.mxu0 %v1793
      %v1862 = vpop.f32.mrf.mxu0
      %v1863 = vadd.f32 0.0, %v1862
      %v1864 = vpop.f32.mrf.mxu0
      %v1865 = vadd.f32 0.0, %v1864
      %1866 = vmatmul.bf16.gmra.mxu0 %v1796
      %v1867 = vpop.f32.mrf.mxu0
      %v1868 = vadd.f32 0.0, %v1867
      %v1869 = vpop.f32.mrf.mxu0
      %v1870 = vadd.f32 0.0, %v1869
      %1871 = vmatmul.bf16.gmra.mxu0 %v1799
      %v1872 = vpop.f32.mrf.mxu0
      %v1873 = vadd.f32 0.0, %v1872
      %v1874 = vpop.f32.mrf.mxu0
      %v1875 = vadd.f32 0.0, %v1874
      %1876 = vmatmul.bf16.gmra.mxu0 %v1802
      %v1877 = vpop.f32.mrf.mxu0
      %v1878 = vadd.f32 0.0, %v1877
      %v1879 = vpop.f32.mrf.mxu0
      %v1880 = vadd.f32 0.0, %v1879
      %1881 = vmatmul.bf16.gmra.mxu0 %v1805
      %v1882 = vpop.f32.mrf.mxu0
      %v1883 = vadd.f32 0.0, %v1882
      %v1884 = vpop.f32.mrf.mxu0
      %v1885 = vadd.f32 0.0, %v1884
      %1886 = vmatmul.bf16.gmra.mxu0 %v1808
      %v1887 = vpop.f32.mrf.mxu0
      %v1888 = vadd.f32 0.0, %v1887
      %v1889 = vpop.f32.mrf.mxu0
      %v1890 = vadd.f32 0.0, %v1889
      %1891 = vmatmul.bf16.gmra.mxu0 %v1811
      %v1892 = vpop.f32.mrf.mxu0
      %v1893 = vadd.f32 0.0, %v1892
      %v1894 = vpop.f32.mrf.mxu0
      %v1895 = vadd.f32 0.0, %v1894
      %1896 = vmatmul.bf16.gmra.mxu0 %v1814
      %v1897 = vpop.f32.mrf.mxu0
      %v1898 = vadd.f32 0.0, %v1897
      %v1899 = vpop.f32.mrf.mxu0
      %v1900 = vadd.f32 0.0, %v1899
      %1901 = vmatmul.bf16.gmra.mxu0 %v1817
      %v1902 = vpop.f32.mrf.mxu0
      %v1903 = vadd.f32 0.0, %v1902
      %v1904 = vpop.f32.mrf.mxu0
      %v1905 = vadd.f32 0.0, %v1904
      %1906 = vmatmul.bf16.gmra.mxu0 %v1820
      %v1907 = vpop.f32.mrf.mxu0
      %v1908 = vadd.f32 0.0, %v1907
      %v1909 = vpop.f32.mrf.mxu0
      %v1910 = vadd.f32 0.0, %v1909
      %1911 = vmatmul.bf16.gmra.mxu0 %v1823
      %v1912 = vpop.f32.mrf.mxu0
      %v1913 = vadd.f32 0.0, %v1912
      %v1914 = vpop.f32.mrf.mxu0
      %v1915 = vadd.f32 0.0, %v1914
      %1916 = vdwg.mxu0
      %v1917 = vadd.f32 %v1695, %v1838
      %v1918 = vadd.f32 %v1696, %v1840
      %v1919 = vadd.f32 %v1697, %v1843
      %v1920 = vadd.f32 %v1698, %v1845
      %v1921 = vadd.f32 %v1699, %v1848
      %v1922 = vadd.f32 %v1700, %v1850
      %v1923 = vadd.f32 %v1701, %v1853
      %v1924 = vadd.f32 %v1702, %v1855
      %v1925 = vadd.f32 %v1703, %v1858
      %v1926 = vadd.f32 %v1704, %v1860
      %v1927 = vadd.f32 %v1705, %v1863
      %v1928 = vadd.f32 %v1706, %v1865
      %v1929 = vadd.f32 %v1707, %v1868
      %v1930 = vadd.f32 %v1708, %v1870
      %v1931 = vadd.f32 %v1709, %v1873
      %v1932 = vadd.f32 %v1710, %v1875
      %v1933 = vadd.f32 %v1711, %v1878
      %v1934 = vadd.f32 %v1712, %v1880
      %v1935 = vadd.f32 %v1713, %v1883
      %v1936 = vadd.f32 %v1714, %v1885
      %v1937 = vadd.f32 %v1715, %v1888
      %v1938 = vadd.f32 %v1716, %v1890
      %v1939 = vadd.f32 %v1717, %v1893
      %v1940 = vadd.f32 %v1718, %v1895
      %v1941 = vadd.f32 %v1719, %v1898
      %v1942 = vadd.f32 %v1720, %v1900
      %v1943 = vadd.f32 %v1721, %v1903
      %v1944 = vadd.f32 %v1722, %v1905
      %v1945 = vadd.f32 %v1723, %v1908
      %v1946 = vadd.f32 %v1724, %v1910
      %v1947 = vadd.f32 %v1725, %v1913
      %v1948 = vadd.f32 %v1726, %v1915
      %v1949 = vld [vmem:[%s1504 + $0x2] sm:$0xff]
      %v1950 = vld [vmem:[%s1504 + $0xa] sm:$0xff]
      %v1951 = vld [vmem:[%s1504 + $0x12] sm:$0xff]
      %v1952 = vld [vmem:[%s1504 + $0x1a] sm:$0xff]
      %v1953 = vld [vmem:[%s1504 + $0x2a] sm:$0xff]
      %v1954 = vld [vmem:[%s1504 + $0x32] sm:$0xff]
      %v1955 = vld [vmem:[%s1504 + $0x3a] sm:$0xff]
      %v1956 = vld [vmem:[%s1504 + $0x42] sm:$0xff]
      %v1957 = vld [vmem:[%s1504 + $0x52] sm:$0xff]
      %v1958 = vld [vmem:[%s1504 + $0x5a] sm:$0xff]
      %v1959 = vld [vmem:[%s1504 + $0x62] sm:$0xff]
      %v1960 = vld [vmem:[%s1504 + $0x6a] sm:$0xff]
      %v1961 = vld [vmem:[%s1504 + $0x7a] sm:$0xff]
      %v1962 = vld [vmem:[%s1504 + $0x82] sm:$0xff]
      %v1963 = vld [vmem:[%s1504 + $0x8a] sm:$0xff]
      %v1964 = vld [vmem:[%s1504 + $0x92] sm:$0xff]
      %v1965 = vld [vmem:[%s1504 + $0xa2] sm:$0xff]
      %v1966 = vld [vmem:[%s1504 + $0xaa] sm:$0xff]
      %v1967 = vld [vmem:[%s1504 + $0xb2] sm:$0xff]
      %v1968 = vld [vmem:[%s1504 + $0xba] sm:$0xff]
      %v1969 = vld [vmem:[%s1504 + $0xca] sm:$0xff]
      %v1970 = vld [vmem:[%s1504 + $0xd2] sm:$0xff]
      %v1971 = vld [vmem:[%s1504 + $0xda] sm:$0xff]
      %v1972 = vld [vmem:[%s1504 + $0xe2] sm:$0xff]
      %v1973 = vld [vmem:[%s1504 + $0xf2] sm:$0xff]
      %v1974 = vld [vmem:[%s1504 + $0xfa] sm:$0xff]
      %v1975 = vld [vmem:[%s1504 + $0x102] sm:$0xff]
      %v1976 = vld [vmem:[%s1504 + $0x10a] sm:$0xff]
      %v1977 = vld [vmem:[%s1504 + $0x11a] sm:$0xff]
      %v1978 = vld [vmem:[%s1504 + $0x122] sm:$0xff]
      %v1979 = vld [vmem:[%s1504 + $0x12a] sm:$0xff]
      %v1980 = vld [vmem:[%s1504 + $0x132] sm:$0xff]
      %v1981 = vpack.c.bf16 %v1950, %v1949
      %v1982 = vpack.c.bf16 %v1952, %v1951
      %v1983 = vpack.c.bf16 %v1954, %v1953
      %v1984 = vpack.c.bf16 %v1956, %v1955
      %v1985 = vpack.c.bf16 %v1958, %v1957
      %v1986 = vpack.c.bf16 %v1960, %v1959
      %v1987 = vpack.c.bf16 %v1962, %v1961
      %v1988 = vpack.c.bf16 %v1964, %v1963
      %v1989 = vpack.c.bf16 %v1966, %v1965
      %v1990 = vpack.c.bf16 %v1968, %v1967
      %v1991 = vpack.c.bf16 %v1970, %v1969
      %v1992 = vpack.c.bf16 %v1972, %v1971
      %v1993 = vpack.c.bf16 %v1974, %v1973
      %v1994 = vpack.c.bf16 %v1976, %v1975
      %v1995 = vpack.c.bf16 %v1978, %v1977
      %v1996 = vpack.c.bf16 %v1980, %v1979
      %s1997 = scalar_lea.vmem %s1, 16
      %v1998 = vld [vmem:[%s1997] sm:$0x3]
      %v2000 = vsel %vm326, %v1981, 0
      %v2003 = vsel %vm326, %v1982, 0
      %v2006 = vsel %vm326, %v1983, 0
      %v2009 = vsel %vm326, %v1984, 0
      %v2012 = vsel %vm326, %v1985, 0
      %v2015 = vsel %vm326, %v1986, 0
      %v2018 = vsel %vm326, %v1987, 0
      %v2021 = vsel %vm326, %v1988, 0
      %v2024 = vsel %vm326, %v1989, 0
      %v2027 = vsel %vm326, %v1990, 0
      %v2030 = vsel %vm326, %v1991, 0
      %v2033 = vsel %vm326, %v1992, 0
      %v2036 = vsel %vm326, %v1993, 0
      %v2039 = vsel %vm326, %v1994, 0
      %v2042 = vsel %vm326, %v1995, 0
      %v2045 = vsel %vm326, %v1996, 0
      %v2048 = vand.u32 %v1998, %v378
      %2050 = vmatpush.bf16.msra.mxu0 0
      %2051 = vmatpush.bf16.msra.mxu0 0
      %2052 = vmatpush.bf16.msra.mxu0 0
      %2053 = vmatpush.bf16.msra.mxu0 0
      %2054 = vmatpush.bf16.msra.mxu0 0
      %2055 = vmatpush.bf16.msra.mxu0 0
      %2056 = vmatpush.bf16.msra.mxu0 0
      %2057 = vmatpush.bf16.msra.mxu0 %v2048
      %2058 = vmatmul.bf16.gmra.mxu0 %v2000
      %v2059 = vpop.f32.mrf.mxu0
      %v2060 = vadd.f32 0.0, %v2059
      %v2061 = vpop.f32.mrf.mxu0
      %v2062 = vadd.f32 0.0, %v2061
      %2063 = vmatmul.bf16.gmra.mxu0 %v2003
      %v2064 = vpop.f32.mrf.mxu0
      %v2065 = vadd.f32 0.0, %v2064
      %v2066 = vpop.f32.mrf.mxu0
      %v2067 = vadd.f32 0.0, %v2066
      %2068 = vmatmul.bf16.gmra.mxu0 %v2006
      %v2069 = vpop.f32.mrf.mxu0
      %v2070 = vadd.f32 0.0, %v2069
      %v2071 = vpop.f32.mrf.mxu0
      %v2072 = vadd.f32 0.0, %v2071
      %2073 = vmatmul.bf16.gmra.mxu0 %v2009
      %v2074 = vpop.f32.mrf.mxu0
      %v2075 = vadd.f32 0.0, %v2074
      %v2076 = vpop.f32.mrf.mxu0
      %v2077 = vadd.f32 0.0, %v2076
      %2078 = vmatmul.bf16.gmra.mxu0 %v2012
      %v2079 = vpop.f32.mrf.mxu0
      %v2080 = vadd.f32 0.0, %v2079
      %v2081 = vpop.f32.mrf.mxu0
      %v2082 = vadd.f32 0.0, %v2081
      %2083 = vmatmul.bf16.gmra.mxu0 %v2015
      %v2084 = vpop.f32.mrf.mxu0
      %v2085 = vadd.f32 0.0, %v2084
      %v2086 = vpop.f32.mrf.mxu0
      %v2087 = vadd.f32 0.0, %v2086
      %2088 = vmatmul.bf16.gmra.mxu0 %v2018
      %v2089 = vpop.f32.mrf.mxu0
      %v2090 = vadd.f32 0.0, %v2089
      %v2091 = vpop.f32.mrf.mxu0
      %v2092 = vadd.f32 0.0, %v2091
      %2093 = vmatmul.bf16.gmra.mxu0 %v2021
      %v2094 = vpop.f32.mrf.mxu0
      %v2095 = vadd.f32 0.0, %v2094
      %v2096 = vpop.f32.mrf.mxu0
      %v2097 = vadd.f32 0.0, %v2096
      %2098 = vmatmul.bf16.gmra.mxu0 %v2024
      %v2099 = vpop.f32.mrf.mxu0
      %v2100 = vadd.f32 0.0, %v2099
      %v2101 = vpop.f32.mrf.mxu0
      %v2102 = vadd.f32 0.0, %v2101
      %2103 = vmatmul.bf16.gmra.mxu0 %v2027
      %v2104 = vpop.f32.mrf.mxu0
      %v2105 = vadd.f32 0.0, %v2104
      %v2106 = vpop.f32.mrf.mxu0
      %v2107 = vadd.f32 0.0, %v2106
      %2108 = vmatmul.bf16.gmra.mxu0 %v2030
      %v2109 = vpop.f32.mrf.mxu0
      %v2110 = vadd.f32 0.0, %v2109
      %v2111 = vpop.f32.mrf.mxu0
      %v2112 = vadd.f32 0.0, %v2111
      %2113 = vmatmul.bf16.gmra.mxu0 %v2033
      %v2114 = vpop.f32.mrf.mxu0
      %v2115 = vadd.f32 0.0, %v2114
      %v2116 = vpop.f32.mrf.mxu0
      %v2117 = vadd.f32 0.0, %v2116
      %2118 = vmatmul.bf16.gmra.mxu0 %v2036
      %v2119 = vpop.f32.mrf.mxu0
      %v2120 = vadd.f32 0.0, %v2119
      %v2121 = vpop.f32.mrf.mxu0
      %v2122 = vadd.f32 0.0, %v2121
      %2123 = vmatmul.bf16.gmra.mxu0 %v2039
      %v2124 = vpop.f32.mrf.mxu0
      %v2125 = vadd.f32 0.0, %v2124
      %v2126 = vpop.f32.mrf.mxu0
      %v2127 = vadd.f32 0.0, %v2126
      %2128 = vmatmul.bf16.gmra.mxu0 %v2042
      %v2129 = vpop.f32.mrf.mxu0
      %v2130 = vadd.f32 0.0, %v2129
      %v2131 = vpop.f32.mrf.mxu0
      %v2132 = vadd.f32 0.0, %v2131
      %2133 = vmatmul.bf16.gmra.mxu0 %v2045
      %v2134 = vpop.f32.mrf.mxu0
      %v2135 = vadd.f32 0.0, %v2134
      %v2136 = vpop.f32.mrf.mxu0
      %v2137 = vadd.f32 0.0, %v2136
      %2138 = vdwg.mxu0
      %v2139 = vadd.f32 %v1917, %v2060
      %v2140 = vadd.f32 %v1918, %v2062
      %v2141 = vadd.f32 %v1919, %v2065
      %v2142 = vadd.f32 %v1920, %v2067
      %v2143 = vadd.f32 %v1921, %v2070
      %v2144 = vadd.f32 %v1922, %v2072
      %v2145 = vadd.f32 %v1923, %v2075
      %v2146 = vadd.f32 %v1924, %v2077
      %v2147 = vadd.f32 %v1925, %v2080
      %v2148 = vadd.f32 %v1926, %v2082
      %v2149 = vadd.f32 %v1927, %v2085
      %v2150 = vadd.f32 %v1928, %v2087
      %v2151 = vadd.f32 %v1929, %v2090
      %v2152 = vadd.f32 %v1930, %v2092
      %v2153 = vadd.f32 %v1931, %v2095
      %v2154 = vadd.f32 %v1932, %v2097
      %v2155 = vadd.f32 %v1933, %v2100
      %v2156 = vadd.f32 %v1934, %v2102
      %v2157 = vadd.f32 %v1935, %v2105
      %v2158 = vadd.f32 %v1936, %v2107
      %v2159 = vadd.f32 %v1937, %v2110
      %v2160 = vadd.f32 %v1938, %v2112
      %v2161 = vadd.f32 %v1939, %v2115
      %v2162 = vadd.f32 %v1940, %v2117
      %v2163 = vadd.f32 %v1941, %v2120
      %v2164 = vadd.f32 %v1942, %v2122
      %v2165 = vadd.f32 %v1943, %v2125
      %v2166 = vadd.f32 %v1944, %v2127
      %v2167 = vadd.f32 %v1945, %v2130
      %v2168 = vadd.f32 %v1946, %v2132
      %v2169 = vadd.f32 %v1947, %v2135
      %v2170 = vadd.f32 %v1948, %v2137
      %v2171 = vld [vmem:[%s2] sm:$0x1]
      %v2173 = vperm.slane %v2171, 0
      %v2175 = vmul.f32 %v2139, %v2173
      %v2176 = vmul.f32 %v2140, %v2173
      %v2177 = vmul.f32 %v2141, %v2173
      %v2178 = vmul.f32 %v2142, %v2173
      %v2179 = vmul.f32 %v2143, %v2173
      %v2180 = vmul.f32 %v2144, %v2173
      %v2181 = vmul.f32 %v2145, %v2173
      %v2182 = vmul.f32 %v2146, %v2173
      %v2183 = vmul.f32 %v2147, %v2173
      %v2184 = vmul.f32 %v2148, %v2173
      %v2185 = vmul.f32 %v2149, %v2173
      %v2186 = vmul.f32 %v2150, %v2173
      %v2187 = vmul.f32 %v2151, %v2173
      %v2188 = vmul.f32 %v2152, %v2173
      %v2189 = vmul.f32 %v2153, %v2173
      %v2190 = vmul.f32 %v2154, %v2173
      %v2191 = vmul.f32 %v2155, %v2173
      %v2192 = vmul.f32 %v2156, %v2173
      %v2193 = vmul.f32 %v2157, %v2173
      %v2194 = vmul.f32 %v2158, %v2173
      %v2195 = vmul.f32 %v2159, %v2173
      %v2196 = vmul.f32 %v2160, %v2173
      %v2197 = vmul.f32 %v2161, %v2173
      %v2198 = vmul.f32 %v2162, %v2173
      %v2199 = vmul.f32 %v2163, %v2173
      %v2200 = vmul.f32 %v2164, %v2173
      %v2201 = vmul.f32 %v2165, %v2173
      %v2202 = vmul.f32 %v2166, %v2173
      %v2203 = vmul.f32 %v2167, %v2173
      %v2204 = vmul.f32 %v2168, %v2173
      %v2205 = vmul.f32 %v2169, %v2173
      %v2206 = vmul.f32 %v2170, %v2173
      %v2207 = vld [vmem:[%s3] sm:$0x1]
      %v2209 = vperm.slane %v2207, 0
      %v2211 = vadd.f32 %v2175, %v2209
      %v2212 = vadd.f32 %v2176, %v2209
      %v2213 = vadd.f32 %v2177, %v2209
      %v2214 = vadd.f32 %v2178, %v2209
      %v2215 = vadd.f32 %v2179, %v2209
      %v2216 = vadd.f32 %v2180, %v2209
      %v2217 = vadd.f32 %v2181, %v2209
      %v2218 = vadd.f32 %v2182, %v2209
      %v2219 = vadd.f32 %v2183, %v2209
      %v2220 = vadd.f32 %v2184, %v2209
      %v2221 = vadd.f32 %v2185, %v2209
      %v2222 = vadd.f32 %v2186, %v2209
      %v2223 = vadd.f32 %v2187, %v2209
      %v2224 = vadd.f32 %v2188, %v2209
      %v2225 = vadd.f32 %v2189, %v2209
      %v2226 = vadd.f32 %v2190, %v2209
      %v2227 = vadd.f32 %v2191, %v2209
      %v2228 = vadd.f32 %v2192, %v2209
      %v2229 = vadd.f32 %v2193, %v2209
      %v2230 = vadd.f32 %v2194, %v2209
      %v2231 = vadd.f32 %v2195, %v2209
      %v2232 = vadd.f32 %v2196, %v2209
      %v2233 = vadd.f32 %v2197, %v2209
      %v2234 = vadd.f32 %v2198, %v2209
      %v2235 = vadd.f32 %v2199, %v2209
      %v2236 = vadd.f32 %v2200, %v2209
      %v2237 = vadd.f32 %v2201, %v2209
      %v2238 = vadd.f32 %v2202, %v2209
      %v2239 = vadd.f32 %v2203, %v2209
      %v2240 = vadd.f32 %v2204, %v2209
      %v2241 = vadd.f32 %v2205, %v2209
      %v2242 = vadd.f32 %v2206, %v2209
      %vm2243 = vcmask 261120
      %2244 = vst.msk [vmem:[%s221] sm:$0xff] %vm2243, %v2211
      %2245 = vst.msk [vmem:[%s221 + $0x8] sm:$0xff] %vm2243, %v2212
      %2246 = vst.msk [vmem:[%s221 + $0x10] sm:$0xff] %vm2243, %v2213
      %2247 = vst.msk [vmem:[%s221 + $0x18] sm:$0xff] %vm2243, %v2214
      %2248 = vst.msk [vmem:[%s221 + $0x20] sm:$0xff] %vm2243, %v2215
      %2249 = vst.msk [vmem:[%s221 + $0x28] sm:$0xff] %vm2243, %v2216
      %2250 = vst.msk [vmem:[%s221 + $0x30] sm:$0xff] %vm2243, %v2217
      %2251 = vst.msk [vmem:[%s221 + $0x38] sm:$0xff] %vm2243, %v2218
      %2252 = vst.msk [vmem:[%s221 + $0x40] sm:$0xff] %vm2243, %v2219
      %2253 = vst.msk [vmem:[%s221 + $0x48] sm:$0xff] %vm2243, %v2220
      %2254 = vst.msk [vmem:[%s221 + $0x50] sm:$0xff] %vm2243, %v2221
      %2255 = vst.msk [vmem:[%s221 + $0x58] sm:$0xff] %vm2243, %v2222
      %2256 = vst.msk [vmem:[%s221 + $0x60] sm:$0xff] %vm2243, %v2223
      %2257 = vst.msk [vmem:[%s221 + $0x68] sm:$0xff] %vm2243, %v2224
      %2258 = vst.msk [vmem:[%s221 + $0x70] sm:$0xff] %vm2243, %v2225
      %2259 = vst.msk [vmem:[%s221 + $0x78] sm:$0xff] %vm2243, %v2226
      %2260 = vst.msk [vmem:[%s221 + $0x80] sm:$0xff] %vm2243, %v2227
      %2261 = vst.msk [vmem:[%s221 + $0x88] sm:$0xff] %vm2243, %v2228
      %2262 = vst.msk [vmem:[%s221 + $0x90] sm:$0xff] %vm2243, %v2229
      %2263 = vst.msk [vmem:[%s221 + $0x98] sm:$0xff] %vm2243, %v2230
      %2264 = vst.msk [vmem:[%s221 + $0xa0] sm:$0xff] %vm2243, %v2231
      %2265 = vst.msk [vmem:[%s221 + $0xa8] sm:$0xff] %vm2243, %v2232
      %2266 = vst.msk [vmem:[%s221 + $0xb0] sm:$0xff] %vm2243, %v2233
      %2267 = vst.msk [vmem:[%s221 + $0xb8] sm:$0xff] %vm2243, %v2234
      %2268 = vst.msk [vmem:[%s221 + $0xc0] sm:$0xff] %vm2243, %v2235
      %2269 = vst.msk [vmem:[%s221 + $0xc8] sm:$0xff] %vm2243, %v2236
      %2270 = vst.msk [vmem:[%s221 + $0xd0] sm:$0xff] %vm2243, %v2237
      %2271 = vst.msk [vmem:[%s221 + $0xd8] sm:$0xff] %vm2243, %v2238
      %2272 = vst.msk [vmem:[%s221 + $0xe0] sm:$0xff] %vm2243, %v2239
      %2273 = vst.msk [vmem:[%s221 + $0xe8] sm:$0xff] %vm2243, %v2240
      %2274 = vst.msk [vmem:[%s221 + $0xf0] sm:$0xff] %vm2243, %v2241
      %2275 = vst.msk [vmem:[%s221 + $0xf8] sm:$0xff] %vm2243, %v2242
      %s2276 = smul.u32 8, %s20
      %p2277 = scmp.lt.s32.totalorder %s19, 1
      %s2278 = scalar_select %p2277, %s19, 1
      %p2279 = scmp.lt.s32.totalorder %s2276, 31
      %s2280 = scalar_select %p2279, %s2276, 31
      %s2281 = smul.addr %s2280, 4
      %s2282 = smul.addr %s2278, 128
      %s2283 = sadd.s32 %s2281, %s2282
      %s2284 = smul.addr %s2283, 8
      %s2285 = scalar_lea.vmem %s4, %s2284
      // Predicated region
      $region37: #{search_stage_forward.7} parent=35 // pred_check
        %p2286 = pneg %p136
      $region38: #{search_stage_forward.7} parent=35 // pred_check_branch
        %2288 = sbr.rel (%p2286) target = $region40
      $region39: #{search_stage_forward.7} parent=35 // pred_region
        %s2289 = smul.u32 8, %s20
      $region40: #{search_stage_forward.7} parent=35 // pred_fallthru
        _
    $region36: #{search_stage_forward.7} parent=5 // pred_fallthru
      _
    %p2290 = scmp.le.s32.totalorder 2, %s10
    // Predicated region
    $region41: #{search_stage_forward.7} parent=5 // pred_check
      %p2291 = pneg %p2290
    $region42: #{search_stage_forward.7} parent=5 // pred_check_branch
      %2293 = sbr.rel (%p2291) target = $region44
    $region43: #{search_stage_forward.7} parent=5 // pred_region
      %s2294 = ssub.s32 %s10, 2
      // Predicated region
      $region45: #{search_stage_forward.7} parent=43 // pred_check
        %p2295 = pneg %p142
      $region46: #{search_stage_forward.7} parent=43 // pred_check_branch
        %2297 = sbr.rel (%p2295) target = $region48
      $region47: #{search_stage_forward.7} parent=43 // pred_region
        %s2298 = smul.u32 8, %s22
        %p2299 = scmp.lt.s32.totalorder %s21, 1
        %s2300 = scalar_select %p2299, %s21, 1
        %p2301 = scmp.lt.s32.totalorder %s2298, 31
        %s2302 = scalar_select %p2301, %s2298, 31
        %s2303 = smul.addr %s2302, 4
        %s2304 = smul.addr %s2300, 128
        %s2305 = sadd.s32 %s2303, %s2304
        %s2306 = smul.addr %s2305, 8
        %s2307 = scalar_lea.vmem %s4, %s2306
      $region48: #{search_stage_forward.7} parent=43 // pred_fallthru
        _
    $region44: #{search_stage_forward.7} parent=5 // pred_fallthru
      _
  $region6: #{search_stage_forward.7} parent=0 // loop_footer
    %s14 = sadd.s32 1, %s10
  $region7: #{search_stage_forward.7} parent=0 // loop_footer_branch
    %9 = sbr.rel target = $region3
  $region8: #{search_stage_forward.7} parent=0 // loop_exit
    _

// kernel: search_stage_forward.10
$region0: #{search_stage_forward.10}
  #allocation0 [shape = 'u32[]', space=smem, size = 0x4, offset = 0x4, fixed_abs, tag = 'smem constant byte address 0x4 - core index']
  #allocation1 [shape = 'u32[72,128]{1,0:T(1,128)}', space=vmem, size = 0x9000, scoped, tag = 'internal scratch']
  %s0 = inlined_call_operand.vmem [shape: f32[2,3], index: 0, kind: input, shape index: {}]
  %s1 = inlined_call_operand.vmem [shape: f32[2], index: 1, kind: input, shape index: {}]
  %s2 = inlined_call_operand.vmem [shape: f32[512,64], index: 2, kind: input, shape index: {}]
  %s3 = inlined_call_operand.vmem [shape: f32[512,128], index: 3, kind: output, shape index: {}]
  %s4 = sld [smem:[#allocation0]]
  $region53: #{search_stage_forward.10} parent=0
    _
  %s6 = ssub.s32 1, %s4
  %s7 = scalar_select 0, %s6, %s4
  $region1: #{search_stage_forward.10} parent=0
    #allocation2 [shape = 'u8[1024]{0}', space=smem, size = 0x400, scoped, tag = 'input window, operand 0, single buffered']
    #allocation3 [shape = 's32[2]{0}', space=sflag, size = 0x8, scoped, tag = 'scoped memory for search_stage_forward.10']
    #allocation4 [shape = 'u8[512]{0}', space=smem, size = 0x200, scoped, tag = 'input window, operand 1, single buffered']
    #allocation5 [shape = 's32[1]{0}', space=sflag, size = 0x4, scoped, tag = 'scoped memory for search_stage_forward.10']
    %8 = vsyncpa [#allocation3], 0
    %9 = vsyncpa [#allocation5], 0
    loop: start=0, step=1, limit=4
    $region2: #{search_stage_forward.10} parent=1 // loop_pre_header
      _
    $region3: #{search_stage_forward.10} parent=1 // loop_header
      %s11 = sphi 0, %s15
      %p12 = scmp.ge.s32.totalorder %s11, 4
      %s19 = sphi 0, %s19
      %s21 = sphi 0, %s19
      %s22 = sphi 0, %s21
      %s36 = sphi 0, %s22
      %s40 = sphi 0, %s40
      %s42 = sphi 0, %s40
      %s43 = sphi 0, %s42
      %s57 = sphi 0, %s43
      %s63 = sphi 0, %s65
      %s66 = sphi 0, %s63
      %s67 = sphi 0, %s66
      %s83 = sphi 0, %s67
      %s89 = sphi 0, %s91
      %s92 = sphi 0, %s89
      %s93 = sphi 0, %s92
      %s109 = sphi 0, %s93
    $region4: #{search_stage_forward.10} parent=1 // loop_header_branch
      %14 = sbr.rel (%p12) target = $region8
    $region5: #{search_stage_forward.10} parent=1 // loop_body
      %s16 = ssub.s32 %s11, 1
      %s17 = ssub.s32 %s11, 2
      %s18 = sadd.s32 %s11, 1
      %s20 = sadd.s32 %s19, 1
      %p23 = scmp.eq.s32.totalorder %s11, 1
      %p24 = scmp.ne.s32.totalorder %s19, %s21
      %p25 = scmp.eq.s32.totalorder %s11, 0
      %p26 = por %p24, %p25
      %p27 = scmp.ne.s32.totalorder %s19, %s21
      %p28 = scmp.eq.s32.totalorder %s16, 1
      %p29 = por %p27, %p28
      %p30 = scmp.ne.s32.totalorder %s21, %s22
      %p31 = scmp.eq.s32.totalorder %s16, 0
      %p32 = por %p30, %p31
      %p33 = scmp.ne.s32.totalorder %s21, %s22
      %p34 = scmp.eq.s32.totalorder %s17, 1
      %p35 = por %p33, %p34
      %p37 = scmp.ne.s32.totalorder %s22, %s36
      %p38 = scmp.eq.s32.totalorder %s17, 0
      %p39 = por %p37, %p38
      %s41 = sadd.s32 %s40, 1
      %p44 = scmp.eq.s32.totalorder %s11, 1
      %p45 = scmp.ne.s32.totalorder %s40, %s42
      %p46 = scmp.eq.s32.totalorder %s11, 0
      %p47 = por %p45, %p46
      %p48 = scmp.ne.s32.totalorder %s40, %s42
      %p49 = scmp.eq.s32.totalorder %s16, 1
      %p50 = por %p48, %p49
      %p51 = scmp.ne.s32.totalorder %s42, %s43
      %p52 = scmp.eq.s32.totalorder %s16, 0
      %p53 = por %p51, %p52
      %p54 = scmp.ne.s32.totalorder %s42, %s43
      %p55 = scmp.eq.s32.totalorder %s17, 1
      %p56 = por %p54, %p55
      %p58 = scmp.ne.s32.totalorder %s43, %s57
      %p59 = scmp.eq.s32.totalorder %s17, 0
      %p60 = por %p58, %p59
      %s61 = ssub.s32 %s11, %s18
      %p62 = scmp.eq.s32.totalorder %s61, 0
      %s64 = sadd.s32 %s63, 1
      %s65 = scalar_select %p62, %s63, %s64
      %p68 = pneg %p62
      %p69 = scmp.eq.s32.totalorder %s11, 1
      %p70 = por %p68, %p69
      %p71 = scmp.ne.s32.totalorder %s63, %s66
      %p72 = scmp.eq.s32.totalorder %s11, 0
      %p73 = por %p71, %p72
      %p74 = scmp.ne.s32.totalorder %s63, %s66
      %p75 = scmp.eq.s32.totalorder %s16, 1
      %p76 = por %p74, %p75
      %p77 = scmp.ne.s32.totalorder %s66, %s67
      %p78 = scmp.eq.s32.totalorder %s16, 0
      %p79 = por %p77, %p78
      %p80 = scmp.ne.s32.totalorder %s66, %s67
      %p81 = scmp.eq.s32.totalorder %s17, 1
      %p82 = por %p80, %p81
      %p84 = scmp.ne.s32.totalorder %s67, %s83
      %p85 = scmp.eq.s32.totalorder %s17, 0
      %p86 = por %p84, %p85
      %s87 = ssub.s32 %s11, %s18
      %p88 = scmp.eq.s32.totalorder %s87, 0
      %s90 = sadd.s32 %s89, 1
      %s91 = scalar_select %p88, %s89, %s90
      %p94 = pneg %p88
      %p95 = scmp.eq.s32.totalorder %s11, 1
      %p96 = por %p94, %p95
      %p97 = scmp.ne.s32.totalorder %s89, %s92
      %p98 = scmp.eq.s32.totalorder %s11, 0
      %p99 = por %p97, %p98
      %p100 = scmp.ne.s32.totalorder %s89, %s92
      %p101 = scmp.eq.s32.totalorder %s16, 1
      %p102 = por %p100, %p101
      %p103 = scmp.ne.s32.totalorder %s92, %s93
      %p104 = scmp.eq.s32.totalorder %s16, 0
      %p105 = por %p103, %p104
      %p106 = scmp.ne.s32.totalorder %s92, %s93
      %p107 = scmp.eq.s32.totalorder %s17, 1
      %p108 = por %p106, %p107
      %p110 = scmp.ne.s32.totalorder %s93, %s109
      %p111 = scmp.eq.s32.totalorder %s17, 0
      %p112 = por %p110, %p111
      %p113 = scmp.le.s32.totalorder 1, %s11
      %p114 = scmp.lt.s32.totalorder %s11, 3
      %p115 = pnand %p113, %p114
      %p116 = pneg %p115
      // Predicated region
      $region9: #{search_stage_forward.10} parent=5 // pred_check
        _
      $region10: #{search_stage_forward.10} parent=5 // pred_check_branch
        %118 = sbr.rel (%p115) target = $region12
      $region11: #{search_stage_forward.10} parent=5 // pred_region
        %s119 = ssub.s32 %s11, 1
        // Predicated region
        $region13: #{search_stage_forward.10} parent=11 // pred_check
          %p120 = pneg %p32
        $region14: #{search_stage_forward.10} parent=11 // pred_check_branch
          %122 = sbr.rel (%p120) target = $region16
        $region15: #{search_stage_forward.10} parent=11 // pred_region
          %124 = vsyncadd [#allocation3], 0
          %s126 = sshll.u32 %s0, 4
          %s127 = int_to_ptr.vmem [resolvable:$true] %s126
          %129 = dma.vmem_to_smem %s127, 32, [#allocation2], [#allocation3]
        $region16: #{search_stage_forward.10} parent=11 // pred_fallthru
          _
        // Predicated region
        $region17: #{search_stage_forward.10} parent=11 // pred_check
          %p130 = pneg %p53
        $region18: #{search_stage_forward.10} parent=11 // pred_check_branch
          %132 = sbr.rel (%p130) target = $region20
        $region19: #{search_stage_forward.10} parent=11 // pred_region
          %134 = vsyncadd [#allocation5], 0
          %s136 = sshll.u32 %s1, 4
          %s137 = int_to_ptr.vmem [resolvable:$true] %s136
          %139 = dma.vmem_to_smem %s137, 16, [#allocation4], [#allocation5]
        $region20: #{search_stage_forward.10} parent=11 // pred_fallthru
          _
      $region12: #{search_stage_forward.10} parent=5 // pred_fallthru
        _
      %p140 = scmp.lt.s32.totalorder %s11, 2
      // Predicated region
      $region21: #{search_stage_forward.10} parent=5 // pred_check
        %p141 = pneg %p140
      $region22: #{search_stage_forward.10} parent=5 // pred_check_branch
        %143 = sbr.rel (%p141) target = $region24
      $region23: #{search_stage_forward.10} parent=5 // pred_region
        // Predicated region
        $region25: #{search_stage_forward.10} parent=23 // pred_check
          %p144 = pneg %p73
        $region26: #{search_stage_forward.10} parent=23 // pred_check_branch
          %146 = sbr.rel (%p144) target = $region28
        $region27: #{search_stage_forward.10} parent=23 // pred_region
          %s147 = smul.u32 32, %s11
          %p148 = scmp.lt.s32.totalorder %s147, 63
          %s149 = scalar_select %p148, %s147, 63
          %s150 = smul.addr %s149, 8
          %s151 = scalar_lea.vmem %s2, %s150
          %s152 = smul.u32 32, %s11
        $region28: #{search_stage_forward.10} parent=23 // pred_fallthru
          _
      $region24: #{search_stage_forward.10} parent=5 // pred_fallthru
        _
      %p153 = scmp.le.s32.totalorder 1, %s11
      %p154 = scmp.lt.s32.totalorder %s11, 3
      %p155 = pnand %p153, %p154
      %p156 = pneg %p155
      // Predicated region
      $region29: #{search_stage_forward.10} parent=5 // pred_check
        _
      $region30: #{search_stage_forward.10} parent=5 // pred_check_branch
        %158 = sbr.rel (%p155) target = $region32
      $region31: #{search_stage_forward.10} parent=5 // pred_region
        %s159 = ssub.s32 %s11, 1
        // Predicated region
        $region33: #{search_stage_forward.10} parent=31 // pred_check
          %p160 = pneg %p32
        $region34: #{search_stage_forward.10} parent=31 // pred_check_branch
          %162 = sbr.rel (%p160) target = $region36
        $region35: #{search_stage_forward.10} parent=31 // pred_region
          %164 = dma.done [#allocation3], 32
        $region36: #{search_stage_forward.10} parent=31 // pred_fallthru
          _
        // Predicated region
        $region37: #{search_stage_forward.10} parent=31 // pred_check
          %p165 = pneg %p53
        $region38: #{search_stage_forward.10} parent=31 // pred_check_branch
          %167 = sbr.rel (%p165) target = $region40
        $region39: #{search_stage_forward.10} parent=31 // pred_region
          %169 = dma.done [#allocation5], 16
        $region40: #{search_stage_forward.10} parent=31 // pred_fallthru
          _
        %170 = sfence
        %p171 = pneg %p32
        %p172 = pneg %p29
        %p173 = pneg %p53
        %p174 = pneg %p50
        %s175 = smul.u32 32, %s16
        %p176 = scmp.lt.s32.totalorder %s175, 63
        %s177 = scalar_select %p176, %s175, 63
        %s178 = smul.addr %s177, 8
        %s179 = scalar_lea.vmem %s2, %s178
        %p180 = pneg %p79
        %p181 = pneg %p76
        %p182 = pneg %p105
        %p183 = pneg %p102
        %s184 = smul.u32 32, %s16
        %p185 = scmp.lt.s32.totalorder %s184, 63
        %s186 = scalar_select %p185, %s184, 63
        %s187 = smul.addr %s186, 8
        %s188 = scalar_lea.vmem %s3, %s187
        %s189 = smul.u32 32, %s16
        %p190 = scmp.lt.s32.totalorder %s189, 63
        %s191 = scalar_select %p190, %s189, 63
        %s192 = smul.addr %s191, 8
        %s193 = scalar_lea.vmem %s2, %s192
        %s194 = smul.u32 32, %s16
        %s195 = smul.u32 32, %s16
        %p196 = scmp.lt.s32.totalorder %s195, 63
        %s197 = scalar_select %p196, %s195, 63
        %s198 = smul.addr %s197, 8
        %s199 = scalar_lea.vmem %s3, %s198
        %s200 = smul.u32 32, %s16
        %v201 = vld [vmem:[%s193] sm:$0xff]
        %v202 = vld [vmem:[%s193 + $0x8] sm:$0xff]
        %v203 = vld [vmem:[%s193 + $0x10] sm:$0xff]
        %v204 = vld [vmem:[%s193 + $0x18] sm:$0xff]
        %v205 = vld [vmem:[%s193 + $0x20] sm:$0xff]
        %v206 = vld [vmem:[%s193 + $0x28] sm:$0xff]
        %v207 = vld [vmem:[%s193 + $0x30] sm:$0xff]
        %v208 = vld [vmem:[%s193 + $0x38] sm:$0xff]
        %v209 = vld [vmem:[%s193 + $0x40] sm:$0xff]
        %v210 = vld [vmem:[%s193 + $0x48] sm:$0xff]
        %v211 = vld [vmem:[%s193 + $0x50] sm:$0xff]
        %v212 = vld [vmem:[%s193 + $0x58] sm:$0xff]
        %v213 = vld [vmem:[%s193 + $0x60] sm:$0xff]
        %v214 = vld [vmem:[%s193 + $0x68] sm:$0xff]
        %v215 = vld [vmem:[%s193 + $0x70] sm:$0xff]
        %v216 = vld [vmem:[%s193 + $0x78] sm:$0xff]
        %v217 = vld [vmem:[%s193 + $0x80] sm:$0xff]
        %v218 = vld [vmem:[%s193 + $0x88] sm:$0xff]
        %v219 = vld [vmem:[%s193 + $0x90] sm:$0xff]
        %v220 = vld [vmem:[%s193 + $0x98] sm:$0xff]
        %v221 = vld [vmem:[%s193 + $0xa0] sm:$0xff]
        %v222 = vld [vmem:[%s193 + $0xa8] sm:$0xff]
        %v223 = vld [vmem:[%s193 + $0xb0] sm:$0xff]
        %v224 = vld [vmem:[%s193 + $0xb8] sm:$0xff]
        %v225 = vld [vmem:[%s193 + $0xc0] sm:$0xff]
        %v226 = vld [vmem:[%s193 + $0xc8] sm:$0xff]
        %v227 = vld [vmem:[%s193 + $0xd0] sm:$0xff]
        %v228 = vld [vmem:[%s193 + $0xd8] sm:$0xff]
        %v229 = vld [vmem:[%s193 + $0xe0] sm:$0xff]
        %v230 = vld [vmem:[%s193 + $0xe8] sm:$0xff]
        %v231 = vld [vmem:[%s193 + $0xf0] sm:$0xff]
        %v232 = vld [vmem:[%s193 + $0xf8] sm:$0xff]
        %s233 = sld [smem:[#allocation2]]
        %v234 = vstv %s233
        %v235 = vmul.f32 %v234, %v201
        %v236 = vmul.f32 %v234, %v202
        %v237 = vmul.f32 %v234, %v203
        %v238 = vmul.f32 %v234, %v204
        %v239 = vmul.f32 %v234, %v205
        %v240 = vmul.f32 %v234, %v206
        %v241 = vmul.f32 %v234, %v207
        %v242 = vmul.f32 %v234, %v208
        %v243 = vmul.f32 %v234, %v209
        %v244 = vmul.f32 %v234, %v210
        %v245 = vmul.f32 %v234, %v211
        %v246 = vmul.f32 %v234, %v212
        %v247 = vmul.f32 %v234, %v213
        %v248 = vmul.f32 %v234, %v214
        %v249 = vmul.f32 %v234, %v215
        %v250 = vmul.f32 %v234, %v216
        %v251 = vmul.f32 %v234, %v217
        %v252 = vmul.f32 %v234, %v218
        %v253 = vmul.f32 %v234, %v219
        %v254 = vmul.f32 %v234, %v220
        %v255 = vmul.f32 %v234, %v221
        %v256 = vmul.f32 %v234, %v222
        %v257 = vmul.f32 %v234, %v223
        %v258 = vmul.f32 %v234, %v224
        %v259 = vmul.f32 %v234, %v225
        %v260 = vmul.f32 %v234, %v226
        %v261 = vmul.f32 %v234, %v227
        %v262 = vmul.f32 %v234, %v228
        %v263 = vmul.f32 %v234, %v229
        %v264 = vmul.f32 %v234, %v230
        %v265 = vmul.f32 %v234, %v231
        %v266 = vmul.f32 %v234, %v232
        %s267 = sld [smem:[#allocation2 + $0x1]]
        %v268 = vstv %s267
        %v269 = vmul.f32 %v268, %v201
        %v270 = vmul.f32 %v268, %v202
        %v271 = vmul.f32 %v268, %v203
        %v272 = vmul.f32 %v268, %v204
        %v273 = vmul.f32 %v268, %v205
        %v274 = vmul.f32 %v268, %v206
        %v275 = vmul.f32 %v268, %v207
        %v276 = vmul.f32 %v268, %v208
        %v277 = vmul.f32 %v268, %v209
        %v278 = vmul.f32 %v268, %v210
        %v279 = vmul.f32 %v268, %v211
        %v280 = vmul.f32 %v268, %v212
        %v281 = vmul.f32 %v268, %v213
        %v282 = vmul.f32 %v268, %v214
        %v283 = vmul.f32 %v268, %v215
        %v284 = vmul.f32 %v268, %v216
        %v285 = vmul.f32 %v268, %v217
        %v286 = vmul.f32 %v268, %v218
        %v287 = vmul.f32 %v268, %v219
        %v288 = vmul.f32 %v268, %v220
        %v289 = vmul.f32 %v268, %v221
        %v290 = vmul.f32 %v268, %v222
        %v291 = vmul.f32 %v268, %v223
        %v292 = vmul.f32 %v268, %v224
        %v293 = vmul.f32 %v268, %v225
        %v294 = vmul.f32 %v268, %v226
        %v295 = vmul.f32 %v268, %v227
        %v296 = vmul.f32 %v268, %v228
        %v297 = vmul.f32 %v268, %v229
        %v298 = vmul.f32 %v268, %v230
        %v299 = vmul.f32 %v268, %v231
        %v300 = vmul.f32 %v268, %v232
        %v301 = vadd.f32 %v235, %v269
        %v302 = vadd.f32 %v236, %v270
        %v303 = vadd.f32 %v237, %v271
        %v304 = vadd.f32 %v238, %v272
        %v305 = vadd.f32 %v239, %v273
        %v306 = vadd.f32 %v240, %v274
        %v307 = vadd.f32 %v241, %v275
        %v308 = vadd.f32 %v242, %v276
        %v309 = vadd.f32 %v243, %v277
        %v310 = vadd.f32 %v244, %v278
        %v311 = vadd.f32 %v245, %v279
        %v312 = vadd.f32 %v246, %v280
        %v313 = vadd.f32 %v247, %v281
        %v314 = vadd.f32 %v248, %v282
        %v315 = vadd.f32 %v249, %v283
        %v316 = vadd.f32 %v250, %v284
        %v317 = vadd.f32 %v251, %v285
        %v318 = vadd.f32 %v252, %v286
        %v319 = vadd.f32 %v253, %v287
        %v320 = vadd.f32 %v254, %v288
        %v321 = vadd.f32 %v255, %v289
        %v322 = vadd.f32 %v256, %v290
        %v323 = vadd.f32 %v257, %v291
        %v324 = vadd.f32 %v258, %v292
        %v325 = vadd.f32 %v259, %v293
        %v326 = vadd.f32 %v260, %v294
        %v327 = vadd.f32 %v261, %v295
        %v328 = vadd.f32 %v262, %v296
        %v329 = vadd.f32 %v263, %v297
        %v330 = vadd.f32 %v264, %v298
        %v331 = vadd.f32 %v265, %v299
        %v332 = vadd.f32 %v266, %v300
        %s333 = sld [smem:[#allocation2 + $0x80]]
        %v334 = vstv %s333
        %v335 = vmul.f32 %v334, %v201
        %v336 = vmul.f32 %v334, %v202
        %v337 = vmul.f32 %v334, %v203
        %v338 = vmul.f32 %v334, %v204
        %v339 = vmul.f32 %v334, %v205
        %v340 = vmul.f32 %v334, %v206
        %v341 = vmul.f32 %v334, %v207
        %v342 = vmul.f32 %v334, %v208
        %v343 = vmul.f32 %v334, %v209
        %v344 = vmul.f32 %v334, %v210
        %v345 = vmul.f32 %v334, %v211
        %v346 = vmul.f32 %v334, %v212
        %v347 = vmul.f32 %v334, %v213
        %v348 = vmul.f32 %v334, %v214
        %v349 = vmul.f32 %v334, %v215
        %v350 = vmul.f32 %v334, %v216
        %v351 = vmul.f32 %v334, %v217
        %v352 = vmul.f32 %v334, %v218
        %v353 = vmul.f32 %v334, %v219
        %v354 = vmul.f32 %v334, %v220
        %v355 = vmul.f32 %v334, %v221
        %v356 = vmul.f32 %v334, %v222
        %v357 = vmul.f32 %v334, %v223
        %v358 = vmul.f32 %v334, %v224
        %v359 = vmul.f32 %v334, %v225
        %v360 = vmul.f32 %v334, %v226
        %v361 = vmul.f32 %v334, %v227
        %v362 = vmul.f32 %v334, %v228
        %v363 = vmul.f32 %v334, %v229
        %v364 = vmul.f32 %v334, %v230
        %v365 = vmul.f32 %v334, %v231
        %v366 = vmul.f32 %v334, %v232
        %s367 = sld [smem:[#allocation2 + $0x81]]
        %v368 = vstv %s367
        %v369 = vmul.f32 %v368, %v201
        %v370 = vmul.f32 %v368, %v202
        %v371 = vmul.f32 %v368, %v203
        %v372 = vmul.f32 %v368, %v204
        %v373 = vmul.f32 %v368, %v205
        %v374 = vmul.f32 %v368, %v206
        %v375 = vmul.f32 %v368, %v207
        %v376 = vmul.f32 %v368, %v208
        %v377 = vmul.f32 %v368, %v209
        %v378 = vmul.f32 %v368, %v210
        %v379 = vmul.f32 %v368, %v211
        %v380 = vmul.f32 %v368, %v212
        %v381 = vmul.f32 %v368, %v213
        %v382 = vmul.f32 %v368, %v214
        %v383 = vmul.f32 %v368, %v215
        %v384 = vmul.f32 %v368, %v216
        %v385 = vmul.f32 %v368, %v217
        %v386 = vmul.f32 %v368, %v218
        %v387 = vmul.f32 %v368, %v219
        %v388 = vmul.f32 %v368, %v220
        %v389 = vmul.f32 %v368, %v221
        %v390 = vmul.f32 %v368, %v222
        %v391 = vmul.f32 %v368, %v223
        %v392 = vmul.f32 %v368, %v224
        %v393 = vmul.f32 %v368, %v225
        %v394 = vmul.f32 %v368, %v226
        %v395 = vmul.f32 %v368, %v227
        %v396 = vmul.f32 %v368, %v228
        %v397 = vmul.f32 %v368, %v229
        %v398 = vmul.f32 %v368, %v230
        %v399 = vmul.f32 %v368, %v231
        %v400 = vmul.f32 %v368, %v232
        %v401 = vadd.f32 %v335, %v369
        %v402 = vadd.f32 %v336, %v370
        %v403 = vadd.f32 %v337, %v371
        %v404 = vadd.f32 %v338, %v372
        %v405 = vadd.f32 %v339, %v373
        %v406 = vadd.f32 %v340, %v374
        %v407 = vadd.f32 %v341, %v375
        %v408 = vadd.f32 %v342, %v376
        %v409 = vadd.f32 %v343, %v377
        %v410 = vadd.f32 %v344, %v378
        %v411 = vadd.f32 %v345, %v379
        %v412 = vadd.f32 %v346, %v380
        %v413 = vadd.f32 %v347, %v381
        %v414 = vadd.f32 %v348, %v382
        %v415 = vadd.f32 %v349, %v383
        %v416 = vadd.f32 %v350, %v384
        %v417 = vadd.f32 %v351, %v385
        %v418 = vadd.f32 %v352, %v386
        %v419 = vadd.f32 %v353, %v387
        %v420 = vadd.f32 %v354, %v388
        %v421 = vadd.f32 %v355, %v389
        %v422 = vadd.f32 %v356, %v390
        %v423 = vadd.f32 %v357, %v391
        %v424 = vadd.f32 %v358, %v392
        %v425 = vadd.f32 %v359, %v393
        %v426 = vadd.f32 %v360, %v394
        %v427 = vadd.f32 %v361, %v395
        %v428 = vadd.f32 %v362, %v396
        %v429 = vadd.f32 %v363, %v397
        %v430 = vadd.f32 %v364, %v398
        %v431 = vadd.f32 %v365, %v399
        %v432 = vadd.f32 %v366, %v400
        %s433 = sld [smem:[#allocation2 + $0x82]]
        %v434 = vstv %s433
        %v435 = vmul.f32 %v434, %v301
        %v436 = vmul.f32 %v434, %v302
        %v437 = vmul.f32 %v434, %v303
        %v438 = vmul.f32 %v434, %v304
        %v439 = vmul.f32 %v434, %v305
        %v440 = vmul.f32 %v434, %v306
        %v441 = vmul.f32 %v434, %v307
        %v442 = vmul.f32 %v434, %v308
        %v443 = vmul.f32 %v434, %v309
        %v444 = vmul.f32 %v434, %v310
        %v445 = vmul.f32 %v434, %v311
        %v446 = vmul.f32 %v434, %v312
        %v447 = vmul.f32 %v434, %v313
        %v448 = vmul.f32 %v434, %v314
        %v449 = vmul.f32 %v434, %v315
        %v450 = vmul.f32 %v434, %v316
        %v451 = vmul.f32 %v434, %v317
        %v452 = vmul.f32 %v434, %v318
        %v453 = vmul.f32 %v434, %v319
        %v454 = vmul.f32 %v434, %v320
        %v455 = vmul.f32 %v434, %v321
        %v456 = vmul.f32 %v434, %v322
        %v457 = vmul.f32 %v434, %v323
        %v458 = vmul.f32 %v434, %v324
        %v459 = vmul.f32 %v434, %v325
        %v460 = vmul.f32 %v434, %v326
        %v461 = vmul.f32 %v434, %v327
        %v462 = vmul.f32 %v434, %v328
        %v463 = vmul.f32 %v434, %v329
        %v464 = vmul.f32 %v434, %v330
        %v465 = vmul.f32 %v434, %v331
        %v466 = vmul.f32 %v434, %v332
        %v467 = vadd.f32 %v401, %v435
        %v468 = vadd.f32 %v402, %v436
        %v469 = vadd.f32 %v403, %v437
        %v470 = vadd.f32 %v404, %v438
        %v471 = vadd.f32 %v405, %v439
        %v472 = vadd.f32 %v406, %v440
        %v473 = vadd.f32 %v407, %v441
        %v474 = vadd.f32 %v408, %v442
        %v475 = vadd.f32 %v409, %v443
        %v476 = vadd.f32 %v410, %v444
        %v477 = vadd.f32 %v411, %v445
        %v478 = vadd.f32 %v412, %v446
        %v479 = vadd.f32 %v413, %v447
        %v480 = vadd.f32 %v414, %v448
        %v481 = vadd.f32 %v415, %v449
        %v482 = vadd.f32 %v416, %v450
        %v483 = vadd.f32 %v417, %v451
        %v484 = vadd.f32 %v418, %v452
        %v485 = vadd.f32 %v419, %v453
        %v486 = vadd.f32 %v420, %v454
        %v487 = vadd.f32 %v421, %v455
        %v488 = vadd.f32 %v422, %v456
        %v489 = vadd.f32 %v423, %v457
        %v490 = vadd.f32 %v424, %v458
        %v491 = vadd.f32 %v425, %v459
        %v492 = vadd.f32 %v426, %v460
        %v493 = vadd.f32 %v427, %v461
        %v494 = vadd.f32 %v428, %v462
        %v495 = vadd.f32 %v429, %v463
        %v496 = vadd.f32 %v430, %v464
        %v497 = vadd.f32 %v431, %v465
        %v498 = vadd.f32 %v432, %v466
        %s499 = sld [smem:[#allocation4]]
        %v500 = vstv %s499
        %v501 = vmul.f32 %v500, %v301
        %v502 = vmul.f32 %v500, %v302
        %v503 = vmul.f32 %v500, %v303
        %v504 = vmul.f32 %v500, %v304
        %v505 = vmul.f32 %v500, %v305
        %v506 = vmul.f32 %v500, %v306
        %v507 = vmul.f32 %v500, %v307
        %v508 = vmul.f32 %v500, %v308
        %v509 = vmul.f32 %v500, %v309
        %v510 = vmul.f32 %v500, %v310
        %v511 = vmul.f32 %v500, %v311
        %v512 = vmul.f32 %v500, %v312
        %v513 = vmul.f32 %v500, %v313
        %v514 = vmul.f32 %v500, %v314
        %v515 = vmul.f32 %v500, %v315
        %v516 = vmul.f32 %v500, %v316
        %v517 = vmul.f32 %v500, %v317
        %v518 = vmul.f32 %v500, %v318
        %v519 = vmul.f32 %v500, %v319
        %v520 = vmul.f32 %v500, %v320
        %v521 = vmul.f32 %v500, %v321
        %v522 = vmul.f32 %v500, %v322
        %v523 = vmul.f32 %v500, %v323
        %v524 = vmul.f32 %v500, %v324
        %v525 = vmul.f32 %v500, %v325
        %v526 = vmul.f32 %v500, %v326
        %v527 = vmul.f32 %v500, %v327
        %v528 = vmul.f32 %v500, %v328
        %v529 = vmul.f32 %v500, %v329
        %v530 = vmul.f32 %v500, %v330
        %v531 = vmul.f32 %v500, %v331
        %v532 = vmul.f32 %v500, %v332
        %s533 = sld [smem:[#allocation4 + $0x1]]
        %v534 = vstv %s533
        %v535 = vmul.f32 %v534, %v467
        %v536 = vmul.f32 %v534, %v468
        %v537 = vmul.f32 %v534, %v469
        %v538 = vmul.f32 %v534, %v470
        %v539 = vmul.f32 %v534, %v471
        %v540 = vmul.f32 %v534, %v472
        %v541 = vmul.f32 %v534, %v473
        %v542 = vmul.f32 %v534, %v474
        %v543 = vmul.f32 %v534, %v475
        %v544 = vmul.f32 %v534, %v476
        %v545 = vmul.f32 %v534, %v477
        %v546 = vmul.f32 %v534, %v478
        %v547 = vmul.f32 %v534, %v479
        %v548 = vmul.f32 %v534, %v480
        %v549 = vmul.f32 %v534, %v481
        %v550 = vmul.f32 %v534, %v482
        %v551 = vmul.f32 %v534, %v483
        %v552 = vmul.f32 %v534, %v484
        %v553 = vmul.f32 %v534, %v485
        %v554 = vmul.f32 %v534, %v486
        %v555 = vmul.f32 %v534, %v487
        %v556 = vmul.f32 %v534, %v488
        %v557 = vmul.f32 %v534, %v489
        %v558 = vmul.f32 %v534, %v490
        %v559 = vmul.f32 %v534, %v491
        %v560 = vmul.f32 %v534, %v492
        %v561 = vmul.f32 %v534, %v493
        %v562 = vmul.f32 %v534, %v494
        %v563 = vmul.f32 %v534, %v495
        %v564 = vmul.f32 %v534, %v496
        %v565 = vmul.f32 %v534, %v497
        %v566 = vmul.f32 %v534, %v498
        %599 = vrot.lane.b32.xlu0 %v535, 64
        %v600 = vpop.permute.xlu0 %599
        %601 = vrot.lane.b32.xlu0 %v536, 64
        %v602 = vpop.permute.xlu0 %601
        %603 = vrot.lane.b32.xlu0 %v537, 64
        %v604 = vpop.permute.xlu0 %603
        %605 = vrot.lane.b32.xlu0 %v538, 64
        %v606 = vpop.permute.xlu0 %605
        %607 = vrot.lane.b32.xlu0 %v539, 64
        %v608 = vpop.permute.xlu0 %607
        %609 = vrot.lane.b32.xlu0 %v540, 64
        %v610 = vpop.permute.xlu0 %609
        %611 = vrot.lane.b32.xlu0 %v541, 64
        %v612 = vpop.permute.xlu0 %611
        %613 = vrot.lane.b32.xlu0 %v542, 64
        %v614 = vpop.permute.xlu0 %613
        %615 = vrot.lane.b32.xlu0 %v543, 64
        %v616 = vpop.permute.xlu0 %615
        %617 = vrot.lane.b32.xlu0 %v544, 64
        %v618 = vpop.permute.xlu0 %617
        %619 = vrot.lane.b32.xlu0 %v545, 64
        %v620 = vpop.permute.xlu0 %619
        %621 = vrot.lane.b32.xlu0 %v546, 64
        %v622 = vpop.permute.xlu0 %621
        %623 = vrot.lane.b32.xlu0 %v547, 64
        %v624 = vpop.permute.xlu0 %623
        %625 = vrot.lane.b32.xlu0 %v548, 64
        %v626 = vpop.permute.xlu0 %625
        %627 = vrot.lane.b32.xlu0 %v549, 64
        %v628 = vpop.permute.xlu0 %627
        %629 = vrot.lane.b32.xlu0 %v550, 64
        %v630 = vpop.permute.xlu0 %629
        %631 = vrot.lane.b32.xlu0 %v551, 64
        %v632 = vpop.permute.xlu0 %631
        %633 = vrot.lane.b32.xlu0 %v552, 64
        %v634 = vpop.permute.xlu0 %633
        %635 = vrot.lane.b32.xlu0 %v553, 64
        %v636 = vpop.permute.xlu0 %635
        %637 = vrot.lane.b32.xlu0 %v554, 64
        %v638 = vpop.permute.xlu0 %637
        %639 = vrot.lane.b32.xlu0 %v555, 64
        %v640 = vpop.permute.xlu0 %639
        %641 = vrot.lane.b32.xlu0 %v556, 64
        %v642 = vpop.permute.xlu0 %641
        %643 = vrot.lane.b32.xlu0 %v557, 64
        %v644 = vpop.permute.xlu0 %643
        %645 = vrot.lane.b32.xlu0 %v558, 64
        %v646 = vpop.permute.xlu0 %645
        %647 = vrot.lane.b32.xlu0 %v559, 64
        %v648 = vpop.permute.xlu0 %647
        %649 = vrot.lane.b32.xlu0 %v560, 64
        %v650 = vpop.permute.xlu0 %649
        %651 = vrot.lane.b32.xlu0 %v561, 64
        %v652 = vpop.permute.xlu0 %651
        %653 = vrot.lane.b32.xlu0 %v562, 64
        %v654 = vpop.permute.xlu0 %653
        %655 = vrot.lane.b32.xlu0 %v563, 64
        %v656 = vpop.permute.xlu0 %655
        %657 = vrot.lane.b32.xlu0 %v564, 64
        %v658 = vpop.permute.xlu0 %657
        %659 = vrot.lane.b32.xlu0 %v565, 64
        %v660 = vpop.permute.xlu0 %659
        %661 = vrot.lane.b32.xlu0 %v566, 64
        %v662 = vpop.permute.xlu0 %661
        %vm695 = vcmask 523264
        %v696 = vsel %vm695, %v501, %v600
        %v697 = vsel %vm695, %v502, %v602
        %v698 = vsel %vm695, %v503, %v604
        %v699 = vsel %vm695, %v504, %v606
        %v700 = vsel %vm695, %v505, %v608
        %v701 = vsel %vm695, %v506, %v610
        %v702 = vsel %vm695, %v507, %v612
        %v703 = vsel %vm695, %v508, %v614
        %v704 = vsel %vm695, %v509, %v616
        %v705 = vsel %vm695, %v510, %v618
        %v706 = vsel %vm695, %v511, %v620
        %v707 = vsel %vm695, %v512, %v622
        %v708 = vsel %vm695, %v513, %v624
        %v709 = vsel %vm695, %v514, %v626
        %v710 = vsel %vm695, %v515, %v628
        %v711 = vsel %vm695, %v516, %v630
        %v712 = vsel %vm695, %v517, %v632
        %v713 = vsel %vm695, %v518, %v634
        %v714 = vsel %vm695, %v519, %v636
        %v715 = vsel %vm695, %v520, %v638
        %v716 = vsel %vm695, %v521, %v640
        %v717 = vsel %vm695, %v522, %v642
        %v718 = vsel %vm695, %v523, %v644
        %v719 = vsel %vm695, %v524, %v646
        %v720 = vsel %vm695, %v525, %v648
        %v721 = vsel %vm695, %v526, %v650
        %v722 = vsel %vm695, %v527, %v652
        %v723 = vsel %vm695, %v528, %v654
        %v724 = vsel %vm695, %v529, %v656
        %v725 = vsel %vm695, %v530, %v658
        %v726 = vsel %vm695, %v531, %v660
        %v727 = vsel %vm695, %v532, %v662
        %728 = vst [vmem:[%s199] sm:$0xff] %v696
        %729 = vst [vmem:[%s199 + $0x8] sm:$0xff] %v697
        %730 = vst [vmem:[%s199 + $0x10] sm:$0xff] %v698
        %731 = vst [vmem:[%s199 + $0x18] sm:$0xff] %v699
        %732 = vst [vmem:[%s199 + $0x20] sm:$0xff] %v700
        %733 = vst [vmem:[%s199 + $0x28] sm:$0xff] %v701
        %734 = vst [vmem:[%s199 + $0x30] sm:$0xff] %v702
        %735 = vst [vmem:[%s199 + $0x38] sm:$0xff] %v703
        %736 = vst [vmem:[%s199 + $0x40] sm:$0xff] %v704
        %737 = vst [vmem:[%s199 + $0x48] sm:$0xff] %v705
        %738 = vst [vmem:[%s199 + $0x50] sm:$0xff] %v706
        %739 = vst [vmem:[%s199 + $0x58] sm:$0xff] %v707
        %740 = vst [vmem:[%s199 + $0x60] sm:$0xff] %v708
        %741 = vst [vmem:[%s199 + $0x68] sm:$0xff] %v709
        %742 = vst [vmem:[%s199 + $0x70] sm:$0xff] %v710
        %743 = vst [vmem:[%s199 + $0x78] sm:$0xff] %v711
        %744 = vst [vmem:[%s199 + $0x80] sm:$0xff] %v712
        %745 = vst [vmem:[%s199 + $0x88] sm:$0xff] %v713
        %746 = vst [vmem:[%s199 + $0x90] sm:$0xff] %v714
        %747 = vst [vmem:[%s199 + $0x98] sm:$0xff] %v715
        %748 = vst [vmem:[%s199 + $0xa0] sm:$0xff] %v716
        %749 = vst [vmem:[%s199 + $0xa8] sm:$0xff] %v717
        %750 = vst [vmem:[%s199 + $0xb0] sm:$0xff] %v718
        %751 = vst [vmem:[%s199 + $0xb8] sm:$0xff] %v719
        %752 = vst [vmem:[%s199 + $0xc0] sm:$0xff] %v720
        %753 = vst [vmem:[%s199 + $0xc8] sm:$0xff] %v721
        %754 = vst [vmem:[%s199 + $0xd0] sm:$0xff] %v722
        %755 = vst [vmem:[%s199 + $0xd8] sm:$0xff] %v723
        %756 = vst [vmem:[%s199 + $0xe0] sm:$0xff] %v724
        %757 = vst [vmem:[%s199 + $0xe8] sm:$0xff] %v725
        %758 = vst [vmem:[%s199 + $0xf0] sm:$0xff] %v726
        %759 = vst [vmem:[%s199 + $0xf8] sm:$0xff] %v727
        %s760 = smul.u32 32, %s16
        %p761 = scmp.lt.s32.totalorder %s760, 63
        %s762 = scalar_select %p761, %s760, 63
        %s763 = smul.addr %s762, 8
        %s764 = scalar_lea.vmem %s3, %s763
        // Predicated region
        $region41: #{search_stage_forward.10} parent=31 // pred_check
          %p765 = pneg %p102
        $region42: #{search_stage_forward.10} parent=31 // pred_check_branch
          %767 = sbr.rel (%p765) target = $region44
        $region43: #{search_stage_forward.10} parent=31 // pred_region
          %s768 = smul.u32 32, %s16
        $region44: #{search_stage_forward.10} parent=31 // pred_fallthru
          _
      $region32: #{search_stage_forward.10} parent=5 // pred_fallthru
        _
      %p769 = scmp.le.s32.totalorder 2, %s11
      // Predicated region
      $region45: #{search_stage_forward.10} parent=5 // pred_check
        %p770 = pneg %p769
      $region46: #{search_stage_forward.10} parent=5 // pred_check_branch
        %772 = sbr.rel (%p770) target = $region48
      $region47: #{search_stage_forward.10} parent=5 // pred_region
        %s773 = ssub.s32 %s11, 2
        // Predicated region
        $region49: #{search_stage_forward.10} parent=47 // pred_check
          %p774 = pneg %p108
        $region50: #{search_stage_forward.10} parent=47 // pred_check_branch
          %776 = sbr.rel (%p774) target = $region52
        $region51: #{search_stage_forward.10} parent=47 // pred_region
          %s777 = smul.u32 32, %s17
          %p778 = scmp.lt.s32.totalorder %s777, 63
          %s779 = scalar_select %p778, %s777, 63
          %s780 = smul.addr %s779, 8
          %s781 = scalar_lea.vmem %s3, %s780
        $region52: #{search_stage_forward.10} parent=47 // pred_fallthru
          _
      $region48: #{search_stage_forward.10} parent=5 // pred_fallthru
        _
    $region6: #{search_stage_forward.10} parent=1 // loop_footer
      %s15 = sadd.s32 1, %s11
    $region7: #{search_stage_forward.10} parent=1 // loop_footer_branch
      %10 = sbr.rel target = $region3
    $region8: #{search_stage_forward.10} parent=1 // loop_exit
      _
    %782 = vsyncpa [#allocation3], 1
    %s783 = scalar_lea.sflag [#allocation3], 1
    %784 = vsyncpa %s783, 1
    %785 = vsyncpa [#allocation5], 1

// kernel: search_stage_forward.9
$region0: #{search_stage_forward.9}
  #allocation0 [shape = 'u32[]', space=smem, size = 0x4, offset = 0x4, fixed_abs, tag = 'smem constant byte address 0x4 - core index']
  #allocation1 [shape = 'u32[72,128]{1,0:T(1,128)}', space=vmem, size = 0x9000, scoped, tag = 'internal scratch']
  %s0 = inlined_call_operand.vmem [shape: f32[2,4,17,17,64], index: 0, kind: input, shape index: {}]
  %s1 = inlined_call_operand.vmem [shape: bf16[9,64,64], index: 1, kind: input, shape index: {}]
  %s2 = inlined_call_operand.vmem [shape: f32[1,64], index: 2, kind: input, shape index: {}]
  %s3 = inlined_call_operand.vmem [shape: f32[1,64], index: 3, kind: input, shape index: {}]
  %s4 = inlined_call_operand.vmem [shape: f32[2,16,16,64], index: 4, kind: output, shape index: {}]
  %s5 = sld [smem:[#allocation0]]
  $region49: #{search_stage_forward.9} parent=0
    _
  %s7 = ssub.s32 1, %s5
  %s8 = scalar_select 0, %s7, %s5
  loop: start=0, step=1, limit=6
  $region2: #{search_stage_forward.9} parent=0 // loop_pre_header
    _
  $region3: #{search_stage_forward.9} parent=0 // loop_header
    %s10 = sphi 0, %s14
    %p11 = scmp.ge.s32.totalorder %s10, 6
    %s17 = sphi 0, %s29
    %s18 = sphi 0, %s25
    %s19 = sphi 0, %s17
    %s20 = sphi 0, %s18
    %s21 = sphi 0, %s19
    %s22 = sphi 0, %s20
    %s32 = sphi 0, %s34
    %s35 = sphi 0, %s32
    %s36 = sphi 0, %s35
    %s52 = sphi 0, %s36
    %s56 = sphi 0, %s56
    %s58 = sphi 0, %s56
    %s59 = sphi 0, %s58
    %s73 = sphi 0, %s59
    %s77 = sphi 0, %s77
    %s79 = sphi 0, %s77
    %s80 = sphi 0, %s79
    %s94 = sphi 0, %s80
    %s98 = sphi 0, %s98
    %s100 = sphi 0, %s98
    %s101 = sphi 0, %s100
    %s115 = sphi 0, %s101
    %s123 = sphi 0, %s125
    %s126 = sphi 0, %s123
    %s127 = sphi 0, %s126
    %s143 = sphi 0, %s127
  $region4: #{search_stage_forward.9} parent=0 // loop_header_branch
    %13 = sbr.rel (%p11) target = $region8
  $region5: #{search_stage_forward.9} parent=0 // loop_body
    %s15 = ssub.s32 %s10, 1
    %s16 = ssub.s32 %s10, 2
    %s23 = sadd.s32 1, %s18
    %p24 = scmp.ge.s32.totalorder %s23, 2
    %s25 = scalar_select %p24, 0, %s23
    %s26 = sadd.s32 1, %s17
    %s27 = scalar_select %p24, %s26, %s17
    %p28 = scmp.ge.s32.totalorder %s27, 2
    %s29 = scalar_select %p28, 0, %s27
    %s30 = ssub.s32 %s17, %s29
    %p31 = scmp.eq.s32.totalorder %s30, 0
    %s33 = sadd.s32 %s32, 1
    %s34 = scalar_select %p31, %s32, %s33
    %p37 = pneg %p31
    %p38 = scmp.eq.s32.totalorder %s10, 3
    %p39 = por %p37, %p38
    %p40 = scmp.ne.s32.totalorder %s32, %s35
    %p41 = scmp.eq.s32.totalorder %s10, 0
    %p42 = por %p40, %p41
    %p43 = scmp.ne.s32.totalorder %s32, %s35
    %p44 = scmp.eq.s32.totalorder %s15, 3
    %p45 = por %p43, %p44
    %p46 = scmp.ne.s32.totalorder %s35, %s36
    %p47 = scmp.eq.s32.totalorder %s15, 0
    %p48 = por %p46, %p47
    %p49 = scmp.ne.s32.totalorder %s35, %s36
    %p50 = scmp.eq.s32.totalorder %s16, 3
    %p51 = por %p49, %p50
    %p53 = scmp.ne.s32.totalorder %s36, %s52
    %p54 = scmp.eq.s32.totalorder %s16, 0
    %p55 = por %p53, %p54
    %s57 = sadd.s32 %s56, 1
    %p60 = scmp.eq.s32.totalorder %s10, 3
    %p61 = scmp.ne.s32.totalorder %s56, %s58
    %p62 = scmp.eq.s32.totalorder %s10, 0
    %p63 = por %p61, %p62
    %p64 = scmp.ne.s32.totalorder %s56, %s58
    %p65 = scmp.eq.s32.totalorder %s15, 3
    %p66 = por %p64, %p65
    %p67 = scmp.ne.s32.totalorder %s58, %s59
    %p68 = scmp.eq.s32.totalorder %s15, 0
    %p69 = por %p67, %p68
    %p70 = scmp.ne.s32.totalorder %s58, %s59
    %p71 = scmp.eq.s32.totalorder %s16, 3
    %p72 = por %p70, %p71
    %p74 = scmp.ne.s32.totalorder %s59, %s73
    %p75 = scmp.eq.s32.totalorder %s16, 0
    %p76 = por %p74, %p75
    %s78 = sadd.s32 %s77, 1
    %p81 = scmp.eq.s32.totalorder %s10, 3
    %p82 = scmp.ne.s32.totalorder %s77, %s79
    %p83 = scmp.eq.s32.totalorder %s10, 0
    %p84 = por %p82, %p83
    %p85 = scmp.ne.s32.totalorder %s77, %s79
    %p86 = scmp.eq.s32.totalorder %s15, 3
    %p87 = por %p85, %p86
    %p88 = scmp.ne.s32.totalorder %s79, %s80
    %p89 = scmp.eq.s32.totalorder %s15, 0
    %p90 = por %p88, %p89
    %p91 = scmp.ne.s32.totalorder %s79, %s80
    %p92 = scmp.eq.s32.totalorder %s16, 3
    %p93 = por %p91, %p92
    %p95 = scmp.ne.s32.totalorder %s80, %s94
    %p96 = scmp.eq.s32.totalorder %s16, 0
    %p97 = por %p95, %p96
    %s99 = sadd.s32 %s98, 1
    %p102 = scmp.eq.s32.totalorder %s10, 3
    %p103 = scmp.ne.s32.totalorder %s98, %s100
    %p104 = scmp.eq.s32.totalorder %s10, 0
    %p105 = por %p103, %p104
    %p106 = scmp.ne.s32.totalorder %s98, %s100
    %p107 = scmp.eq.s32.totalorder %s15, 3
    %p108 = por %p106, %p107
    %p109 = scmp.ne.s32.totalorder %s100, %s101
    %p110 = scmp.eq.s32.totalorder %s15, 0
    %p111 = por %p109, %p110
    %p112 = scmp.ne.s32.totalorder %s100, %s101
    %p113 = scmp.eq.s32.totalorder %s16, 3
    %p114 = por %p112, %p113
    %p116 = scmp.ne.s32.totalorder %s101, %s115
    %p117 = scmp.eq.s32.totalorder %s16, 0
    %p118 = por %p116, %p117
    %s119 = ssub.s32 %s17, %s29
    %s120 = ssub.s32 %s18, %s25
    %s121 = sor.u32 %s119, %s120
    %p122 = scmp.eq.s32.totalorder %s121, 0
    %s124 = sadd.s32 %s123, 1
    %s125 = scalar_select %p122, %s123, %s124
    %p128 = pneg %p122
    %p129 = scmp.eq.s32.totalorder %s10, 3
    %p130 = por %p128, %p129
    %p131 = scmp.ne.s32.totalorder %s123, %s126
    %p132 = scmp.eq.s32.totalorder %s10, 0
    %p133 = por %p131, %p132
    %p134 = scmp.ne.s32.totalorder %s123, %s126
    %p135 = scmp.eq.s32.totalorder %s15, 3
    %p136 = por %p134, %p135
    %p137 = scmp.ne.s32.totalorder %s126, %s127
    %p138 = scmp.eq.s32.totalorder %s15, 0
    %p139 = por %p137, %p138
    %p140 = scmp.ne.s32.totalorder %s126, %s127
    %p141 = scmp.eq.s32.totalorder %s16, 3
    %p142 = por %p140, %p141
    %p144 = scmp.ne.s32.totalorder %s127, %s143
    %p145 = scmp.eq.s32.totalorder %s16, 0
    %p146 = por %p144, %p145
    %p147 = scmp.le.s32.totalorder 1, %s10
    %p148 = scmp.lt.s32.totalorder %s10, 5
    %p149 = pnand %p147, %p148
    %p150 = pneg %p149
    // Predicated region
    $region9: #{search_stage_forward.9} parent=5 // pred_check
      _
    $region10: #{search_stage_forward.9} parent=5 // pred_check_branch
      %152 = sbr.rel (%p149) target = $region12
    $region11: #{search_stage_forward.9} parent=5 // pred_region
      %s153 = ssub.s32 %s10, 1
      // Predicated region
      $region13: #{search_stage_forward.9} parent=11 // pred_check
        %p154 = pneg %p69
      $region14: #{search_stage_forward.9} parent=11 // pred_check_branch
        %156 = sbr.rel (%p154) target = $region16
      $region15: #{search_stage_forward.9} parent=11 // pred_region
        _
      $region16: #{search_stage_forward.9} parent=11 // pred_fallthru
        _
      // Predicated region
      $region17: #{search_stage_forward.9} parent=11 // pred_check
        %p157 = pneg %p90
      $region18: #{search_stage_forward.9} parent=11 // pred_check_branch
        %159 = sbr.rel (%p157) target = $region20
      $region19: #{search_stage_forward.9} parent=11 // pred_region
        _
      $region20: #{search_stage_forward.9} parent=11 // pred_fallthru
        _
      // Predicated region
      $region21: #{search_stage_forward.9} parent=11 // pred_check
        %p160 = pneg %p111
      $region22: #{search_stage_forward.9} parent=11 // pred_check_branch
        %162 = sbr.rel (%p160) target = $region24
      $region23: #{search_stage_forward.9} parent=11 // pred_region
        _
      $region24: #{search_stage_forward.9} parent=11 // pred_fallthru
        _
    $region12: #{search_stage_forward.9} parent=5 // pred_fallthru
      _
    %p163 = scmp.lt.s32.totalorder %s10, 4
    // Predicated region
    $region25: #{search_stage_forward.9} parent=5 // pred_check
      %p164 = pneg %p163
    $region26: #{search_stage_forward.9} parent=5 // pred_check_branch
      %166 = sbr.rel (%p164) target = $region28
    $region27: #{search_stage_forward.9} parent=5 // pred_region
      // Predicated region
      $region29: #{search_stage_forward.9} parent=27 // pred_check
        %p167 = pneg %p42
      $region30: #{search_stage_forward.9} parent=27 // pred_check_branch
        %169 = sbr.rel (%p167) target = $region32
      $region31: #{search_stage_forward.9} parent=27 // pred_region
        %p170 = scmp.lt.s32.totalorder %s17, 1
        %s171 = scalar_select %p170, %s17, 1
        %s172 = smul.addr %s171, 204
        %s173 = smul.addr %s172, 8
        %s174 = scalar_lea.vmem %s0, %s173
      $region32: #{search_stage_forward.9} parent=27 // pred_fallthru
        _
    $region28: #{search_stage_forward.9} parent=5 // pred_fallthru
      _
    %p175 = scmp.le.s32.totalorder 1, %s10
    %p176 = scmp.lt.s32.totalorder %s10, 5
    %p177 = pnand %p175, %p176
    %p178 = pneg %p177
    // Predicated region
    $region33: #{search_stage_forward.9} parent=5 // pred_check
      _
    $region34: #{search_stage_forward.9} parent=5 // pred_check_branch
      %180 = sbr.rel (%p177) target = $region36
    $region35: #{search_stage_forward.9} parent=5 // pred_region
      %s181 = ssub.s32 %s10, 1
      %p182 = scmp.lt.s32.totalorder %s19, 1
      %s183 = scalar_select %p182, %s19, 1
      %s184 = smul.addr %s183, 204
      %s185 = smul.addr %s184, 8
      %s186 = scalar_lea.vmem %s0, %s185
      %p187 = pneg %p48
      %p188 = pneg %p45
      %p189 = pneg %p69
      %p190 = pneg %p66
      %p191 = pneg %p90
      %p192 = pneg %p87
      %p193 = pneg %p111
      %p194 = pneg %p108
      %p195 = pneg %p139
      %p196 = pneg %p136
      %s197 = smul.u32 8, %s20
      %p198 = scmp.lt.s32.totalorder %s19, 1
      %s199 = scalar_select %p198, %s19, 1
      %p200 = scmp.lt.s32.totalorder %s197, 15
      %s201 = scalar_select %p200, %s197, 15
      %s202 = smul.addr %s201, 2
      %s203 = smul.addr %s199, 32
      %s204 = sadd.s32 %s202, %s203
      %s205 = smul.addr %s204, 8
      %s206 = scalar_lea.vmem %s4, %s205
      %p207 = scmp.lt.s32.totalorder %s19, 1
      %s208 = scalar_select %p207, %s19, 1
      %s209 = smul.addr %s208, 204
      %s210 = smul.addr %s209, 8
      %s211 = scalar_lea.vmem %s0, %s210
      %s212 = smul.u32 8, %s20
      %p213 = scmp.lt.s32.totalorder %s19, 1
      %s214 = scalar_select %p213, %s19, 1
      %p215 = scmp.lt.s32.totalorder %s212, 15
      %s216 = scalar_select %p215, %s212, 15
      %s217 = smul.addr %s216, 2
      %s218 = smul.addr %s214, 32
      %s219 = sadd.s32 %s217, %s218
      %s220 = smul.addr %s219, 8
      %s221 = scalar_lea.vmem %s4, %s220
      %s222 = smul.u32 8, %s20
      %s224 = smul.u32 %s20, 8
      %s225 = smul.u32 %s224, 24
      %s226 = scalar_lea.vmem %s211, %s225
      %v227 = vld [vmem:[%s226] sm:$0xff]
      %v228 = vld [vmem:[%s226 + $0x8] sm:$0xff]
      %v229 = vld [vmem:[%s226 + $0x18] sm:$0xff]
      %v230 = vld [vmem:[%s226 + $0x20] sm:$0xff]
      %v231 = vld [vmem:[%s226 + $0x30] sm:$0xff]
      %v232 = vld [vmem:[%s226 + $0x38] sm:$0xff]
      %v233 = vld [vmem:[%s226 + $0x48] sm:$0xff]
      %v234 = vld [vmem:[%s226 + $0x50] sm:$0xff]
      %v235 = vld [vmem:[%s226 + $0x60] sm:$0xff]
      %v236 = vld [vmem:[%s226 + $0x68] sm:$0xff]
      %v237 = vld [vmem:[%s226 + $0x78] sm:$0xff]
      %v238 = vld [vmem:[%s226 + $0x80] sm:$0xff]
      %v239 = vld [vmem:[%s226 + $0x90] sm:$0xff]
      %v240 = vld [vmem:[%s226 + $0x98] sm:$0xff]
      %v241 = vld [vmem:[%s226 + $0xa8] sm:$0xff]
      %v242 = vld [vmem:[%s226 + $0xb0] sm:$0xff]
      %v243 = vpack.c.bf16 %v228, %v227
      %v244 = vpack.c.bf16 %v230, %v229
      %v245 = vpack.c.bf16 %v232, %v231
      %v246 = vpack.c.bf16 %v234, %v233
      %v247 = vpack.c.bf16 %v236, %v235
      %v248 = vpack.c.bf16 %v238, %v237
      %v249 = vpack.c.bf16 %v240, %v239
      %v250 = vpack.c.bf16 %v242, %v241
      %v251 = vld [vmem:[%s1] sm:$0xf]
      %v252 = vld [vmem:[%s1 + $0x4] sm:$0xf]
      %v253 = vld [vmem:[%s1 + $0x8] sm:$0xf]
      %v254 = vld [vmem:[%s1 + $0xc] sm:$0xf]
      %v255 = vld [vmem:[%s1 + $0x10] sm:$0xf]
      %v256 = vld [vmem:[%s1 + $0x14] sm:$0xf]
      %v257 = vld [vmem:[%s1 + $0x18] sm:$0xf]
      %v258 = vld [vmem:[%s1 + $0x1c] sm:$0xf]
      %s259 = sadd.s32 %s225, 408
      %s260 = scalar_lea.vmem %s211, %s259
      %v261 = vld [vmem:[%s260] sm:$0xff]
      %v262 = vld [vmem:[%s260 + $0x8] sm:$0xff]
      %v263 = vld [vmem:[%s260 + $0x18] sm:$0xff]
      %v264 = vld [vmem:[%s260 + $0x20] sm:$0xff]
      %v265 = vld [vmem:[%s260 + $0x30] sm:$0xff]
      %v266 = vld [vmem:[%s260 + $0x38] sm:$0xff]
      %v267 = vld [vmem:[%s260 + $0x48] sm:$0xff]
      %v268 = vld [vmem:[%s260 + $0x50] sm:$0xff]
      %v269 = vld [vmem:[%s260 + $0x60] sm:$0xff]
      %v270 = vld [vmem:[%s260 + $0x68] sm:$0xff]
      %v271 = vld [vmem:[%s260 + $0x78] sm:$0xff]
      %v272 = vld [vmem:[%s260 + $0x80] sm:$0xff]
      %v273 = vld [vmem:[%s260 + $0x90] sm:$0xff]
      %v274 = vld [vmem:[%s260 + $0x98] sm:$0xff]
      %v275 = vld [vmem:[%s260 + $0xa8] sm:$0xff]
      %v276 = vld [vmem:[%s260 + $0xb0] sm:$0xff]
      %v277 = vpack.c.bf16 %v262, %v261
      %v278 = vpack.c.bf16 %v264, %v263
      %v279 = vpack.c.bf16 %v266, %v265
      %v280 = vpack.c.bf16 %v268, %v267
      %v281 = vpack.c.bf16 %v270, %v269
      %v282 = vpack.c.bf16 %v272, %v271
      %v283 = vpack.c.bf16 %v274, %v273
      %v284 = vpack.c.bf16 %v276, %v275
      %s285 = scalar_lea.vmem %s1, 32
      %v286 = vld [vmem:[%s285] sm:$0xf]
      %v287 = vld [vmem:[%s285 + $0x4] sm:$0xf]
      %v288 = vld [vmem:[%s285 + $0x8] sm:$0xf]
      %v289 = vld [vmem:[%s285 + $0xc] sm:$0xf]
      %v290 = vld [vmem:[%s285 + $0x10] sm:$0xf]
      %v291 = vld [vmem:[%s285 + $0x14] sm:$0xf]
      %v292 = vld [vmem:[%s285 + $0x18] sm:$0xf]
      %v293 = vld [vmem:[%s285 + $0x1c] sm:$0xf]
      %v302 = vunpack.c.l.b16 %v286
      %v303 = vunpack.c.l.b16 %v287
      %v304 = vunpack.c.l.b16 %v288
      %v305 = vunpack.c.l.b16 %v289
      %v306 = vunpack.c.l.b16 %v290
      %v307 = vunpack.c.l.b16 %v291
      %v308 = vunpack.c.l.b16 %v292
      %v309 = vunpack.c.l.b16 %v293
      %v310 = vpack.c.b16 %v303, %v302
      %v311 = vpack.c.b16 %v305, %v304
      %v312 = vpack.c.b16 %v307, %v306
      %v313 = vpack.c.b16 %v309, %v308
      %vm318 = vcmask 523264
      %v320 = vsel %vm318, %v277, 0
      %v323 = vsel %vm318, %v278, 0
      %v326 = vsel %vm318, %v279, 0
      %v329 = vsel %vm318, %v280, 0
      %v332 = vsel %vm318, %v281, 0
      %v335 = vsel %vm318, %v282, 0
      %v338 = vsel %vm318, %v283, 0
      %v341 = vsel %vm318, %v284, 0
      %343 = vmatpush.bf16.msra.mxu0 0
      %344 = vmatpush.bf16.msra.mxu0 0
      %345 = vmatpush.bf16.msra.mxu0 0
      %346 = vmatpush.bf16.msra.mxu0 0
      %347 = vmatpush.bf16.msra.mxu0 %v313
      %348 = vmatpush.bf16.msra.mxu0 %v312
      %349 = vmatpush.bf16.msra.mxu0 %v311
      %350 = vmatpush.bf16.msra.mxu0 %v310
      %351 = vmatmul.bf16.gmra.mxu0 %v320
      %v352 = vpop.f32.mrf.mxu0
      %v353 = vadd.f32 0.0, %v352
      %v354 = vpop.f32.mrf.mxu0
      %v355 = vadd.f32 0.0, %v354
      %356 = vmatmul.bf16.gmra.mxu0 %v323
      %v357 = vpop.f32.mrf.mxu0
      %v358 = vadd.f32 0.0, %v357
      %v359 = vpop.f32.mrf.mxu0
      %v360 = vadd.f32 0.0, %v359
      %361 = vmatmul.bf16.gmra.mxu0 %v326
      %v362 = vpop.f32.mrf.mxu0
      %v363 = vadd.f32 0.0, %v362
      %v364 = vpop.f32.mrf.mxu0
      %v365 = vadd.f32 0.0, %v364
      %366 = vmatmul.bf16.gmra.mxu0 %v329
      %v367 = vpop.f32.mrf.mxu0
      %v368 = vadd.f32 0.0, %v367
      %v369 = vpop.f32.mrf.mxu0
      %v370 = vadd.f32 0.0, %v369
      %371 = vmatmul.bf16.gmra.mxu0 %v332
      %v372 = vpop.f32.mrf.mxu0
      %v373 = vadd.f32 0.0, %v372
      %v374 = vpop.f32.mrf.mxu0
      %v375 = vadd.f32 0.0, %v374
      %376 = vmatmul.bf16.gmra.mxu0 %v335
      %v377 = vpop.f32.mrf.mxu0
      %v378 = vadd.f32 0.0, %v377
      %v379 = vpop.f32.mrf.mxu0
      %v380 = vadd.f32 0.0, %v379
      %381 = vmatmul.bf16.gmra.mxu0 %v338
      %v382 = vpop.f32.mrf.mxu0
      %v383 = vadd.f32 0.0, %v382
      %v384 = vpop.f32.mrf.mxu0
      %v385 = vadd.f32 0.0, %v384
      %386 = vmatmul.bf16.gmra.mxu0 %v341
      %v387 = vpop.f32.mrf.mxu0
      %v388 = vadd.f32 0.0, %v387
      %v389 = vpop.f32.mrf.mxu0
      %v390 = vadd.f32 0.0, %v389
      %391 = vdwg.mxu0
      %v400 = vunpack.c.l.b16 %v251
      %v401 = vunpack.c.l.b16 %v252
      %v402 = vunpack.c.l.b16 %v253
      %v403 = vunpack.c.l.b16 %v254
      %v404 = vunpack.c.l.b16 %v255
      %v405 = vunpack.c.l.b16 %v256
      %v406 = vunpack.c.l.b16 %v257
      %v407 = vunpack.c.l.b16 %v258
      %v408 = vpack.c.b16 %v401, %v400
      %v409 = vpack.c.b16 %v403, %v402
      %v410 = vpack.c.b16 %v405, %v404
      %v411 = vpack.c.b16 %v407, %v406
      %v417 = vsel %vm318, %v243, 0
      %v420 = vsel %vm318, %v244, 0
      %v423 = vsel %vm318, %v245, 0
      %v426 = vsel %vm318, %v246, 0
      %v429 = vsel %vm318, %v247, 0
      %v432 = vsel %vm318, %v248, 0
      %v435 = vsel %vm318, %v249, 0
      %v438 = vsel %vm318, %v250, 0
      %440 = vmatpush.bf16.msra.mxu0 0
      %441 = vmatpush.bf16.msra.mxu0 0
      %442 = vmatpush.bf16.msra.mxu0 0
      %443 = vmatpush.bf16.msra.mxu0 0
      %444 = vmatpush.bf16.msra.mxu0 %v411
      %445 = vmatpush.bf16.msra.mxu0 %v410
      %446 = vmatpush.bf16.msra.mxu0 %v409
      %447 = vmatpush.bf16.msra.mxu0 %v408
      %448 = vmatmul.bf16.gmra.mxu0 %v417
      %v449 = vpop.f32.mrf.mxu0
      %v450 = vadd.f32 %v353, %v449
      %v451 = vpop.f32.mrf.mxu0
      %v452 = vadd.f32 %v355, %v451
      %453 = vmatmul.bf16.gmra.mxu0 %v420
      %v454 = vpop.f32.mrf.mxu0
      %v455 = vadd.f32 %v358, %v454
      %v456 = vpop.f32.mrf.mxu0
      %v457 = vadd.f32 %v360, %v456
      %458 = vmatmul.bf16.gmra.mxu0 %v423
      %v459 = vpop.f32.mrf.mxu0
      %v460 = vadd.f32 %v363, %v459
      %v461 = vpop.f32.mrf.mxu0
      %v462 = vadd.f32 %v365, %v461
      %463 = vmatmul.bf16.gmra.mxu0 %v426
      %v464 = vpop.f32.mrf.mxu0
      %v465 = vadd.f32 %v368, %v464
      %v466 = vpop.f32.mrf.mxu0
      %v467 = vadd.f32 %v370, %v466
      %468 = vmatmul.bf16.gmra.mxu0 %v429
      %v469 = vpop.f32.mrf.mxu0
      %v470 = vadd.f32 %v373, %v469
      %v471 = vpop.f32.mrf.mxu0
      %v472 = vadd.f32 %v375, %v471
      %473 = vmatmul.bf16.gmra.mxu0 %v432
      %v474 = vpop.f32.mrf.mxu0
      %v475 = vadd.f32 %v378, %v474
      %v476 = vpop.f32.mrf.mxu0
      %v477 = vadd.f32 %v380, %v476
      %478 = vmatmul.bf16.gmra.mxu0 %v435
      %v479 = vpop.f32.mrf.mxu0
      %v480 = vadd.f32 %v383, %v479
      %v481 = vpop.f32.mrf.mxu0
      %v482 = vadd.f32 %v385, %v481
      %483 = vmatmul.bf16.gmra.mxu0 %v438
      %v484 = vpop.f32.mrf.mxu0
      %v485 = vadd.f32 %v388, %v484
      %v486 = vpop.f32.mrf.mxu0
      %v487 = vadd.f32 %v390, %v486
      %488 = vdwg.mxu0
      %v489 = vld [vmem:[%s226 + $0x1] sm:$0xff]
      %v490 = vld [vmem:[%s226 + $0x9] sm:$0xff]
      %v491 = vld [vmem:[%s226 + $0x19] sm:$0xff]
      %v492 = vld [vmem:[%s226 + $0x21] sm:$0xff]
      %v493 = vld [vmem:[%s226 + $0x31] sm:$0xff]
      %v494 = vld [vmem:[%s226 + $0x39] sm:$0xff]
      %v495 = vld [vmem:[%s226 + $0x49] sm:$0xff]
      %v496 = vld [vmem:[%s226 + $0x51] sm:$0xff]
      %v497 = vld [vmem:[%s226 + $0x61] sm:$0xff]
      %v498 = vld [vmem:[%s226 + $0x69] sm:$0xff]
      %v499 = vld [vmem:[%s226 + $0x79] sm:$0xff]
      %v500 = vld [vmem:[%s226 + $0x81] sm:$0xff]
      %v501 = vld [vmem:[%s226 + $0x91] sm:$0xff]
      %v502 = vld [vmem:[%s226 + $0x99] sm:$0xff]
      %v503 = vld [vmem:[%s226 + $0xa9] sm:$0xff]
      %v504 = vld [vmem:[%s226 + $0xb1] sm:$0xff]
      %v505 = vpack.c.bf16 %v490, %v489
      %v506 = vpack.c.bf16 %v492, %v491
      %v507 = vpack.c.bf16 %v494, %v493
      %v508 = vpack.c.bf16 %v496, %v495
      %v509 = vpack.c.bf16 %v498, %v497
      %v510 = vpack.c.bf16 %v500, %v499
      %v511 = vpack.c.bf16 %v502, %v501
      %v512 = vpack.c.bf16 %v504, %v503
      %s513 = scalar_lea.vmem %s1, 64
      %v514 = vld [vmem:[%s513] sm:$0xf]
      %v515 = vld [vmem:[%s513 + $0x4] sm:$0xf]
      %v516 = vld [vmem:[%s513 + $0x8] sm:$0xf]
      %v517 = vld [vmem:[%s513 + $0xc] sm:$0xf]
      %v518 = vld [vmem:[%s513 + $0x10] sm:$0xf]
      %v519 = vld [vmem:[%s513 + $0x14] sm:$0xf]
      %v520 = vld [vmem:[%s513 + $0x18] sm:$0xf]
      %v521 = vld [vmem:[%s513 + $0x1c] sm:$0xf]
      %v530 = vunpack.c.l.b16 %v514
      %v531 = vunpack.c.l.b16 %v515
      %v532 = vunpack.c.l.b16 %v516
      %v533 = vunpack.c.l.b16 %v517
      %v534 = vunpack.c.l.b16 %v518
      %v535 = vunpack.c.l.b16 %v519
      %v536 = vunpack.c.l.b16 %v520
      %v537 = vunpack.c.l.b16 %v521
      %v538 = vpack.c.b16 %v531, %v530
      %v539 = vpack.c.b16 %v533, %v532
      %v540 = vpack.c.b16 %v535, %v534
      %v541 = vpack.c.b16 %v537, %v536
      %v547 = vsel %vm318, %v505, 0
      %v550 = vsel %vm318, %v506, 0
      %v553 = vsel %vm318, %v507, 0
      %v556 = vsel %vm318, %v508, 0
      %v559 = vsel %vm318, %v509, 0
      %v562 = vsel %vm318, %v510, 0
      %v565 = vsel %vm318, %v511, 0
      %v568 = vsel %vm318, %v512, 0
      %570 = vmatpush.bf16.msra.mxu0 0
      %571 = vmatpush.bf16.msra.mxu0 0
      %572 = vmatpush.bf16.msra.mxu0 0
      %573 = vmatpush.bf16.msra.mxu0 0
      %574 = vmatpush.bf16.msra.mxu0 %v541
      %575 = vmatpush.bf16.msra.mxu0 %v540
      %576 = vmatpush.bf16.msra.mxu0 %v539
      %577 = vmatpush.bf16.msra.mxu0 %v538
      %578 = vmatmul.bf16.gmra.mxu0 %v547
      %v579 = vpop.f32.mrf.mxu0
      %v580 = vadd.f32 0.0, %v579
      %v581 = vpop.f32.mrf.mxu0
      %v582 = vadd.f32 0.0, %v581
      %583 = vmatmul.bf16.gmra.mxu0 %v550
      %v584 = vpop.f32.mrf.mxu0
      %v585 = vadd.f32 0.0, %v584
      %v586 = vpop.f32.mrf.mxu0
      %v587 = vadd.f32 0.0, %v586
      %588 = vmatmul.bf16.gmra.mxu0 %v553
      %v589 = vpop.f32.mrf.mxu0
      %v590 = vadd.f32 0.0, %v589
      %v591 = vpop.f32.mrf.mxu0
      %v592 = vadd.f32 0.0, %v591
      %593 = vmatmul.bf16.gmra.mxu0 %v556
      %v594 = vpop.f32.mrf.mxu0
      %v595 = vadd.f32 0.0, %v594
      %v596 = vpop.f32.mrf.mxu0
      %v597 = vadd.f32 0.0, %v596
      %598 = vmatmul.bf16.gmra.mxu0 %v559
      %v599 = vpop.f32.mrf.mxu0
      %v600 = vadd.f32 0.0, %v599
      %v601 = vpop.f32.mrf.mxu0
      %v602 = vadd.f32 0.0, %v601
      %603 = vmatmul.bf16.gmra.mxu0 %v562
      %v604 = vpop.f32.mrf.mxu0
      %v605 = vadd.f32 0.0, %v604
      %v606 = vpop.f32.mrf.mxu0
      %v607 = vadd.f32 0.0, %v606
      %608 = vmatmul.bf16.gmra.mxu0 %v565
      %v609 = vpop.f32.mrf.mxu0
      %v610 = vadd.f32 0.0, %v609
      %v611 = vpop.f32.mrf.mxu0
      %v612 = vadd.f32 0.0, %v611
      %613 = vmatmul.bf16.gmra.mxu0 %v568
      %v614 = vpop.f32.mrf.mxu0
      %v615 = vadd.f32 0.0, %v614
      %v616 = vpop.f32.mrf.mxu0
      %v617 = vadd.f32 0.0, %v616
      %618 = vdwg.mxu0
      %v619 = vadd.f32 %v450, %v580
      %v620 = vadd.f32 %v452, %v582
      %v621 = vadd.f32 %v455, %v585
      %v622 = vadd.f32 %v457, %v587
      %v623 = vadd.f32 %v460, %v590
      %v624 = vadd.f32 %v462, %v592
      %v625 = vadd.f32 %v465, %v595
      %v626 = vadd.f32 %v467, %v597
      %v627 = vadd.f32 %v470, %v600
      %v628 = vadd.f32 %v472, %v602
      %v629 = vadd.f32 %v475, %v605
      %v630 = vadd.f32 %v477, %v607
      %v631 = vadd.f32 %v480, %v610
      %v632 = vadd.f32 %v482, %v612
      %v633 = vadd.f32 %v485, %v615
      %v634 = vadd.f32 %v487, %v617
      %s635 = sadd.s32 %s225, 816
      %s636 = scalar_lea.vmem %s211, %s635
      %v637 = vld [vmem:[%s636] sm:$0xff]
      %v638 = vld [vmem:[%s636 + $0x8] sm:$0xff]
      %v639 = vld [vmem:[%s636 + $0x18] sm:$0xff]
      %v640 = vld [vmem:[%s636 + $0x20] sm:$0xff]
      %v641 = vld [vmem:[%s636 + $0x30] sm:$0xff]
      %v642 = vld [vmem:[%s636 + $0x38] sm:$0xff]
      %v643 = vld [vmem:[%s636 + $0x48] sm:$0xff]
      %v644 = vld [vmem:[%s636 + $0x50] sm:$0xff]
      %v645 = vld [vmem:[%s636 + $0x60] sm:$0xff]
      %v646 = vld [vmem:[%s636 + $0x68] sm:$0xff]
      %v647 = vld [vmem:[%s636 + $0x78] sm:$0xff]
      %v648 = vld [vmem:[%s636 + $0x80] sm:$0xff]
      %v649 = vld [vmem:[%s636 + $0x90] sm:$0xff]
      %v650 = vld [vmem:[%s636 + $0x98] sm:$0xff]
      %v651 = vld [vmem:[%s636 + $0xa8] sm:$0xff]
      %v652 = vld [vmem:[%s636 + $0xb0] sm:$0xff]
      %v653 = vpack.c.bf16 %v638, %v637
      %v654 = vpack.c.bf16 %v640, %v639
      %v655 = vpack.c.bf16 %v642, %v641
      %v656 = vpack.c.bf16 %v644, %v643
      %v657 = vpack.c.bf16 %v646, %v645
      %v658 = vpack.c.bf16 %v648, %v647
      %v659 = vpack.c.bf16 %v650, %v649
      %v660 = vpack.c.bf16 %v652, %v651
      %s661 = scalar_lea.vmem %s1, 96
      %v662 = vld [vmem:[%s661] sm:$0xf]
      %v663 = vld [vmem:[%s661 + $0x4] sm:$0xf]
      %v664 = vld [vmem:[%s661 + $0x8] sm:$0xf]
      %v665 = vld [vmem:[%s661 + $0xc] sm:$0xf]
      %v666 = vld [vmem:[%s661 + $0x10] sm:$0xf]
      %v667 = vld [vmem:[%s661 + $0x14] sm:$0xf]
      %v668 = vld [vmem:[%s661 + $0x18] sm:$0xf]
      %v669 = vld [vmem:[%s661 + $0x1c] sm:$0xf]
      %v678 = vunpack.c.l.b16 %v662
      %v679 = vunpack.c.l.b16 %v663
      %v680 = vunpack.c.l.b16 %v664
      %v681 = vunpack.c.l.b16 %v665
      %v682 = vunpack.c.l.b16 %v666
      %v683 = vunpack.c.l.b16 %v667
      %v684 = vunpack.c.l.b16 %v668
      %v685 = vunpack.c.l.b16 %v669
      %v686 = vpack.c.b16 %v679, %v678
      %v687 = vpack.c.b16 %v681, %v680
      %v688 = vpack.c.b16 %v683, %v682
      %v689 = vpack.c.b16 %v685, %v684
      %v695 = vsel %vm318, %v653, 0
      %v698 = vsel %vm318, %v654, 0
      %v701 = vsel %vm318, %v655, 0
      %v704 = vsel %vm318, %v656, 0
      %v707 = vsel %vm318, %v657, 0
      %v710 = vsel %vm318, %v658, 0
      %v713 = vsel %vm318, %v659, 0
      %v716 = vsel %vm318, %v660, 0
      %718 = vmatpush.bf16.msra.mxu0 0
      %719 = vmatpush.bf16.msra.mxu0 0
      %720 = vmatpush.bf16.msra.mxu0 0
      %721 = vmatpush.bf16.msra.mxu0 0
      %722 = vmatpush.bf16.msra.mxu0 %v689
      %723 = vmatpush.bf16.msra.mxu0 %v688
      %724 = vmatpush.bf16.msra.mxu0 %v687
      %725 = vmatpush.bf16.msra.mxu0 %v686
      %726 = vmatmul.bf16.gmra.mxu0 %v695
      %v727 = vpop.f32.mrf.mxu0
      %v728 = vadd.f32 0.0, %v727
      %v729 = vpop.f32.mrf.mxu0
      %v730 = vadd.f32 0.0, %v729
      %731 = vmatmul.bf16.gmra.mxu0 %v698
      %v732 = vpop.f32.mrf.mxu0
      %v733 = vadd.f32 0.0, %v732
      %v734 = vpop.f32.mrf.mxu0
      %v735 = vadd.f32 0.0, %v734
      %736 = vmatmul.bf16.gmra.mxu0 %v701
      %v737 = vpop.f32.mrf.mxu0
      %v738 = vadd.f32 0.0, %v737
      %v739 = vpop.f32.mrf.mxu0
      %v740 = vadd.f32 0.0, %v739
      %741 = vmatmul.bf16.gmra.mxu0 %v704
      %v742 = vpop.f32.mrf.mxu0
      %v743 = vadd.f32 0.0, %v742
      %v744 = vpop.f32.mrf.mxu0
      %v745 = vadd.f32 0.0, %v744
      %746 = vmatmul.bf16.gmra.mxu0 %v707
      %v747 = vpop.f32.mrf.mxu0
      %v748 = vadd.f32 0.0, %v747
      %v749 = vpop.f32.mrf.mxu0
      %v750 = vadd.f32 0.0, %v749
      %751 = vmatmul.bf16.gmra.mxu0 %v710
      %v752 = vpop.f32.mrf.mxu0
      %v753 = vadd.f32 0.0, %v752
      %v754 = vpop.f32.mrf.mxu0
      %v755 = vadd.f32 0.0, %v754
      %756 = vmatmul.bf16.gmra.mxu0 %v713
      %v757 = vpop.f32.mrf.mxu0
      %v758 = vadd.f32 0.0, %v757
      %v759 = vpop.f32.mrf.mxu0
      %v760 = vadd.f32 0.0, %v759
      %761 = vmatmul.bf16.gmra.mxu0 %v716
      %v762 = vpop.f32.mrf.mxu0
      %v763 = vadd.f32 0.0, %v762
      %v764 = vpop.f32.mrf.mxu0
      %v765 = vadd.f32 0.0, %v764
      %766 = vdwg.mxu0
      %v767 = vadd.f32 %v619, %v728
      %v768 = vadd.f32 %v620, %v730
      %v769 = vadd.f32 %v621, %v733
      %v770 = vadd.f32 %v622, %v735
      %v771 = vadd.f32 %v623, %v738
      %v772 = vadd.f32 %v624, %v740
      %v773 = vadd.f32 %v625, %v743
      %v774 = vadd.f32 %v626, %v745
      %v775 = vadd.f32 %v627, %v748
      %v776 = vadd.f32 %v628, %v750
      %v777 = vadd.f32 %v629, %v753
      %v778 = vadd.f32 %v630, %v755
      %v779 = vadd.f32 %v631, %v758
      %v780 = vadd.f32 %v632, %v760
      %v781 = vadd.f32 %v633, %v763
      %v782 = vadd.f32 %v634, %v765
      %s783 = sadd.s32 %s225, 1224
      %s784 = scalar_lea.vmem %s211, %s783
      %v785 = vld [vmem:[%s784] sm:$0xff]
      %v786 = vld [vmem:[%s784 + $0x8] sm:$0xff]
      %v787 = vld [vmem:[%s784 + $0x18] sm:$0xff]
      %v788 = vld [vmem:[%s784 + $0x20] sm:$0xff]
      %v789 = vld [vmem:[%s784 + $0x30] sm:$0xff]
      %v790 = vld [vmem:[%s784 + $0x38] sm:$0xff]
      %v791 = vld [vmem:[%s784 + $0x48] sm:$0xff]
      %v792 = vld [vmem:[%s784 + $0x50] sm:$0xff]
      %v793 = vld [vmem:[%s784 + $0x60] sm:$0xff]
      %v794 = vld [vmem:[%s784 + $0x68] sm:$0xff]
      %v795 = vld [vmem:[%s784 + $0x78] sm:$0xff]
      %v796 = vld [vmem:[%s784 + $0x80] sm:$0xff]
      %v797 = vld [vmem:[%s784 + $0x90] sm:$0xff]
      %v798 = vld [vmem:[%s784 + $0x98] sm:$0xff]
      %v799 = vld [vmem:[%s784 + $0xa8] sm:$0xff]
      %v800 = vld [vmem:[%s784 + $0xb0] sm:$0xff]
      %v801 = vpack.c.bf16 %v786, %v785
      %v802 = vpack.c.bf16 %v788, %v787
      %v803 = vpack.c.bf16 %v790, %v789
      %v804 = vpack.c.bf16 %v792, %v791
      %v805 = vpack.c.bf16 %v794, %v793
      %v806 = vpack.c.bf16 %v796, %v795
      %v807 = vpack.c.bf16 %v798, %v797
      %v808 = vpack.c.bf16 %v800, %v799
      %s809 = scalar_lea.vmem %s1, 128
      %v810 = vld [vmem:[%s809] sm:$0xf]
      %v811 = vld [vmem:[%s809 + $0x4] sm:$0xf]
      %v812 = vld [vmem:[%s809 + $0x8] sm:$0xf]
      %v813 = vld [vmem:[%s809 + $0xc] sm:$0xf]
      %v814 = vld [vmem:[%s809 + $0x10] sm:$0xf]
      %v815 = vld [vmem:[%s809 + $0x14] sm:$0xf]
      %v816 = vld [vmem:[%s809 + $0x18] sm:$0xf]
      %v817 = vld [vmem:[%s809 + $0x1c] sm:$0xf]
      %v826 = vunpack.c.l.b16 %v810
      %v827 = vunpack.c.l.b16 %v811
      %v828 = vunpack.c.l.b16 %v812
      %v829 = vunpack.c.l.b16 %v813
      %v830 = vunpack.c.l.b16 %v814
      %v831 = vunpack.c.l.b16 %v815
      %v832 = vunpack.c.l.b16 %v816
      %v833 = vunpack.c.l.b16 %v817
      %v834 = vpack.c.b16 %v827, %v826
      %v835 = vpack.c.b16 %v829, %v828
      %v836 = vpack.c.b16 %v831, %v830
      %v837 = vpack.c.b16 %v833, %v832
      %v843 = vsel %vm318, %v801, 0
      %v846 = vsel %vm318, %v802, 0
      %v849 = vsel %vm318, %v803, 0
      %v852 = vsel %vm318, %v804, 0
      %v855 = vsel %vm318, %v805, 0
      %v858 = vsel %vm318, %v806, 0
      %v861 = vsel %vm318, %v807, 0
      %v864 = vsel %vm318, %v808, 0
      %866 = vmatpush.bf16.msra.mxu0 0
      %867 = vmatpush.bf16.msra.mxu0 0
      %868 = vmatpush.bf16.msra.mxu0 0
      %869 = vmatpush.bf16.msra.mxu0 0
      %870 = vmatpush.bf16.msra.mxu0 %v837
      %871 = vmatpush.bf16.msra.mxu0 %v836
      %872 = vmatpush.bf16.msra.mxu0 %v835
      %873 = vmatpush.bf16.msra.mxu0 %v834
      %874 = vmatmul.bf16.gmra.mxu0 %v843
      %v875 = vpop.f32.mrf.mxu0
      %v876 = vadd.f32 0.0, %v875
      %v877 = vpop.f32.mrf.mxu0
      %v878 = vadd.f32 0.0, %v877
      %879 = vmatmul.bf16.gmra.mxu0 %v846
      %v880 = vpop.f32.mrf.mxu0
      %v881 = vadd.f32 0.0, %v880
      %v882 = vpop.f32.mrf.mxu0
      %v883 = vadd.f32 0.0, %v882
      %884 = vmatmul.bf16.gmra.mxu0 %v849
      %v885 = vpop.f32.mrf.mxu0
      %v886 = vadd.f32 0.0, %v885
      %v887 = vpop.f32.mrf.mxu0
      %v888 = vadd.f32 0.0, %v887
      %889 = vmatmul.bf16.gmra.mxu0 %v852
      %v890 = vpop.f32.mrf.mxu0
      %v891 = vadd.f32 0.0, %v890
      %v892 = vpop.f32.mrf.mxu0
      %v893 = vadd.f32 0.0, %v892
      %894 = vmatmul.bf16.gmra.mxu0 %v855
      %v895 = vpop.f32.mrf.mxu0
      %v896 = vadd.f32 0.0, %v895
      %v897 = vpop.f32.mrf.mxu0
      %v898 = vadd.f32 0.0, %v897
      %899 = vmatmul.bf16.gmra.mxu0 %v858
      %v900 = vpop.f32.mrf.mxu0
      %v901 = vadd.f32 0.0, %v900
      %v902 = vpop.f32.mrf.mxu0
      %v903 = vadd.f32 0.0, %v902
      %904 = vmatmul.bf16.gmra.mxu0 %v861
      %v905 = vpop.f32.mrf.mxu0
      %v906 = vadd.f32 0.0, %v905
      %v907 = vpop.f32.mrf.mxu0
      %v908 = vadd.f32 0.0, %v907
      %909 = vmatmul.bf16.gmra.mxu0 %v864
      %v910 = vpop.f32.mrf.mxu0
      %v911 = vadd.f32 0.0, %v910
      %v912 = vpop.f32.mrf.mxu0
      %v913 = vadd.f32 0.0, %v912
      %914 = vdwg.mxu0
      %v915 = vadd.f32 %v767, %v876
      %v916 = vadd.f32 %v768, %v878
      %v917 = vadd.f32 %v769, %v881
      %v918 = vadd.f32 %v770, %v883
      %v919 = vadd.f32 %v771, %v886
      %v920 = vadd.f32 %v772, %v888
      %v921 = vadd.f32 %v773, %v891
      %v922 = vadd.f32 %v774, %v893
      %v923 = vadd.f32 %v775, %v896
      %v924 = vadd.f32 %v776, %v898
      %v925 = vadd.f32 %v777, %v901
      %v926 = vadd.f32 %v778, %v903
      %v927 = vadd.f32 %v779, %v906
      %v928 = vadd.f32 %v780, %v908
      %v929 = vadd.f32 %v781, %v911
      %v930 = vadd.f32 %v782, %v913
      %v931 = vld [vmem:[%s636 + $0x1] sm:$0xff]
      %v932 = vld [vmem:[%s636 + $0x9] sm:$0xff]
      %v933 = vld [vmem:[%s636 + $0x19] sm:$0xff]
      %v934 = vld [vmem:[%s636 + $0x21] sm:$0xff]
      %v935 = vld [vmem:[%s636 + $0x31] sm:$0xff]
      %v936 = vld [vmem:[%s636 + $0x39] sm:$0xff]
      %v937 = vld [vmem:[%s636 + $0x49] sm:$0xff]
      %v938 = vld [vmem:[%s636 + $0x51] sm:$0xff]
      %v939 = vld [vmem:[%s636 + $0x61] sm:$0xff]
      %v940 = vld [vmem:[%s636 + $0x69] sm:$0xff]
      %v941 = vld [vmem:[%s636 + $0x79] sm:$0xff]
      %v942 = vld [vmem:[%s636 + $0x81] sm:$0xff]
      %v943 = vld [vmem:[%s636 + $0x91] sm:$0xff]
      %v944 = vld [vmem:[%s636 + $0x99] sm:$0xff]
      %v945 = vld [vmem:[%s636 + $0xa9] sm:$0xff]
      %v946 = vld [vmem:[%s636 + $0xb1] sm:$0xff]
      %v947 = vpack.c.bf16 %v932, %v931
      %v948 = vpack.c.bf16 %v934, %v933
      %v949 = vpack.c.bf16 %v936, %v935
      %v950 = vpack.c.bf16 %v938, %v937
      %v951 = vpack.c.bf16 %v940, %v939
      %v952 = vpack.c.bf16 %v942, %v941
      %v953 = vpack.c.bf16 %v944, %v943
      %v954 = vpack.c.bf16 %v946, %v945
      %s955 = scalar_lea.vmem %s1, 160
      %v956 = vld [vmem:[%s955] sm:$0xf]
      %v957 = vld [vmem:[%s955 + $0x4] sm:$0xf]
      %v958 = vld [vmem:[%s955 + $0x8] sm:$0xf]
      %v959 = vld [vmem:[%s955 + $0xc] sm:$0xf]
      %v960 = vld [vmem:[%s955 + $0x10] sm:$0xf]
      %v961 = vld [vmem:[%s955 + $0x14] sm:$0xf]
      %v962 = vld [vmem:[%s955 + $0x18] sm:$0xf]
      %v963 = vld [vmem:[%s955 + $0x1c] sm:$0xf]
      %v972 = vunpack.c.l.b16 %v956
      %v973 = vunpack.c.l.b16 %v957
      %v974 = vunpack.c.l.b16 %v958
      %v975 = vunpack.c.l.b16 %v959
      %v976 = vunpack.c.l.b16 %v960
      %v977 = vunpack.c.l.b16 %v961
      %v978 = vunpack.c.l.b16 %v962
      %v979 = vunpack.c.l.b16 %v963
      %v980 = vpack.c.b16 %v973, %v972
      %v981 = vpack.c.b16 %v975, %v974
      %v982 = vpack.c.b16 %v977, %v976
      %v983 = vpack.c.b16 %v979, %v978
      %v989 = vsel %vm318, %v947, 0
      %v992 = vsel %vm318, %v948, 0
      %v995 = vsel %vm318, %v949, 0
      %v998 = vsel %vm318, %v950, 0
      %v1001 = vsel %vm318, %v951, 0
      %v1004 = vsel %vm318, %v952, 0
      %v1007 = vsel %vm318, %v953, 0
      %v1010 = vsel %vm318, %v954, 0
      %1012 = vmatpush.bf16.msra.mxu0 0
      %1013 = vmatpush.bf16.msra.mxu0 0
      %1014 = vmatpush.bf16.msra.mxu0 0
      %1015 = vmatpush.bf16.msra.mxu0 0
      %1016 = vmatpush.bf16.msra.mxu0 %v983
      %1017 = vmatpush.bf16.msra.mxu0 %v982
      %1018 = vmatpush.bf16.msra.mxu0 %v981
      %1019 = vmatpush.bf16.msra.mxu0 %v980
      %1020 = vmatmul.bf16.gmra.mxu0 %v989
      %v1021 = vpop.f32.mrf.mxu0
      %v1022 = vadd.f32 0.0, %v1021
      %v1023 = vpop.f32.mrf.mxu0
      %v1024 = vadd.f32 0.0, %v1023
      %1025 = vmatmul.bf16.gmra.mxu0 %v992
      %v1026 = vpop.f32.mrf.mxu0
      %v1027 = vadd.f32 0.0, %v1026
      %v1028 = vpop.f32.mrf.mxu0
      %v1029 = vadd.f32 0.0, %v1028
      %1030 = vmatmul.bf16.gmra.mxu0 %v995
      %v1031 = vpop.f32.mrf.mxu0
      %v1032 = vadd.f32 0.0, %v1031
      %v1033 = vpop.f32.mrf.mxu0
      %v1034 = vadd.f32 0.0, %v1033
      %1035 = vmatmul.bf16.gmra.mxu0 %v998
      %v1036 = vpop.f32.mrf.mxu0
      %v1037 = vadd.f32 0.0, %v1036
      %v1038 = vpop.f32.mrf.mxu0
      %v1039 = vadd.f32 0.0, %v1038
      %1040 = vmatmul.bf16.gmra.mxu0 %v1001
      %v1041 = vpop.f32.mrf.mxu0
      %v1042 = vadd.f32 0.0, %v1041
      %v1043 = vpop.f32.mrf.mxu0
      %v1044 = vadd.f32 0.0, %v1043
      %1045 = vmatmul.bf16.gmra.mxu0 %v1004
      %v1046 = vpop.f32.mrf.mxu0
      %v1047 = vadd.f32 0.0, %v1046
      %v1048 = vpop.f32.mrf.mxu0
      %v1049 = vadd.f32 0.0, %v1048
      %1050 = vmatmul.bf16.gmra.mxu0 %v1007
      %v1051 = vpop.f32.mrf.mxu0
      %v1052 = vadd.f32 0.0, %v1051
      %v1053 = vpop.f32.mrf.mxu0
      %v1054 = vadd.f32 0.0, %v1053
      %1055 = vmatmul.bf16.gmra.mxu0 %v1010
      %v1056 = vpop.f32.mrf.mxu0
      %v1057 = vadd.f32 0.0, %v1056
      %v1058 = vpop.f32.mrf.mxu0
      %v1059 = vadd.f32 0.0, %v1058
      %1060 = vdwg.mxu0
      %v1061 = vadd.f32 %v915, %v1022
      %v1062 = vadd.f32 %v916, %v1024
      %v1063 = vadd.f32 %v917, %v1027
      %v1064 = vadd.f32 %v918, %v1029
      %v1065 = vadd.f32 %v919, %v1032
      %v1066 = vadd.f32 %v920, %v1034
      %v1067 = vadd.f32 %v921, %v1037
      %v1068 = vadd.f32 %v922, %v1039
      %v1069 = vadd.f32 %v923, %v1042
      %v1070 = vadd.f32 %v924, %v1044
      %v1071 = vadd.f32 %v925, %v1047
      %v1072 = vadd.f32 %v926, %v1049
      %v1073 = vadd.f32 %v927, %v1052
      %v1074 = vadd.f32 %v928, %v1054
      %v1075 = vadd.f32 %v929, %v1057
      %v1076 = vadd.f32 %v930, %v1059
      %s1077 = sadd.s32 %s224, 1
      %s1078 = smul.u32 %s1077, 24
      %s1079 = scalar_lea.vmem %s211, %s1078
      %v1080 = vld [vmem:[%s1079] sm:$0xff]
      %v1081 = vld [vmem:[%s1079 + $0x8] sm:$0xff]
      %v1082 = vld [vmem:[%s1079 + $0x18] sm:$0xff]
      %v1083 = vld [vmem:[%s1079 + $0x20] sm:$0xff]
      %v1084 = vld [vmem:[%s1079 + $0x30] sm:$0xff]
      %v1085 = vld [vmem:[%s1079 + $0x38] sm:$0xff]
      %v1086 = vld [vmem:[%s1079 + $0x48] sm:$0xff]
      %v1087 = vld [vmem:[%s1079 + $0x50] sm:$0xff]
      %v1088 = vld [vmem:[%s1079 + $0x60] sm:$0xff]
      %v1089 = vld [vmem:[%s1079 + $0x68] sm:$0xff]
      %v1090 = vld [vmem:[%s1079 + $0x78] sm:$0xff]
      %v1091 = vld [vmem:[%s1079 + $0x80] sm:$0xff]
      %v1092 = vld [vmem:[%s1079 + $0x90] sm:$0xff]
      %v1093 = vld [vmem:[%s1079 + $0x98] sm:$0xff]
      %v1094 = vld [vmem:[%s1079 + $0xa8] sm:$0xff]
      %v1095 = vld [vmem:[%s1079 + $0xb0] sm:$0xff]
      %v1096 = vpack.c.bf16 %v1081, %v1080
      %v1097 = vpack.c.bf16 %v1083, %v1082
      %v1098 = vpack.c.bf16 %v1085, %v1084
      %v1099 = vpack.c.bf16 %v1087, %v1086
      %v1100 = vpack.c.bf16 %v1089, %v1088
      %v1101 = vpack.c.bf16 %v1091, %v1090
      %v1102 = vpack.c.bf16 %v1093, %v1092
      %v1103 = vpack.c.bf16 %v1095, %v1094
      %s1104 = scalar_lea.vmem %s1, 192
      %v1105 = vld [vmem:[%s1104] sm:$0xf]
      %v1106 = vld [vmem:[%s1104 + $0x4] sm:$0xf]
      %v1107 = vld [vmem:[%s1104 + $0x8] sm:$0xf]
      %v1108 = vld [vmem:[%s1104 + $0xc] sm:$0xf]
      %v1109 = vld [vmem:[%s1104 + $0x10] sm:$0xf]
      %v1110 = vld [vmem:[%s1104 + $0x14] sm:$0xf]
      %v1111 = vld [vmem:[%s1104 + $0x18] sm:$0xf]
      %v1112 = vld [vmem:[%s1104 + $0x1c] sm:$0xf]
      %v1121 = vunpack.c.l.b16 %v1105
      %v1122 = vunpack.c.l.b16 %v1106
      %v1123 = vunpack.c.l.b16 %v1107
      %v1124 = vunpack.c.l.b16 %v1108
      %v1125 = vunpack.c.l.b16 %v1109
      %v1126 = vunpack.c.l.b16 %v1110
      %v1127 = vunpack.c.l.b16 %v1111
      %v1128 = vunpack.c.l.b16 %v1112
      %v1129 = vpack.c.b16 %v1122, %v1121
      %v1130 = vpack.c.b16 %v1124, %v1123
      %v1131 = vpack.c.b16 %v1126, %v1125
      %v1132 = vpack.c.b16 %v1128, %v1127
      %v1138 = vsel %vm318, %v1096, 0
      %v1141 = vsel %vm318, %v1097, 0
      %v1144 = vsel %vm318, %v1098, 0
      %v1147 = vsel %vm318, %v1099, 0
      %v1150 = vsel %vm318, %v1100, 0
      %v1153 = vsel %vm318, %v1101, 0
      %v1156 = vsel %vm318, %v1102, 0
      %v1159 = vsel %vm318, %v1103, 0
      %1161 = vmatpush.bf16.msra.mxu0 0
      %1162 = vmatpush.bf16.msra.mxu0 0
      %1163 = vmatpush.bf16.msra.mxu0 0
      %1164 = vmatpush.bf16.msra.mxu0 0
      %1165 = vmatpush.bf16.msra.mxu0 %v1132
      %1166 = vmatpush.bf16.msra.mxu0 %v1131
      %1167 = vmatpush.bf16.msra.mxu0 %v1130
      %1168 = vmatpush.bf16.msra.mxu0 %v1129
      %1169 = vmatmul.bf16.gmra.mxu0 %v1138
      %v1170 = vpop.f32.mrf.mxu0
      %v1171 = vadd.f32 0.0, %v1170
      %v1172 = vpop.f32.mrf.mxu0
      %v1173 = vadd.f32 0.0, %v1172
      %1174 = vmatmul.bf16.gmra.mxu0 %v1141
      %v1175 = vpop.f32.mrf.mxu0
      %v1176 = vadd.f32 0.0, %v1175
      %v1177 = vpop.f32.mrf.mxu0
      %v1178 = vadd.f32 0.0, %v1177
      %1179 = vmatmul.bf16.gmra.mxu0 %v1144
      %v1180 = vpop.f32.mrf.mxu0
      %v1181 = vadd.f32 0.0, %v1180
      %v1182 = vpop.f32.mrf.mxu0
      %v1183 = vadd.f32 0.0, %v1182
      %1184 = vmatmul.bf16.gmra.mxu0 %v1147
      %v1185 = vpop.f32.mrf.mxu0
      %v1186 = vadd.f32 0.0, %v1185
      %v1187 = vpop.f32.mrf.mxu0
      %v1188 = vadd.f32 0.0, %v1187
      %1189 = vmatmul.bf16.gmra.mxu0 %v1150
      %v1190 = vpop.f32.mrf.mxu0
      %v1191 = vadd.f32 0.0, %v1190
      %v1192 = vpop.f32.mrf.mxu0
      %v1193 = vadd.f32 0.0, %v1192
      %1194 = vmatmul.bf16.gmra.mxu0 %v1153
      %v1195 = vpop.f32.mrf.mxu0
      %v1196 = vadd.f32 0.0, %v1195
      %v1197 = vpop.f32.mrf.mxu0
      %v1198 = vadd.f32 0.0, %v1197
      %1199 = vmatmul.bf16.gmra.mxu0 %v1156
      %v1200 = vpop.f32.mrf.mxu0
      %v1201 = vadd.f32 0.0, %v1200
      %v1202 = vpop.f32.mrf.mxu0
      %v1203 = vadd.f32 0.0, %v1202
      %1204 = vmatmul.bf16.gmra.mxu0 %v1159
      %v1205 = vpop.f32.mrf.mxu0
      %v1206 = vadd.f32 0.0, %v1205
      %v1207 = vpop.f32.mrf.mxu0
      %v1208 = vadd.f32 0.0, %v1207
      %1209 = vdwg.mxu0
      %v1210 = vadd.f32 %v1061, %v1171
      %v1211 = vadd.f32 %v1062, %v1173
      %v1212 = vadd.f32 %v1063, %v1176
      %v1213 = vadd.f32 %v1064, %v1178
      %v1214 = vadd.f32 %v1065, %v1181
      %v1215 = vadd.f32 %v1066, %v1183
      %v1216 = vadd.f32 %v1067, %v1186
      %v1217 = vadd.f32 %v1068, %v1188
      %v1218 = vadd.f32 %v1069, %v1191
      %v1219 = vadd.f32 %v1070, %v1193
      %v1220 = vadd.f32 %v1071, %v1196
      %v1221 = vadd.f32 %v1072, %v1198
      %v1222 = vadd.f32 %v1073, %v1201
      %v1223 = vadd.f32 %v1074, %v1203
      %v1224 = vadd.f32 %v1075, %v1206
      %v1225 = vadd.f32 %v1076, %v1208
      %s1226 = sadd.s32 %s1078, 408
      %s1227 = scalar_lea.vmem %s211, %s1226
      %v1228 = vld [vmem:[%s1227] sm:$0xff]
      %v1229 = vld [vmem:[%s1227 + $0x8] sm:$0xff]
      %v1230 = vld [vmem:[%s1227 + $0x18] sm:$0xff]
      %v1231 = vld [vmem:[%s1227 + $0x20] sm:$0xff]
      %v1232 = vld [vmem:[%s1227 + $0x30] sm:$0xff]
      %v1233 = vld [vmem:[%s1227 + $0x38] sm:$0xff]
      %v1234 = vld [vmem:[%s1227 + $0x48] sm:$0xff]
      %v1235 = vld [vmem:[%s1227 + $0x50] sm:$0xff]
      %v1236 = vld [vmem:[%s1227 + $0x60] sm:$0xff]
      %v1237 = vld [vmem:[%s1227 + $0x68] sm:$0xff]
      %v1238 = vld [vmem:[%s1227 + $0x78] sm:$0xff]
      %v1239 = vld [vmem:[%s1227 + $0x80] sm:$0xff]
      %v1240 = vld [vmem:[%s1227 + $0x90] sm:$0xff]
      %v1241 = vld [vmem:[%s1227 + $0x98] sm:$0xff]
      %v1242 = vld [vmem:[%s1227 + $0xa8] sm:$0xff]
      %v1243 = vld [vmem:[%s1227 + $0xb0] sm:$0xff]
      %v1244 = vpack.c.bf16 %v1229, %v1228
      %v1245 = vpack.c.bf16 %v1231, %v1230
      %v1246 = vpack.c.bf16 %v1233, %v1232
      %v1247 = vpack.c.bf16 %v1235, %v1234
      %v1248 = vpack.c.bf16 %v1237, %v1236
      %v1249 = vpack.c.bf16 %v1239, %v1238
      %v1250 = vpack.c.bf16 %v1241, %v1240
      %v1251 = vpack.c.bf16 %v1243, %v1242
      %s1252 = scalar_lea.vmem %s1, 224
      %v1253 = vld [vmem:[%s1252] sm:$0xf]
      %v1254 = vld [vmem:[%s1252 + $0x4] sm:$0xf]
      %v1255 = vld [vmem:[%s1252 + $0x8] sm:$0xf]
      %v1256 = vld [vmem:[%s1252 + $0xc] sm:$0xf]
      %v1257 = vld [vmem:[%s1252 + $0x10] sm:$0xf]
      %v1258 = vld [vmem:[%s1252 + $0x14] sm:$0xf]
      %v1259 = vld [vmem:[%s1252 + $0x18] sm:$0xf]
      %v1260 = vld [vmem:[%s1252 + $0x1c] sm:$0xf]
      %v1269 = vunpack.c.l.b16 %v1253
      %v1270 = vunpack.c.l.b16 %v1254
      %v1271 = vunpack.c.l.b16 %v1255
      %v1272 = vunpack.c.l.b16 %v1256
      %v1273 = vunpack.c.l.b16 %v1257
      %v1274 = vunpack.c.l.b16 %v1258
      %v1275 = vunpack.c.l.b16 %v1259
      %v1276 = vunpack.c.l.b16 %v1260
      %v1277 = vpack.c.b16 %v1270, %v1269
      %v1278 = vpack.c.b16 %v1272, %v1271
      %v1279 = vpack.c.b16 %v1274, %v1273
      %v1280 = vpack.c.b16 %v1276, %v1275
      %v1286 = vsel %vm318, %v1244, 0
      %v1289 = vsel %vm318, %v1245, 0
      %v1292 = vsel %vm318, %v1246, 0
      %v1295 = vsel %vm318, %v1247, 0
      %v1298 = vsel %vm318, %v1248, 0
      %v1301 = vsel %vm318, %v1249, 0
      %v1304 = vsel %vm318, %v1250, 0
      %v1307 = vsel %vm318, %v1251, 0
      %1309 = vmatpush.bf16.msra.mxu0 0
      %1310 = vmatpush.bf16.msra.mxu0 0
      %1311 = vmatpush.bf16.msra.mxu0 0
      %1312 = vmatpush.bf16.msra.mxu0 0
      %1313 = vmatpush.bf16.msra.mxu0 %v1280
      %1314 = vmatpush.bf16.msra.mxu0 %v1279
      %1315 = vmatpush.bf16.msra.mxu0 %v1278
      %1316 = vmatpush.bf16.msra.mxu0 %v1277
      %1317 = vmatmul.bf16.gmra.mxu0 %v1286
      %v1318 = vpop.f32.mrf.mxu0
      %v1319 = vadd.f32 0.0, %v1318
      %v1320 = vpop.f32.mrf.mxu0
      %v1321 = vadd.f32 0.0, %v1320
      %1322 = vmatmul.bf16.gmra.mxu0 %v1289
      %v1323 = vpop.f32.mrf.mxu0
      %v1324 = vadd.f32 0.0, %v1323
      %v1325 = vpop.f32.mrf.mxu0
      %v1326 = vadd.f32 0.0, %v1325
      %1327 = vmatmul.bf16.gmra.mxu0 %v1292
      %v1328 = vpop.f32.mrf.mxu0
      %v1329 = vadd.f32 0.0, %v1328
      %v1330 = vpop.f32.mrf.mxu0
      %v1331 = vadd.f32 0.0, %v1330
      %1332 = vmatmul.bf16.gmra.mxu0 %v1295
      %v1333 = vpop.f32.mrf.mxu0
      %v1334 = vadd.f32 0.0, %v1333
      %v1335 = vpop.f32.mrf.mxu0
      %v1336 = vadd.f32 0.0, %v1335
      %1337 = vmatmul.bf16.gmra.mxu0 %v1298
      %v1338 = vpop.f32.mrf.mxu0
      %v1339 = vadd.f32 0.0, %v1338
      %v1340 = vpop.f32.mrf.mxu0
      %v1341 = vadd.f32 0.0, %v1340
      %1342 = vmatmul.bf16.gmra.mxu0 %v1301
      %v1343 = vpop.f32.mrf.mxu0
      %v1344 = vadd.f32 0.0, %v1343
      %v1345 = vpop.f32.mrf.mxu0
      %v1346 = vadd.f32 0.0, %v1345
      %1347 = vmatmul.bf16.gmra.mxu0 %v1304
      %v1348 = vpop.f32.mrf.mxu0
      %v1349 = vadd.f32 0.0, %v1348
      %v1350 = vpop.f32.mrf.mxu0
      %v1351 = vadd.f32 0.0, %v1350
      %1352 = vmatmul.bf16.gmra.mxu0 %v1307
      %v1353 = vpop.f32.mrf.mxu0
      %v1354 = vadd.f32 0.0, %v1353
      %v1355 = vpop.f32.mrf.mxu0
      %v1356 = vadd.f32 0.0, %v1355
      %1357 = vdwg.mxu0
      %v1358 = vadd.f32 %v1210, %v1319
      %v1359 = vadd.f32 %v1211, %v1321
      %v1360 = vadd.f32 %v1212, %v1324
      %v1361 = vadd.f32 %v1213, %v1326
      %v1362 = vadd.f32 %v1214, %v1329
      %v1363 = vadd.f32 %v1215, %v1331
      %v1364 = vadd.f32 %v1216, %v1334
      %v1365 = vadd.f32 %v1217, %v1336
      %v1366 = vadd.f32 %v1218, %v1339
      %v1367 = vadd.f32 %v1219, %v1341
      %v1368 = vadd.f32 %v1220, %v1344
      %v1369 = vadd.f32 %v1221, %v1346
      %v1370 = vadd.f32 %v1222, %v1349
      %v1371 = vadd.f32 %v1223, %v1351
      %v1372 = vadd.f32 %v1224, %v1354
      %v1373 = vadd.f32 %v1225, %v1356
      %v1374 = vld [vmem:[%s1079 + $0x1] sm:$0xff]
      %v1375 = vld [vmem:[%s1079 + $0x9] sm:$0xff]
      %v1376 = vld [vmem:[%s1079 + $0x19] sm:$0xff]
      %v1377 = vld [vmem:[%s1079 + $0x21] sm:$0xff]
      %v1378 = vld [vmem:[%s1079 + $0x31] sm:$0xff]
      %v1379 = vld [vmem:[%s1079 + $0x39] sm:$0xff]
      %v1380 = vld [vmem:[%s1079 + $0x49] sm:$0xff]
      %v1381 = vld [vmem:[%s1079 + $0x51] sm:$0xff]
      %v1382 = vld [vmem:[%s1079 + $0x61] sm:$0xff]
      %v1383 = vld [vmem:[%s1079 + $0x69] sm:$0xff]
      %v1384 = vld [vmem:[%s1079 + $0x79] sm:$0xff]
      %v1385 = vld [vmem:[%s1079 + $0x81] sm:$0xff]
      %v1386 = vld [vmem:[%s1079 + $0x91] sm:$0xff]
      %v1387 = vld [vmem:[%s1079 + $0x99] sm:$0xff]
      %v1388 = vld [vmem:[%s1079 + $0xa9] sm:$0xff]
      %v1389 = vld [vmem:[%s1079 + $0xb1] sm:$0xff]
      %v1390 = vpack.c.bf16 %v1375, %v1374
      %v1391 = vpack.c.bf16 %v1377, %v1376
      %v1392 = vpack.c.bf16 %v1379, %v1378
      %v1393 = vpack.c.bf16 %v1381, %v1380
      %v1394 = vpack.c.bf16 %v1383, %v1382
      %v1395 = vpack.c.bf16 %v1385, %v1384
      %v1396 = vpack.c.bf16 %v1387, %v1386
      %v1397 = vpack.c.bf16 %v1389, %v1388
      %s1398 = scalar_lea.vmem %s1, 256
      %v1399 = vld [vmem:[%s1398] sm:$0xf]
      %v1400 = vld [vmem:[%s1398 + $0x4] sm:$0xf]
      %v1401 = vld [vmem:[%s1398 + $0x8] sm:$0xf]
      %v1402 = vld [vmem:[%s1398 + $0xc] sm:$0xf]
      %v1403 = vld [vmem:[%s1398 + $0x10] sm:$0xf]
      %v1404 = vld [vmem:[%s1398 + $0x14] sm:$0xf]
      %v1405 = vld [vmem:[%s1398 + $0x18] sm:$0xf]
      %v1406 = vld [vmem:[%s1398 + $0x1c] sm:$0xf]
      %v1415 = vunpack.c.l.b16 %v1399
      %v1416 = vunpack.c.l.b16 %v1400
      %v1417 = vunpack.c.l.b16 %v1401
      %v1418 = vunpack.c.l.b16 %v1402
      %v1419 = vunpack.c.l.b16 %v1403
      %v1420 = vunpack.c.l.b16 %v1404
      %v1421 = vunpack.c.l.b16 %v1405
      %v1422 = vunpack.c.l.b16 %v1406
      %v1423 = vpack.c.b16 %v1416, %v1415
      %v1424 = vpack.c.b16 %v1418, %v1417
      %v1425 = vpack.c.b16 %v1420, %v1419
      %v1426 = vpack.c.b16 %v1422, %v1421
      %v1432 = vsel %vm318, %v1390, 0
      %v1435 = vsel %vm318, %v1391, 0
      %v1438 = vsel %vm318, %v1392, 0
      %v1441 = vsel %vm318, %v1393, 0
      %v1444 = vsel %vm318, %v1394, 0
      %v1447 = vsel %vm318, %v1395, 0
      %v1450 = vsel %vm318, %v1396, 0
      %v1453 = vsel %vm318, %v1397, 0
      %1455 = vmatpush.bf16.msra.mxu0 0
      %1456 = vmatpush.bf16.msra.mxu0 0
      %1457 = vmatpush.bf16.msra.mxu0 0
      %1458 = vmatpush.bf16.msra.mxu0 0
      %1459 = vmatpush.bf16.msra.mxu0 %v1426
      %1460 = vmatpush.bf16.msra.mxu0 %v1425
      %1461 = vmatpush.bf16.msra.mxu0 %v1424
      %1462 = vmatpush.bf16.msra.mxu0 %v1423
      %1463 = vmatmul.bf16.gmra.mxu0 %v1432
      %v1464 = vpop.f32.mrf.mxu0
      %v1465 = vadd.f32 0.0, %v1464
      %v1466 = vpop.f32.mrf.mxu0
      %v1467 = vadd.f32 0.0, %v1466
      %1468 = vmatmul.bf16.gmra.mxu0 %v1435
      %v1469 = vpop.f32.mrf.mxu0
      %v1470 = vadd.f32 0.0, %v1469
      %v1471 = vpop.f32.mrf.mxu0
      %v1472 = vadd.f32 0.0, %v1471
      %1473 = vmatmul.bf16.gmra.mxu0 %v1438
      %v1474 = vpop.f32.mrf.mxu0
      %v1475 = vadd.f32 0.0, %v1474
      %v1476 = vpop.f32.mrf.mxu0
      %v1477 = vadd.f32 0.0, %v1476
      %1478 = vmatmul.bf16.gmra.mxu0 %v1441
      %v1479 = vpop.f32.mrf.mxu0
      %v1480 = vadd.f32 0.0, %v1479
      %v1481 = vpop.f32.mrf.mxu0
      %v1482 = vadd.f32 0.0, %v1481
      %1483 = vmatmul.bf16.gmra.mxu0 %v1444
      %v1484 = vpop.f32.mrf.mxu0
      %v1485 = vadd.f32 0.0, %v1484
      %v1486 = vpop.f32.mrf.mxu0
      %v1487 = vadd.f32 0.0, %v1486
      %1488 = vmatmul.bf16.gmra.mxu0 %v1447
      %v1489 = vpop.f32.mrf.mxu0
      %v1490 = vadd.f32 0.0, %v1489
      %v1491 = vpop.f32.mrf.mxu0
      %v1492 = vadd.f32 0.0, %v1491
      %1493 = vmatmul.bf16.gmra.mxu0 %v1450
      %v1494 = vpop.f32.mrf.mxu0
      %v1495 = vadd.f32 0.0, %v1494
      %v1496 = vpop.f32.mrf.mxu0
      %v1497 = vadd.f32 0.0, %v1496
      %1498 = vmatmul.bf16.gmra.mxu0 %v1453
      %v1499 = vpop.f32.mrf.mxu0
      %v1500 = vadd.f32 0.0, %v1499
      %v1501 = vpop.f32.mrf.mxu0
      %v1502 = vadd.f32 0.0, %v1501
      %1503 = vdwg.mxu0
      %v1504 = vadd.f32 %v1358, %v1465
      %v1505 = vadd.f32 %v1359, %v1467
      %v1506 = vadd.f32 %v1360, %v1470
      %v1507 = vadd.f32 %v1361, %v1472
      %v1508 = vadd.f32 %v1362, %v1475
      %v1509 = vadd.f32 %v1363, %v1477
      %v1510 = vadd.f32 %v1364, %v1480
      %v1511 = vadd.f32 %v1365, %v1482
      %v1512 = vadd.f32 %v1366, %v1485
      %v1513 = vadd.f32 %v1367, %v1487
      %v1514 = vadd.f32 %v1368, %v1490
      %v1515 = vadd.f32 %v1369, %v1492
      %v1516 = vadd.f32 %v1370, %v1495
      %v1517 = vadd.f32 %v1371, %v1497
      %v1518 = vadd.f32 %v1372, %v1500
      %v1519 = vadd.f32 %v1373, %v1502
      %v1520 = vld [vmem:[%s2] sm:$0x1]
      %v1522 = vperm.slane %v1520, 0
      %v1524 = vmul.f32 %v1504, %v1522
      %v1525 = vmul.f32 %v1505, %v1522
      %v1526 = vmul.f32 %v1506, %v1522
      %v1527 = vmul.f32 %v1507, %v1522
      %v1528 = vmul.f32 %v1508, %v1522
      %v1529 = vmul.f32 %v1509, %v1522
      %v1530 = vmul.f32 %v1510, %v1522
      %v1531 = vmul.f32 %v1511, %v1522
      %v1532 = vmul.f32 %v1512, %v1522
      %v1533 = vmul.f32 %v1513, %v1522
      %v1534 = vmul.f32 %v1514, %v1522
      %v1535 = vmul.f32 %v1515, %v1522
      %v1536 = vmul.f32 %v1516, %v1522
      %v1537 = vmul.f32 %v1517, %v1522
      %v1538 = vmul.f32 %v1518, %v1522
      %v1539 = vmul.f32 %v1519, %v1522
      %v1540 = vld [vmem:[%s3] sm:$0x1]
      %v1542 = vperm.slane %v1540, 0
      %v1544 = vadd.f32 %v1524, %v1542
      %v1545 = vadd.f32 %v1525, %v1542
      %v1546 = vadd.f32 %v1526, %v1542
      %v1547 = vadd.f32 %v1527, %v1542
      %v1548 = vadd.f32 %v1528, %v1542
      %v1549 = vadd.f32 %v1529, %v1542
      %v1550 = vadd.f32 %v1530, %v1542
      %v1551 = vadd.f32 %v1531, %v1542
      %v1552 = vadd.f32 %v1532, %v1542
      %v1553 = vadd.f32 %v1533, %v1542
      %v1554 = vadd.f32 %v1534, %v1542
      %v1555 = vadd.f32 %v1535, %v1542
      %v1556 = vadd.f32 %v1536, %v1542
      %v1557 = vadd.f32 %v1537, %v1542
      %v1558 = vadd.f32 %v1538, %v1542
      %v1559 = vadd.f32 %v1539, %v1542
      %v1560 = vmax.f32 %v1544, 0.0
      %v1561 = vmax.f32 %v1545, 0.0
      %v1562 = vmax.f32 %v1546, 0.0
      %v1563 = vmax.f32 %v1547, 0.0
      %v1564 = vmax.f32 %v1548, 0.0
      %v1565 = vmax.f32 %v1549, 0.0
      %v1566 = vmax.f32 %v1550, 0.0
      %v1567 = vmax.f32 %v1551, 0.0
      %v1568 = vmax.f32 %v1552, 0.0
      %v1569 = vmax.f32 %v1553, 0.0
      %v1570 = vmax.f32 %v1554, 0.0
      %v1571 = vmax.f32 %v1555, 0.0
      %v1572 = vmax.f32 %v1556, 0.0
      %v1573 = vmax.f32 %v1557, 0.0
      %v1574 = vmax.f32 %v1558, 0.0
      %v1575 = vmax.f32 %v1559, 0.0
      %1576 = vst.msk [vmem:[%s221] sm:$0xff] %vm318, %v1560
      %1577 = vst.msk [vmem:[%s221 + $0x8] sm:$0xff] %vm318, %v1561
      %1578 = vst.msk [vmem:[%s221 + $0x10] sm:$0xff] %vm318, %v1562
      %1579 = vst.msk [vmem:[%s221 + $0x18] sm:$0xff] %vm318, %v1563
      %1580 = vst.msk [vmem:[%s221 + $0x20] sm:$0xff] %vm318, %v1564
      %1581 = vst.msk [vmem:[%s221 + $0x28] sm:$0xff] %vm318, %v1565
      %1582 = vst.msk [vmem:[%s221 + $0x30] sm:$0xff] %vm318, %v1566
      %1583 = vst.msk [vmem:[%s221 + $0x38] sm:$0xff] %vm318, %v1567
      %1584 = vst.msk [vmem:[%s221 + $0x40] sm:$0xff] %vm318, %v1568
      %1585 = vst.msk [vmem:[%s221 + $0x48] sm:$0xff] %vm318, %v1569
      %1586 = vst.msk [vmem:[%s221 + $0x50] sm:$0xff] %vm318, %v1570
      %1587 = vst.msk [vmem:[%s221 + $0x58] sm:$0xff] %vm318, %v1571
      %1588 = vst.msk [vmem:[%s221 + $0x60] sm:$0xff] %vm318, %v1572
      %1589 = vst.msk [vmem:[%s221 + $0x68] sm:$0xff] %vm318, %v1573
      %1590 = vst.msk [vmem:[%s221 + $0x70] sm:$0xff] %vm318, %v1574
      %1591 = vst.msk [vmem:[%s221 + $0x78] sm:$0xff] %vm318, %v1575
      %s1592 = smul.u32 8, %s20
      %p1593 = scmp.lt.s32.totalorder %s19, 1
      %s1594 = scalar_select %p1593, %s19, 1
      %p1595 = scmp.lt.s32.totalorder %s1592, 15
      %s1596 = scalar_select %p1595, %s1592, 15
      %s1597 = smul.addr %s1596, 2
      %s1598 = smul.addr %s1594, 32
      %s1599 = sadd.s32 %s1597, %s1598
      %s1600 = smul.addr %s1599, 8
      %s1601 = scalar_lea.vmem %s4, %s1600
      // Predicated region
      $region37: #{search_stage_forward.9} parent=35 // pred_check
        %p1602 = pneg %p136
      $region38: #{search_stage_forward.9} parent=35 // pred_check_branch
        %1604 = sbr.rel (%p1602) target = $region40
      $region39: #{search_stage_forward.9} parent=35 // pred_region
        %s1605 = smul.u32 8, %s20
      $region40: #{search_stage_forward.9} parent=35 // pred_fallthru
        _
    $region36: #{search_stage_forward.9} parent=5 // pred_fallthru
      _
    %p1606 = scmp.le.s32.totalorder 2, %s10
    // Predicated region
    $region41: #{search_stage_forward.9} parent=5 // pred_check
      %p1607 = pneg %p1606
    $region42: #{search_stage_forward.9} parent=5 // pred_check_branch
      %1609 = sbr.rel (%p1607) target = $region44
    $region43: #{search_stage_forward.9} parent=5 // pred_region
      %s1610 = ssub.s32 %s10, 2
      // Predicated region
      $region45: #{search_stage_forward.9} parent=43 // pred_check
        %p1611 = pneg %p142
      $region46: #{search_stage_forward.9} parent=43 // pred_check_branch
        %1613 = sbr.rel (%p1611) target = $region48
      $region47: #{search_stage_forward.9} parent=43 // pred_region
        %s1614 = smul.u32 8, %s22
        %p1615 = scmp.lt.s32.totalorder %s21, 1
        %s1616 = scalar_select %p1615, %s21, 1
        %p1617 = scmp.lt.s32.totalorder %s1614, 15
        %s1618 = scalar_select %p1617, %s1614, 15
        %s1619 = smul.addr %s1618, 2
        %s1620 = smul.addr %s1616, 32
        %s1621 = sadd.s32 %s1619, %s1620
        %s1622 = smul.addr %s1621, 8
        %s1623 = scalar_lea.vmem %s4, %s1622
      $region48: #{search_stage_forward.9} parent=43 // pred_fallthru
        _
    $region44: #{search_stage_forward.9} parent=5 // pred_fallthru
      _
  $region6: #{search_stage_forward.9} parent=0 // loop_footer
    %s14 = sadd.s32 1, %s10
  $region7: #{search_stage_forward.9} parent=0 // loop_footer_branch
    %9 = sbr.rel target = $region3
  $region8: #{search_stage_forward.9} parent=0 // loop_exit
    _

// kernel: search_stage_forward.12
$region0: #{search_stage_forward.12}
  #allocation0 [shape = 'u32[]', space=smem, size = 0x4, offset = 0x4, fixed_abs, tag = 'smem constant byte address 0x4 - core index']
  #allocation1 [shape = 'u32[72,128]{1,0:T(1,128)}', space=vmem, size = 0x9000, scoped, tag = 'internal scratch']
  %s0 = inlined_call_operand.vmem [shape: f32[2,3], index: 0, kind: input, shape index: {}]
  %s1 = inlined_call_operand.vmem [shape: f32[2], index: 1, kind: input, shape index: {}]
  %s2 = inlined_call_operand.vmem [shape: f32[128,128], index: 2, kind: input, shape index: {}]
  %s3 = inlined_call_operand.vmem [shape: f32[128,256], index: 3, kind: output, shape index: {}]
  %s4 = sld [smem:[#allocation0]]
  $region30: #{search_stage_forward.12} parent=0
    _
  %s6 = ssub.s32 1, %s4
  %s7 = scalar_select 0, %s6, %s4
  $region1: #{search_stage_forward.12} parent=0
    #allocation2 [shape = 'u8[1024]{0}', space=smem, size = 0x400, scoped, tag = 'input window, operand 0, single buffered']
    #allocation3 [shape = 's32[1]{0}', space=sflag, size = 0x4, scoped, tag = 'scoped memory for search_stage_forward.12']
    #allocation4 [shape = 'u8[512]{0}', space=smem, size = 0x200, scoped, tag = 'input window, operand 1, single buffered']
    #allocation5 [shape = 's32[1]{0}', space=sflag, size = 0x4, scoped, tag = 'scoped memory for search_stage_forward.12']
    %8 = vsyncpa [#allocation3], 0
    %9 = vsyncpa [#allocation5], 0
    // Predicated region
    $region2: #{search_stage_forward.12} parent=1 // pred_check
      _
    $region3: #{search_stage_forward.12} parent=1 // pred_check_branch
      %11 = sbr.rel (0) target = $region5
    $region4: #{search_stage_forward.12} parent=1 // pred_region
      %13 = vsyncadd [#allocation3], 0
      %s15 = sshll.u32 %s0, 4
      %s16 = int_to_ptr.vmem [resolvable:$true] %s15
      %18 = dma.vmem_to_smem %s16, 32, [#allocation2], [#allocation3]
    $region5: #{search_stage_forward.12} parent=1 // pred_fallthru
      _
    // Predicated region
    $region6: #{search_stage_forward.12} parent=1 // pred_check
      _
    $region7: #{search_stage_forward.12} parent=1 // pred_check_branch
      %20 = sbr.rel (0) target = $region9
    $region8: #{search_stage_forward.12} parent=1 // pred_region
      %22 = vsyncadd [#allocation5], 0
      %s24 = sshll.u32 %s1, 4
      %s25 = int_to_ptr.vmem [resolvable:$true] %s24
      %27 = dma.vmem_to_smem %s25, 16, [#allocation4], [#allocation5]
    $region9: #{search_stage_forward.12} parent=1 // pred_fallthru
      _
    // Predicated region
    $region10: #{search_stage_forward.12} parent=1 // pred_check
      _
    $region11: #{search_stage_forward.12} parent=1 // pred_check_branch
      %29 = sbr.rel (0) target = $region13
    $region12: #{search_stage_forward.12} parent=1 // pred_region
      _
    $region13: #{search_stage_forward.12} parent=1 // pred_fallthru
      _
    // Predicated region
    $region14: #{search_stage_forward.12} parent=1 // pred_check
      _
    $region15: #{search_stage_forward.12} parent=1 // pred_check_branch
      %31 = sbr.rel (0) target = $region17
    $region16: #{search_stage_forward.12} parent=1 // pred_region
      %33 = dma.done [#allocation3], 32
    $region17: #{search_stage_forward.12} parent=1 // pred_fallthru
      _
    // Predicated region
    $region18: #{search_stage_forward.12} parent=1 // pred_check
      _
    $region19: #{search_stage_forward.12} parent=1 // pred_check_branch
      %35 = sbr.rel (0) target = $region21
    $region20: #{search_stage_forward.12} parent=1 // pred_region
      %37 = dma.done [#allocation5], 16
    $region21: #{search_stage_forward.12} parent=1 // pred_fallthru
      _
    %38 = sfence
    %v39 = vld [vmem:[%s2] sm:$0xff]
    %v40 = vld [vmem:[%s2 + $0x8] sm:$0xff]
    %v41 = vld [vmem:[%s2 + $0x10] sm:$0xff]
    %v42 = vld [vmem:[%s2 + $0x18] sm:$0xff]
    %v43 = vld [vmem:[%s2 + $0x20] sm:$0xff]
    %v44 = vld [vmem:[%s2 + $0x28] sm:$0xff]
    %v45 = vld [vmem:[%s2 + $0x30] sm:$0xff]
    %v46 = vld [vmem:[%s2 + $0x38] sm:$0xff]
    %v47 = vld [vmem:[%s2 + $0x40] sm:$0xff]
    %v48 = vld [vmem:[%s2 + $0x48] sm:$0xff]
    %v49 = vld [vmem:[%s2 + $0x50] sm:$0xff]
    %v50 = vld [vmem:[%s2 + $0x58] sm:$0xff]
    %v51 = vld [vmem:[%s2 + $0x60] sm:$0xff]
    %v52 = vld [vmem:[%s2 + $0x68] sm:$0xff]
    %v53 = vld [vmem:[%s2 + $0x70] sm:$0xff]
    %v54 = vld [vmem:[%s2 + $0x78] sm:$0xff]
    %s55 = sld [smem:[#allocation2]]
    %v56 = vstv %s55
    %v57 = vmul.f32 %v56, %v39
    %v58 = vmul.f32 %v56, %v40
    %v59 = vmul.f32 %v56, %v41
    %v60 = vmul.f32 %v56, %v42
    %v61 = vmul.f32 %v56, %v43
    %v62 = vmul.f32 %v56, %v44
    %v63 = vmul.f32 %v56, %v45
    %v64 = vmul.f32 %v56, %v46
    %v65 = vmul.f32 %v56, %v47
    %v66 = vmul.f32 %v56, %v48
    %v67 = vmul.f32 %v56, %v49
    %v68 = vmul.f32 %v56, %v50
    %v69 = vmul.f32 %v56, %v51
    %v70 = vmul.f32 %v56, %v52
    %v71 = vmul.f32 %v56, %v53
    %v72 = vmul.f32 %v56, %v54
    %s73 = sld [smem:[#allocation2 + $0x1]]
    %v74 = vstv %s73
    %v75 = vmul.f32 %v74, %v39
    %v76 = vmul.f32 %v74, %v40
    %v77 = vmul.f32 %v74, %v41
    %v78 = vmul.f32 %v74, %v42
    %v79 = vmul.f32 %v74, %v43
    %v80 = vmul.f32 %v74, %v44
    %v81 = vmul.f32 %v74, %v45
    %v82 = vmul.f32 %v74, %v46
    %v83 = vmul.f32 %v74, %v47
    %v84 = vmul.f32 %v74, %v48
    %v85 = vmul.f32 %v74, %v49
    %v86 = vmul.f32 %v74, %v50
    %v87 = vmul.f32 %v74, %v51
    %v88 = vmul.f32 %v74, %v52
    %v89 = vmul.f32 %v74, %v53
    %v90 = vmul.f32 %v74, %v54
    %v91 = vadd.f32 %v57, %v75
    %v92 = vadd.f32 %v58, %v76
    %v93 = vadd.f32 %v59, %v77
    %v94 = vadd.f32 %v60, %v78
    %v95 = vadd.f32 %v61, %v79
    %v96 = vadd.f32 %v62, %v80
    %v97 = vadd.f32 %v63, %v81
    %v98 = vadd.f32 %v64, %v82
    %v99 = vadd.f32 %v65, %v83
    %v100 = vadd.f32 %v66, %v84
    %v101 = vadd.f32 %v67, %v85
    %v102 = vadd.f32 %v68, %v86
    %v103 = vadd.f32 %v69, %v87
    %v104 = vadd.f32 %v70, %v88
    %v105 = vadd.f32 %v71, %v89
    %v106 = vadd.f32 %v72, %v90
    %s107 = sld [smem:[#allocation2 + $0x80]]
    %v108 = vstv %s107
    %v109 = vmul.f32 %v108, %v39
    %v110 = vmul.f32 %v108, %v40
    %v111 = vmul.f32 %v108, %v41
    %v112 = vmul.f32 %v108, %v42
    %v113 = vmul.f32 %v108, %v43
    %v114 = vmul.f32 %v108, %v44
    %v115 = vmul.f32 %v108, %v45
    %v116 = vmul.f32 %v108, %v46
    %v117 = vmul.f32 %v108, %v47
    %v118 = vmul.f32 %v108, %v48
    %v119 = vmul.f32 %v108, %v49
    %v120 = vmul.f32 %v108, %v50
    %v121 = vmul.f32 %v108, %v51
    %v122 = vmul.f32 %v108, %v52
    %v123 = vmul.f32 %v108, %v53
    %v124 = vmul.f32 %v108, %v54
    %s125 = sld [smem:[#allocation2 + $0x81]]
    %v126 = vstv %s125
    %v127 = vmul.f32 %v126, %v39
    %v128 = vmul.f32 %v126, %v40
    %v129 = vmul.f32 %v126, %v41
    %v130 = vmul.f32 %v126, %v42
    %v131 = vmul.f32 %v126, %v43
    %v132 = vmul.f32 %v126, %v44
    %v133 = vmul.f32 %v126, %v45
    %v134 = vmul.f32 %v126, %v46
    %v135 = vmul.f32 %v126, %v47
    %v136 = vmul.f32 %v126, %v48
    %v137 = vmul.f32 %v126, %v49
    %v138 = vmul.f32 %v126, %v50
    %v139 = vmul.f32 %v126, %v51
    %v140 = vmul.f32 %v126, %v52
    %v141 = vmul.f32 %v126, %v53
    %v142 = vmul.f32 %v126, %v54
    %v143 = vadd.f32 %v109, %v127
    %v144 = vadd.f32 %v110, %v128
    %v145 = vadd.f32 %v111, %v129
    %v146 = vadd.f32 %v112, %v130
    %v147 = vadd.f32 %v113, %v131
    %v148 = vadd.f32 %v114, %v132
    %v149 = vadd.f32 %v115, %v133
    %v150 = vadd.f32 %v116, %v134
    %v151 = vadd.f32 %v117, %v135
    %v152 = vadd.f32 %v118, %v136
    %v153 = vadd.f32 %v119, %v137
    %v154 = vadd.f32 %v120, %v138
    %v155 = vadd.f32 %v121, %v139
    %v156 = vadd.f32 %v122, %v140
    %v157 = vadd.f32 %v123, %v141
    %v158 = vadd.f32 %v124, %v142
    %s159 = sld [smem:[#allocation2 + $0x82]]
    %v160 = vstv %s159
    %v161 = vmul.f32 %v160, %v91
    %v162 = vmul.f32 %v160, %v92
    %v163 = vmul.f32 %v160, %v93
    %v164 = vmul.f32 %v160, %v94
    %v165 = vmul.f32 %v160, %v95
    %v166 = vmul.f32 %v160, %v96
    %v167 = vmul.f32 %v160, %v97
    %v168 = vmul.f32 %v160, %v98
    %v169 = vmul.f32 %v160, %v99
    %v170 = vmul.f32 %v160, %v100
    %v171 = vmul.f32 %v160, %v101
    %v172 = vmul.f32 %v160, %v102
    %v173 = vmul.f32 %v160, %v103
    %v174 = vmul.f32 %v160, %v104
    %v175 = vmul.f32 %v160, %v105
    %v176 = vmul.f32 %v160, %v106
    %v177 = vadd.f32 %v143, %v161
    %v178 = vadd.f32 %v144, %v162
    %v179 = vadd.f32 %v145, %v163
    %v180 = vadd.f32 %v146, %v164
    %v181 = vadd.f32 %v147, %v165
    %v182 = vadd.f32 %v148, %v166
    %v183 = vadd.f32 %v149, %v167
    %v184 = vadd.f32 %v150, %v168
    %v185 = vadd.f32 %v151, %v169
    %v186 = vadd.f32 %v152, %v170
    %v187 = vadd.f32 %v153, %v171
    %v188 = vadd.f32 %v154, %v172
    %v189 = vadd.f32 %v155, %v173
    %v190 = vadd.f32 %v156, %v174
    %v191 = vadd.f32 %v157, %v175
    %v192 = vadd.f32 %v158, %v176
    %s193 = sld [smem:[#allocation4]]
    %v194 = vstv %s193
    %v195 = vmul.f32 %v194, %v91
    %v196 = vmul.f32 %v194, %v92
    %v197 = vmul.f32 %v194, %v93
    %v198 = vmul.f32 %v194, %v94
    %v199 = vmul.f32 %v194, %v95
    %v200 = vmul.f32 %v194, %v96
    %v201 = vmul.f32 %v194, %v97
    %v202 = vmul.f32 %v194, %v98
    %v203 = vmul.f32 %v194, %v99
    %v204 = vmul.f32 %v194, %v100
    %v205 = vmul.f32 %v194, %v101
    %v206 = vmul.f32 %v194, %v102
    %v207 = vmul.f32 %v194, %v103
    %v208 = vmul.f32 %v194, %v104
    %v209 = vmul.f32 %v194, %v105
    %v210 = vmul.f32 %v194, %v106
    %s211 = sld [smem:[#allocation4 + $0x1]]
    %v212 = vstv %s211
    %v213 = vmul.f32 %v212, %v177
    %v214 = vmul.f32 %v212, %v178
    %v215 = vmul.f32 %v212, %v179
    %v216 = vmul.f32 %v212, %v180
    %v217 = vmul.f32 %v212, %v181
    %v218 = vmul.f32 %v212, %v182
    %v219 = vmul.f32 %v212, %v183
    %v220 = vmul.f32 %v212, %v184
    %v221 = vmul.f32 %v212, %v185
    %v222 = vmul.f32 %v212, %v186
    %v223 = vmul.f32 %v212, %v187
    %v224 = vmul.f32 %v212, %v188
    %v225 = vmul.f32 %v212, %v189
    %v226 = vmul.f32 %v212, %v190
    %v227 = vmul.f32 %v212, %v191
    %v228 = vmul.f32 %v212, %v192
    %229 = vst [vmem:[%s3] sm:$0xff] %v195
    %230 = vst [vmem:[%s3 + $0x8] sm:$0xff] %v213
    %231 = vst [vmem:[%s3 + $0x10] sm:$0xff] %v196
    %232 = vst [vmem:[%s3 + $0x18] sm:$0xff] %v214
    %233 = vst [vmem:[%s3 + $0x20] sm:$0xff] %v197
    %234 = vst [vmem:[%s3 + $0x28] sm:$0xff] %v215
    %235 = vst [vmem:[%s3 + $0x30] sm:$0xff] %v198
    %236 = vst [vmem:[%s3 + $0x38] sm:$0xff] %v216
    %237 = vst [vmem:[%s3 + $0x40] sm:$0xff] %v199
    %238 = vst [vmem:[%s3 + $0x48] sm:$0xff] %v217
    %239 = vst [vmem:[%s3 + $0x50] sm:$0xff] %v200
    %240 = vst [vmem:[%s3 + $0x58] sm:$0xff] %v218
    %241 = vst [vmem:[%s3 + $0x60] sm:$0xff] %v201
    %242 = vst [vmem:[%s3 + $0x68] sm:$0xff] %v219
    %243 = vst [vmem:[%s3 + $0x70] sm:$0xff] %v202
    %244 = vst [vmem:[%s3 + $0x78] sm:$0xff] %v220
    %245 = vst [vmem:[%s3 + $0x80] sm:$0xff] %v203
    %246 = vst [vmem:[%s3 + $0x88] sm:$0xff] %v221
    %247 = vst [vmem:[%s3 + $0x90] sm:$0xff] %v204
    %248 = vst [vmem:[%s3 + $0x98] sm:$0xff] %v222
    %249 = vst [vmem:[%s3 + $0xa0] sm:$0xff] %v205
    %250 = vst [vmem:[%s3 + $0xa8] sm:$0xff] %v223
    %251 = vst [vmem:[%s3 + $0xb0] sm:$0xff] %v206
    %252 = vst [vmem:[%s3 + $0xb8] sm:$0xff] %v224
    %253 = vst [vmem:[%s3 + $0xc0] sm:$0xff] %v207
    %254 = vst [vmem:[%s3 + $0xc8] sm:$0xff] %v225
    %255 = vst [vmem:[%s3 + $0xd0] sm:$0xff] %v208
    %256 = vst [vmem:[%s3 + $0xd8] sm:$0xff] %v226
    %257 = vst [vmem:[%s3 + $0xe0] sm:$0xff] %v209
    %258 = vst [vmem:[%s3 + $0xe8] sm:$0xff] %v227
    %259 = vst [vmem:[%s3 + $0xf0] sm:$0xff] %v210
    %260 = vst [vmem:[%s3 + $0xf8] sm:$0xff] %v228
    // Predicated region
    $region22: #{search_stage_forward.12} parent=1 // pred_check
      _
    $region23: #{search_stage_forward.12} parent=1 // pred_check_branch
      %262 = sbr.rel (0) target = $region25
    $region24: #{search_stage_forward.12} parent=1 // pred_region
      _
    $region25: #{search_stage_forward.12} parent=1 // pred_fallthru
      _
    // Predicated region
    $region26: #{search_stage_forward.12} parent=1 // pred_check
      _
    $region27: #{search_stage_forward.12} parent=1 // pred_check_branch
      %264 = sbr.rel (0) target = $region29
    $region28: #{search_stage_forward.12} parent=1 // pred_region
      _
    $region29: #{search_stage_forward.12} parent=1 // pred_fallthru
      _
    %265 = vsyncpa [#allocation3], 1
    %266 = vsyncpa [#allocation5], 1

// kernel: search_stage_forward.13
$region0: #{search_stage_forward.13}
  #allocation0 [shape = 'u32[]', space=smem, size = 0x4, offset = 0x4, fixed_abs, tag = 'smem constant byte address 0x4 - core index']
  #allocation1 [shape = 'u32[72,128]{1,0:T(1,128)}', space=vmem, size = 0x9000, scoped, tag = 'internal scratch']
  #allocation2 [shape = 'f32[2,128]{1,0:T(2,128)}', space=vmem, size = 0x400, scoped, tag = 'scratch operand']
  %s0 = inlined_call_operand.vmem [shape: f32[2,64,256], index: 0, kind: input, shape index: {}]
  %s1 = inlined_call_operand.vmem [shape: bf16[256,128], index: 1, kind: input, shape index: {}]
  %s2 = inlined_call_operand.vmem [shape: f32[1,128], index: 2, kind: input, shape index: {}]
  %s3 = inlined_call_operand.hbm [shape: f32[2,128], index: 3, kind: output, shape index: {}]
  %s4 = sld [smem:[#allocation0]]
  $region76: #{search_stage_forward.13} parent=0
    _
  %s6 = ssub.s32 1, %s4
  %s7 = scalar_select 0, %s6, %s4
  $region1: #{search_stage_forward.13} parent=0
    #allocation3 [shape = 'u8[32768]{0}', space=vmem, size = 0x8000, scoped, tag = 'input window, operand 0']
    #allocation4 [shape = 'u8[1024]{0}', space=vmem, size = 0x400, scoped, tag = 'output window, operand 0, single buffered']
    #allocation5 [shape = 's32[2]{0}', space=sflag, size = 0x8, scoped, tag = 'scoped memory for search_stage_forward.13']
    %8 = vsyncpa [#allocation5], 0
    loop: start=0, step=1, limit=10
    $region2: #{search_stage_forward.13} parent=1 // loop_pre_header
      _
    $region3: #{search_stage_forward.13} parent=1 // loop_header
      %s10 = sphi 0, %s14
      %p11 = scmp.ge.s32.totalorder %s10, 10
      %s20 = sphi 0, %s22
      %s23 = sphi 0, %s20
      %s24 = sphi 0, %s23
      %s40 = sphi 0, %s24
      %s44 = sphi 0, %s44
      %s46 = sphi 0, %s44
      %s47 = sphi 0, %s46
      %s61 = sphi 0, %s47
      %s65 = sphi 0, %s65
      %s67 = sphi 0, %s65
      %s68 = sphi 0, %s67
      %s82 = sphi 0, %s68
      %s86 = sphi 0, %s86
      %s88 = sphi 0, %s86
      %s89 = sphi 0, %s88
      %s103 = sphi 0, %s89
    $region4: #{search_stage_forward.13} parent=1 // loop_header_branch
      %13 = sbr.rel (%p11) target = $region8
    $region5: #{search_stage_forward.13} parent=1 // loop_body
      %s15 = ssub.s32 %s10, 1
      %s16 = ssub.s32 %s10, 2
      %s17 = sadd.s32 %s10, 1
      %s18 = ssub.s32 %s10, %s17
      %p19 = scmp.eq.s32.totalorder %s18, 0
      %s21 = sadd.s32 %s20, 1
      %s22 = scalar_select %p19, %s20, %s21
      %p25 = pneg %p19
      %p26 = scmp.eq.s32.totalorder %s10, 7
      %p27 = por %p25, %p26
      %p28 = scmp.ne.s32.totalorder %s20, %s23
      %p29 = scmp.eq.s32.totalorder %s10, 0
      %p30 = por %p28, %p29
      %p31 = scmp.ne.s32.totalorder %s20, %s23
      %p32 = scmp.eq.s32.totalorder %s15, 7
      %p33 = por %p31, %p32
      %p34 = scmp.ne.s32.totalorder %s23, %s24
      %p35 = scmp.eq.s32.totalorder %s15, 0
      %p36 = por %p34, %p35
      %p37 = scmp.ne.s32.totalorder %s23, %s24
      %p38 = scmp.eq.s32.totalorder %s16, 7
      %p39 = por %p37, %p38
      %p41 = scmp.ne.s32.totalorder %s24, %s40
      %p42 = scmp.eq.s32.totalorder %s16, 0
      %p43 = por %p41, %p42
      %s45 = sadd.s32 %s44, 1
      %p48 = scmp.eq.s32.totalorder %s10, 7
      %p49 = scmp.ne.s32.totalorder %s44, %s46
      %p50 = scmp.eq.s32.totalorder %s10, 0
      %p51 = por %p49, %p50
      %p52 = scmp.ne.s32.totalorder %s44, %s46
      %p53 = scmp.eq.s32.totalorder %s15, 7
      %p54 = por %p52, %p53
      %p55 = scmp.ne.s32.totalorder %s46, %s47
      %p56 = scmp.eq.s32.totalorder %s15, 0
      %p57 = por %p55, %p56
      %p58 = scmp.ne.s32.totalorder %s46, %s47
      %p59 = scmp.eq.s32.totalorder %s16, 7
      %p60 = por %p58, %p59
      %p62 = scmp.ne.s32.totalorder %s47, %s61
      %p63 = scmp.eq.s32.totalorder %s16, 0
      %p64 = por %p62, %p63
      %s66 = sadd.s32 %s65, 1
      %p69 = scmp.eq.s32.totalorder %s10, 7
      %p70 = scmp.ne.s32.totalorder %s65, %s67
      %p71 = scmp.eq.s32.totalorder %s10, 0
      %p72 = por %p70, %p71
      %p73 = scmp.ne.s32.totalorder %s65, %s67
      %p74 = scmp.eq.s32.totalorder %s15, 7
      %p75 = por %p73, %p74
      %p76 = scmp.ne.s32.totalorder %s67, %s68
      %p77 = scmp.eq.s32.totalorder %s15, 0
      %p78 = por %p76, %p77
      %p79 = scmp.ne.s32.totalorder %s67, %s68
      %p80 = scmp.eq.s32.totalorder %s16, 7
      %p81 = por %p79, %p80
      %p83 = scmp.ne.s32.totalorder %s68, %s82
      %p84 = scmp.eq.s32.totalorder %s16, 0
      %p85 = por %p83, %p84
      %s87 = sadd.s32 %s86, 1
      %p90 = scmp.eq.s32.totalorder %s10, 7
      %p91 = scmp.ne.s32.totalorder %s86, %s88
      %p92 = scmp.eq.s32.totalorder %s10, 0
      %p93 = por %p91, %p92
      %p94 = scmp.ne.s32.totalorder %s86, %s88
      %p95 = scmp.eq.s32.totalorder %s15, 7
      %p96 = por %p94, %p95
      %p97 = scmp.ne.s32.totalorder %s88, %s89
      %p98 = scmp.eq.s32.totalorder %s15, 0
      %p99 = por %p97, %p98
      %p100 = scmp.ne.s32.totalorder %s88, %s89
      %p101 = scmp.eq.s32.totalorder %s16, 7
      %p102 = por %p100, %p101
      %p104 = scmp.ne.s32.totalorder %s89, %s103
      %p105 = scmp.eq.s32.totalorder %s16, 0
      %p106 = por %p104, %p105
      %p107 = scmp.le.s32.totalorder 1, %s10
      %p108 = scmp.lt.s32.totalorder %s10, 9
      %p109 = pnand %p107, %p108
      %p110 = pneg %p109
      // Predicated region
      $region9: #{search_stage_forward.13} parent=5 // pred_check
        _
      $region10: #{search_stage_forward.13} parent=5 // pred_check_branch
        %112 = sbr.rel (%p109) target = $region12
      $region11: #{search_stage_forward.13} parent=5 // pred_region
        %s113 = ssub.s32 %s10, 1
        // Predicated region
        $region13: #{search_stage_forward.13} parent=11 // pred_check
          %p114 = pneg %p57
        $region14: #{search_stage_forward.13} parent=11 // pred_check_branch
          %116 = sbr.rel (%p114) target = $region16
        $region15: #{search_stage_forward.13} parent=11 // pred_region
          _
        $region16: #{search_stage_forward.13} parent=11 // pred_fallthru
          _
        // Predicated region
        $region17: #{search_stage_forward.13} parent=11 // pred_check
          %p117 = pneg %p78
        $region18: #{search_stage_forward.13} parent=11 // pred_check_branch
          %119 = sbr.rel (%p117) target = $region20
        $region19: #{search_stage_forward.13} parent=11 // pred_region
          _
        $region20: #{search_stage_forward.13} parent=11 // pred_fallthru
          _
      $region12: #{search_stage_forward.13} parent=5 // pred_fallthru
        _
      %p120 = scmp.lt.s32.totalorder %s10, 8
      // Predicated region
      $region21: #{search_stage_forward.13} parent=5 // pred_check
        %p121 = pneg %p120
      $region22: #{search_stage_forward.13} parent=5 // pred_check_branch
        %123 = sbr.rel (%p121) target = $region24
      $region23: #{search_stage_forward.13} parent=5 // pred_region
        // Predicated region
        $region25: #{search_stage_forward.13} parent=23 // pred_check
          %p124 = pneg %p30
        $region26: #{search_stage_forward.13} parent=23 // pred_check_branch
          %126 = sbr.rel (%p124) target = $region28
        $region27: #{search_stage_forward.13} parent=23 // pred_region
          %s127 = sand.u32 %s20, 1
          %s128 = sand.u32 %s20, 1
          %s129 = smul.addr %s128, 32
          %s130 = scalar_lea.vmem [#allocation3], %s129
          %s131 = smul.addr %s10, 2
          %s132 = smul.addr %s131, 8
          %s133 = scalar_lea.vmem %s0, %s132
          // Predicated region
          $region29: #{search_stage_forward.13} parent=27 // pred_check
            _
          $region30: #{search_stage_forward.13} parent=27 // pred_check_branch
            %135 = sbr.rel (0) target = $region32
          $region31: #{search_stage_forward.13} parent=27 // pred_region
            // Predicated region
            $region33: #{search_stage_forward.13} parent=31 // pred_check
              _
            $region34: #{search_stage_forward.13} parent=31 // pred_check_branch
              %137 = sbr.rel (0) target = $region36
            $region35: #{search_stage_forward.13} parent=31 // pred_region
              loop: start=0, step=1, limit=1
              $region37: #{search_stage_forward.13} parent=35 // loop_pre_header
                _
              $region38: #{search_stage_forward.13} parent=35 // loop_header
                %s139 = sphi 0, %s143
                %p140 = scmp.ge.s32.totalorder %s139, 1
                %s144 = sphi %s133, %s133
                %s145 = sphi %s130, %s130
              $region39: #{search_stage_forward.13} parent=35 // loop_header_branch
                %142 = sbr.rel (%p140) target = $region43
              $region40: #{search_stage_forward.13} parent=35 // loop_body
                %v146 = vld [vmem:[%s144] sm:$0xff]
                %147 = vst [vmem:[%s145] sm:$0xff] %v146
                %v148 = vld [vmem:[%s144 + $0x8] sm:$0xff]
                %149 = vst [vmem:[%s145 + $0x8] sm:$0xff] %v148
                %v150 = vld [vmem:[%s144 + $0x80] sm:$0xff]
                %151 = vst [vmem:[%s145 + $0x10] sm:$0xff] %v150
                %v152 = vld [vmem:[%s144 + $0x88] sm:$0xff]
                %153 = vst [vmem:[%s145 + $0x18] sm:$0xff] %v152
              $region41: #{search_stage_forward.13} parent=35 // loop_footer
                %s143 = sadd.s32 1, %s139
              $region42: #{search_stage_forward.13} parent=35 // loop_footer_branch
                %138 = sbr.rel target = $region38
              $region43: #{search_stage_forward.13} parent=35 // loop_exit
                _
            $region36: #{search_stage_forward.13} parent=31 // pred_fallthru
              _
            // Predicated region
            $region44: #{search_stage_forward.13} parent=31 // pred_check
              _
            $region45: #{search_stage_forward.13} parent=31 // pred_check_branch
              %155 = sbr.rel target = $region47
            $region46: #{search_stage_forward.13} parent=31 // pred_region
              _
            $region47: #{search_stage_forward.13} parent=31 // pred_fallthru
              _
          $region32: #{search_stage_forward.13} parent=27 // pred_fallthru
            _
          %156 = vnop
        $region28: #{search_stage_forward.13} parent=23 // pred_fallthru
          _
      $region24: #{search_stage_forward.13} parent=5 // pred_fallthru
        _
      %p157 = scmp.le.s32.totalorder 1, %s10
      %p158 = scmp.lt.s32.totalorder %s10, 9
      %p159 = pnand %p157, %p158
      %p160 = pneg %p159
      // Predicated region
      $region48: #{search_stage_forward.13} parent=5 // pred_check
        _
      $region49: #{search_stage_forward.13} parent=5 // pred_check_branch
        %162 = sbr.rel (%p159) target = $region51
      $region50: #{search_stage_forward.13} parent=5 // pred_region
        %s163 = ssub.s32 %s10, 1
        %s164 = sand.u32 %s23, 1
        %s165 = sand.u32 %s23, 1
        %s166 = smul.addr %s165, 32
        %s167 = scalar_lea.vmem [#allocation3], %s166
        // Predicated region
        $region52: #{search_stage_forward.13} parent=50 // pred_check
          %p168 = pneg %p36
        $region53: #{search_stage_forward.13} parent=50 // pred_check_branch
          %170 = sbr.rel (%p168) target = $region55
        $region54: #{search_stage_forward.13} parent=50 // pred_region
          _
        $region55: #{search_stage_forward.13} parent=50 // pred_fallthru
          _
        %s171 = sand.u32 %s23, 1
        %s172 = sand.u32 %s23, 1
        %s173 = smul.addr %s172, 32
        %s174 = scalar_lea.vmem [#allocation3], %s173
        %p175 = pneg %p36
        %p176 = pneg %p33
        %p177 = pneg %p57
        %p178 = pneg %p54
        %p179 = pneg %p78
        %p180 = pneg %p75
        %p181 = pneg %p99
        %p182 = pneg %p96
        %p183 = scmp.eq.s32.totalorder %s15, 0
        // Predicated region
        $region56: #{search_stage_forward.13} parent=50 // pred_check
          %p184 = pneg %p183
        $region57: #{search_stage_forward.13} parent=50 // pred_check_branch
          %186 = sbr.rel (%p184) target = $region59
        $region58: #{search_stage_forward.13} parent=50 // pred_region
          %187 = vst [vmem:[#allocation2] sm:$0x3] 0.0
        $region59: #{search_stage_forward.13} parent=50 // pred_fallthru
          _
        %v188 = vld [vmem:[%s167] sm:$0xff]
        %v189 = vld [vmem:[%s167 + $0x8] sm:$0xff]
        %v190 = vld [vmem:[%s167 + $0x10] sm:$0xff]
        %v191 = vld [vmem:[%s167 + $0x18] sm:$0xff]
        %v192 = vrot.slane %v188, 4
        %v193 = vadd.f32 %v188, %v192
        %v194 = vrot.slane %v193, 2
        %v195 = vadd.f32 %v193, %v194
        %v196 = vrot.slane %v195, 1
        %v197 = vadd.f32 %v195, %v196
        %v198 = vrot.slane %v189, 4
        %v199 = vadd.f32 %v189, %v198
        %v200 = vrot.slane %v199, 2
        %v201 = vadd.f32 %v199, %v200
        %v202 = vrot.slane %v201, 1
        %v203 = vadd.f32 %v201, %v202
        %v204 = vrot.slane %v190, 4
        %v205 = vadd.f32 %v190, %v204
        %v206 = vrot.slane %v205, 2
        %v207 = vadd.f32 %v205, %v206
        %v208 = vrot.slane %v207, 1
        %v209 = vadd.f32 %v207, %v208
        %v210 = vrot.slane %v191, 4
        %v211 = vadd.f32 %v191, %v210
        %v212 = vrot.slane %v211, 2
        %v213 = vadd.f32 %v211, %v212
        %v214 = vrot.slane %v213, 1
        %v215 = vadd.f32 %v213, %v214
        %v216 = vld [vmem:[#allocation2] sm:$0x3]
        %v217 = vpack.c.bf16 %v197, %v197
        %v218 = vpack.c.bf16 %v203, %v203
        %v219 = vpack.c.bf16 %v209, %v209
        %v220 = vpack.c.bf16 %v215, %v215
        %v221 = vld [vmem:[%s1] sm:$0xf]
        %v222 = vld [vmem:[%s1 + $0x4] sm:$0xf]
        %v223 = vld [vmem:[%s1 + $0x8] sm:$0xf]
        %v224 = vld [vmem:[%s1 + $0xc] sm:$0xf]
        %v225 = vld [vmem:[%s1 + $0x10] sm:$0xf]
        %v226 = vld [vmem:[%s1 + $0x14] sm:$0xf]
        %v227 = vld [vmem:[%s1 + $0x18] sm:$0xf]
        %v228 = vld [vmem:[%s1 + $0x1c] sm:$0xf]
        %v229 = vld [vmem:[%s1 + $0x20] sm:$0xf]
        %v230 = vld [vmem:[%s1 + $0x24] sm:$0xf]
        %v231 = vld [vmem:[%s1 + $0x28] sm:$0xf]
        %v232 = vld [vmem:[%s1 + $0x2c] sm:$0xf]
        %v233 = vld [vmem:[%s1 + $0x30] sm:$0xf]
        %v234 = vld [vmem:[%s1 + $0x34] sm:$0xf]
        %v235 = vld [vmem:[%s1 + $0x38] sm:$0xf]
        %v236 = vld [vmem:[%s1 + $0x3c] sm:$0xf]
        %v237 = vld [vmem:[%s1 + $0x40] sm:$0xf]
        %v238 = vld [vmem:[%s1 + $0x44] sm:$0xf]
        %v239 = vld [vmem:[%s1 + $0x48] sm:$0xf]
        %v240 = vld [vmem:[%s1 + $0x4c] sm:$0xf]
        %v241 = vld [vmem:[%s1 + $0x50] sm:$0xf]
        %v242 = vld [vmem:[%s1 + $0x54] sm:$0xf]
        %v243 = vld [vmem:[%s1 + $0x58] sm:$0xf]
        %v244 = vld [vmem:[%s1 + $0x5c] sm:$0xf]
        %v245 = vld [vmem:[%s1 + $0x60] sm:$0xf]
        %v246 = vld [vmem:[%s1 + $0x64] sm:$0xf]
        %v247 = vld [vmem:[%s1 + $0x68] sm:$0xf]
        %v248 = vld [vmem:[%s1 + $0x6c] sm:$0xf]
        %v249 = vld [vmem:[%s1 + $0x70] sm:$0xf]
        %v250 = vld [vmem:[%s1 + $0x74] sm:$0xf]
        %v251 = vld [vmem:[%s1 + $0x78] sm:$0xf]
        %v252 = vld [vmem:[%s1 + $0x7c] sm:$0xf]
        %v257 = vunpack.c.l.b16 %v217
        %v258 = vunpack.c.l.b16 %v218
        %v259 = vunpack.c.l.b16 %v219
        %v260 = vunpack.c.l.b16 %v220
        %vm261 = vcmask 1041409
        %v262 = vsel %vm261, %v259, %v257
        %v263 = vsel %vm261, %v260, %v258
        %v264 = vpack.c.b16 %v262, %v262
        %v265 = vpack.c.b16 %v263, %v263
        %v300 = vunpack.c.l.b16 %v221
        %v301 = vunpack.c.l.b16 %v222
        %v302 = vunpack.c.l.b16 %v223
        %v303 = vunpack.c.l.b16 %v224
        %v304 = vunpack.c.l.b16 %v225
        %v305 = vunpack.c.l.b16 %v226
        %v306 = vunpack.c.l.b16 %v227
        %v307 = vunpack.c.l.b16 %v228
        %v308 = vunpack.c.l.b16 %v229
        %v309 = vunpack.c.l.b16 %v230
        %v310 = vunpack.c.l.b16 %v231
        %v311 = vunpack.c.l.b16 %v232
        %v312 = vunpack.c.l.b16 %v233
        %v313 = vunpack.c.l.b16 %v234
        %v314 = vunpack.c.l.b16 %v235
        %v315 = vunpack.c.l.b16 %v236
        %v316 = vunpack.c.l.b16 %v237
        %v317 = vunpack.c.l.b16 %v238
        %v318 = vunpack.c.l.b16 %v239
        %v319 = vunpack.c.l.b16 %v240
        %v320 = vunpack.c.l.b16 %v241
        %v321 = vunpack.c.l.b16 %v242
        %v322 = vunpack.c.l.b16 %v243
        %v323 = vunpack.c.l.b16 %v244
        %v324 = vunpack.c.l.b16 %v245
        %v325 = vunpack.c.l.b16 %v246
        %v326 = vunpack.c.l.b16 %v247
        %v327 = vunpack.c.l.b16 %v248
        %v328 = vunpack.c.l.b16 %v249
        %v329 = vunpack.c.l.b16 %v250
        %v330 = vunpack.c.l.b16 %v251
        %v331 = vunpack.c.l.b16 %v252
        %v332 = vpack.c.b16 %v301, %v300
        %v333 = vpack.c.b16 %v303, %v302
        %v334 = vpack.c.b16 %v305, %v304
        %v335 = vpack.c.b16 %v307, %v306
        %v336 = vpack.c.b16 %v309, %v308
        %v337 = vpack.c.b16 %v311, %v310
        %v338 = vpack.c.b16 %v313, %v312
        %v339 = vpack.c.b16 %v315, %v314
        %v340 = vpack.c.b16 %v317, %v316
        %v341 = vpack.c.b16 %v319, %v318
        %v342 = vpack.c.b16 %v321, %v320
        %v343 = vpack.c.b16 %v323, %v322
        %v344 = vpack.c.b16 %v325, %v324
        %v345 = vpack.c.b16 %v327, %v326
        %v346 = vpack.c.b16 %v329, %v328
        %v347 = vpack.c.b16 %v331, %v330
        %364 = vmatpush.bf16.msra.mxu0 %v339
        %365 = vmatpush.bf16.msra.mxu0 %v338
        %366 = vmatpush.bf16.msra.mxu0 %v337
        %367 = vmatpush.bf16.msra.mxu0 %v336
        %368 = vmatpush.bf16.msra.mxu0 %v335
        %369 = vmatpush.bf16.msra.mxu0 %v334
        %370 = vmatpush.bf16.msra.mxu0 %v333
        %371 = vmatpush.bf16.msra.mxu0 %v332
        %372 = vmatmul.bf16.gmra.mxu0 %v264
        %v373 = vpop.f32.mrf.mxu0
        %v374 = vadd.f32 0.0, %v373
        %v375 = vpop.f32.mrf.mxu0
        %376 = vdwg.mxu0
        %377 = vmatpush.bf16.msra.mxu0 %v347
        %378 = vmatpush.bf16.msra.mxu0 %v346
        %379 = vmatpush.bf16.msra.mxu0 %v345
        %380 = vmatpush.bf16.msra.mxu0 %v344
        %381 = vmatpush.bf16.msra.mxu0 %v343
        %382 = vmatpush.bf16.msra.mxu0 %v342
        %383 = vmatpush.bf16.msra.mxu0 %v341
        %384 = vmatpush.bf16.msra.mxu0 %v340
        %385 = vmatmul.bf16.gmra.mxu0 %v265
        %v386 = vpop.f32.mrf.mxu0
        %v387 = vadd.f32 %v374, %v386
        %v388 = vpop.f32.mrf.mxu0
        %389 = vdwg.mxu0
        %v390 = vadd.f32 %v216, %v387
        %391 = vst [vmem:[#allocation2] sm:$0x3] %v390
        %p392 = scmp.eq.s32.totalorder %s15, 7
        // Predicated region
        $region60: #{search_stage_forward.13} parent=50 // pred_check
          %p393 = pneg %p392
        $region61: #{search_stage_forward.13} parent=50 // pred_check_branch
          %395 = sbr.rel (%p393) target = $region63
        $region62: #{search_stage_forward.13} parent=50 // pred_region
          %v396 = vld [vmem:[#allocation2] sm:$0x3]
          %v397 = vmul.f32 %v396, 0.015625
          %v398 = vld [vmem:[%s2] sm:$0x1]
          %v400 = vperm.slane %v398, 0
          %v402 = vadd.f32 %v397, %v400
          %403 = vst [vmem:[#allocation4] sm:$0x3] %v402
        $region63: #{search_stage_forward.13} parent=50 // pred_fallthru
          _
        // Predicated region
        $region64: #{search_stage_forward.13} parent=50 // pred_check
          %p404 = pneg %p96
        $region65: #{search_stage_forward.13} parent=50 // pred_check_branch
          %406 = sbr.rel (%p404) target = $region67
        $region66: #{search_stage_forward.13} parent=50 // pred_region
          %408 = vsyncadd [#allocation5], 0
          %s410 = sshll.u32 [#allocation4], 4
          %s411 = int_to_ptr.vmem [resolvable:$true] %s410
          %s412 = sshll.u32 %s3, 4
          %s413 = int_to_ptr.hbm [resolvable:$true] %s412
          %415 = dma.vmem_to_hbm [thread:$0]  %s411, 32, %s413, [#allocation5]
        $region67: #{search_stage_forward.13} parent=50 // pred_fallthru
          _
        // Predicated region
        $region68: #{search_stage_forward.13} parent=50 // pred_check
          %p416 = pneg %p96
        $region69: #{search_stage_forward.13} parent=50 // pred_check_branch
          %418 = sbr.rel (%p416) target = $region71
        $region70: #{search_stage_forward.13} parent=50 // pred_region
          %420 = dma.done [#allocation5], 32
        $region71: #{search_stage_forward.13} parent=50 // pred_fallthru
          _
      $region51: #{search_stage_forward.13} parent=5 // pred_fallthru
        _
      %p421 = scmp.le.s32.totalorder 2, %s10
      // Predicated region
      $region72: #{search_stage_forward.13} parent=5 // pred_check
        %p422 = pneg %p421
      $region73: #{search_stage_forward.13} parent=5 // pred_check_branch
        %424 = sbr.rel (%p422) target = $region75
      $region74: #{search_stage_forward.13} parent=5 // pred_region
        %s425 = ssub.s32 %s10, 2
      $region75: #{search_stage_forward.13} parent=5 // pred_fallthru
        _
    $region6: #{search_stage_forward.13} parent=1 // loop_footer
      %s14 = sadd.s32 1, %s10
    $region7: #{search_stage_forward.13} parent=1 // loop_footer_branch
      %9 = sbr.rel target = $region3
    $region8: #{search_stage_forward.13} parent=1 // loop_exit
      _
    %426 = vsyncpa [#allocation5], 1
    %s427 = scalar_lea.sflag [#allocation5], 1
    %428 = vsyncpa %s427, 1

// kernel: search_stage_forward.11
$region0: #{search_stage_forward.11}
  #allocation0 [shape = 'u32[]', space=smem, size = 0x4, offset = 0x4, fixed_abs, tag = 'smem constant byte address 0x4 - core index']
  #allocation1 [shape = 'u32[72,128]{1,0:T(1,128)}', space=vmem, size = 0x9000, scoped, tag = 'internal scratch']
  %s0 = inlined_call_operand.vmem [shape: f32[2,4,9,9,128], index: 0, kind: input, shape index: {}]
  %s1 = inlined_call_operand.vmem [shape: bf16[9,128,128], index: 1, kind: input, shape index: {}]
  %s2 = inlined_call_operand.vmem [shape: f32[1,128], index: 2, kind: input, shape index: {}]
  %s3 = inlined_call_operand.vmem [shape: f32[1,128], index: 3, kind: input, shape index: {}]
  %s4 = inlined_call_operand.vmem [shape: f32[2,8,8,128], index: 4, kind: output, shape index: {}]
  %s5 = sld [smem:[#allocation0]]
  $region49: #{search_stage_forward.11} parent=0
    _
  %s7 = ssub.s32 1, %s5
  %s8 = scalar_select 0, %s7, %s5
  loop: start=0, step=1, limit=4
  $region2: #{search_stage_forward.11} parent=0 // loop_pre_header
    _
  $region3: #{search_stage_forward.11} parent=0 // loop_header
    %s10 = sphi 0, %s14
    %p11 = scmp.ge.s32.totalorder %s10, 4
    %s17 = sphi 0, %s29
    %s18 = sphi 0, %s25
    %s19 = sphi 0, %s17
    %s20 = sphi 0, %s18
    %s21 = sphi 0, %s19
    %s22 = sphi 0, %s20
    %s32 = sphi 0, %s34
    %s35 = sphi 0, %s32
    %s36 = sphi 0, %s35
    %s52 = sphi 0, %s36
    %s56 = sphi 0, %s56
    %s58 = sphi 0, %s56
    %s59 = sphi 0, %s58
    %s73 = sphi 0, %s59
    %s77 = sphi 0, %s77
    %s79 = sphi 0, %s77
    %s80 = sphi 0, %s79
    %s94 = sphi 0, %s80
    %s98 = sphi 0, %s98
    %s100 = sphi 0, %s98
    %s101 = sphi 0, %s100
    %s115 = sphi 0, %s101
    %s123 = sphi 0, %s125
    %s126 = sphi 0, %s123
    %s127 = sphi 0, %s126
    %s143 = sphi 0, %s127
  $region4: #{search_stage_forward.11} parent=0 // loop_header_branch
    %13 = sbr.rel (%p11) target = $region8
  $region5: #{search_stage_forward.11} parent=0 // loop_body
    %s15 = ssub.s32 %s10, 1
    %s16 = ssub.s32 %s10, 2
    %s23 = sadd.s32 1, %s18
    %p24 = scmp.ge.s32.totalorder %s23, 1
    %s25 = scalar_select %p24, 0, %s23
    %s26 = sadd.s32 1, %s17
    %s27 = scalar_select %p24, %s26, %s17
    %p28 = scmp.ge.s32.totalorder %s27, 2
    %s29 = scalar_select %p28, 0, %s27
    %s30 = ssub.s32 %s17, %s29
    %p31 = scmp.eq.s32.totalorder %s30, 0
    %s33 = sadd.s32 %s32, 1
    %s34 = scalar_select %p31, %s32, %s33
    %p37 = pneg %p31
    %p38 = scmp.eq.s32.totalorder %s10, 1
    %p39 = por %p37, %p38
    %p40 = scmp.ne.s32.totalorder %s32, %s35
    %p41 = scmp.eq.s32.totalorder %s10, 0
    %p42 = por %p40, %p41
    %p43 = scmp.ne.s32.totalorder %s32, %s35
    %p44 = scmp.eq.s32.totalorder %s15, 1
    %p45 = por %p43, %p44
    %p46 = scmp.ne.s32.totalorder %s35, %s36
    %p47 = scmp.eq.s32.totalorder %s15, 0
    %p48 = por %p46, %p47
    %p49 = scmp.ne.s32.totalorder %s35, %s36
    %p50 = scmp.eq.s32.totalorder %s16, 1
    %p51 = por %p49, %p50
    %p53 = scmp.ne.s32.totalorder %s36, %s52
    %p54 = scmp.eq.s32.totalorder %s16, 0
    %p55 = por %p53, %p54
    %s57 = sadd.s32 %s56, 1
    %p60 = scmp.eq.s32.totalorder %s10, 1
    %p61 = scmp.ne.s32.totalorder %s56, %s58
    %p62 = scmp.eq.s32.totalorder %s10, 0
    %p63 = por %p61, %p62
    %p64 = scmp.ne.s32.totalorder %s56, %s58
    %p65 = scmp.eq.s32.totalorder %s15, 1
    %p66 = por %p64, %p65
    %p67 = scmp.ne.s32.totalorder %s58, %s59
    %p68 = scmp.eq.s32.totalorder %s15, 0
    %p69 = por %p67, %p68
    %p70 = scmp.ne.s32.totalorder %s58, %s59
    %p71 = scmp.eq.s32.totalorder %s16, 1
    %p72 = por %p70, %p71
    %p74 = scmp.ne.s32.totalorder %s59, %s73
    %p75 = scmp.eq.s32.totalorder %s16, 0
    %p76 = por %p74, %p75
    %s78 = sadd.s32 %s77, 1
    %p81 = scmp.eq.s32.totalorder %s10, 1
    %p82 = scmp.ne.s32.totalorder %s77, %s79
    %p83 = scmp.eq.s32.totalorder %s10, 0
    %p84 = por %p82, %p83
    %p85 = scmp.ne.s32.totalorder %s77, %s79
    %p86 = scmp.eq.s32.totalorder %s15, 1
    %p87 = por %p85, %p86
    %p88 = scmp.ne.s32.totalorder %s79, %s80
    %p89 = scmp.eq.s32.totalorder %s15, 0
    %p90 = por %p88, %p89
    %p91 = scmp.ne.s32.totalorder %s79, %s80
    %p92 = scmp.eq.s32.totalorder %s16, 1
    %p93 = por %p91, %p92
    %p95 = scmp.ne.s32.totalorder %s80, %s94
    %p96 = scmp.eq.s32.totalorder %s16, 0
    %p97 = por %p95, %p96
    %s99 = sadd.s32 %s98, 1
    %p102 = scmp.eq.s32.totalorder %s10, 1
    %p103 = scmp.ne.s32.totalorder %s98, %s100
    %p104 = scmp.eq.s32.totalorder %s10, 0
    %p105 = por %p103, %p104
    %p106 = scmp.ne.s32.totalorder %s98, %s100
    %p107 = scmp.eq.s32.totalorder %s15, 1
    %p108 = por %p106, %p107
    %p109 = scmp.ne.s32.totalorder %s100, %s101
    %p110 = scmp.eq.s32.totalorder %s15, 0
    %p111 = por %p109, %p110
    %p112 = scmp.ne.s32.totalorder %s100, %s101
    %p113 = scmp.eq.s32.totalorder %s16, 1
    %p114 = por %p112, %p113
    %p116 = scmp.ne.s32.totalorder %s101, %s115
    %p117 = scmp.eq.s32.totalorder %s16, 0
    %p118 = por %p116, %p117
    %s119 = ssub.s32 %s17, %s29
    %s120 = ssub.s32 %s18, %s25
    %s121 = sor.u32 %s119, %s120
    %p122 = scmp.eq.s32.totalorder %s121, 0
    %s124 = sadd.s32 %s123, 1
    %s125 = scalar_select %p122, %s123, %s124
    %p128 = pneg %p122
    %p129 = scmp.eq.s32.totalorder %s10, 1
    %p130 = por %p128, %p129
    %p131 = scmp.ne.s32.totalorder %s123, %s126
    %p132 = scmp.eq.s32.totalorder %s10, 0
    %p133 = por %p131, %p132
    %p134 = scmp.ne.s32.totalorder %s123, %s126
    %p135 = scmp.eq.s32.totalorder %s15, 1
    %p136 = por %p134, %p135
    %p137 = scmp.ne.s32.totalorder %s126, %s127
    %p138 = scmp.eq.s32.totalorder %s15, 0
    %p139 = por %p137, %p138
    %p140 = scmp.ne.s32.totalorder %s126, %s127
    %p141 = scmp.eq.s32.totalorder %s16, 1
    %p142 = por %p140, %p141
    %p144 = scmp.ne.s32.totalorder %s127, %s143
    %p145 = scmp.eq.s32.totalorder %s16, 0
    %p146 = por %p144, %p145
    %p147 = scmp.le.s32.totalorder 1, %s10
    %p148 = scmp.lt.s32.totalorder %s10, 3
    %p149 = pnand %p147, %p148
    %p150 = pneg %p149
    // Predicated region
    $region9: #{search_stage_forward.11} parent=5 // pred_check
      _
    $region10: #{search_stage_forward.11} parent=5 // pred_check_branch
      %152 = sbr.rel (%p149) target = $region12
    $region11: #{search_stage_forward.11} parent=5 // pred_region
      %s153 = ssub.s32 %s10, 1
      // Predicated region
      $region13: #{search_stage_forward.11} parent=11 // pred_check
        %p154 = pneg %p69
      $region14: #{search_stage_forward.11} parent=11 // pred_check_branch
        %156 = sbr.rel (%p154) target = $region16
      $region15: #{search_stage_forward.11} parent=11 // pred_region
        _
      $region16: #{search_stage_forward.11} parent=11 // pred_fallthru
        _
      // Predicated region
      $region17: #{search_stage_forward.11} parent=11 // pred_check
        %p157 = pneg %p90
      $region18: #{search_stage_forward.11} parent=11 // pred_check_branch
        %159 = sbr.rel (%p157) target = $region20
      $region19: #{search_stage_forward.11} parent=11 // pred_region
        _
      $region20: #{search_stage_forward.11} parent=11 // pred_fallthru
        _
      // Predicated region
      $region21: #{search_stage_forward.11} parent=11 // pred_check
        %p160 = pneg %p111
      $region22: #{search_stage_forward.11} parent=11 // pred_check_branch
        %162 = sbr.rel (%p160) target = $region24
      $region23: #{search_stage_forward.11} parent=11 // pred_region
        _
      $region24: #{search_stage_forward.11} parent=11 // pred_fallthru
        _
    $region12: #{search_stage_forward.11} parent=5 // pred_fallthru
      _
    %p163 = scmp.lt.s32.totalorder %s10, 2
    // Predicated region
    $region25: #{search_stage_forward.11} parent=5 // pred_check
      %p164 = pneg %p163
    $region26: #{search_stage_forward.11} parent=5 // pred_check_branch
      %166 = sbr.rel (%p164) target = $region28
    $region27: #{search_stage_forward.11} parent=5 // pred_region
      // Predicated region
      $region29: #{search_stage_forward.11} parent=27 // pred_check
        %p167 = pneg %p42
      $region30: #{search_stage_forward.11} parent=27 // pred_check_branch
        %169 = sbr.rel (%p167) target = $region32
      $region31: #{search_stage_forward.11} parent=27 // pred_region
        %p170 = scmp.lt.s32.totalorder %s17, 1
        %s171 = scalar_select %p170, %s17, 1
        %s172 = smul.addr %s171, 72
        %s173 = smul.addr %s172, 8
        %s174 = scalar_lea.vmem %s0, %s173
      $region32: #{search_stage_forward.11} parent=27 // pred_fallthru
        _
    $region28: #{search_stage_forward.11} parent=5 // pred_fallthru
      _
    %p175 = scmp.le.s32.totalorder 1, %s10
    %p176 = scmp.lt.s32.totalorder %s10, 3
    %p177 = pnand %p175, %p176
    %p178 = pneg %p177
    // Predicated region
    $region33: #{search_stage_forward.11} parent=5 // pred_check
      _
    $region34: #{search_stage_forward.11} parent=5 // pred_check_branch
      %180 = sbr.rel (%p177) target = $region36
    $region35: #{search_stage_forward.11} parent=5 // pred_region
      %s181 = ssub.s32 %s10, 1
      %p182 = scmp.lt.s32.totalorder %s19, 1
      %s183 = scalar_select %p182, %s19, 1
      %s184 = smul.addr %s183, 72
      %s185 = smul.addr %s184, 8
      %s186 = scalar_lea.vmem %s0, %s185
      %p187 = pneg %p48
      %p188 = pneg %p45
      %p189 = pneg %p69
      %p190 = pneg %p66
      %p191 = pneg %p90
      %p192 = pneg %p87
      %p193 = pneg %p111
      %p194 = pneg %p108
      %p195 = pneg %p139
      %p196 = pneg %p136
      %s197 = smul.u32 8, %s20
      %p198 = scmp.lt.s32.totalorder %s19, 1
      %s199 = scalar_select %p198, %s19, 1
      %p200 = scmp.lt.s32.totalorder %s197, 7
      %s201 = scalar_select %p200, %s197, 7
      %s202 = smul.addr %s199, 8
      %s203 = sadd.s32 %s201, %s202
      %s204 = smul.addr %s203, 8
      %s205 = scalar_lea.vmem %s4, %s204
      %p206 = scmp.lt.s32.totalorder %s19, 1
      %s207 = scalar_select %p206, %s19, 1
      %s208 = smul.addr %s207, 72
      %s209 = smul.addr %s208, 8
      %s210 = scalar_lea.vmem %s0, %s209
      %s211 = smul.u32 8, %s20
      %p212 = scmp.lt.s32.totalorder %s19, 1
      %s213 = scalar_select %p212, %s19, 1
      %p214 = scmp.lt.s32.totalorder %s211, 7
      %s215 = scalar_select %p214, %s211, 7
      %s216 = smul.addr %s213, 8
      %s217 = sadd.s32 %s215, %s216
      %s218 = smul.addr %s217, 8
      %s219 = scalar_lea.vmem %s4, %s218
      %s220 = smul.u32 8, %s20
      %s221 = smul.u32 %s20, 8
      %s222 = smul.u32 %s221, 16
      %s223 = scalar_lea.vmem %s210, %s222
      %v224 = vld [vmem:[%s223] sm:$0xff]
      %v225 = vld [vmem:[%s223 + $0x10] sm:$0xff]
      %v226 = vld [vmem:[%s223 + $0x20] sm:$0xff]
      %v227 = vld [vmem:[%s223 + $0x30] sm:$0xff]
      %v228 = vld [vmem:[%s223 + $0x40] sm:$0xff]
      %v229 = vld [vmem:[%s223 + $0x50] sm:$0xff]
      %v230 = vld [vmem:[%s223 + $0x60] sm:$0xff]
      %v231 = vld [vmem:[%s223 + $0x70] sm:$0xff]
      %v232 = vpack.c.bf16 %v225, %v224
      %v233 = vpack.c.bf16 %v227, %v226
      %v234 = vpack.c.bf16 %v229, %v228
      %v235 = vpack.c.bf16 %v231, %v230
      %v236 = vld [vmem:[%s1] sm:$0xf]
      %v237 = vld [vmem:[%s1 + $0x4] sm:$0xf]
      %v238 = vld [vmem:[%s1 + $0x8] sm:$0xf]
      %v239 = vld [vmem:[%s1 + $0xc] sm:$0xf]
      %v240 = vld [vmem:[%s1 + $0x10] sm:$0xf]
      %v241 = vld [vmem:[%s1 + $0x14] sm:$0xf]
      %v242 = vld [vmem:[%s1 + $0x18] sm:$0xf]
      %v243 = vld [vmem:[%s1 + $0x1c] sm:$0xf]
      %v244 = vld [vmem:[%s1 + $0x20] sm:$0xf]
      %v245 = vld [vmem:[%s1 + $0x24] sm:$0xf]
      %v246 = vld [vmem:[%s1 + $0x28] sm:$0xf]
      %v247 = vld [vmem:[%s1 + $0x2c] sm:$0xf]
      %v248 = vld [vmem:[%s1 + $0x30] sm:$0xf]
      %v249 = vld [vmem:[%s1 + $0x34] sm:$0xf]
      %v250 = vld [vmem:[%s1 + $0x38] sm:$0xf]
      %v251 = vld [vmem:[%s1 + $0x3c] sm:$0xf]
      %s252 = sadd.s32 %s222, 144
      %s253 = scalar_lea.vmem %s210, %s252
      %v254 = vld [vmem:[%s253] sm:$0xff]
      %v255 = vld [vmem:[%s253 + $0x10] sm:$0xff]
      %v256 = vld [vmem:[%s253 + $0x20] sm:$0xff]
      %v257 = vld [vmem:[%s253 + $0x30] sm:$0xff]
      %v258 = vld [vmem:[%s253 + $0x40] sm:$0xff]
      %v259 = vld [vmem:[%s253 + $0x50] sm:$0xff]
      %v260 = vld [vmem:[%s253 + $0x60] sm:$0xff]
      %v261 = vld [vmem:[%s253 + $0x70] sm:$0xff]
      %v262 = vpack.c.bf16 %v255, %v254
      %v263 = vpack.c.bf16 %v257, %v256
      %v264 = vpack.c.bf16 %v259, %v258
      %v265 = vpack.c.bf16 %v261, %v260
      %s266 = scalar_lea.vmem %s1, 64
      %v267 = vld [vmem:[%s266] sm:$0xf]
      %v268 = vld [vmem:[%s266 + $0x4] sm:$0xf]
      %v269 = vld [vmem:[%s266 + $0x8] sm:$0xf]
      %v270 = vld [vmem:[%s266 + $0xc] sm:$0xf]
      %v271 = vld [vmem:[%s266 + $0x10] sm:$0xf]
      %v272 = vld [vmem:[%s266 + $0x14] sm:$0xf]
      %v273 = vld [vmem:[%s266 + $0x18] sm:$0xf]
      %v274 = vld [vmem:[%s266 + $0x1c] sm:$0xf]
      %v275 = vld [vmem:[%s266 + $0x20] sm:$0xf]
      %v276 = vld [vmem:[%s266 + $0x24] sm:$0xf]
      %v277 = vld [vmem:[%s266 + $0x28] sm:$0xf]
      %v278 = vld [vmem:[%s266 + $0x2c] sm:$0xf]
      %v279 = vld [vmem:[%s266 + $0x30] sm:$0xf]
      %v280 = vld [vmem:[%s266 + $0x34] sm:$0xf]
      %v281 = vld [vmem:[%s266 + $0x38] sm:$0xf]
      %v282 = vld [vmem:[%s266 + $0x3c] sm:$0xf]
      %v299 = vunpack.c.l.b16 %v267
      %v300 = vunpack.c.l.b16 %v268
      %v301 = vunpack.c.l.b16 %v269
      %v302 = vunpack.c.l.b16 %v270
      %v303 = vunpack.c.l.b16 %v271
      %v304 = vunpack.c.l.b16 %v272
      %v305 = vunpack.c.l.b16 %v273
      %v306 = vunpack.c.l.b16 %v274
      %v307 = vunpack.c.l.b16 %v275
      %v308 = vunpack.c.l.b16 %v276
      %v309 = vunpack.c.l.b16 %v277
      %v310 = vunpack.c.l.b16 %v278
      %v311 = vunpack.c.l.b16 %v279
      %v312 = vunpack.c.l.b16 %v280
      %v313 = vunpack.c.l.b16 %v281
      %v314 = vunpack.c.l.b16 %v282
      %v315 = vpack.c.b16 %v300, %v299
      %v316 = vpack.c.b16 %v302, %v301
      %v317 = vpack.c.b16 %v304, %v303
      %v318 = vpack.c.b16 %v306, %v305
      %v319 = vpack.c.b16 %v308, %v307
      %v320 = vpack.c.b16 %v310, %v309
      %v321 = vpack.c.b16 %v312, %v311
      %v322 = vpack.c.b16 %v314, %v313
      %331 = vmatpush.bf16.msra.mxu0 %v322
      %332 = vmatpush.bf16.msra.mxu0 %v321
      %333 = vmatpush.bf16.msra.mxu0 %v320
      %334 = vmatpush.bf16.msra.mxu0 %v319
      %335 = vmatpush.bf16.msra.mxu0 %v318
      %336 = vmatpush.bf16.msra.mxu0 %v317
      %337 = vmatpush.bf16.msra.mxu0 %v316
      %338 = vmatpush.bf16.msra.mxu0 %v315
      %339 = vmatmul.bf16.gmra.mxu0 %v262
      %v340 = vpop.f32.mrf.mxu0
      %v341 = vadd.f32 0.0, %v340
      %v342 = vpop.f32.mrf.mxu0
      %v343 = vadd.f32 0.0, %v342
      %344 = vmatmul.bf16.gmra.mxu0 %v263
      %v345 = vpop.f32.mrf.mxu0
      %v346 = vadd.f32 0.0, %v345
      %v347 = vpop.f32.mrf.mxu0
      %v348 = vadd.f32 0.0, %v347
      %349 = vmatmul.bf16.gmra.mxu0 %v264
      %v350 = vpop.f32.mrf.mxu0
      %v351 = vadd.f32 0.0, %v350
      %v352 = vpop.f32.mrf.mxu0
      %v353 = vadd.f32 0.0, %v352
      %354 = vmatmul.bf16.gmra.mxu0 %v265
      %v355 = vpop.f32.mrf.mxu0
      %v356 = vadd.f32 0.0, %v355
      %v357 = vpop.f32.mrf.mxu0
      %v358 = vadd.f32 0.0, %v357
      %359 = vdwg.mxu0
      %v376 = vunpack.c.l.b16 %v236
      %v377 = vunpack.c.l.b16 %v237
      %v378 = vunpack.c.l.b16 %v238
      %v379 = vunpack.c.l.b16 %v239
      %v380 = vunpack.c.l.b16 %v240
      %v381 = vunpack.c.l.b16 %v241
      %v382 = vunpack.c.l.b16 %v242
      %v383 = vunpack.c.l.b16 %v243
      %v384 = vunpack.c.l.b16 %v244
      %v385 = vunpack.c.l.b16 %v245
      %v386 = vunpack.c.l.b16 %v246
      %v387 = vunpack.c.l.b16 %v247
      %v388 = vunpack.c.l.b16 %v248
      %v389 = vunpack.c.l.b16 %v249
      %v390 = vunpack.c.l.b16 %v250
      %v391 = vunpack.c.l.b16 %v251
      %v392 = vpack.c.b16 %v377, %v376
      %v393 = vpack.c.b16 %v379, %v378
      %v394 = vpack.c.b16 %v381, %v380
      %v395 = vpack.c.b16 %v383, %v382
      %v396 = vpack.c.b16 %v385, %v384
      %v397 = vpack.c.b16 %v387, %v386
      %v398 = vpack.c.b16 %v389, %v388
      %v399 = vpack.c.b16 %v391, %v390
      %408 = vmatpush.bf16.msra.mxu0 %v399
      %409 = vmatpush.bf16.msra.mxu0 %v398
      %410 = vmatpush.bf16.msra.mxu0 %v397
      %411 = vmatpush.bf16.msra.mxu0 %v396
      %412 = vmatpush.bf16.msra.mxu0 %v395
      %413 = vmatpush.bf16.msra.mxu0 %v394
      %414 = vmatpush.bf16.msra.mxu0 %v393
      %415 = vmatpush.bf16.msra.mxu0 %v392
      %416 = vmatmul.bf16.gmra.mxu0 %v232
      %v417 = vpop.f32.mrf.mxu0
      %v418 = vadd.f32 %v341, %v417
      %v419 = vpop.f32.mrf.mxu0
      %v420 = vadd.f32 %v343, %v419
      %421 = vmatmul.bf16.gmra.mxu0 %v233
      %v422 = vpop.f32.mrf.mxu0
      %v423 = vadd.f32 %v346, %v422
      %v424 = vpop.f32.mrf.mxu0
      %v425 = vadd.f32 %v348, %v424
      %426 = vmatmul.bf16.gmra.mxu0 %v234
      %v427 = vpop.f32.mrf.mxu0
      %v428 = vadd.f32 %v351, %v427
      %v429 = vpop.f32.mrf.mxu0
      %v430 = vadd.f32 %v353, %v429
      %431 = vmatmul.bf16.gmra.mxu0 %v235
      %v432 = vpop.f32.mrf.mxu0
      %v433 = vadd.f32 %v356, %v432
      %v434 = vpop.f32.mrf.mxu0
      %v435 = vadd.f32 %v358, %v434
      %436 = vdwg.mxu0
      %v437 = vld [vmem:[%s223 + $0x1] sm:$0xff]
      %v438 = vld [vmem:[%s223 + $0x11] sm:$0xff]
      %v439 = vld [vmem:[%s223 + $0x21] sm:$0xff]
      %v440 = vld [vmem:[%s223 + $0x31] sm:$0xff]
      %v441 = vld [vmem:[%s223 + $0x41] sm:$0xff]
      %v442 = vld [vmem:[%s223 + $0x51] sm:$0xff]
      %v443 = vld [vmem:[%s223 + $0x61] sm:$0xff]
      %v444 = vld [vmem:[%s223 + $0x71] sm:$0xff]
      %v445 = vpack.c.bf16 %v438, %v437
      %v446 = vpack.c.bf16 %v440, %v439
      %v447 = vpack.c.bf16 %v442, %v441
      %v448 = vpack.c.bf16 %v444, %v443
      %s449 = scalar_lea.vmem %s1, 128
      %v450 = vld [vmem:[%s449] sm:$0xf]
      %v451 = vld [vmem:[%s449 + $0x4] sm:$0xf]
      %v452 = vld [vmem:[%s449 + $0x8] sm:$0xf]
      %v453 = vld [vmem:[%s449 + $0xc] sm:$0xf]
      %v454 = vld [vmem:[%s449 + $0x10] sm:$0xf]
      %v455 = vld [vmem:[%s449 + $0x14] sm:$0xf]
      %v456 = vld [vmem:[%s449 + $0x18] sm:$0xf]
      %v457 = vld [vmem:[%s449 + $0x1c] sm:$0xf]
      %v458 = vld [vmem:[%s449 + $0x20] sm:$0xf]
      %v459 = vld [vmem:[%s449 + $0x24] sm:$0xf]
      %v460 = vld [vmem:[%s449 + $0x28] sm:$0xf]
      %v461 = vld [vmem:[%s449 + $0x2c] sm:$0xf]
      %v462 = vld [vmem:[%s449 + $0x30] sm:$0xf]
      %v463 = vld [vmem:[%s449 + $0x34] sm:$0xf]
      %v464 = vld [vmem:[%s449 + $0x38] sm:$0xf]
      %v465 = vld [vmem:[%s449 + $0x3c] sm:$0xf]
      %v482 = vunpack.c.l.b16 %v450
      %v483 = vunpack.c.l.b16 %v451
      %v484 = vunpack.c.l.b16 %v452
      %v485 = vunpack.c.l.b16 %v453
      %v486 = vunpack.c.l.b16 %v454
      %v487 = vunpack.c.l.b16 %v455
      %v488 = vunpack.c.l.b16 %v456
      %v489 = vunpack.c.l.b16 %v457
      %v490 = vunpack.c.l.b16 %v458
      %v491 = vunpack.c.l.b16 %v459
      %v492 = vunpack.c.l.b16 %v460
      %v493 = vunpack.c.l.b16 %v461
      %v494 = vunpack.c.l.b16 %v462
      %v495 = vunpack.c.l.b16 %v463
      %v496 = vunpack.c.l.b16 %v464
      %v497 = vunpack.c.l.b16 %v465
      %v498 = vpack.c.b16 %v483, %v482
      %v499 = vpack.c.b16 %v485, %v484
      %v500 = vpack.c.b16 %v487, %v486
      %v501 = vpack.c.b16 %v489, %v488
      %v502 = vpack.c.b16 %v491, %v490
      %v503 = vpack.c.b16 %v493, %v492
      %v504 = vpack.c.b16 %v495, %v494
      %v505 = vpack.c.b16 %v497, %v496
      %514 = vmatpush.bf16.msra.mxu0 %v505
      %515 = vmatpush.bf16.msra.mxu0 %v504
      %516 = vmatpush.bf16.msra.mxu0 %v503
      %517 = vmatpush.bf16.msra.mxu0 %v502
      %518 = vmatpush.bf16.msra.mxu0 %v501
      %519 = vmatpush.bf16.msra.mxu0 %v500
      %520 = vmatpush.bf16.msra.mxu0 %v499
      %521 = vmatpush.bf16.msra.mxu0 %v498
      %522 = vmatmul.bf16.gmra.mxu0 %v445
      %v523 = vpop.f32.mrf.mxu0
      %v524 = vadd.f32 0.0, %v523
      %v525 = vpop.f32.mrf.mxu0
      %v526 = vadd.f32 0.0, %v525
      %527 = vmatmul.bf16.gmra.mxu0 %v446
      %v528 = vpop.f32.mrf.mxu0
      %v529 = vadd.f32 0.0, %v528
      %v530 = vpop.f32.mrf.mxu0
      %v531 = vadd.f32 0.0, %v530
      %532 = vmatmul.bf16.gmra.mxu0 %v447
      %v533 = vpop.f32.mrf.mxu0
      %v534 = vadd.f32 0.0, %v533
      %v535 = vpop.f32.mrf.mxu0
      %v536 = vadd.f32 0.0, %v535
      %537 = vmatmul.bf16.gmra.mxu0 %v448
      %v538 = vpop.f32.mrf.mxu0
      %v539 = vadd.f32 0.0, %v538
      %v540 = vpop.f32.mrf.mxu0
      %v541 = vadd.f32 0.0, %v540
      %542 = vdwg.mxu0
      %v543 = vadd.f32 %v418, %v524
      %v544 = vadd.f32 %v420, %v526
      %v545 = vadd.f32 %v423, %v529
      %v546 = vadd.f32 %v425, %v531
      %v547 = vadd.f32 %v428, %v534
      %v548 = vadd.f32 %v430, %v536
      %v549 = vadd.f32 %v433, %v539
      %v550 = vadd.f32 %v435, %v541
      %s551 = sadd.s32 %s222, 288
      %s552 = scalar_lea.vmem %s210, %s551
      %v553 = vld [vmem:[%s552] sm:$0xff]
      %v554 = vld [vmem:[%s552 + $0x10] sm:$0xff]
      %v555 = vld [vmem:[%s552 + $0x20] sm:$0xff]
      %v556 = vld [vmem:[%s552 + $0x30] sm:$0xff]
      %v557 = vld [vmem:[%s552 + $0x40] sm:$0xff]
      %v558 = vld [vmem:[%s552 + $0x50] sm:$0xff]
      %v559 = vld [vmem:[%s552 + $0x60] sm:$0xff]
      %v560 = vld [vmem:[%s552 + $0x70] sm:$0xff]
      %v561 = vpack.c.bf16 %v554, %v553
      %v562 = vpack.c.bf16 %v556, %v555
      %v563 = vpack.c.bf16 %v558, %v557
      %v564 = vpack.c.bf16 %v560, %v559
      %s565 = scalar_lea.vmem %s1, 192
      %v566 = vld [vmem:[%s565] sm:$0xf]
      %v567 = vld [vmem:[%s565 + $0x4] sm:$0xf]
      %v568 = vld [vmem:[%s565 + $0x8] sm:$0xf]
      %v569 = vld [vmem:[%s565 + $0xc] sm:$0xf]
      %v570 = vld [vmem:[%s565 + $0x10] sm:$0xf]
      %v571 = vld [vmem:[%s565 + $0x14] sm:$0xf]
      %v572 = vld [vmem:[%s565 + $0x18] sm:$0xf]
      %v573 = vld [vmem:[%s565 + $0x1c] sm:$0xf]
      %v574 = vld [vmem:[%s565 + $0x20] sm:$0xf]
      %v575 = vld [vmem:[%s565 + $0x24] sm:$0xf]
      %v576 = vld [vmem:[%s565 + $0x28] sm:$0xf]
      %v577 = vld [vmem:[%s565 + $0x2c] sm:$0xf]
      %v578 = vld [vmem:[%s565 + $0x30] sm:$0xf]
      %v579 = vld [vmem:[%s565 + $0x34] sm:$0xf]
      %v580 = vld [vmem:[%s565 + $0x38] sm:$0xf]
      %v581 = vld [vmem:[%s565 + $0x3c] sm:$0xf]
      %v598 = vunpack.c.l.b16 %v566
      %v599 = vunpack.c.l.b16 %v567
      %v600 = vunpack.c.l.b16 %v568
      %v601 = vunpack.c.l.b16 %v569
      %v602 = vunpack.c.l.b16 %v570
      %v603 = vunpack.c.l.b16 %v571
      %v604 = vunpack.c.l.b16 %v572
      %v605 = vunpack.c.l.b16 %v573
      %v606 = vunpack.c.l.b16 %v574
      %v607 = vunpack.c.l.b16 %v575
      %v608 = vunpack.c.l.b16 %v576
      %v609 = vunpack.c.l.b16 %v577
      %v610 = vunpack.c.l.b16 %v578
      %v611 = vunpack.c.l.b16 %v579
      %v612 = vunpack.c.l.b16 %v580
      %v613 = vunpack.c.l.b16 %v581
      %v614 = vpack.c.b16 %v599, %v598
      %v615 = vpack.c.b16 %v601, %v600
      %v616 = vpack.c.b16 %v603, %v602
      %v617 = vpack.c.b16 %v605, %v604
      %v618 = vpack.c.b16 %v607, %v606
      %v619 = vpack.c.b16 %v609, %v608
      %v620 = vpack.c.b16 %v611, %v610
      %v621 = vpack.c.b16 %v613, %v612
      %630 = vmatpush.bf16.msra.mxu0 %v621
      %631 = vmatpush.bf16.msra.mxu0 %v620
      %632 = vmatpush.bf16.msra.mxu0 %v619
      %633 = vmatpush.bf16.msra.mxu0 %v618
      %634 = vmatpush.bf16.msra.mxu0 %v617
      %635 = vmatpush.bf16.msra.mxu0 %v616
      %636 = vmatpush.bf16.msra.mxu0 %v615
      %637 = vmatpush.bf16.msra.mxu0 %v614
      %638 = vmatmul.bf16.gmra.mxu0 %v561
      %v639 = vpop.f32.mrf.mxu0
      %v640 = vadd.f32 0.0, %v639
      %v641 = vpop.f32.mrf.mxu0
      %v642 = vadd.f32 0.0, %v641
      %643 = vmatmul.bf16.gmra.mxu0 %v562
      %v644 = vpop.f32.mrf.mxu0
      %v645 = vadd.f32 0.0, %v644
      %v646 = vpop.f32.mrf.mxu0
      %v647 = vadd.f32 0.0, %v646
      %648 = vmatmul.bf16.gmra.mxu0 %v563
      %v649 = vpop.f32.mrf.mxu0
      %v650 = vadd.f32 0.0, %v649
      %v651 = vpop.f32.mrf.mxu0
      %v652 = vadd.f32 0.0, %v651
      %653 = vmatmul.bf16.gmra.mxu0 %v564
      %v654 = vpop.f32.mrf.mxu0
      %v655 = vadd.f32 0.0, %v654
      %v656 = vpop.f32.mrf.mxu0
      %v657 = vadd.f32 0.0, %v656
      %658 = vdwg.mxu0
      %v659 = vadd.f32 %v543, %v640
      %v660 = vadd.f32 %v544, %v642
      %v661 = vadd.f32 %v545, %v645
      %v662 = vadd.f32 %v546, %v647
      %v663 = vadd.f32 %v547, %v650
      %v664 = vadd.f32 %v548, %v652
      %v665 = vadd.f32 %v549, %v655
      %v666 = vadd.f32 %v550, %v657
      %s667 = sadd.s32 %s222, 432
      %s668 = scalar_lea.vmem %s210, %s667
      %v669 = vld [vmem:[%s668] sm:$0xff]
      %v670 = vld [vmem:[%s668 + $0x10] sm:$0xff]
      %v671 = vld [vmem:[%s668 + $0x20] sm:$0xff]
      %v672 = vld [vmem:[%s668 + $0x30] sm:$0xff]
      %v673 = vld [vmem:[%s668 + $0x40] sm:$0xff]
      %v674 = vld [vmem:[%s668 + $0x50] sm:$0xff]
      %v675 = vld [vmem:[%s668 + $0x60] sm:$0xff]
      %v676 = vld [vmem:[%s668 + $0x70] sm:$0xff]
      %v677 = vpack.c.bf16 %v670, %v669
      %v678 = vpack.c.bf16 %v672, %v671
      %v679 = vpack.c.bf16 %v674, %v673
      %v680 = vpack.c.bf16 %v676, %v675
      %s681 = scalar_lea.vmem %s1, 256
      %v682 = vld [vmem:[%s681] sm:$0xf]
      %v683 = vld [vmem:[%s681 + $0x4] sm:$0xf]
      %v684 = vld [vmem:[%s681 + $0x8] sm:$0xf]
      %v685 = vld [vmem:[%s681 + $0xc] sm:$0xf]
      %v686 = vld [vmem:[%s681 + $0x10] sm:$0xf]
      %v687 = vld [vmem:[%s681 + $0x14] sm:$0xf]
      %v688 = vld [vmem:[%s681 + $0x18] sm:$0xf]
      %v689 = vld [vmem:[%s681 + $0x1c] sm:$0xf]
      %v690 = vld [vmem:[%s681 + $0x20] sm:$0xf]
      %v691 = vld [vmem:[%s681 + $0x24] sm:$0xf]
      %v692 = vld [vmem:[%s681 + $0x28] sm:$0xf]
      %v693 = vld [vmem:[%s681 + $0x2c] sm:$0xf]
      %v694 = vld [vmem:[%s681 + $0x30] sm:$0xf]
      %v695 = vld [vmem:[%s681 + $0x34] sm:$0xf]
      %v696 = vld [vmem:[%s681 + $0x38] sm:$0xf]
      %v697 = vld [vmem:[%s681 + $0x3c] sm:$0xf]
      %v714 = vunpack.c.l.b16 %v682
      %v715 = vunpack.c.l.b16 %v683
      %v716 = vunpack.c.l.b16 %v684
      %v717 = vunpack.c.l.b16 %v685
      %v718 = vunpack.c.l.b16 %v686
      %v719 = vunpack.c.l.b16 %v687
      %v720 = vunpack.c.l.b16 %v688
      %v721 = vunpack.c.l.b16 %v689
      %v722 = vunpack.c.l.b16 %v690
      %v723 = vunpack.c.l.b16 %v691
      %v724 = vunpack.c.l.b16 %v692
      %v725 = vunpack.c.l.b16 %v693
      %v726 = vunpack.c.l.b16 %v694
      %v727 = vunpack.c.l.b16 %v695
      %v728 = vunpack.c.l.b16 %v696
      %v729 = vunpack.c.l.b16 %v697
      %v730 = vpack.c.b16 %v715, %v714
      %v731 = vpack.c.b16 %v717, %v716
      %v732 = vpack.c.b16 %v719, %v718
      %v733 = vpack.c.b16 %v721, %v720
      %v734 = vpack.c.b16 %v723, %v722
      %v735 = vpack.c.b16 %v725, %v724
      %v736 = vpack.c.b16 %v727, %v726
      %v737 = vpack.c.b16 %v729, %v728
      %746 = vmatpush.bf16.msra.mxu0 %v737
      %747 = vmatpush.bf16.msra.mxu0 %v736
      %748 = vmatpush.bf16.msra.mxu0 %v735
      %749 = vmatpush.bf16.msra.mxu0 %v734
      %750 = vmatpush.bf16.msra.mxu0 %v733
      %751 = vmatpush.bf16.msra.mxu0 %v732
      %752 = vmatpush.bf16.msra.mxu0 %v731
      %753 = vmatpush.bf16.msra.mxu0 %v730
      %754 = vmatmul.bf16.gmra.mxu0 %v677
      %v755 = vpop.f32.mrf.mxu0
      %v756 = vadd.f32 0.0, %v755
      %v757 = vpop.f32.mrf.mxu0
      %v758 = vadd.f32 0.0, %v757
      %759 = vmatmul.bf16.gmra.mxu0 %v678
      %v760 = vpop.f32.mrf.mxu0
      %v761 = vadd.f32 0.0, %v760
      %v762 = vpop.f32.mrf.mxu0
      %v763 = vadd.f32 0.0, %v762
      %764 = vmatmul.bf16.gmra.mxu0 %v679
      %v765 = vpop.f32.mrf.mxu0
      %v766 = vadd.f32 0.0, %v765
      %v767 = vpop.f32.mrf.mxu0
      %v768 = vadd.f32 0.0, %v767
      %769 = vmatmul.bf16.gmra.mxu0 %v680
      %v770 = vpop.f32.mrf.mxu0
      %v771 = vadd.f32 0.0, %v770
      %v772 = vpop.f32.mrf.mxu0
      %v773 = vadd.f32 0.0, %v772
      %774 = vdwg.mxu0
      %v775 = vadd.f32 %v659, %v756
      %v776 = vadd.f32 %v660, %v758
      %v777 = vadd.f32 %v661, %v761
      %v778 = vadd.f32 %v662, %v763
      %v779 = vadd.f32 %v663, %v766
      %v780 = vadd.f32 %v664, %v768
      %v781 = vadd.f32 %v665, %v771
      %v782 = vadd.f32 %v666, %v773
      %v783 = vld [vmem:[%s552 + $0x1] sm:$0xff]
      %v784 = vld [vmem:[%s552 + $0x11] sm:$0xff]
      %v785 = vld [vmem:[%s552 + $0x21] sm:$0xff]
      %v786 = vld [vmem:[%s552 + $0x31] sm:$0xff]
      %v787 = vld [vmem:[%s552 + $0x41] sm:$0xff]
      %v788 = vld [vmem:[%s552 + $0x51] sm:$0xff]
      %v789 = vld [vmem:[%s552 + $0x61] sm:$0xff]
      %v790 = vld [vmem:[%s552 + $0x71] sm:$0xff]
      %v791 = vpack.c.bf16 %v784, %v783
      %v792 = vpack.c.bf16 %v786, %v785
      %v793 = vpack.c.bf16 %v788, %v787
      %v794 = vpack.c.bf16 %v790, %v789
      %s795 = scalar_lea.vmem %s1, 320
      %v796 = vld [vmem:[%s795] sm:$0xf]
      %v797 = vld [vmem:[%s795 + $0x4] sm:$0xf]
      %v798 = vld [vmem:[%s795 + $0x8] sm:$0xf]
      %v799 = vld [vmem:[%s795 + $0xc] sm:$0xf]
      %v800 = vld [vmem:[%s795 + $0x10] sm:$0xf]
      %v801 = vld [vmem:[%s795 + $0x14] sm:$0xf]
      %v802 = vld [vmem:[%s795 + $0x18] sm:$0xf]
      %v803 = vld [vmem:[%s795 + $0x1c] sm:$0xf]
      %v804 = vld [vmem:[%s795 + $0x20] sm:$0xf]
      %v805 = vld [vmem:[%s795 + $0x24] sm:$0xf]
      %v806 = vld [vmem:[%s795 + $0x28] sm:$0xf]
      %v807 = vld [vmem:[%s795 + $0x2c] sm:$0xf]
      %v808 = vld [vmem:[%s795 + $0x30] sm:$0xf]
      %v809 = vld [vmem:[%s795 + $0x34] sm:$0xf]
      %v810 = vld [vmem:[%s795 + $0x38] sm:$0xf]
      %v811 = vld [vmem:[%s795 + $0x3c] sm:$0xf]
      %v828 = vunpack.c.l.b16 %v796
      %v829 = vunpack.c.l.b16 %v797
      %v830 = vunpack.c.l.b16 %v798
      %v831 = vunpack.c.l.b16 %v799
      %v832 = vunpack.c.l.b16 %v800
      %v833 = vunpack.c.l.b16 %v801
      %v834 = vunpack.c.l.b16 %v802
      %v835 = vunpack.c.l.b16 %v803
      %v836 = vunpack.c.l.b16 %v804
      %v837 = vunpack.c.l.b16 %v805
      %v838 = vunpack.c.l.b16 %v806
      %v839 = vunpack.c.l.b16 %v807
      %v840 = vunpack.c.l.b16 %v808
      %v841 = vunpack.c.l.b16 %v809
      %v842 = vunpack.c.l.b16 %v810
      %v843 = vunpack.c.l.b16 %v811
      %v844 = vpack.c.b16 %v829, %v828
      %v845 = vpack.c.b16 %v831, %v830
      %v846 = vpack.c.b16 %v833, %v832
      %v847 = vpack.c.b16 %v835, %v834
      %v848 = vpack.c.b16 %v837, %v836
      %v849 = vpack.c.b16 %v839, %v838
      %v850 = vpack.c.b16 %v841, %v840
      %v851 = vpack.c.b16 %v843, %v842
      %860 = vmatpush.bf16.msra.mxu0 %v851
      %861 = vmatpush.bf16.msra.mxu0 %v850
      %862 = vmatpush.bf16.msra.mxu0 %v849
      %863 = vmatpush.bf16.msra.mxu0 %v848
      %864 = vmatpush.bf16.msra.mxu0 %v847
      %865 = vmatpush.bf16.msra.mxu0 %v846
      %866 = vmatpush.bf16.msra.mxu0 %v845
      %867 = vmatpush.bf16.msra.mxu0 %v844
      %868 = vmatmul.bf16.gmra.mxu0 %v791
      %v869 = vpop.f32.mrf.mxu0
      %v870 = vadd.f32 0.0, %v869
      %v871 = vpop.f32.mrf.mxu0
      %v872 = vadd.f32 0.0, %v871
      %873 = vmatmul.bf16.gmra.mxu0 %v792
      %v874 = vpop.f32.mrf.mxu0
      %v875 = vadd.f32 0.0, %v874
      %v876 = vpop.f32.mrf.mxu0
      %v877 = vadd.f32 0.0, %v876
      %878 = vmatmul.bf16.gmra.mxu0 %v793
      %v879 = vpop.f32.mrf.mxu0
      %v880 = vadd.f32 0.0, %v879
      %v881 = vpop.f32.mrf.mxu0
      %v882 = vadd.f32 0.0, %v881
      %883 = vmatmul.bf16.gmra.mxu0 %v794
      %v884 = vpop.f32.mrf.mxu0
      %v885 = vadd.f32 0.0, %v884
      %v886 = vpop.f32.mrf.mxu0
      %v887 = vadd.f32 0.0, %v886
      %888 = vdwg.mxu0
      %v889 = vadd.f32 %v775, %v870
      %v890 = vadd.f32 %v776, %v872
      %v891 = vadd.f32 %v777, %v875
      %v892 = vadd.f32 %v778, %v877
      %v893 = vadd.f32 %v779, %v880
      %v894 = vadd.f32 %v780, %v882
      %v895 = vadd.f32 %v781, %v885
      %v896 = vadd.f32 %v782, %v887
      %s897 = sadd.s32 %s221, 1
      %s898 = smul.u32 %s897, 16
      %s899 = scalar_lea.vmem %s210, %s898
      %v900 = vld [vmem:[%s899] sm:$0xff]
      %v901 = vld [vmem:[%s899 + $0x10] sm:$0xff]
      %v902 = vld [vmem:[%s899 + $0x20] sm:$0xff]
      %v903 = vld [vmem:[%s899 + $0x30] sm:$0xff]
      %v904 = vld [vmem:[%s899 + $0x40] sm:$0xff]
      %v905 = vld [vmem:[%s899 + $0x50] sm:$0xff]
      %v906 = vld [vmem:[%s899 + $0x60] sm:$0xff]
      %v907 = vld [vmem:[%s899 + $0x70] sm:$0xff]
      %v908 = vpack.c.bf16 %v901, %v900
      %v909 = vpack.c.bf16 %v903, %v902
      %v910 = vpack.c.bf16 %v905, %v904
      %v911 = vpack.c.bf16 %v907, %v906
      %s912 = scalar_lea.vmem %s1, 384
      %v913 = vld [vmem:[%s912] sm:$0xf]
      %v914 = vld [vmem:[%s912 + $0x4] sm:$0xf]
      %v915 = vld [vmem:[%s912 + $0x8] sm:$0xf]
      %v916 = vld [vmem:[%s912 + $0xc] sm:$0xf]
      %v917 = vld [vmem:[%s912 + $0x10] sm:$0xf]
      %v918 = vld [vmem:[%s912 + $0x14] sm:$0xf]
      %v919 = vld [vmem:[%s912 + $0x18] sm:$0xf]
      %v920 = vld [vmem:[%s912 + $0x1c] sm:$0xf]
      %v921 = vld [vmem:[%s912 + $0x20] sm:$0xf]
      %v922 = vld [vmem:[%s912 + $0x24] sm:$0xf]
      %v923 = vld [vmem:[%s912 + $0x28] sm:$0xf]
      %v924 = vld [vmem:[%s912 + $0x2c] sm:$0xf]
      %v925 = vld [vmem:[%s912 + $0x30] sm:$0xf]
      %v926 = vld [vmem:[%s912 + $0x34] sm:$0xf]
      %v927 = vld [vmem:[%s912 + $0x38] sm:$0xf]
      %v928 = vld [vmem:[%s912 + $0x3c] sm:$0xf]
      %v945 = vunpack.c.l.b16 %v913
      %v946 = vunpack.c.l.b16 %v914
      %v947 = vunpack.c.l.b16 %v915
      %v948 = vunpack.c.l.b16 %v916
      %v949 = vunpack.c.l.b16 %v917
      %v950 = vunpack.c.l.b16 %v918
      %v951 = vunpack.c.l.b16 %v919
      %v952 = vunpack.c.l.b16 %v920
      %v953 = vunpack.c.l.b16 %v921
      %v954 = vunpack.c.l.b16 %v922
      %v955 = vunpack.c.l.b16 %v923
      %v956 = vunpack.c.l.b16 %v924
      %v957 = vunpack.c.l.b16 %v925
      %v958 = vunpack.c.l.b16 %v926
      %v959 = vunpack.c.l.b16 %v927
      %v960 = vunpack.c.l.b16 %v928
      %v961 = vpack.c.b16 %v946, %v945
      %v962 = vpack.c.b16 %v948, %v947
      %v963 = vpack.c.b16 %v950, %v949
      %v964 = vpack.c.b16 %v952, %v951
      %v965 = vpack.c.b16 %v954, %v953
      %v966 = vpack.c.b16 %v956, %v955
      %v967 = vpack.c.b16 %v958, %v957
      %v968 = vpack.c.b16 %v960, %v959
      %977 = vmatpush.bf16.msra.mxu0 %v968
      %978 = vmatpush.bf16.msra.mxu0 %v967
      %979 = vmatpush.bf16.msra.mxu0 %v966
      %980 = vmatpush.bf16.msra.mxu0 %v965
      %981 = vmatpush.bf16.msra.mxu0 %v964
      %982 = vmatpush.bf16.msra.mxu0 %v963
      %983 = vmatpush.bf16.msra.mxu0 %v962
      %984 = vmatpush.bf16.msra.mxu0 %v961
      %985 = vmatmul.bf16.gmra.mxu0 %v908
      %v986 = vpop.f32.mrf.mxu0
      %v987 = vadd.f32 0.0, %v986
      %v988 = vpop.f32.mrf.mxu0
      %v989 = vadd.f32 0.0, %v988
      %990 = vmatmul.bf16.gmra.mxu0 %v909
      %v991 = vpop.f32.mrf.mxu0
      %v992 = vadd.f32 0.0, %v991
      %v993 = vpop.f32.mrf.mxu0
      %v994 = vadd.f32 0.0, %v993
      %995 = vmatmul.bf16.gmra.mxu0 %v910
      %v996 = vpop.f32.mrf.mxu0
      %v997 = vadd.f32 0.0, %v996
      %v998 = vpop.f32.mrf.mxu0
      %v999 = vadd.f32 0.0, %v998
      %1000 = vmatmul.bf16.gmra.mxu0 %v911
      %v1001 = vpop.f32.mrf.mxu0
      %v1002 = vadd.f32 0.0, %v1001
      %v1003 = vpop.f32.mrf.mxu0
      %v1004 = vadd.f32 0.0, %v1003
      %1005 = vdwg.mxu0
      %v1006 = vadd.f32 %v889, %v987
      %v1007 = vadd.f32 %v890, %v989
      %v1008 = vadd.f32 %v891, %v992
      %v1009 = vadd.f32 %v892, %v994
      %v1010 = vadd.f32 %v893, %v997
      %v1011 = vadd.f32 %v894, %v999
      %v1012 = vadd.f32 %v895, %v1002
      %v1013 = vadd.f32 %v896, %v1004
      %s1014 = sadd.s32 %s898, 144
      %s1015 = scalar_lea.vmem %s210, %s1014
      %v1016 = vld [vmem:[%s1015] sm:$0xff]
      %v1017 = vld [vmem:[%s1015 + $0x10] sm:$0xff]
      %v1018 = vld [vmem:[%s1015 + $0x20] sm:$0xff]
      %v1019 = vld [vmem:[%s1015 + $0x30] sm:$0xff]
      %v1020 = vld [vmem:[%s1015 + $0x40] sm:$0xff]
      %v1021 = vld [vmem:[%s1015 + $0x50] sm:$0xff]
      %v1022 = vld [vmem:[%s1015 + $0x60] sm:$0xff]
      %v1023 = vld [vmem:[%s1015 + $0x70] sm:$0xff]
      %v1024 = vpack.c.bf16 %v1017, %v1016
      %v1025 = vpack.c.bf16 %v1019, %v1018
      %v1026 = vpack.c.bf16 %v1021, %v1020
      %v1027 = vpack.c.bf16 %v1023, %v1022
      %s1028 = scalar_lea.vmem %s1, 448
      %v1029 = vld [vmem:[%s1028] sm:$0xf]
      %v1030 = vld [vmem:[%s1028 + $0x4] sm:$0xf]
      %v1031 = vld [vmem:[%s1028 + $0x8] sm:$0xf]
      %v1032 = vld [vmem:[%s1028 + $0xc] sm:$0xf]
      %v1033 = vld [vmem:[%s1028 + $0x10] sm:$0xf]
      %v1034 = vld [vmem:[%s1028 + $0x14] sm:$0xf]
      %v1035 = vld [vmem:[%s1028 + $0x18] sm:$0xf]
      %v1036 = vld [vmem:[%s1028 + $0x1c] sm:$0xf]
      %v1037 = vld [vmem:[%s1028 + $0x20] sm:$0xf]
      %v1038 = vld [vmem:[%s1028 + $0x24] sm:$0xf]
      %v1039 = vld [vmem:[%s1028 + $0x28] sm:$0xf]
      %v1040 = vld [vmem:[%s1028 + $0x2c] sm:$0xf]
      %v1041 = vld [vmem:[%s1028 + $0x30] sm:$0xf]
      %v1042 = vld [vmem:[%s1028 + $0x34] sm:$0xf]
      %v1043 = vld [vmem:[%s1028 + $0x38] sm:$0xf]
      %v1044 = vld [vmem:[%s1028 + $0x3c] sm:$0xf]
      %v1061 = vunpack.c.l.b16 %v1029
      %v1062 = vunpack.c.l.b16 %v1030
      %v1063 = vunpack.c.l.b16 %v1031
      %v1064 = vunpack.c.l.b16 %v1032
      %v1065 = vunpack.c.l.b16 %v1033
      %v1066 = vunpack.c.l.b16 %v1034
      %v1067 = vunpack.c.l.b16 %v1035
      %v1068 = vunpack.c.l.b16 %v1036
      %v1069 = vunpack.c.l.b16 %v1037
      %v1070 = vunpack.c.l.b16 %v1038
      %v1071 = vunpack.c.l.b16 %v1039
      %v1072 = vunpack.c.l.b16 %v1040
      %v1073 = vunpack.c.l.b16 %v1041
      %v1074 = vunpack.c.l.b16 %v1042
      %v1075 = vunpack.c.l.b16 %v1043
      %v1076 = vunpack.c.l.b16 %v1044
      %v1077 = vpack.c.b16 %v1062, %v1061
      %v1078 = vpack.c.b16 %v1064, %v1063
      %v1079 = vpack.c.b16 %v1066, %v1065
      %v1080 = vpack.c.b16 %v1068, %v1067
      %v1081 = vpack.c.b16 %v1070, %v1069
      %v1082 = vpack.c.b16 %v1072, %v1071
      %v1083 = vpack.c.b16 %v1074, %v1073
      %v1084 = vpack.c.b16 %v1076, %v1075
      %1093 = vmatpush.bf16.msra.mxu0 %v1084
      %1094 = vmatpush.bf16.msra.mxu0 %v1083
      %1095 = vmatpush.bf16.msra.mxu0 %v1082
      %1096 = vmatpush.bf16.msra.mxu0 %v1081
      %1097 = vmatpush.bf16.msra.mxu0 %v1080
      %1098 = vmatpush.bf16.msra.mxu0 %v1079
      %1099 = vmatpush.bf16.msra.mxu0 %v1078
      %1100 = vmatpush.bf16.msra.mxu0 %v1077
      %1101 = vmatmul.bf16.gmra.mxu0 %v1024
      %v1102 = vpop.f32.mrf.mxu0
      %v1103 = vadd.f32 0.0, %v1102
      %v1104 = vpop.f32.mrf.mxu0
      %v1105 = vadd.f32 0.0, %v1104
      %1106 = vmatmul.bf16.gmra.mxu0 %v1025
      %v1107 = vpop.f32.mrf.mxu0
      %v1108 = vadd.f32 0.0, %v1107
      %v1109 = vpop.f32.mrf.mxu0
      %v1110 = vadd.f32 0.0, %v1109
      %1111 = vmatmul.bf16.gmra.mxu0 %v1026
      %v1112 = vpop.f32.mrf.mxu0
      %v1113 = vadd.f32 0.0, %v1112
      %v1114 = vpop.f32.mrf.mxu0
      %v1115 = vadd.f32 0.0, %v1114
      %1116 = vmatmul.bf16.gmra.mxu0 %v1027
      %v1117 = vpop.f32.mrf.mxu0
      %v1118 = vadd.f32 0.0, %v1117
      %v1119 = vpop.f32.mrf.mxu0
      %v1120 = vadd.f32 0.0, %v1119
      %1121 = vdwg.mxu0
      %v1122 = vadd.f32 %v1006, %v1103
      %v1123 = vadd.f32 %v1007, %v1105
      %v1124 = vadd.f32 %v1008, %v1108
      %v1125 = vadd.f32 %v1009, %v1110
      %v1126 = vadd.f32 %v1010, %v1113
      %v1127 = vadd.f32 %v1011, %v1115
      %v1128 = vadd.f32 %v1012, %v1118
      %v1129 = vadd.f32 %v1013, %v1120
      %v1130 = vld [vmem:[%s899 + $0x1] sm:$0xff]
      %v1131 = vld [vmem:[%s899 + $0x11] sm:$0xff]
      %v1132 = vld [vmem:[%s899 + $0x21] sm:$0xff]
      %v1133 = vld [vmem:[%s899 + $0x31] sm:$0xff]
      %v1134 = vld [vmem:[%s899 + $0x41] sm:$0xff]
      %v1135 = vld [vmem:[%s899 + $0x51] sm:$0xff]
      %v1136 = vld [vmem:[%s899 + $0x61] sm:$0xff]
      %v1137 = vld [vmem:[%s899 + $0x71] sm:$0xff]
      %v1138 = vpack.c.bf16 %v1131, %v1130
      %v1139 = vpack.c.bf16 %v1133, %v1132
      %v1140 = vpack.c.bf16 %v1135, %v1134
      %v1141 = vpack.c.bf16 %v1137, %v1136
      %s1142 = scalar_lea.vmem %s1, 512
      %v1143 = vld [vmem:[%s1142] sm:$0xf]
      %v1144 = vld [vmem:[%s1142 + $0x4] sm:$0xf]
      %v1145 = vld [vmem:[%s1142 + $0x8] sm:$0xf]
      %v1146 = vld [vmem:[%s1142 + $0xc] sm:$0xf]
      %v1147 = vld [vmem:[%s1142 + $0x10] sm:$0xf]
      %v1148 = vld [vmem:[%s1142 + $0x14] sm:$0xf]
      %v1149 = vld [vmem:[%s1142 + $0x18] sm:$0xf]
      %v1150 = vld [vmem:[%s1142 + $0x1c] sm:$0xf]
      %v1151 = vld [vmem:[%s1142 + $0x20] sm:$0xf]
      %v1152 = vld [vmem:[%s1142 + $0x24] sm:$0xf]
      %v1153 = vld [vmem:[%s1142 + $0x28] sm:$0xf]
      %v1154 = vld [vmem:[%s1142 + $0x2c] sm:$0xf]
      %v1155 = vld [vmem:[%s1142 + $0x30] sm:$0xf]
      %v1156 = vld [vmem:[%s1142 + $0x34] sm:$0xf]
      %v1157 = vld [vmem:[%s1142 + $0x38] sm:$0xf]
      %v1158 = vld [vmem:[%s1142 + $0x3c] sm:$0xf]
      %v1175 = vunpack.c.l.b16 %v1143
      %v1176 = vunpack.c.l.b16 %v1144
      %v1177 = vunpack.c.l.b16 %v1145
      %v1178 = vunpack.c.l.b16 %v1146
      %v1179 = vunpack.c.l.b16 %v1147
      %v1180 = vunpack.c.l.b16 %v1148
      %v1181 = vunpack.c.l.b16 %v1149
      %v1182 = vunpack.c.l.b16 %v1150
      %v1183 = vunpack.c.l.b16 %v1151
      %v1184 = vunpack.c.l.b16 %v1152
      %v1185 = vunpack.c.l.b16 %v1153
      %v1186 = vunpack.c.l.b16 %v1154
      %v1187 = vunpack.c.l.b16 %v1155
      %v1188 = vunpack.c.l.b16 %v1156
      %v1189 = vunpack.c.l.b16 %v1157
      %v1190 = vunpack.c.l.b16 %v1158
      %v1191 = vpack.c.b16 %v1176, %v1175
      %v1192 = vpack.c.b16 %v1178, %v1177
      %v1193 = vpack.c.b16 %v1180, %v1179
      %v1194 = vpack.c.b16 %v1182, %v1181
      %v1195 = vpack.c.b16 %v1184, %v1183
      %v1196 = vpack.c.b16 %v1186, %v1185
      %v1197 = vpack.c.b16 %v1188, %v1187
      %v1198 = vpack.c.b16 %v1190, %v1189
      %1207 = vmatpush.bf16.msra.mxu0 %v1198
      %1208 = vmatpush.bf16.msra.mxu0 %v1197
      %1209 = vmatpush.bf16.msra.mxu0 %v1196
      %1210 = vmatpush.bf16.msra.mxu0 %v1195
      %1211 = vmatpush.bf16.msra.mxu0 %v1194
      %1212 = vmatpush.bf16.msra.mxu0 %v1193
      %1213 = vmatpush.bf16.msra.mxu0 %v1192
      %1214 = vmatpush.bf16.msra.mxu0 %v1191
      %1215 = vmatmul.bf16.gmra.mxu0 %v1138
      %v1216 = vpop.f32.mrf.mxu0
      %v1217 = vadd.f32 0.0, %v1216
      %v1218 = vpop.f32.mrf.mxu0
      %v1219 = vadd.f32 0.0, %v1218
      %1220 = vmatmul.bf16.gmra.mxu0 %v1139
      %v1221 = vpop.f32.mrf.mxu0
      %v1222 = vadd.f32 0.0, %v1221
      %v1223 = vpop.f32.mrf.mxu0
      %v1224 = vadd.f32 0.0, %v1223
      %1225 = vmatmul.bf16.gmra.mxu0 %v1140
      %v1226 = vpop.f32.mrf.mxu0
      %v1227 = vadd.f32 0.0, %v1226
      %v1228 = vpop.f32.mrf.mxu0
      %v1229 = vadd.f32 0.0, %v1228
      %1230 = vmatmul.bf16.gmra.mxu0 %v1141
      %v1231 = vpop.f32.mrf.mxu0
      %v1232 = vadd.f32 0.0, %v1231
      %v1233 = vpop.f32.mrf.mxu0
      %v1234 = vadd.f32 0.0, %v1233
      %1235 = vdwg.mxu0
      %v1236 = vadd.f32 %v1122, %v1217
      %v1237 = vadd.f32 %v1123, %v1219
      %v1238 = vadd.f32 %v1124, %v1222
      %v1239 = vadd.f32 %v1125, %v1224
      %v1240 = vadd.f32 %v1126, %v1227
      %v1241 = vadd.f32 %v1127, %v1229
      %v1242 = vadd.f32 %v1128, %v1232
      %v1243 = vadd.f32 %v1129, %v1234
      %v1244 = vld [vmem:[%s2] sm:$0x1]
      %v1246 = vperm.slane %v1244, 0
      %v1248 = vmul.f32 %v1236, %v1246
      %v1249 = vmul.f32 %v1237, %v1246
      %v1250 = vmul.f32 %v1238, %v1246
      %v1251 = vmul.f32 %v1239, %v1246
      %v1252 = vmul.f32 %v1240, %v1246
      %v1253 = vmul.f32 %v1241, %v1246
      %v1254 = vmul.f32 %v1242, %v1246
      %v1255 = vmul.f32 %v1243, %v1246
      %v1256 = vld [vmem:[%s3] sm:$0x1]
      %v1258 = vperm.slane %v1256, 0
      %v1260 = vadd.f32 %v1248, %v1258
      %v1261 = vadd.f32 %v1249, %v1258
      %v1262 = vadd.f32 %v1250, %v1258
      %v1263 = vadd.f32 %v1251, %v1258
      %v1264 = vadd.f32 %v1252, %v1258
      %v1265 = vadd.f32 %v1253, %v1258
      %v1266 = vadd.f32 %v1254, %v1258
      %v1267 = vadd.f32 %v1255, %v1258
      %v1268 = vmax.f32 %v1260, 0.0
      %v1269 = vmax.f32 %v1261, 0.0
      %v1270 = vmax.f32 %v1262, 0.0
      %v1271 = vmax.f32 %v1263, 0.0
      %v1272 = vmax.f32 %v1264, 0.0
      %v1273 = vmax.f32 %v1265, 0.0
      %v1274 = vmax.f32 %v1266, 0.0
      %v1275 = vmax.f32 %v1267, 0.0
      %1276 = vst [vmem:[%s219] sm:$0xff] %v1268
      %1277 = vst [vmem:[%s219 + $0x8] sm:$0xff] %v1269
      %1278 = vst [vmem:[%s219 + $0x10] sm:$0xff] %v1270
      %1279 = vst [vmem:[%s219 + $0x18] sm:$0xff] %v1271
      %1280 = vst [vmem:[%s219 + $0x20] sm:$0xff] %v1272
      %1281 = vst [vmem:[%s219 + $0x28] sm:$0xff] %v1273
      %1282 = vst [vmem:[%s219 + $0x30] sm:$0xff] %v1274
      %1283 = vst [vmem:[%s219 + $0x38] sm:$0xff] %v1275
      %s1284 = smul.u32 8, %s20
      %p1285 = scmp.lt.s32.totalorder %s19, 1
      %s1286 = scalar_select %p1285, %s19, 1
      %p1287 = scmp.lt.s32.totalorder %s1284, 7
      %s1288 = scalar_select %p1287, %s1284, 7
      %s1289 = smul.addr %s1286, 8
      %s1290 = sadd.s32 %s1288, %s1289
      %s1291 = smul.addr %s1290, 8
      %s1292 = scalar_lea.vmem %s4, %s1291
      // Predicated region
      $region37: #{search_stage_forward.11} parent=35 // pred_check
        %p1293 = pneg %p136
      $region38: #{search_stage_forward.11} parent=35 // pred_check_branch
        %1295 = sbr.rel (%p1293) target = $region40
      $region39: #{search_stage_forward.11} parent=35 // pred_region
        %s1296 = smul.u32 8, %s20
      $region40: #{search_stage_forward.11} parent=35 // pred_fallthru
        _
    $region36: #{search_stage_forward.11} parent=5 // pred_fallthru
      _
    %p1297 = scmp.le.s32.totalorder 2, %s10
    // Predicated region
    $region41: #{search_stage_forward.11} parent=5 // pred_check
      %p1298 = pneg %p1297
    $region42: #{search_stage_forward.11} parent=5 // pred_check_branch
      %1300 = sbr.rel (%p1298) target = $region44
    $region43: #{search_stage_forward.11} parent=5 // pred_region
      %s1301 = ssub.s32 %s10, 2
      // Predicated region
      $region45: #{search_stage_forward.11} parent=43 // pred_check
        %p1302 = pneg %p142
      $region46: #{search_stage_forward.11} parent=43 // pred_check_branch
        %1304 = sbr.rel (%p1302) target = $region48
      $region47: #{search_stage_forward.11} parent=43 // pred_region
        %s1305 = smul.u32 8, %s22
        %p1306 = scmp.lt.s32.totalorder %s21, 1
        %s1307 = scalar_select %p1306, %s21, 1
        %p1308 = scmp.lt.s32.totalorder %s1305, 7
        %s1309 = scalar_select %p1308, %s1305, 7
        %s1310 = smul.addr %s1307, 8
        %s1311 = sadd.s32 %s1309, %s1310
        %s1312 = smul.addr %s1311, 8
        %s1313 = scalar_lea.vmem %s4, %s1312
      $region48: #{search_stage_forward.11} parent=43 // pred_fallthru
        _
    $region44: #{search_stage_forward.11} parent=5 // pred_fallthru
      _
  $region6: #{search_stage_forward.11} parent=0 // loop_footer
    %s14 = sadd.s32 1, %s10
  $region7: #{search_stage_forward.11} parent=0 // loop_footer_branch
    %9 = sbr.rel target = $region3
  $region8: #{search_stage_forward.11} parent=0 // loop_exit
    _

</llo_original>
